<compile_context>
chip_gen: v7x
topology: tpu7x:2x2x1
jax: 0.10.0
libtpu: 0.0.40
codegen_flags: <defaults>
</compile_context>

<pallas_src>
import numpy as np
import jax
import jax.numpy as jnp
from jax import lax
from jax.experimental import pallas as pl
from jax.experimental.pallas import tpu as pltpu


# ---------------------------------------------------------------------------
# Fixed Haar synthesis weights, computed exactly as the PyTorch module does
# (float64 outer products, then cast to float32 -> entries are exactly +-0.5).
# ---------------------------------------------------------------------------
_SQRT2_INV = 1.0 / np.sqrt(2.0)
_P_LOW = np.array([_SQRT2_INV, _SQRT2_INV], np.float64)      # low pass
_P_HIGH = np.array([-_SQRT2_INV, _SQRT2_INV], np.float64)    # high pass
_W_LL = np.outer(_P_LOW, _P_LOW).astype(np.float32)
_W_LH = np.outer(_P_LOW, _P_HIGH).astype(np.float32)
_W_HL = np.outer(_P_HIGH, _P_LOW).astype(np.float32)
_W_HH = np.outer(_P_HIGH, _P_HIGH).astype(np.float32)
_BAND_WEIGHTS = (_W_LL, _W_LH, _W_HL, _W_HH)


# ---------------------------------------------------------------------------
# One-time constants (built with numpy -> baked as constants, never rebuilt per grid step).
# ---------------------------------------------------------------------------
def _scaled_dilation_matrices(W, g, dtype):
    """Block-diagonal dilation + fold of the +-0.5 band scales.

    D_k[m, l] = w_k[a, b]  iff  l//(4W) == m//W  and  ((l%(4W))%(2W))//2 == m%W,
    where a = (l%(4W))//(2W) (output row parity) and b = l%2 (output col parity).
    x (rows, g*W) @ D_k (g*W, 4*g*W) -> staged band (rows, 4*g*W).
    """
    gW = g * W
    src = np.arange(gW, dtype=np.int64)[:, None]
    dst = np.arange(4 * gW, dtype=np.int64)[None, :]
    hit = ((dst // (4 * W)) == (src // W)) & (((dst % (4 * W)) % (2 * W)) // 2 == (src % W))
    a = (dst % (4 * W)) // (2 * W)
    b = dst % 2
    mats = []
    for w2 in _BAND_WEIGHTS:
        wvals = np.where(a == 0,
                         np.where(b == 0, w2[0, 0], w2[0, 1]),
                         np.where(b == 0, w2[1, 0], w2[1, 1]))
        mats.append(np.where(hit, wvals, 0.0).astype(np.float32))
    return jnp.asarray(np.stack(mats)).astype(dtype)          # (4, gW, 4*gW)


def _choose_group(H, W):
    """Smallest divisor g of H making the staged output lane-dense (4*g*W % 128 == 0, >= 512)."""
    divisors = [g for g in range(1, H + 1) if H % g == 0]
    for g in divisors:                       # smallest first -> minimal extra MXU work
        if (4 * g * W) % 128 == 0 and 4 * g * W >= 512:
            return g
    for g in divisors:
        if (4 * g * W) % 128 == 0:
            return g
    cands = [g for g in divisors if 4 * g * W <= 1024]
    return max(cands) if cands else 1


# ---------------------------------------------------------------------------
# Generation-aware VMEM budgeting.
# ---------------------------------------------------------------------------
def _vmem_budgets():
    """Returns (vmem_limit_bytes, per-step block budget in bytes)."""
    cap = None
    try:
        info = pltpu.get_tpu_info()
        cap = getattr(info, "vmem_capacity_bytes", None)
    except Exception:
        cap = None
    if cap is None:
        cap = 64 * 1024 * 1024                      # conservative fallback (v7x-sized)
    if cap >= 96 * 1024 * 1024:                     # v5e / v6e: 128 MiB physical
        return 96 * 1024 * 1024, 56 * 1024 * 1024
    return 44 * 1024 * 1024, 14 * 1024 * 1024       # v7x: 64 MiB physical


def _padded_tile_bytes(rows, cols, itemsize):
    sub = 8 * (4 // itemsize) if itemsize <= 4 else 8   # 8 (f32) / 16 (bf16) / 32 (i8) sublanes
    r = -(-rows // sub) * sub
    c = -(-cols // 128) * 128
    return r * c * itemsize


def _per_step_bytes(cb, H, W, g, n_out_planes, has_orig, itemsize):
    rows = cb * H // g
    lin, lout = g * W, 4 * g * W
    band = _padded_tile_bytes(rows, lin, itemsize)
    wide = _padded_tile_bytes(rows, lout, itemsize)
    dil = 4 * _padded_tile_bytes(lin, lout, itemsize)
    # Pallas double-buffers every pipelined block (dil included, even though its index is fixed).
    pipelined = 2 * (4 * band + (wide if has_orig else 0) + n_out_planes * wide + dil)
    # In-kernel temporaries: f32 matmul accumulator + HIGHEST operand-split headroom.
    temporaries = 2 * _padded_tile_bytes(rows, lout, 4) + 2 * band + dil // 2
    return pipelined + temporaries


def _choose_channel_block(N, C, H, W, g, n_out_planes, has_orig, itemsize, block_budget):
    sub = 8 * (4 // itemsize) if itemsize <= 4 else 8
    total_rows = C * H // g
    valid = []
    for cb in range(1, C + 1):
        if C % cb:
            continue
        if (cb * H) % g:
            continue
        rows = cb * H // g
        if rows != total_rows and rows % sub:       # (8,128)-rule on second-minor dim
            continue
        valid.append(cb)
    if not valid:
        valid = [C]
    fitting = [cb for cb in valid
               if _per_step_bytes(cb, H, W, g, n_out_planes, has_orig, itemsize) <= block_budget]
    if not fitting:
        # TODO(synk): add an H-tile grid axis instead of hoping the smallest cb fits.
        fitting = [min(valid)]
    # Keep enough grid steps for both v7x TensorCores before maximizing cb.
    for min_steps in (4, 2, 1):
        cands = [cb for cb in fitting if N * (C // cb) >= min_steps]
        if cands:
            return max(cands)
    return max(fitting)


# ---------------------------------------------------------------------------
# Kernels (dilation matrices arrive pre-scaled; no per-step constant rebuilds).
# ---------------------------------------------------------------------------
def _make_cat5_kernel(precision):
    def kernel(dil_ref, ll_ref, lh_ref, hl_ref, hh_ref, orig_ref, out_ref):
        for k, band_ref in enumerate((ll_ref, lh_ref, hl_ref, hh_ref)):
            z = jnp.dot(band_ref[0], dil_ref[k], precision=precision,
                        preferred_element_type=jnp.float32)
            out_ref[0, k] = z.astype(out_ref.dtype)
        out_ref[0, 4] = orig_ref[0]        # 'original' passthrough, full lane-width store
    return kernel


def _make_sum_kernel(precision):
    def kernel(dil_ref, ll_ref, lh_ref, hl_ref, hh_ref, out_ref):
        acc = jnp.dot(ll_ref[0], dil_ref[0], precision=precision,
                      preferred_element_type=jnp.float32)
        for k, band_ref in enumerate((lh_ref, hl_ref, hh_ref), start=1):
            acc = acc + jnp.dot(band_ref[0], dil_ref[k], precision=precision,
                                preferred_element_type=jnp.float32)
        out_ref[0] = acc.astype(out_ref.dtype)
    return kernel


# ---------------------------------------------------------------------------
# Wrapper
# ---------------------------------------------------------------------------
def wave_unpool(LL, LH, HL, HH, original=None, option_unpool="cat5"):
    N, C, H, W = LL.shape
    dtype = LL.dtype
    itemsize = jnp.dtype(dtype).itemsize

    g = _choose_group(H, W)
    gW = g * W
    rows_total = C * H // g

    # Contiguous, layout-only reshapes: (N,C,H,W) -> (N, C*H/g, g*W).
    bands = [x.reshape(N, rows_total, gW) for x in (LL, LH, HL, HH)]
    dil = _scaled_dilation_matrices(W, g, dtype)
    # f32: HIGHEST keeps activations bit-exact through the MXU (only nonzero product is *0.5).
    # bf16: DEFAULT is already exact against a 0/+-0.5 matrix and avoids multi-pass waste.
    precision = lax.Precision.HIGHEST if itemsize >= 4 else lax.Precision.DEFAULT

    vmem_limit, block_budget = _vmem_budgets()
    cparams = pltpu.CompilerParams(
        dimension_semantics=("parallel", "parallel"),
        vmem_limit_bytes=vmem_limit)
    dil_spec = pl.BlockSpec((4, gW, 4 * gW), lambda n, c: (0, 0, 0))   # fetched once

    if option_unpool == "cat5":
        if original is None:
            raise NotImplementedError("cat5 requires `original`")
        cb = _choose_channel_block(N, C, H, W, g, n_out_planes=5, has_orig=True,
                                   itemsize=itemsize, block_budget=block_budget)
        br = cb * H // g
        band_spec = pl.BlockSpec((1, br, gW), lambda n, c: (n, c, 0))
        orig_spec = pl.BlockSpec((1, br, 4 * gW), lambda n, c: (n, c, 0))
        out_spec = pl.BlockSpec((1, 5, br, 4 * gW), lambda n, c: (n, 0, c, 0))
        origf = original.reshape(N, rows_total, 4 * gW)
        staged = pl.pallas_call(
            _make_cat5_kernel(precision),
            out_shape=jax.ShapeDtypeStruct((N, 5, rows_total, 4 * gW), dtype),
            grid=(N, C // cb),
            in_specs=[dil_spec, band_spec, band_spec, band_spec, band_spec, orig_spec],
            out_specs=out_spec,
            compiler_params=cparams,
        )(dil, *bands, origf)
        # Contiguous un-staging: (N,5,C*H/g,4*g*W) == (N,5,C,H,2,W,2) -> (N,5C,2H,2W),
        # identical to torch.cat([LL,LH,HL,HH,original], dim=1).
        return staged.reshape(N, 5 * C, 2 * H, 2 * W)

    elif option_unpool == "sum":
        cb = _choose_channel_block(N, C, H, W, g, n_out_planes=1, has_orig=False,
                                   itemsize=itemsize, block_budget=block_budget)
        br = cb * H // g
        band_spec = pl.BlockSpec((1, br, gW), lambda n, c: (n, c, 0))
        out_spec = pl.BlockSpec((1, br, 4 * gW), lambda n, c: (n, c, 0))
        staged = pl.pallas_call(
            _make_sum_kernel(precision),
            out_shape=jax.ShapeDtypeStruct((N, rows_total, 4 * gW), dtype),
            grid=(N, C // cb),
            in_specs=[dil_spec, band_spec, band_spec, band_spec, band_spec],
            out_specs=out_spec,
            compiler_params=cparams,
        )(dil, *bands)
        return staged.reshape(N, C, 2 * H, 2 * W)

    else:
        raise NotImplementedError("Unsupported unpooling option")


# ---------------------------------------------------------------------------
# Pure-JAX reference (mirrors the PyTorch ConvTranspose2d semantics exactly)
# ---------------------------------------------------------------------------
def _ref_upsample(x, w2x2):
    N, C, H, W = x.shape
    y = x[:, :, :, None, :, None] * jnp.asarray(w2x2)[None, None, None, :, None, :]
    return y.reshape(N, C, 2 * H, 2 * W)


def wave_unpool_ref(LL, LH, HL, HH, original):
    return jnp.concatenate(
        [_ref_upsample(LL, _W_LL), _ref_upsample(LH, _W_LH),
         _ref_upsample(HL, _W_HL), _ref_upsample(HH, _W_HH), original], axis=1)


if __name__ == "__main__":
    key = jax.random.PRNGKey(0)
    k_ll, k_lh, k_hl, k_hh, k_or = jax.random.split(key, 5)
    N, C, H, W = 2, 4, 16, 16
    LL = jax.random.normal(k_ll, (N, C, H, W), jnp.float32)
    LH = jax.random.normal(k_lh, (N, C, H, W), jnp.float32)
    HL = jax.random.normal(k_hl, (N, C, H, W), jnp.float32)
    HH = jax.random.normal(k_hh, (N, C, H, W), jnp.float32)
    original = jax.random.normal(k_or, (N, C, 2 * H, 2 * W), jnp.float32)

    out_cat5 = jax.block_until_ready(
        wave_unpool(LL, LH, HL, HH, original, option_unpool="cat5"))
    out_sum = jax.block_until_ready(
        wave_unpool(LL, LH, HL, HH, option_unpool="sum"))

    ref = wave_unpool_ref(LL, LH, HL, HH, original)
    assert out_cat5.shape == (N, 5 * C, 2 * H, 2 * W)
    assert out_sum.shape == (N, C, 2 * H, 2 * W)
    assert jnp.allclose(out_cat5, ref, atol=1e-5, rtol=1e-5)
    assert jnp.allclose(
        out_sum,
        ref[:, 0:C] + ref[:, C:2 * C] + ref[:, 2 * C:3 * C] + ref[:, 3 * C:4 * C],
        atol=1e-5, rtol=1e-5)
    print("KERNEL_OK")
</pallas_src>

<mosaic_0001>
module attributes {stable_mosaic.version = 11 : i64} {
  func.func @kernel(%arg0: i32, %arg1: i32, %arg2: memref<4x128x512xf32, #tpu.memory_space<vmem>>, %arg3: memref<1x8x128xf32, #tpu.memory_space<vmem>>, %arg4: memref<1x8x128xf32, #tpu.memory_space<vmem>>, %arg5: memref<1x8x128xf32, #tpu.memory_space<vmem>>, %arg6: memref<1x8x128xf32, #tpu.memory_space<vmem>>, %arg7: memref<1x8x512xf32, #tpu.memory_space<vmem>>, %arg8: memref<1x5x8x512xf32, #tpu.memory_space<vmem>>) attributes {dimension_semantics = [#tpu.dimension_semantics<parallel>, #tpu.dimension_semantics<parallel>], iteration_bounds = array<i64: 2, 1>, scalar_prefetch = 0 : i64, scratch_operands = 0 : i64, tpu.core_type = #tpu.core_type<tc>, window_params = [{pipeline_mode = #tpu.pipeline_mode<synchronous>, transform_indices = @transform_0, window_bounds = array<i64: 4, 128, 512>}, {transform_indices = @transform_1, window_bounds = array<i64: 1, 8, 128>}, {transform_indices = @transform_2, window_bounds = array<i64: 1, 8, 128>}, {transform_indices = @transform_3, window_bounds = array<i64: 1, 8, 128>}, {transform_indices = @transform_4, window_bounds = array<i64: 1, 8, 128>}, {transform_indices = @transform_5, window_bounds = array<i64: 1, 8, 512>}, {transform_indices = @transform_6, window_bounds = array<i64: 1, 5, 8, 512>}]} {
    %c0 = arith.constant 0 : index
    %c0_0 = arith.constant 0 : index
    %c0_1 = arith.constant 0 : index
    %0 = vector.load %arg3[%c0, %c0_0, %c0_1] : memref<1x8x128xf32, #tpu.memory_space<vmem>>, vector<1x8x128xf32>
    %1 = vector.shape_cast %0 : vector<1x8x128xf32> to vector<8x128xf32>
    %c0_2 = arith.constant 0 : index
    %c0_3 = arith.constant 0 : index
    %c0_4 = arith.constant 0 : index
    %2 = vector.load %arg2[%c0_2, %c0_3, %c0_4] : memref<4x128x512xf32, #tpu.memory_space<vmem>>, vector<1x128x512xf32>
    %3 = vector.shape_cast %2 : vector<1x128x512xf32> to vector<128x512xf32>
    %cst = arith.constant dense<0.000000e+00> : vector<8x512xf32>
    %4 = tpu.matmul %1, %3, %cst {dimension_numbers = #tpu.dot_dimension_numbers<[1], [0], [0], [1], [0, 0, 1, 1], [], []>, precision = #tpu.contract_precision<fp32>} : vector<8x128xf32>, vector<128x512xf32>, vector<8x512xf32> -> vector<8x512xf32>
    %c0_5 = arith.constant 0 : index
    %c0_6 = arith.constant 0 : index
    %c0_7 = arith.constant 0 : index
    %c0_8 = arith.constant 0 : index
    %5 = vector.load %arg8[%c0_5, %c0_6, %c0_7, %c0_8] : memref<1x5x8x512xf32, #tpu.memory_space<vmem>>, vector<1x1x8x512xf32>
    %6 = vector.shape_cast %5 : vector<1x1x8x512xf32> to vector<8x512xf32>
    %7 = vector.shape_cast %4 : vector<8x512xf32> to vector<1x1x8x512xf32>
    tpu.vector_store %arg8[%c0_5, %c0_6, %c0_7, %c0_8], %7 {strides = array<i32>} : memref<1x5x8x512xf32, #tpu.memory_space<vmem>>, vector<1x1x8x512xf32>,
    %c0_9 = arith.constant 0 : index
    %c0_10 = arith.constant 0 : index
    %c0_11 = arith.constant 0 : index
    %8 = vector.load %arg4[%c0_9, %c0_10, %c0_11] : memref<1x8x128xf32, #tpu.memory_space<vmem>>, vector<1x8x128xf32>
    %9 = vector.shape_cast %8 : vector<1x8x128xf32> to vector<8x128xf32>
    %c1 = arith.constant 1 : index
    %c0_12 = arith.constant 0 : index
    %c0_13 = arith.constant 0 : index
    %10 = vector.load %arg2[%c1, %c0_12, %c0_13] : memref<4x128x512xf32, #tpu.memory_space<vmem>>, vector<1x128x512xf32>
    %11 = vector.shape_cast %10 : vector<1x128x512xf32> to vector<128x512xf32>
    %cst_14 = arith.constant dense<0.000000e+00> : vector<8x512xf32>
    %12 = tpu.matmul %9, %11, %cst_14 {dimension_numbers = #tpu.dot_dimension_numbers<[1], [0], [0], [1], [0, 0, 1, 1], [], []>, precision = #tpu.contract_precision<fp32>} : vector<8x128xf32>, vector<128x512xf32>, vector<8x512xf32> -> vector<8x512xf32>
    %c0_15 = arith.constant 0 : index
    %c1_16 = arith.constant 1 : index
    %c0_17 = arith.constant 0 : index
    %c0_18 = arith.constant 0 : index
    %13 = vector.load %arg8[%c0_15, %c1_16, %c0_17, %c0_18] : memref<1x5x8x512xf32, #tpu.memory_space<vmem>>, vector<1x1x8x512xf32>
    %14 = vector.shape_cast %13 : vector<1x1x8x512xf32> to vector<8x512xf32>
    %15 = vector.shape_cast %12 : vector<8x512xf32> to vector<1x1x8x512xf32>
    tpu.vector_store %arg8[%c0_15, %c1_16, %c0_17, %c0_18], %15 {strides = array<i32>} : memref<1x5x8x512xf32, #tpu.memory_space<vmem>>, vector<1x1x8x512xf32>,
    %c0_19 = arith.constant 0 : index
    %c0_20 = arith.constant 0 : index
    %c0_21 = arith.constant 0 : index
    %16 = vector.load %arg5[%c0_19, %c0_20, %c0_21] : memref<1x8x128xf32, #tpu.memory_space<vmem>>, vector<1x8x128xf32>
    %17 = vector.shape_cast %16 : vector<1x8x128xf32> to vector<8x128xf32>
    %c2 = arith.constant 2 : index
    %c0_22 = arith.constant 0 : index
    %c0_23 = arith.constant 0 : index
    %18 = vector.load %arg2[%c2, %c0_22, %c0_23] : memref<4x128x512xf32, #tpu.memory_space<vmem>>, vector<1x128x512xf32>
    %19 = vector.shape_cast %18 : vector<1x128x512xf32> to vector<128x512xf32>
    %cst_24 = arith.constant dense<0.000000e+00> : vector<8x512xf32>
    %20 = tpu.matmul %17, %19, %cst_24 {dimension_numbers = #tpu.dot_dimension_numbers<[1], [0], [0], [1], [0, 0, 1, 1], [], []>, precision = #tpu.contract_precision<fp32>} : vector<8x128xf32>, vector<128x512xf32>, vector<8x512xf32> -> vector<8x512xf32>
    %c0_25 = arith.constant 0 : index
    %c2_26 = arith.constant 2 : index
    %c0_27 = arith.constant 0 : index
    %c0_28 = arith.constant 0 : index
    %21 = vector.load %arg8[%c0_25, %c2_26, %c0_27, %c0_28] : memref<1x5x8x512xf32, #tpu.memory_space<vmem>>, vector<1x1x8x512xf32>
    %22 = vector.shape_cast %21 : vector<1x1x8x512xf32> to vector<8x512xf32>
    %23 = vector.shape_cast %20 : vector<8x512xf32> to vector<1x1x8x512xf32>
    tpu.vector_store %arg8[%c0_25, %c2_26, %c0_27, %c0_28], %23 {strides = array<i32>} : memref<1x5x8x512xf32, #tpu.memory_space<vmem>>, vector<1x1x8x512xf32>,
    %c0_29 = arith.constant 0 : index
    %c0_30 = arith.constant 0 : index
    %c0_31 = arith.constant 0 : index
    %24 = vector.load %arg6[%c0_29, %c0_30, %c0_31] : memref<1x8x128xf32, #tpu.memory_space<vmem>>, vector<1x8x128xf32>
    %25 = vector.shape_cast %24 : vector<1x8x128xf32> to vector<8x128xf32>
    %c3 = arith.constant 3 : index
    %c0_32 = arith.constant 0 : index
    %c0_33 = arith.constant 0 : index
    %26 = vector.load %arg2[%c3, %c0_32, %c0_33] : memref<4x128x512xf32, #tpu.memory_space<vmem>>, vector<1x128x512xf32>
    %27 = vector.shape_cast %26 : vector<1x128x512xf32> to vector<128x512xf32>
    %cst_34 = arith.constant dense<0.000000e+00> : vector<8x512xf32>
    %28 = tpu.matmul %25, %27, %cst_34 {dimension_numbers = #tpu.dot_dimension_numbers<[1], [0], [0], [1], [0, 0, 1, 1], [], []>, precision = #tpu.contract_precision<fp32>} : vector<8x128xf32>, vector<128x512xf32>, vector<8x512xf32> -> vector<8x512xf32>
    %c0_35 = arith.constant 0 : index
    %c3_36 = arith.constant 3 : index
    %c0_37 = arith.constant 0 : index
    %c0_38 = arith.constant 0 : index
    %29 = vector.load %arg8[%c0_35, %c3_36, %c0_37, %c0_38] : memref<1x5x8x512xf32, #tpu.memory_space<vmem>>, vector<1x1x8x512xf32>
    %30 = vector.shape_cast %29 : vector<1x1x8x512xf32> to vector<8x512xf32>
    %31 = vector.shape_cast %28 : vector<8x512xf32> to vector<1x1x8x512xf32>
    tpu.vector_store %arg8[%c0_35, %c3_36, %c0_37, %c0_38], %31 {strides = array<i32>} : memref<1x5x8x512xf32, #tpu.memory_space<vmem>>, vector<1x1x8x512xf32>,
    %c0_39 = arith.constant 0 : index
    %c0_40 = arith.constant 0 : index
    %c0_41 = arith.constant 0 : index
    %32 = vector.load %arg7[%c0_39, %c0_40, %c0_41] : memref<1x8x512xf32, #tpu.memory_space<vmem>>, vector<1x8x512xf32>
    %33 = vector.shape_cast %32 : vector<1x8x512xf32> to vector<8x512xf32>
    %c0_42 = arith.constant 0 : index
    %c4 = arith.constant 4 : index
    %c0_43 = arith.constant 0 : index
    %c0_44 = arith.constant 0 : index
    %34 = vector.load %arg8[%c0_42, %c4, %c0_43, %c0_44] : memref<1x5x8x512xf32, #tpu.memory_space<vmem>>, vector<1x1x8x512xf32>
    %35 = vector.shape_cast %34 : vector<1x1x8x512xf32> to vector<8x512xf32>
    %36 = vector.shape_cast %33 : vector<8x512xf32> to vector<1x1x8x512xf32>
    tpu.vector_store %arg8[%c0_42, %c4, %c0_43, %c0_44], %36 {strides = array<i32>} : memref<1x5x8x512xf32, #tpu.memory_space<vmem>>, vector<1x1x8x512xf32>,
    return
  }
  func.func @transform_0(%arg0: i32, %arg1: i32) -> (i32, i32, i32) {
    %c0_i32 = arith.constant 0 : i32
    %c0_i32_0 = arith.constant 0 : i32
    %c0_i32_1 = arith.constant 0 : i32
    %c0_i32_2 = arith.constant 0 : i32
    return %c0_i32, %c0_i32_0, %c0_i32_1 : i32, i32, i32
  }
  func.func @transform_1(%arg0: i32, %arg1: i32) -> (i32, i32, i32) {
    %c0_i32 = arith.constant 0 : i32
    %c0_i32_0 = arith.constant 0 : i32
    return %arg0, %arg1, %c0_i32 : i32, i32, i32
  }
  func.func @transform_2(%arg0: i32, %arg1: i32) -> (i32, i32, i32) {
    %c0_i32 = arith.constant 0 : i32
    %c0_i32_0 = arith.constant 0 : i32
    return %arg0, %arg1, %c0_i32 : i32, i32, i32
  }
  func.func @transform_3(%arg0: i32, %arg1: i32) -> (i32, i32, i32) {
    %c0_i32 = arith.constant 0 : i32
    %c0_i32_0 = arith.constant 0 : i32
    return %arg0, %arg1, %c0_i32 : i32, i32, i32
  }
  func.func @transform_4(%arg0: i32, %arg1: i32) -> (i32, i32, i32) {
    %c0_i32 = arith.constant 0 : i32
    %c0_i32_0 = arith.constant 0 : i32
    return %arg0, %arg1, %c0_i32 : i32, i32, i32
  }
  func.func @transform_5(%arg0: i32, %arg1: i32) -> (i32, i32, i32) {
    %c0_i32 = arith.constant 0 : i32
    %c0_i32_0 = arith.constant 0 : i32
    return %arg0, %arg1, %c0_i32 : i32, i32, i32
  }
  func.func @transform_6(%arg0: i32, %arg1: i32) -> (i32, i32, i32, i32) {
    %c0_i32 = arith.constant 0 : i32
    %c0_i32_0 = arith.constant 0 : i32
    %c0_i32_1 = arith.constant 0 : i32
    return %arg0, %c0_i32, %arg1, %c0_i32_0 : i32, i32, i32, i32
  }
}

</mosaic_0001>

<llo_original>
// kernel: tpu_custom_call.1
$region0: #{tpu_custom_call.1}
  #allocation0 [shape = 'u32[]', space=smem, size = 0x4, offset = 0x4, fixed_abs, tag = 'smem constant byte address 0x4 - core index']
  #allocation1 [shape = 'u32[144,128]{1,0:T(1,128)}', space=vmem, size = 0x12000, scoped, tag = 'internal scratch']
  %s0 = inlined_call_operand.hbm [shape: f32[4,128,512], index: 0, kind: input, shape index: {}]
  %s1 = inlined_call_operand.hbm [shape: f32[2,8,128], index: 1, kind: input, shape index: {}]
  %s2 = inlined_call_operand.hbm [shape: f32[2,8,128], index: 2, kind: input, shape index: {}]
  %s3 = inlined_call_operand.hbm [shape: f32[2,8,128], index: 3, kind: input, shape index: {}]
  %s4 = inlined_call_operand.hbm [shape: f32[2,8,128], index: 4, kind: input, shape index: {}]
  %s5 = inlined_call_operand.hbm [shape: f32[2,8,512], index: 5, kind: input, shape index: {}]
  %s6 = inlined_call_operand.hbm [shape: f32[2,5,8,512], index: 6, kind: output, shape index: {}]
  %s7 = sld [smem:[#allocation0]]
  $region81: #{tpu_custom_call.1} parent=0
    _
  %s9 = ssub.s32 1, %s7
  %s10 = scalar_select 0, %s9, %s7
  $region1: #{tpu_custom_call.1} parent=0
    #allocation2 [shape = 'u8[1048576]{0}', space=vmem, size = 0x100000, scoped, tag = 'input window, operand 0, single buffered']
    #allocation3 [shape = 's32[2]{0}', space=sflag, size = 0x8, scoped, tag = 'scoped memory for tpu_custom_call.1']
    #allocation4 [shape = 's32[2]{0}', space=sflag, size = 0x8, scoped, tag = 'scoped memory for tpu_custom_call.1']
    #allocation5 [shape = 'u8[8192]{0}', space=vmem, size = 0x2000, scoped, tag = 'input window, operand 1']
    #allocation6 [shape = 's32[2]{0}', space=sflag, size = 0x8, scoped, tag = 'scoped memory for tpu_custom_call.1']
    #allocation7 [shape = 'u8[8192]{0}', space=vmem, size = 0x2000, scoped, tag = 'input window, operand 2']
    #allocation8 [shape = 'u8[8192]{0}', space=vmem, size = 0x2000, scoped, tag = 'input window, operand 3']
    #allocation9 [shape = 's32[2]{0}', space=sflag, size = 0x8, scoped, tag = 'scoped memory for tpu_custom_call.1']
    #allocation10 [shape = 'u8[8192]{0}', space=vmem, size = 0x2000, scoped, tag = 'input window, operand 4']
    #allocation11 [shape = 'u8[32768]{0}', space=vmem, size = 0x8000, scoped, tag = 'input window, operand 5']
    #allocation12 [shape = 's32[2]{0}', space=sflag, size = 0x8, scoped, tag = 'scoped memory for tpu_custom_call.1']
    #allocation13 [shape = 'u8[163840]{0}', space=vmem, size = 0x28000, scoped, tag = 'output window, operand 0']
    %11 = vsyncpa [#allocation3], 0
    %12 = vsyncpa [#allocation6], 0
    %s13 = scalar_lea.sflag [#allocation6], 1
    %14 = vsyncpa %s13, 0
    %15 = vsyncpa [#allocation9], 0
    %s16 = scalar_lea.sflag [#allocation9], 1
    %17 = vsyncpa %s16, 0
    %18 = vsyncpa [#allocation12], 0
    %s19 = scalar_lea.sflag [#allocation12], 1
    %20 = vsyncpa %s19, 0
    %21 = vsyncpa [#allocation4], 0
    %s22 = scalar_lea.sflag [#allocation4], 1
    %23 = vsyncpa %s22, 0
    loop: start=0, step=1, limit=4
    $region2: #{tpu_custom_call.1} parent=1 // loop_pre_header
      _
    $region3: #{tpu_custom_call.1} parent=1 // loop_header
      %s25 = sphi 0, %s29
      %p26 = scmp.ge.s32.totalorder %s25, 4
      %s32 = sphi 0, %s44
      %s33 = sphi 0, %s40
      %s34 = sphi 0, %s32
      %s35 = sphi 0, %s33
      %s36 = sphi 0, %s34
      %s37 = sphi 0, %s35
      %s45 = sphi 0, %s45
      %s47 = sphi 0, %s45
      %s48 = sphi 0, %s47
      %s62 = sphi 0, %s48
      %s70 = sphi 0, %s72
      %s73 = sphi 0, %s70
      %s74 = sphi 0, %s73
      %s90 = sphi 0, %s74
      %s98 = sphi 0, %s100
      %s101 = sphi 0, %s98
      %s102 = sphi 0, %s101
      %s118 = sphi 0, %s102
      %s126 = sphi 0, %s128
      %s129 = sphi 0, %s126
      %s130 = sphi 0, %s129
      %s146 = sphi 0, %s130
      %s154 = sphi 0, %s156
      %s157 = sphi 0, %s154
      %s158 = sphi 0, %s157
      %s174 = sphi 0, %s158
      %s182 = sphi 0, %s184
      %s185 = sphi 0, %s182
      %s186 = sphi 0, %s185
      %s202 = sphi 0, %s186
      %s210 = sphi 0, %s212
      %s213 = sphi 0, %s210
      %s214 = sphi 0, %s213
      %s230 = sphi 0, %s214
    $region4: #{tpu_custom_call.1} parent=1 // loop_header_branch
      %28 = sbr.rel (%p26) target = $region8
    $region5: #{tpu_custom_call.1} parent=1 // loop_body
      %s30 = ssub.s32 %s25, 1
      %s31 = ssub.s32 %s25, 2
      %s38 = sadd.s32 1, %s33
      %p39 = scmp.ge.s32.totalorder %s38, 1
      %s40 = scalar_select %p39, 0, %s38
      %s41 = sadd.s32 1, %s32
      %s42 = scalar_select %p39, %s41, %s32
      %p43 = scmp.ge.s32.totalorder %s42, 2
      %s44 = scalar_select %p43, 0, %s42
      %s46 = sadd.s32 %s45, 1
      %p49 = scmp.eq.s32.totalorder %s25, 1
      %p50 = scmp.ne.s32.totalorder %s45, %s47
      %p51 = scmp.eq.s32.totalorder %s25, 0
      %p52 = por %p50, %p51
      %p53 = scmp.ne.s32.totalorder %s45, %s47
      %p54 = scmp.eq.s32.totalorder %s30, 1
      %p55 = por %p53, %p54
      %p56 = scmp.ne.s32.totalorder %s47, %s48
      %p57 = scmp.eq.s32.totalorder %s30, 0
      %p58 = por %p56, %p57
      %p59 = scmp.ne.s32.totalorder %s47, %s48
      %p60 = scmp.eq.s32.totalorder %s31, 1
      %p61 = por %p59, %p60
      %p63 = scmp.ne.s32.totalorder %s48, %s62
      %p64 = scmp.eq.s32.totalorder %s31, 0
      %p65 = por %p63, %p64
      %s66 = ssub.s32 %s32, %s44
      %s67 = ssub.s32 %s33, %s40
      %s68 = sor.u32 %s66, %s67
      %p69 = scmp.eq.s32.totalorder %s68, 0
      %s71 = sadd.s32 %s70, 1
      %s72 = scalar_select %p69, %s70, %s71
      %p75 = pneg %p69
      %p76 = scmp.eq.s32.totalorder %s25, 1
      %p77 = por %p75, %p76
      %p78 = scmp.ne.s32.totalorder %s70, %s73
      %p79 = scmp.eq.s32.totalorder %s25, 0
      %p80 = por %p78, %p79
      %p81 = scmp.ne.s32.totalorder %s70, %s73
      %p82 = scmp.eq.s32.totalorder %s30, 1
      %p83 = por %p81, %p82
      %p84 = scmp.ne.s32.totalorder %s73, %s74
      %p85 = scmp.eq.s32.totalorder %s30, 0
      %p86 = por %p84, %p85
      %p87 = scmp.ne.s32.totalorder %s73, %s74
      %p88 = scmp.eq.s32.totalorder %s31, 1
      %p89 = por %p87, %p88
      %p91 = scmp.ne.s32.totalorder %s74, %s90
      %p92 = scmp.eq.s32.totalorder %s31, 0
      %p93 = por %p91, %p92
      %s94 = ssub.s32 %s32, %s44
      %s95 = ssub.s32 %s33, %s40
      %s96 = sor.u32 %s94, %s95
      %p97 = scmp.eq.s32.totalorder %s96, 0
      %s99 = sadd.s32 %s98, 1
      %s100 = scalar_select %p97, %s98, %s99
      %p103 = pneg %p97
      %p104 = scmp.eq.s32.totalorder %s25, 1
      %p105 = por %p103, %p104
      %p106 = scmp.ne.s32.totalorder %s98, %s101
      %p107 = scmp.eq.s32.totalorder %s25, 0
      %p108 = por %p106, %p107
      %p109 = scmp.ne.s32.totalorder %s98, %s101
      %p110 = scmp.eq.s32.totalorder %s30, 1
      %p111 = por %p109, %p110
      %p112 = scmp.ne.s32.totalorder %s101, %s102
      %p113 = scmp.eq.s32.totalorder %s30, 0
      %p114 = por %p112, %p113
      %p115 = scmp.ne.s32.totalorder %s101, %s102
      %p116 = scmp.eq.s32.totalorder %s31, 1
      %p117 = por %p115, %p116
      %p119 = scmp.ne.s32.totalorder %s102, %s118
      %p120 = scmp.eq.s32.totalorder %s31, 0
      %p121 = por %p119, %p120
      %s122 = ssub.s32 %s32, %s44
      %s123 = ssub.s32 %s33, %s40
      %s124 = sor.u32 %s122, %s123
      %p125 = scmp.eq.s32.totalorder %s124, 0
      %s127 = sadd.s32 %s126, 1
      %s128 = scalar_select %p125, %s126, %s127
      %p131 = pneg %p125
      %p132 = scmp.eq.s32.totalorder %s25, 1
      %p133 = por %p131, %p132
      %p134 = scmp.ne.s32.totalorder %s126, %s129
      %p135 = scmp.eq.s32.totalorder %s25, 0
      %p136 = por %p134, %p135
      %p137 = scmp.ne.s32.totalorder %s126, %s129
      %p138 = scmp.eq.s32.totalorder %s30, 1
      %p139 = por %p137, %p138
      %p140 = scmp.ne.s32.totalorder %s129, %s130
      %p141 = scmp.eq.s32.totalorder %s30, 0
      %p142 = por %p140, %p141
      %p143 = scmp.ne.s32.totalorder %s129, %s130
      %p144 = scmp.eq.s32.totalorder %s31, 1
      %p145 = por %p143, %p144
      %p147 = scmp.ne.s32.totalorder %s130, %s146
      %p148 = scmp.eq.s32.totalorder %s31, 0
      %p149 = por %p147, %p148
      %s150 = ssub.s32 %s32, %s44
      %s151 = ssub.s32 %s33, %s40
      %s152 = sor.u32 %s150, %s151
      %p153 = scmp.eq.s32.totalorder %s152, 0
      %s155 = sadd.s32 %s154, 1
      %s156 = scalar_select %p153, %s154, %s155
      %p159 = pneg %p153
      %p160 = scmp.eq.s32.totalorder %s25, 1
      %p161 = por %p159, %p160
      %p162 = scmp.ne.s32.totalorder %s154, %s157
      %p163 = scmp.eq.s32.totalorder %s25, 0
      %p164 = por %p162, %p163
      %p165 = scmp.ne.s32.totalorder %s154, %s157
      %p166 = scmp.eq.s32.totalorder %s30, 1
      %p167 = por %p165, %p166
      %p168 = scmp.ne.s32.totalorder %s157, %s158
      %p169 = scmp.eq.s32.totalorder %s30, 0
      %p170 = por %p168, %p169
      %p171 = scmp.ne.s32.totalorder %s157, %s158
      %p172 = scmp.eq.s32.totalorder %s31, 1
      %p173 = por %p171, %p172
      %p175 = scmp.ne.s32.totalorder %s158, %s174
      %p176 = scmp.eq.s32.totalorder %s31, 0
      %p177 = por %p175, %p176
      %s178 = ssub.s32 %s32, %s44
      %s179 = ssub.s32 %s33, %s40
      %s180 = sor.u32 %s178, %s179
      %p181 = scmp.eq.s32.totalorder %s180, 0
      %s183 = sadd.s32 %s182, 1
      %s184 = scalar_select %p181, %s182, %s183
      %p187 = pneg %p181
      %p188 = scmp.eq.s32.totalorder %s25, 1
      %p189 = por %p187, %p188
      %p190 = scmp.ne.s32.totalorder %s182, %s185
      %p191 = scmp.eq.s32.totalorder %s25, 0
      %p192 = por %p190, %p191
      %p193 = scmp.ne.s32.totalorder %s182, %s185
      %p194 = scmp.eq.s32.totalorder %s30, 1
      %p195 = por %p193, %p194
      %p196 = scmp.ne.s32.totalorder %s185, %s186
      %p197 = scmp.eq.s32.totalorder %s30, 0
      %p198 = por %p196, %p197
      %p199 = scmp.ne.s32.totalorder %s185, %s186
      %p200 = scmp.eq.s32.totalorder %s31, 1
      %p201 = por %p199, %p200
      %p203 = scmp.ne.s32.totalorder %s186, %s202
      %p204 = scmp.eq.s32.totalorder %s31, 0
      %p205 = por %p203, %p204
      %s206 = ssub.s32 %s32, %s44
      %s207 = ssub.s32 %s33, %s40
      %s208 = sor.u32 %s206, %s207
      %p209 = scmp.eq.s32.totalorder %s208, 0
      %s211 = sadd.s32 %s210, 1
      %s212 = scalar_select %p209, %s210, %s211
      %p215 = pneg %p209
      %p216 = scmp.eq.s32.totalorder %s25, 1
      %p217 = por %p215, %p216
      %p218 = scmp.ne.s32.totalorder %s210, %s213
      %p219 = scmp.eq.s32.totalorder %s25, 0
      %p220 = por %p218, %p219
      %p221 = scmp.ne.s32.totalorder %s210, %s213
      %p222 = scmp.eq.s32.totalorder %s30, 1
      %p223 = por %p221, %p222
      %p224 = scmp.ne.s32.totalorder %s213, %s214
      %p225 = scmp.eq.s32.totalorder %s30, 0
      %p226 = por %p224, %p225
      %p227 = scmp.ne.s32.totalorder %s213, %s214
      %p228 = scmp.eq.s32.totalorder %s31, 1
      %p229 = por %p227, %p228
      %p231 = scmp.ne.s32.totalorder %s214, %s230
      %p232 = scmp.eq.s32.totalorder %s31, 0
      %p233 = por %p231, %p232
      %p234 = scmp.le.s32.totalorder 1, %s25
      %p235 = scmp.lt.s32.totalorder %s25, 3
      %p236 = pnand %p234, %p235
      %p237 = pneg %p236
      // Predicated region
      $region9: #{tpu_custom_call.1} parent=5 // pred_check
        _
      $region10: #{tpu_custom_call.1} parent=5 // pred_check_branch
        %239 = sbr.rel (%p236) target = $region12
      $region11: #{tpu_custom_call.1} parent=5 // pred_region
        %s240 = ssub.s32 %s25, 1
        // Predicated region
        $region13: #{tpu_custom_call.1} parent=11 // pred_check
          %p241 = pneg %p58
        $region14: #{tpu_custom_call.1} parent=11 // pred_check_branch
          %243 = sbr.rel (%p241) target = $region16
        $region15: #{tpu_custom_call.1} parent=11 // pred_region
          %s245 = ssub.s32 32768, 32768
          %246 = vsyncadd [#allocation3], %s245
          %s247 = sshll.u32 [#allocation2], 4
          %s248 = int_to_ptr.vmem [resolvable:$true] %s247
          %253 = dma.hbm_to_vmem [thread:$0]  %s0, 32768, %s248, [#allocation3], 512, 512, 32
        $region16: #{tpu_custom_call.1} parent=11 // pred_fallthru
          _
      $region12: #{tpu_custom_call.1} parent=5 // pred_fallthru
        _
      %p254 = scmp.lt.s32.totalorder %s25, 2
      // Predicated region
      $region17: #{tpu_custom_call.1} parent=5 // pred_check
        %p255 = pneg %p254
      $region18: #{tpu_custom_call.1} parent=5 // pred_check_branch
        %257 = sbr.rel (%p255) target = $region20
      $region19: #{tpu_custom_call.1} parent=5 // pred_region
        // Predicated region
        $region21: #{tpu_custom_call.1} parent=19 // pred_check
          %p258 = pneg %p80
        $region22: #{tpu_custom_call.1} parent=19 // pred_check_branch
          %260 = sbr.rel (%p258) target = $region24
        $region23: #{tpu_custom_call.1} parent=19 // pred_region
          %s261 = sand.u32 %s25, 1
          %s262 = scalar_lea.sflag [#allocation6], %s261
          %s263 = sand.u32 %s70, 1
          %s264 = smul.addr %s263, 8
          %s265 = scalar_lea.vmem [#allocation5], %s264
          %s267 = ssub.s32 128, 128
          %268 = vsyncadd %s262, %s267
          %s269 = sadd.s32 %s33, %s32
          %s270 = smul.addr %s269, 128
          %s271 = scalar_lea.hbm %s1, %s270
          %s273 = sshll.u32 %s265, 4
          %s274 = int_to_ptr.vmem [resolvable:$true] %s273
          %276 = dma.hbm_to_vmem [thread:$0]  %s271, 128, %s274, %s262
        $region24: #{tpu_custom_call.1} parent=19 // pred_fallthru
          _
        // Predicated region
        $region25: #{tpu_custom_call.1} parent=19 // pred_check
          %p277 = pneg %p108
        $region26: #{tpu_custom_call.1} parent=19 // pred_check_branch
          %279 = sbr.rel (%p277) target = $region28
        $region27: #{tpu_custom_call.1} parent=19 // pred_region
          %s280 = sand.u32 %s25, 1
          %s281 = scalar_lea.sflag [#allocation6], %s280
          %s282 = sand.u32 %s98, 1
          %s283 = smul.addr %s282, 8
          %s284 = scalar_lea.vmem [#allocation7], %s283
          %s286 = ssub.s32 128, 128
          %287 = vsyncadd %s281, %s286
          %s288 = sadd.s32 %s33, %s32
          %s289 = smul.addr %s288, 128
          %s290 = scalar_lea.hbm %s2, %s289
          %s292 = sshll.u32 %s284, 4
          %s293 = int_to_ptr.vmem [resolvable:$true] %s292
          %295 = dma.hbm_to_vmem [thread:$0]  %s290, 128, %s293, %s281
        $region28: #{tpu_custom_call.1} parent=19 // pred_fallthru
          _
        // Predicated region
        $region29: #{tpu_custom_call.1} parent=19 // pred_check
          %p296 = pneg %p136
        $region30: #{tpu_custom_call.1} parent=19 // pred_check_branch
          %298 = sbr.rel (%p296) target = $region32
        $region31: #{tpu_custom_call.1} parent=19 // pred_region
          %s299 = sand.u32 %s25, 1
          %s300 = scalar_lea.sflag [#allocation9], %s299
          %s301 = sand.u32 %s126, 1
          %s302 = smul.addr %s301, 8
          %s303 = scalar_lea.vmem [#allocation8], %s302
          %s305 = ssub.s32 128, 128
          %306 = vsyncadd %s300, %s305
          %s307 = sadd.s32 %s33, %s32
          %s308 = smul.addr %s307, 128
          %s309 = scalar_lea.hbm %s3, %s308
          %s311 = sshll.u32 %s303, 4
          %s312 = int_to_ptr.vmem [resolvable:$true] %s311
          %314 = dma.hbm_to_vmem [thread:$0]  %s309, 128, %s312, %s300
        $region32: #{tpu_custom_call.1} parent=19 // pred_fallthru
          _
        // Predicated region
        $region33: #{tpu_custom_call.1} parent=19 // pred_check
          %p315 = pneg %p164
        $region34: #{tpu_custom_call.1} parent=19 // pred_check_branch
          %317 = sbr.rel (%p315) target = $region36
        $region35: #{tpu_custom_call.1} parent=19 // pred_region
          %s318 = sand.u32 %s25, 1
          %s319 = scalar_lea.sflag [#allocation9], %s318
          %s320 = sand.u32 %s154, 1
          %s321 = smul.addr %s320, 8
          %s322 = scalar_lea.vmem [#allocation10], %s321
          %s324 = ssub.s32 128, 128
          %325 = vsyncadd %s319, %s324
          %s326 = sadd.s32 %s33, %s32
          %s327 = smul.addr %s326, 128
          %s328 = scalar_lea.hbm %s4, %s327
          %s330 = sshll.u32 %s322, 4
          %s331 = int_to_ptr.vmem [resolvable:$true] %s330
          %333 = dma.hbm_to_vmem [thread:$0]  %s328, 128, %s331, %s319
        $region36: #{tpu_custom_call.1} parent=19 // pred_fallthru
          _
        // Predicated region
        $region37: #{tpu_custom_call.1} parent=19 // pred_check
          %p334 = pneg %p192
        $region38: #{tpu_custom_call.1} parent=19 // pred_check_branch
          %336 = sbr.rel (%p334) target = $region40
        $region39: #{tpu_custom_call.1} parent=19 // pred_region
          %s337 = sand.u32 %s182, 1
          %s338 = scalar_lea.sflag [#allocation12], %s337
          %s339 = sand.u32 %s182, 1
          %s340 = smul.addr %s339, 32
          %s341 = scalar_lea.vmem [#allocation11], %s340
          %s343 = ssub.s32 512, 512
          %344 = vsyncadd %s338, %s343
          %s345 = smul.addr %s33, 4
          %s346 = smul.addr %s32, 4
          %s347 = sadd.s32 %s345, %s346
          %s348 = smul.addr %s347, 128
          %s349 = scalar_lea.hbm %s5, %s348
          %s351 = sshll.u32 %s341, 4
          %s352 = int_to_ptr.vmem [resolvable:$true] %s351
          %354 = dma.hbm_to_vmem [thread:$0]  %s349, 512, %s352, %s338
        $region40: #{tpu_custom_call.1} parent=19 // pred_fallthru
          _
      $region20: #{tpu_custom_call.1} parent=5 // pred_fallthru
        _
      %p355 = scmp.le.s32.totalorder 1, %s25
      %p356 = scmp.lt.s32.totalorder %s25, 3
      %p357 = pnand %p355, %p356
      %p358 = pneg %p357
      // Predicated region
      $region41: #{tpu_custom_call.1} parent=5 // pred_check
        _
      $region42: #{tpu_custom_call.1} parent=5 // pred_check_branch
        %360 = sbr.rel (%p357) target = $region44
      $region43: #{tpu_custom_call.1} parent=5 // pred_region
        %s361 = ssub.s32 %s25, 1
        // Predicated region
        $region45: #{tpu_custom_call.1} parent=43 // pred_check
          %p362 = pneg %p58
        $region46: #{tpu_custom_call.1} parent=43 // pred_check_branch
          %364 = sbr.rel (%p362) target = $region48
        $region47: #{tpu_custom_call.1} parent=43 // pred_region
          %365 = dma.done [#allocation3], 32768
        $region48: #{tpu_custom_call.1} parent=43 // pred_fallthru
          _
        %s366 = sand.u32 %s30, 1
        %s367 = scalar_lea.sflag [#allocation6], %s366
        %s368 = sand.u32 %s73, 1
        %s369 = smul.addr %s368, 8
        %s370 = scalar_lea.vmem [#allocation5], %s369
        // Predicated region
        $region49: #{tpu_custom_call.1} parent=43 // pred_check
          %p371 = pneg %p86
        $region50: #{tpu_custom_call.1} parent=43 // pred_check_branch
          %373 = sbr.rel (%p371) target = $region52
        $region51: #{tpu_custom_call.1} parent=43 // pred_region
          %374 = dma.done %s367, 128
        $region52: #{tpu_custom_call.1} parent=43 // pred_fallthru
          _
        %s375 = sand.u32 %s30, 1
        %s376 = scalar_lea.sflag [#allocation6], %s375
        %s377 = sand.u32 %s101, 1
        %s378 = smul.addr %s377, 8
        %s379 = scalar_lea.vmem [#allocation7], %s378
        // Predicated region
        $region53: #{tpu_custom_call.1} parent=43 // pred_check
          %p380 = pneg %p114
        $region54: #{tpu_custom_call.1} parent=43 // pred_check_branch
          %382 = sbr.rel (%p380) target = $region56
        $region55: #{tpu_custom_call.1} parent=43 // pred_region
          %383 = dma.done %s376, 128
        $region56: #{tpu_custom_call.1} parent=43 // pred_fallthru
          _
        %s384 = sand.u32 %s30, 1
        %s385 = scalar_lea.sflag [#allocation9], %s384
        %s386 = sand.u32 %s129, 1
        %s387 = smul.addr %s386, 8
        %s388 = scalar_lea.vmem [#allocation8], %s387
        // Predicated region
        $region57: #{tpu_custom_call.1} parent=43 // pred_check
          %p389 = pneg %p142
        $region58: #{tpu_custom_call.1} parent=43 // pred_check_branch
          %391 = sbr.rel (%p389) target = $region60
        $region59: #{tpu_custom_call.1} parent=43 // pred_region
          %392 = dma.done %s385, 128
        $region60: #{tpu_custom_call.1} parent=43 // pred_fallthru
          _
        %s393 = sand.u32 %s30, 1
        %s394 = scalar_lea.sflag [#allocation9], %s393
        %s395 = sand.u32 %s157, 1
        %s396 = smul.addr %s395, 8
        %s397 = scalar_lea.vmem [#allocation10], %s396
        // Predicated region
        $region61: #{tpu_custom_call.1} parent=43 // pred_check
          %p398 = pneg %p170
        $region62: #{tpu_custom_call.1} parent=43 // pred_check_branch
          %400 = sbr.rel (%p398) target = $region64
        $region63: #{tpu_custom_call.1} parent=43 // pred_region
          %401 = dma.done %s394, 128
        $region64: #{tpu_custom_call.1} parent=43 // pred_fallthru
          _
        %s402 = sand.u32 %s185, 1
        %s403 = scalar_lea.sflag [#allocation12], %s402
        %s404 = sand.u32 %s185, 1
        %s405 = smul.addr %s404, 32
        %s406 = scalar_lea.vmem [#allocation11], %s405
        // Predicated region
        $region65: #{tpu_custom_call.1} parent=43 // pred_check
          %p407 = pneg %p198
        $region66: #{tpu_custom_call.1} parent=43 // pred_check_branch
          %409 = sbr.rel (%p407) target = $region68
        $region67: #{tpu_custom_call.1} parent=43 // pred_region
          %410 = dma.done %s403, 512
        $region68: #{tpu_custom_call.1} parent=43 // pred_fallthru
          _
        %p411 = pneg %p58
        %p412 = pneg %p55
        %s413 = sand.u32 %s30, 1
        %s414 = scalar_lea.sflag [#allocation6], %s413
        %s415 = sand.u32 %s73, 1
        %s416 = smul.addr %s415, 8
        %s417 = scalar_lea.vmem [#allocation5], %s416
        %p418 = pneg %p86
        %p419 = pneg %p83
        %s420 = sand.u32 %s30, 1
        %s421 = scalar_lea.sflag [#allocation6], %s420
        %s422 = sand.u32 %s101, 1
        %s423 = smul.addr %s422, 8
        %s424 = scalar_lea.vmem [#allocation7], %s423
        %p425 = pneg %p114
        %p426 = pneg %p111
        %s427 = sand.u32 %s30, 1
        %s428 = scalar_lea.sflag [#allocation9], %s427
        %s429 = sand.u32 %s129, 1
        %s430 = smul.addr %s429, 8
        %s431 = scalar_lea.vmem [#allocation8], %s430
        %p432 = pneg %p142
        %p433 = pneg %p139
        %s434 = sand.u32 %s30, 1
        %s435 = scalar_lea.sflag [#allocation9], %s434
        %s436 = sand.u32 %s157, 1
        %s437 = smul.addr %s436, 8
        %s438 = scalar_lea.vmem [#allocation10], %s437
        %p439 = pneg %p170
        %p440 = pneg %p167
        %s441 = sand.u32 %s185, 1
        %s442 = scalar_lea.sflag [#allocation12], %s441
        %s443 = sand.u32 %s185, 1
        %s444 = smul.addr %s443, 32
        %s445 = scalar_lea.vmem [#allocation11], %s444
        %p446 = pneg %p198
        %p447 = pneg %p195
        %p448 = pneg %p226
        %p449 = pneg %p223
        %s450 = sand.u32 %s213, 1
        %s451 = scalar_lea.sflag [#allocation4], %s450
        %s452 = sand.u32 %s213, 1
        %s453 = smul.addr %s452, 160
        %s454 = scalar_lea.vmem [#allocation13], %s453
        %v455 = vld [vmem:[%s370] sm:$0xff]
        %v456 = vld [vmem:[#allocation2] sm:$0xff]
        %v457 = vld [vmem:[#allocation2 + $0x8] sm:$0xff]
        %v458 = vld [vmem:[#allocation2 + $0x10] sm:$0xff]
        %v459 = vld [vmem:[#allocation2 + $0x18] sm:$0xff]
        %v460 = vld [vmem:[#allocation2 + $0x20] sm:$0xff]
        %v461 = vld [vmem:[#allocation2 + $0x28] sm:$0xff]
        %v462 = vld [vmem:[#allocation2 + $0x30] sm:$0xff]
        %v463 = vld [vmem:[#allocation2 + $0x38] sm:$0xff]
        %v464 = vld [vmem:[#allocation2 + $0x40] sm:$0xff]
        %v465 = vld [vmem:[#allocation2 + $0x48] sm:$0xff]
        %v466 = vld [vmem:[#allocation2 + $0x50] sm:$0xff]
        %v467 = vld [vmem:[#allocation2 + $0x58] sm:$0xff]
        %v468 = vld [vmem:[#allocation2 + $0x60] sm:$0xff]
        %v469 = vld [vmem:[#allocation2 + $0x68] sm:$0xff]
        %v470 = vld [vmem:[#allocation2 + $0x70] sm:$0xff]
        %v471 = vld [vmem:[#allocation2 + $0x78] sm:$0xff]
        %v472 = vld [vmem:[#allocation2 + $0x80] sm:$0xff]
        %v473 = vld [vmem:[#allocation2 + $0x88] sm:$0xff]
        %v474 = vld [vmem:[#allocation2 + $0x90] sm:$0xff]
        %v475 = vld [vmem:[#allocation2 + $0x98] sm:$0xff]
        %v476 = vld [vmem:[#allocation2 + $0xa0] sm:$0xff]
        %v477 = vld [vmem:[#allocation2 + $0xa8] sm:$0xff]
        %v478 = vld [vmem:[#allocation2 + $0xb0] sm:$0xff]
        %v479 = vld [vmem:[#allocation2 + $0xb8] sm:$0xff]
        %v480 = vld [vmem:[#allocation2 + $0xc0] sm:$0xff]
        %v481 = vld [vmem:[#allocation2 + $0xc8] sm:$0xff]
        %v482 = vld [vmem:[#allocation2 + $0xd0] sm:$0xff]
        %v483 = vld [vmem:[#allocation2 + $0xd8] sm:$0xff]
        %v484 = vld [vmem:[#allocation2 + $0xe0] sm:$0xff]
        %v485 = vld [vmem:[#allocation2 + $0xe8] sm:$0xff]
        %v486 = vld [vmem:[#allocation2 + $0xf0] sm:$0xff]
        %v487 = vld [vmem:[#allocation2 + $0xf8] sm:$0xff]
        %v488 = vld [vmem:[#allocation2 + $0x100] sm:$0xff]
        %v489 = vld [vmem:[#allocation2 + $0x108] sm:$0xff]
        %v490 = vld [vmem:[#allocation2 + $0x110] sm:$0xff]
        %v491 = vld [vmem:[#allocation2 + $0x118] sm:$0xff]
        %v492 = vld [vmem:[#allocation2 + $0x120] sm:$0xff]
        %v493 = vld [vmem:[#allocation2 + $0x128] sm:$0xff]
        %v494 = vld [vmem:[#allocation2 + $0x130] sm:$0xff]
        %v495 = vld [vmem:[#allocation2 + $0x138] sm:$0xff]
        %v496 = vld [vmem:[#allocation2 + $0x140] sm:$0xff]
        %v497 = vld [vmem:[#allocation2 + $0x148] sm:$0xff]
        %v498 = vld [vmem:[#allocation2 + $0x150] sm:$0xff]
        %v499 = vld [vmem:[#allocation2 + $0x158] sm:$0xff]
        %v500 = vld [vmem:[#allocation2 + $0x160] sm:$0xff]
        %v501 = vld [vmem:[#allocation2 + $0x168] sm:$0xff]
        %v502 = vld [vmem:[#allocation2 + $0x170] sm:$0xff]
        %v503 = vld [vmem:[#allocation2 + $0x178] sm:$0xff]
        %v504 = vld [vmem:[#allocation2 + $0x180] sm:$0xff]
        %v505 = vld [vmem:[#allocation2 + $0x188] sm:$0xff]
        %v506 = vld [vmem:[#allocation2 + $0x190] sm:$0xff]
        %v507 = vld [vmem:[#allocation2 + $0x198] sm:$0xff]
        %v508 = vld [vmem:[#allocation2 + $0x1a0] sm:$0xff]
        %v509 = vld [vmem:[#allocation2 + $0x1a8] sm:$0xff]
        %v510 = vld [vmem:[#allocation2 + $0x1b0] sm:$0xff]
        %v511 = vld [vmem:[#allocation2 + $0x1b8] sm:$0xff]
        %v512 = vld [vmem:[#allocation2 + $0x1c0] sm:$0xff]
        %v513 = vld [vmem:[#allocation2 + $0x1c8] sm:$0xff]
        %v514 = vld [vmem:[#allocation2 + $0x1d0] sm:$0xff]
        %v515 = vld [vmem:[#allocation2 + $0x1d8] sm:$0xff]
        %v516 = vld [vmem:[#allocation2 + $0x1e0] sm:$0xff]
        %v517 = vld [vmem:[#allocation2 + $0x1e8] sm:$0xff]
        %v518 = vld [vmem:[#allocation2 + $0x1f0] sm:$0xff]
        %v519 = vld [vmem:[#allocation2 + $0x1f8] sm:$0xff]
        %v520 = vand.u32 %v457, 4294901760
        %521 = vmatprep.subr.mxu0 %v520
        %v522 = vand.u32 %v456, 4294901760
        %523 = vmatpush1.msra.mxu0 %v522
        %v524 = vand.u32 %v461, 4294901760
        %525 = vmatprep.subr.mxu0 %v524
        %v526 = vand.u32 %v460, 4294901760
        %527 = vmatpush1.msra.mxu0 %v526
        %v528 = vand.u32 %v465, 4294901760
        %529 = vmatprep.subr.mxu0 %v528
        %v530 = vand.u32 %v464, 4294901760
        %531 = vmatpush1.msra.mxu0 %v530
        %v532 = vand.u32 %v469, 4294901760
        %533 = vmatprep.subr.mxu0 %v532
        %v534 = vand.u32 %v468, 4294901760
        %535 = vmatpush1.msra.mxu0 %v534
        %v536 = vand.u32 %v473, 4294901760
        %537 = vmatprep.subr.mxu0 %v536
        %v538 = vand.u32 %v472, 4294901760
        %539 = vmatpush1.msra.mxu0 %v538
        %v540 = vand.u32 %v477, 4294901760
        %541 = vmatprep.subr.mxu0 %v540
        %v542 = vand.u32 %v476, 4294901760
        %543 = vmatpush1.msra.mxu0 %v542
        %v544 = vand.u32 %v481, 4294901760
        %545 = vmatprep.subr.mxu0 %v544
        %v546 = vand.u32 %v480, 4294901760
        %547 = vmatpush1.msra.mxu0 %v546
        %v548 = vand.u32 %v485, 4294901760
        %549 = vmatprep.subr.mxu0 %v548
        %v550 = vand.u32 %v484, 4294901760
        %551 = vmatpush1.msra.mxu0 %v550
        %v552 = vand.u32 %v489, 4294901760
        %553 = vmatprep.subr.mxu0 %v552
        %v554 = vand.u32 %v488, 4294901760
        %555 = vmatpush1.msra.mxu0 %v554
        %v556 = vand.u32 %v493, 4294901760
        %557 = vmatprep.subr.mxu0 %v556
        %v558 = vand.u32 %v492, 4294901760
        %559 = vmatpush1.msra.mxu0 %v558
        %v560 = vand.u32 %v497, 4294901760
        %561 = vmatprep.subr.mxu0 %v560
        %v562 = vand.u32 %v496, 4294901760
        %563 = vmatpush1.msra.mxu0 %v562
        %v564 = vand.u32 %v501, 4294901760
        %565 = vmatprep.subr.mxu0 %v564
        %v566 = vand.u32 %v500, 4294901760
        %567 = vmatpush1.msra.mxu0 %v566
        %v568 = vand.u32 %v505, 4294901760
        %569 = vmatprep.subr.mxu0 %v568
        %v570 = vand.u32 %v504, 4294901760
        %571 = vmatpush1.msra.mxu0 %v570
        %v572 = vand.u32 %v509, 4294901760
        %573 = vmatprep.subr.mxu0 %v572
        %v574 = vand.u32 %v508, 4294901760
        %575 = vmatpush1.msra.mxu0 %v574
        %v576 = vand.u32 %v513, 4294901760
        %577 = vmatprep.subr.mxu0 %v576
        %v578 = vand.u32 %v512, 4294901760
        %579 = vmatpush1.msra.mxu0 %v578
        %v580 = vand.u32 %v517, 4294901760
        %581 = vmatprep.subr.mxu0 %v580
        %v582 = vand.u32 %v516, 4294901760
        %583 = vmatpush1.msra.mxu0 %v582
        %584 = vmatprep.subr.mxu0 0.0
        %585 = vmatpush1.msra.mxu0 0.0
        %586 = vmatprep.subr.mxu0 0.0
        %587 = vmatpush1.msra.mxu0 0.0
        %588 = vmatprep.subr.mxu0 0.0
        %589 = vmatpush1.msra.mxu0 0.0
        %590 = vmatprep.subr.mxu0 0.0
        %591 = vmatpush1.msra.mxu0 0.0
        %592 = vmatprep.subr.mxu0 0.0
        %593 = vmatpush1.msra.mxu0 0.0
        %594 = vmatprep.subr.mxu0 0.0
        %595 = vmatpush1.msra.mxu0 0.0
        %596 = vmatprep.subr.mxu0 0.0
        %597 = vmatpush1.msra.mxu0 0.0
        %598 = vmatprep.subr.mxu0 0.0
        %599 = vmatpush1.msra.mxu0 0.0
        %600 = vmatprep.subr.mxu0 0.0
        %601 = vmatpush1.msra.mxu0 0.0
        %602 = vmatprep.subr.mxu0 0.0
        %603 = vmatpush1.msra.mxu0 0.0
        %604 = vmatprep.subr.mxu0 0.0
        %605 = vmatpush1.msra.mxu0 0.0
        %606 = vmatprep.subr.mxu0 0.0
        %607 = vmatpush1.msra.mxu0 0.0
        %608 = vmatprep.subr.mxu0 0.0
        %609 = vmatpush1.msra.mxu0 0.0
        %610 = vmatprep.subr.mxu0 0.0
        %611 = vmatpush1.msra.mxu0 0.0
        %612 = vmatprep.subr.mxu0 0.0
        %613 = vmatpush1.msra.mxu0 0.0
        %614 = vmatprep.subr.mxu0 0.0
        %615 = vmatpush1.msra.mxu0 0.0
        %616 = vmatprep.mubr.f32.mxu0 0.0
        %v617 = vand.u32 %v455, 4294901760
        %v618 = vsub.f32 %v455, %v617
        %v619 = vand.u32 %v618, 4294901760
        %v620 = vsub.f32 %v618, %v619
        %v621 = vand.u32 %v620, 4294901760
        %622 = vmatmul.mubr.f32.gmra.mrb[0].mxu0 %v621
        %v623 = vpop.f32.mrb[0].mxu0
        %v624 = vadd.f32 0.0, %v623
        %v625 = vpop.f32.mrb[0].mxu0
        %v626 = vadd.f32 0.0, %v625
        %627 = vdwg.mxu0
        %v628 = vand.u32 %v457, 4294901760
        %v629 = vsub.f32 %v457, %v628
        %v630 = vand.u32 %v629, 4294901760
        %v631 = vsub.f32 %v629, %v630
        %v632 = vand.u32 %v631, 4294901760
        %633 = vmatprep.subr.mxu0 %v632
        %v634 = vand.u32 %v456, 4294901760
        %v635 = vsub.f32 %v456, %v634
        %v636 = vand.u32 %v635, 4294901760
        %v637 = vsub.f32 %v635, %v636
        %v638 = vand.u32 %v637, 4294901760
        %639 = vmatpush1.msra.mxu0 %v638
        %v640 = vand.u32 %v461, 4294901760
        %v641 = vsub.f32 %v461, %v640
        %v642 = vand.u32 %v641, 4294901760
        %v643 = vsub.f32 %v641, %v642
        %v644 = vand.u32 %v643, 4294901760
        %645 = vmatprep.subr.mxu0 %v644
        %v646 = vand.u32 %v460, 4294901760
        %v647 = vsub.f32 %v460, %v646
        %v648 = vand.u32 %v647, 4294901760
        %v649 = vsub.f32 %v647, %v648
        %v650 = vand.u32 %v649, 4294901760
        %651 = vmatpush1.msra.mxu0 %v650
        %v652 = vand.u32 %v465, 4294901760
        %v653 = vsub.f32 %v465, %v652
        %v654 = vand.u32 %v653, 4294901760
        %v655 = vsub.f32 %v653, %v654
        %v656 = vand.u32 %v655, 4294901760
        %657 = vmatprep.subr.mxu0 %v656
        %v658 = vand.u32 %v464, 4294901760
        %v659 = vsub.f32 %v464, %v658
        %v660 = vand.u32 %v659, 4294901760
        %v661 = vsub.f32 %v659, %v660
        %v662 = vand.u32 %v661, 4294901760
        %663 = vmatpush1.msra.mxu0 %v662
        %v664 = vand.u32 %v469, 4294901760
        %v665 = vsub.f32 %v469, %v664
        %v666 = vand.u32 %v665, 4294901760
        %v667 = vsub.f32 %v665, %v666
        %v668 = vand.u32 %v667, 4294901760
        %669 = vmatprep.subr.mxu0 %v668
        %v670 = vand.u32 %v468, 4294901760
        %v671 = vsub.f32 %v468, %v670
        %v672 = vand.u32 %v671, 4294901760
        %v673 = vsub.f32 %v671, %v672
        %v674 = vand.u32 %v673, 4294901760
        %675 = vmatpush1.msra.mxu0 %v674
        %v676 = vand.u32 %v473, 4294901760
        %v677 = vsub.f32 %v473, %v676
        %v678 = vand.u32 %v677, 4294901760
        %v679 = vsub.f32 %v677, %v678
        %v680 = vand.u32 %v679, 4294901760
        %681 = vmatprep.subr.mxu0 %v680
        %v682 = vand.u32 %v472, 4294901760
        %v683 = vsub.f32 %v472, %v682
        %v684 = vand.u32 %v683, 4294901760
        %v685 = vsub.f32 %v683, %v684
        %v686 = vand.u32 %v685, 4294901760
        %687 = vmatpush1.msra.mxu0 %v686
        %v688 = vand.u32 %v477, 4294901760
        %v689 = vsub.f32 %v477, %v688
        %v690 = vand.u32 %v689, 4294901760
        %v691 = vsub.f32 %v689, %v690
        %v692 = vand.u32 %v691, 4294901760
        %693 = vmatprep.subr.mxu0 %v692
        %v694 = vand.u32 %v476, 4294901760
        %v695 = vsub.f32 %v476, %v694
        %v696 = vand.u32 %v695, 4294901760
        %v697 = vsub.f32 %v695, %v696
        %v698 = vand.u32 %v697, 4294901760
        %699 = vmatpush1.msra.mxu0 %v698
        %v700 = vand.u32 %v481, 4294901760
        %v701 = vsub.f32 %v481, %v700
        %v702 = vand.u32 %v701, 4294901760
        %v703 = vsub.f32 %v701, %v702
        %v704 = vand.u32 %v703, 4294901760
        %705 = vmatprep.subr.mxu0 %v704
        %v706 = vand.u32 %v480, 4294901760
        %v707 = vsub.f32 %v480, %v706
        %v708 = vand.u32 %v707, 4294901760
        %v709 = vsub.f32 %v707, %v708
        %v710 = vand.u32 %v709, 4294901760
        %711 = vmatpush1.msra.mxu0 %v710
        %v712 = vand.u32 %v485, 4294901760
        %v713 = vsub.f32 %v485, %v712
        %v714 = vand.u32 %v713, 4294901760
        %v715 = vsub.f32 %v713, %v714
        %v716 = vand.u32 %v715, 4294901760
        %717 = vmatprep.subr.mxu0 %v716
        %v718 = vand.u32 %v484, 4294901760
        %v719 = vsub.f32 %v484, %v718
        %v720 = vand.u32 %v719, 4294901760
        %v721 = vsub.f32 %v719, %v720
        %v722 = vand.u32 %v721, 4294901760
        %723 = vmatpush1.msra.mxu0 %v722
        %v724 = vand.u32 %v489, 4294901760
        %v725 = vsub.f32 %v489, %v724
        %v726 = vand.u32 %v725, 4294901760
        %v727 = vsub.f32 %v725, %v726
        %v728 = vand.u32 %v727, 4294901760
        %729 = vmatprep.subr.mxu0 %v728
        %v730 = vand.u32 %v488, 4294901760
        %v731 = vsub.f32 %v488, %v730
        %v732 = vand.u32 %v731, 4294901760
        %v733 = vsub.f32 %v731, %v732
        %v734 = vand.u32 %v733, 4294901760
        %735 = vmatpush1.msra.mxu0 %v734
        %v736 = vand.u32 %v493, 4294901760
        %v737 = vsub.f32 %v493, %v736
        %v738 = vand.u32 %v737, 4294901760
        %v739 = vsub.f32 %v737, %v738
        %v740 = vand.u32 %v739, 4294901760
        %741 = vmatprep.subr.mxu0 %v740
        %v742 = vand.u32 %v492, 4294901760
        %v743 = vsub.f32 %v492, %v742
        %v744 = vand.u32 %v743, 4294901760
        %v745 = vsub.f32 %v743, %v744
        %v746 = vand.u32 %v745, 4294901760
        %747 = vmatpush1.msra.mxu0 %v746
        %v748 = vand.u32 %v497, 4294901760
        %v749 = vsub.f32 %v497, %v748
        %v750 = vand.u32 %v749, 4294901760
        %v751 = vsub.f32 %v749, %v750
        %v752 = vand.u32 %v751, 4294901760
        %753 = vmatprep.subr.mxu0 %v752
        %v754 = vand.u32 %v496, 4294901760
        %v755 = vsub.f32 %v496, %v754
        %v756 = vand.u32 %v755, 4294901760
        %v757 = vsub.f32 %v755, %v756
        %v758 = vand.u32 %v757, 4294901760
        %759 = vmatpush1.msra.mxu0 %v758
        %v760 = vand.u32 %v501, 4294901760
        %v761 = vsub.f32 %v501, %v760
        %v762 = vand.u32 %v761, 4294901760
        %v763 = vsub.f32 %v761, %v762
        %v764 = vand.u32 %v763, 4294901760
        %765 = vmatprep.subr.mxu0 %v764
        %v766 = vand.u32 %v500, 4294901760
        %v767 = vsub.f32 %v500, %v766
        %v768 = vand.u32 %v767, 4294901760
        %v769 = vsub.f32 %v767, %v768
        %v770 = vand.u32 %v769, 4294901760
        %771 = vmatpush1.msra.mxu0 %v770
        %v772 = vand.u32 %v505, 4294901760
        %v773 = vsub.f32 %v505, %v772
        %v774 = vand.u32 %v773, 4294901760
        %v775 = vsub.f32 %v773, %v774
        %v776 = vand.u32 %v775, 4294901760
        %777 = vmatprep.subr.mxu0 %v776
        %v778 = vand.u32 %v504, 4294901760
        %v779 = vsub.f32 %v504, %v778
        %v780 = vand.u32 %v779, 4294901760
        %v781 = vsub.f32 %v779, %v780
        %v782 = vand.u32 %v781, 4294901760
        %783 = vmatpush1.msra.mxu0 %v782
        %v784 = vand.u32 %v509, 4294901760
        %v785 = vsub.f32 %v509, %v784
        %v786 = vand.u32 %v785, 4294901760
        %v787 = vsub.f32 %v785, %v786
        %v788 = vand.u32 %v787, 4294901760
        %789 = vmatprep.subr.mxu0 %v788
        %v790 = vand.u32 %v508, 4294901760
        %v791 = vsub.f32 %v508, %v790
        %v792 = vand.u32 %v791, 4294901760
        %v793 = vsub.f32 %v791, %v792
        %v794 = vand.u32 %v793, 4294901760
        %795 = vmatpush1.msra.mxu0 %v794
        %v796 = vand.u32 %v513, 4294901760
        %v797 = vsub.f32 %v513, %v796
        %v798 = vand.u32 %v797, 4294901760
        %v799 = vsub.f32 %v797, %v798
        %v800 = vand.u32 %v799, 4294901760
        %801 = vmatprep.subr.mxu0 %v800
        %v802 = vand.u32 %v512, 4294901760
        %v803 = vsub.f32 %v512, %v802
        %v804 = vand.u32 %v803, 4294901760
        %v805 = vsub.f32 %v803, %v804
        %v806 = vand.u32 %v805, 4294901760
        %807 = vmatpush1.msra.mxu0 %v806
        %v808 = vand.u32 %v517, 4294901760
        %v809 = vsub.f32 %v517, %v808
        %v810 = vand.u32 %v809, 4294901760
        %v811 = vsub.f32 %v809, %v810
        %v812 = vand.u32 %v811, 4294901760
        %813 = vmatprep.subr.mxu0 %v812
        %v814 = vand.u32 %v516, 4294901760
        %v815 = vsub.f32 %v516, %v814
        %v816 = vand.u32 %v815, 4294901760
        %v817 = vsub.f32 %v815, %v816
        %v818 = vand.u32 %v817, 4294901760
        %819 = vmatpush1.msra.mxu0 %v818
        %820 = vmatprep.subr.mxu0 0.0
        %821 = vmatpush1.msra.mxu0 0.0
        %822 = vmatprep.subr.mxu0 0.0
        %823 = vmatpush1.msra.mxu0 0.0
        %824 = vmatprep.subr.mxu0 0.0
        %825 = vmatpush1.msra.mxu0 0.0
        %826 = vmatprep.subr.mxu0 0.0
        %827 = vmatpush1.msra.mxu0 0.0
        %828 = vmatprep.subr.mxu0 0.0
        %829 = vmatpush1.msra.mxu0 0.0
        %830 = vmatprep.subr.mxu0 0.0
        %831 = vmatpush1.msra.mxu0 0.0
        %832 = vmatprep.subr.mxu0 0.0
        %833 = vmatpush1.msra.mxu0 0.0
        %834 = vmatprep.subr.mxu0 0.0
        %835 = vmatpush1.msra.mxu0 0.0
        %836 = vmatprep.subr.mxu0 0.0
        %837 = vmatpush1.msra.mxu0 0.0
        %838 = vmatprep.subr.mxu0 0.0
        %839 = vmatpush1.msra.mxu0 0.0
        %840 = vmatprep.subr.mxu0 0.0
        %841 = vmatpush1.msra.mxu0 0.0
        %842 = vmatprep.subr.mxu0 0.0
        %843 = vmatpush1.msra.mxu0 0.0
        %844 = vmatprep.subr.mxu0 0.0
        %845 = vmatpush1.msra.mxu0 0.0
        %846 = vmatprep.subr.mxu0 0.0
        %847 = vmatpush1.msra.mxu0 0.0
        %848 = vmatprep.subr.mxu0 0.0
        %849 = vmatpush1.msra.mxu0 0.0
        %850 = vmatprep.subr.mxu0 0.0
        %851 = vmatpush1.msra.mxu0 0.0
        %852 = vmatprep.mubr.f32.mxu0 0.0
        %v853 = vand.u32 %v455, 4294901760
        %854 = vmatmul.mubr.f32.gmra.mrb[0].mxu0 %v853
        %v855 = vpop.f32.mrb[0].mxu0
        %v856 = vadd.f32 %v624, %v855
        %v857 = vpop.f32.mrb[0].mxu0
        %v858 = vadd.f32 %v626, %v857
        %859 = vdwg.mxu0
        %v860 = vand.u32 %v457, 4294901760
        %v861 = vsub.f32 %v457, %v860
        %862 = vmatprep.subr.mxu0 %v861
        %v863 = vand.u32 %v456, 4294901760
        %v864 = vsub.f32 %v456, %v863
        %865 = vmatpush1.msra.mxu0 %v864
        %v866 = vand.u32 %v461, 4294901760
        %v867 = vsub.f32 %v461, %v866
        %868 = vmatprep.subr.mxu0 %v867
        %v869 = vand.u32 %v460, 4294901760
        %v870 = vsub.f32 %v460, %v869
        %871 = vmatpush1.msra.mxu0 %v870
        %v872 = vand.u32 %v465, 4294901760
        %v873 = vsub.f32 %v465, %v872
        %874 = vmatprep.subr.mxu0 %v873
        %v875 = vand.u32 %v464, 4294901760
        %v876 = vsub.f32 %v464, %v875
        %877 = vmatpush1.msra.mxu0 %v876
        %v878 = vand.u32 %v469, 4294901760
        %v879 = vsub.f32 %v469, %v878
        %880 = vmatprep.subr.mxu0 %v879
        %v881 = vand.u32 %v468, 4294901760
        %v882 = vsub.f32 %v468, %v881
        %883 = vmatpush1.msra.mxu0 %v882
        %v884 = vand.u32 %v473, 4294901760
        %v885 = vsub.f32 %v473, %v884
        %886 = vmatprep.subr.mxu0 %v885
        %v887 = vand.u32 %v472, 4294901760
        %v888 = vsub.f32 %v472, %v887
        %889 = vmatpush1.msra.mxu0 %v888
        %v890 = vand.u32 %v477, 4294901760
        %v891 = vsub.f32 %v477, %v890
        %892 = vmatprep.subr.mxu0 %v891
        %v893 = vand.u32 %v476, 4294901760
        %v894 = vsub.f32 %v476, %v893
        %895 = vmatpush1.msra.mxu0 %v894
        %v896 = vand.u32 %v481, 4294901760
        %v897 = vsub.f32 %v481, %v896
        %898 = vmatprep.subr.mxu0 %v897
        %v899 = vand.u32 %v480, 4294901760
        %v900 = vsub.f32 %v480, %v899
        %901 = vmatpush1.msra.mxu0 %v900
        %v902 = vand.u32 %v485, 4294901760
        %v903 = vsub.f32 %v485, %v902
        %904 = vmatprep.subr.mxu0 %v903
        %v905 = vand.u32 %v484, 4294901760
        %v906 = vsub.f32 %v484, %v905
        %907 = vmatpush1.msra.mxu0 %v906
        %v908 = vand.u32 %v489, 4294901760
        %v909 = vsub.f32 %v489, %v908
        %910 = vmatprep.subr.mxu0 %v909
        %v911 = vand.u32 %v488, 4294901760
        %v912 = vsub.f32 %v488, %v911
        %913 = vmatpush1.msra.mxu0 %v912
        %v914 = vand.u32 %v493, 4294901760
        %v915 = vsub.f32 %v493, %v914
        %916 = vmatprep.subr.mxu0 %v915
        %v917 = vand.u32 %v492, 4294901760
        %v918 = vsub.f32 %v492, %v917
        %919 = vmatpush1.msra.mxu0 %v918
        %v920 = vand.u32 %v497, 4294901760
        %v921 = vsub.f32 %v497, %v920
        %922 = vmatprep.subr.mxu0 %v921
        %v923 = vand.u32 %v496, 4294901760
        %v924 = vsub.f32 %v496, %v923
        %925 = vmatpush1.msra.mxu0 %v924
        %v926 = vand.u32 %v501, 4294901760
        %v927 = vsub.f32 %v501, %v926
        %928 = vmatprep.subr.mxu0 %v927
        %v929 = vand.u32 %v500, 4294901760
        %v930 = vsub.f32 %v500, %v929
        %931 = vmatpush1.msra.mxu0 %v930
        %v932 = vand.u32 %v505, 4294901760
        %v933 = vsub.f32 %v505, %v932
        %934 = vmatprep.subr.mxu0 %v933
        %v935 = vand.u32 %v504, 4294901760
        %v936 = vsub.f32 %v504, %v935
        %937 = vmatpush1.msra.mxu0 %v936
        %v938 = vand.u32 %v509, 4294901760
        %v939 = vsub.f32 %v509, %v938
        %940 = vmatprep.subr.mxu0 %v939
        %v941 = vand.u32 %v508, 4294901760
        %v942 = vsub.f32 %v508, %v941
        %943 = vmatpush1.msra.mxu0 %v942
        %v944 = vand.u32 %v513, 4294901760
        %v945 = vsub.f32 %v513, %v944
        %946 = vmatprep.subr.mxu0 %v945
        %v947 = vand.u32 %v512, 4294901760
        %v948 = vsub.f32 %v512, %v947
        %949 = vmatpush1.msra.mxu0 %v948
        %v950 = vand.u32 %v517, 4294901760
        %v951 = vsub.f32 %v517, %v950
        %952 = vmatprep.subr.mxu0 %v951
        %v953 = vand.u32 %v516, 4294901760
        %v954 = vsub.f32 %v516, %v953
        %955 = vmatpush1.msra.mxu0 %v954
        %956 = vmatprep.subr.mxu0 0.0
        %957 = vmatpush1.msra.mxu0 0.0
        %958 = vmatprep.subr.mxu0 0.0
        %959 = vmatpush1.msra.mxu0 0.0
        %960 = vmatprep.subr.mxu0 0.0
        %961 = vmatpush1.msra.mxu0 0.0
        %962 = vmatprep.subr.mxu0 0.0
        %963 = vmatpush1.msra.mxu0 0.0
        %964 = vmatprep.subr.mxu0 0.0
        %965 = vmatpush1.msra.mxu0 0.0
        %966 = vmatprep.subr.mxu0 0.0
        %967 = vmatpush1.msra.mxu0 0.0
        %968 = vmatprep.subr.mxu0 0.0
        %969 = vmatpush1.msra.mxu0 0.0
        %970 = vmatprep.subr.mxu0 0.0
        %971 = vmatpush1.msra.mxu0 0.0
        %972 = vmatprep.subr.mxu0 0.0
        %973 = vmatpush1.msra.mxu0 0.0
        %974 = vmatprep.subr.mxu0 0.0
        %975 = vmatpush1.msra.mxu0 0.0
        %976 = vmatprep.subr.mxu0 0.0
        %977 = vmatpush1.msra.mxu0 0.0
        %978 = vmatprep.subr.mxu0 0.0
        %979 = vmatpush1.msra.mxu0 0.0
        %980 = vmatprep.subr.mxu0 0.0
        %981 = vmatpush1.msra.mxu0 0.0
        %982 = vmatprep.subr.mxu0 0.0
        %983 = vmatpush1.msra.mxu0 0.0
        %984 = vmatprep.subr.mxu0 0.0
        %985 = vmatpush1.msra.mxu0 0.0
        %986 = vmatprep.subr.mxu0 0.0
        %987 = vmatpush1.msra.mxu0 0.0
        %988 = vmatprep.mubr.f32.mxu0 0.0
        %v989 = vand.u32 %v455, 4294901760
        %v990 = vsub.f32 %v455, %v989
        %991 = vmatmul.mubr.f32.gmra.mrb[0].mxu0 %v990
        %v992 = vpop.f32.mrb[0].mxu0
        %v993 = vadd.f32 %v856, %v992
        %v994 = vpop.f32.mrb[0].mxu0
        %v995 = vadd.f32 %v858, %v994
        %996 = vdwg.mxu0
        %v997 = vand.u32 %v457, 4294901760
        %998 = vmatprep.subr.mxu0 %v997
        %v999 = vand.u32 %v456, 4294901760
        %1000 = vmatpush1.msra.mxu0 %v999
        %v1001 = vand.u32 %v461, 4294901760
        %1002 = vmatprep.subr.mxu0 %v1001
        %v1003 = vand.u32 %v460, 4294901760
        %1004 = vmatpush1.msra.mxu0 %v1003
        %v1005 = vand.u32 %v465, 4294901760
        %1006 = vmatprep.subr.mxu0 %v1005
        %v1007 = vand.u32 %v464, 4294901760
        %1008 = vmatpush1.msra.mxu0 %v1007
        %v1009 = vand.u32 %v469, 4294901760
        %1010 = vmatprep.subr.mxu0 %v1009
        %v1011 = vand.u32 %v468, 4294901760
        %1012 = vmatpush1.msra.mxu0 %v1011
        %v1013 = vand.u32 %v473, 4294901760
        %1014 = vmatprep.subr.mxu0 %v1013
        %v1015 = vand.u32 %v472, 4294901760
        %1016 = vmatpush1.msra.mxu0 %v1015
        %v1017 = vand.u32 %v477, 4294901760
        %1018 = vmatprep.subr.mxu0 %v1017
        %v1019 = vand.u32 %v476, 4294901760
        %1020 = vmatpush1.msra.mxu0 %v1019
        %v1021 = vand.u32 %v481, 4294901760
        %1022 = vmatprep.subr.mxu0 %v1021
        %v1023 = vand.u32 %v480, 4294901760
        %1024 = vmatpush1.msra.mxu0 %v1023
        %v1025 = vand.u32 %v485, 4294901760
        %1026 = vmatprep.subr.mxu0 %v1025
        %v1027 = vand.u32 %v484, 4294901760
        %1028 = vmatpush1.msra.mxu0 %v1027
        %v1029 = vand.u32 %v489, 4294901760
        %1030 = vmatprep.subr.mxu0 %v1029
        %v1031 = vand.u32 %v488, 4294901760
        %1032 = vmatpush1.msra.mxu0 %v1031
        %v1033 = vand.u32 %v493, 4294901760
        %1034 = vmatprep.subr.mxu0 %v1033
        %v1035 = vand.u32 %v492, 4294901760
        %1036 = vmatpush1.msra.mxu0 %v1035
        %v1037 = vand.u32 %v497, 4294901760
        %1038 = vmatprep.subr.mxu0 %v1037
        %v1039 = vand.u32 %v496, 4294901760
        %1040 = vmatpush1.msra.mxu0 %v1039
        %v1041 = vand.u32 %v501, 4294901760
        %1042 = vmatprep.subr.mxu0 %v1041
        %v1043 = vand.u32 %v500, 4294901760
        %1044 = vmatpush1.msra.mxu0 %v1043
        %v1045 = vand.u32 %v505, 4294901760
        %1046 = vmatprep.subr.mxu0 %v1045
        %v1047 = vand.u32 %v504, 4294901760
        %1048 = vmatpush1.msra.mxu0 %v1047
        %v1049 = vand.u32 %v509, 4294901760
        %1050 = vmatprep.subr.mxu0 %v1049
        %v1051 = vand.u32 %v508, 4294901760
        %1052 = vmatpush1.msra.mxu0 %v1051
        %v1053 = vand.u32 %v513, 4294901760
        %1054 = vmatprep.subr.mxu0 %v1053
        %v1055 = vand.u32 %v512, 4294901760
        %1056 = vmatpush1.msra.mxu0 %v1055
        %v1057 = vand.u32 %v517, 4294901760
        %1058 = vmatprep.subr.mxu0 %v1057
        %v1059 = vand.u32 %v516, 4294901760
        %1060 = vmatpush1.msra.mxu0 %v1059
        %1061 = vmatprep.subr.mxu0 0.0
        %1062 = vmatpush1.msra.mxu0 0.0
        %1063 = vmatprep.subr.mxu0 0.0
        %1064 = vmatpush1.msra.mxu0 0.0
        %1065 = vmatprep.subr.mxu0 0.0
        %1066 = vmatpush1.msra.mxu0 0.0
        %1067 = vmatprep.subr.mxu0 0.0
        %1068 = vmatpush1.msra.mxu0 0.0
        %1069 = vmatprep.subr.mxu0 0.0
        %1070 = vmatpush1.msra.mxu0 0.0
        %1071 = vmatprep.subr.mxu0 0.0
        %1072 = vmatpush1.msra.mxu0 0.0
        %1073 = vmatprep.subr.mxu0 0.0
        %1074 = vmatpush1.msra.mxu0 0.0
        %1075 = vmatprep.subr.mxu0 0.0
        %1076 = vmatpush1.msra.mxu0 0.0
        %1077 = vmatprep.subr.mxu0 0.0
        %1078 = vmatpush1.msra.mxu0 0.0
        %1079 = vmatprep.subr.mxu0 0.0
        %1080 = vmatpush1.msra.mxu0 0.0
        %1081 = vmatprep.subr.mxu0 0.0
        %1082 = vmatpush1.msra.mxu0 0.0
        %1083 = vmatprep.subr.mxu0 0.0
        %1084 = vmatpush1.msra.mxu0 0.0
        %1085 = vmatprep.subr.mxu0 0.0
        %1086 = vmatpush1.msra.mxu0 0.0
        %1087 = vmatprep.subr.mxu0 0.0
        %1088 = vmatpush1.msra.mxu0 0.0
        %1089 = vmatprep.subr.mxu0 0.0
        %1090 = vmatpush1.msra.mxu0 0.0
        %1091 = vmatprep.subr.mxu0 0.0
        %1092 = vmatpush1.msra.mxu0 0.0
        %1093 = vmatprep.mubr.f32.mxu0 0.0
        %v1094 = vand.u32 %v455, 4294901760
        %v1095 = vsub.f32 %v455, %v1094
        %v1096 = vand.u32 %v1095, 4294901760
        %1097 = vmatmul.mubr.f32.gmra.mrb[0].mxu0 %v1096
        %v1098 = vpop.f32.mrb[0].mxu0
        %v1099 = vadd.f32 %v993, %v1098
        %v1100 = vpop.f32.mrb[0].mxu0
        %v1101 = vadd.f32 %v995, %v1100
        %1102 = vdwg.mxu0
        %v1103 = vand.u32 %v457, 4294901760
        %v1104 = vsub.f32 %v457, %v1103
        %v1105 = vand.u32 %v1104, 4294901760
        %1106 = vmatprep.subr.mxu0 %v1105
        %v1107 = vand.u32 %v456, 4294901760
        %v1108 = vsub.f32 %v456, %v1107
        %v1109 = vand.u32 %v1108, 4294901760
        %1110 = vmatpush1.msra.mxu0 %v1109
        %v1111 = vand.u32 %v461, 4294901760
        %v1112 = vsub.f32 %v461, %v1111
        %v1113 = vand.u32 %v1112, 4294901760
        %1114 = vmatprep.subr.mxu0 %v1113
        %v1115 = vand.u32 %v460, 4294901760
        %v1116 = vsub.f32 %v460, %v1115
        %v1117 = vand.u32 %v1116, 4294901760
        %1118 = vmatpush1.msra.mxu0 %v1117
        %v1119 = vand.u32 %v465, 4294901760
        %v1120 = vsub.f32 %v465, %v1119
        %v1121 = vand.u32 %v1120, 4294901760
        %1122 = vmatprep.subr.mxu0 %v1121
        %v1123 = vand.u32 %v464, 4294901760
        %v1124 = vsub.f32 %v464, %v1123
        %v1125 = vand.u32 %v1124, 4294901760
        %1126 = vmatpush1.msra.mxu0 %v1125
        %v1127 = vand.u32 %v469, 4294901760
        %v1128 = vsub.f32 %v469, %v1127
        %v1129 = vand.u32 %v1128, 4294901760
        %1130 = vmatprep.subr.mxu0 %v1129
        %v1131 = vand.u32 %v468, 4294901760
        %v1132 = vsub.f32 %v468, %v1131
        %v1133 = vand.u32 %v1132, 4294901760
        %1134 = vmatpush1.msra.mxu0 %v1133
        %v1135 = vand.u32 %v473, 4294901760
        %v1136 = vsub.f32 %v473, %v1135
        %v1137 = vand.u32 %v1136, 4294901760
        %1138 = vmatprep.subr.mxu0 %v1137
        %v1139 = vand.u32 %v472, 4294901760
        %v1140 = vsub.f32 %v472, %v1139
        %v1141 = vand.u32 %v1140, 4294901760
        %1142 = vmatpush1.msra.mxu0 %v1141
        %v1143 = vand.u32 %v477, 4294901760
        %v1144 = vsub.f32 %v477, %v1143
        %v1145 = vand.u32 %v1144, 4294901760
        %1146 = vmatprep.subr.mxu0 %v1145
        %v1147 = vand.u32 %v476, 4294901760
        %v1148 = vsub.f32 %v476, %v1147
        %v1149 = vand.u32 %v1148, 4294901760
        %1150 = vmatpush1.msra.mxu0 %v1149
        %v1151 = vand.u32 %v481, 4294901760
        %v1152 = vsub.f32 %v481, %v1151
        %v1153 = vand.u32 %v1152, 4294901760
        %1154 = vmatprep.subr.mxu0 %v1153
        %v1155 = vand.u32 %v480, 4294901760
        %v1156 = vsub.f32 %v480, %v1155
        %v1157 = vand.u32 %v1156, 4294901760
        %1158 = vmatpush1.msra.mxu0 %v1157
        %v1159 = vand.u32 %v485, 4294901760
        %v1160 = vsub.f32 %v485, %v1159
        %v1161 = vand.u32 %v1160, 4294901760
        %1162 = vmatprep.subr.mxu0 %v1161
        %v1163 = vand.u32 %v484, 4294901760
        %v1164 = vsub.f32 %v484, %v1163
        %v1165 = vand.u32 %v1164, 4294901760
        %1166 = vmatpush1.msra.mxu0 %v1165
        %v1167 = vand.u32 %v489, 4294901760
        %v1168 = vsub.f32 %v489, %v1167
        %v1169 = vand.u32 %v1168, 4294901760
        %1170 = vmatprep.subr.mxu0 %v1169
        %v1171 = vand.u32 %v488, 4294901760
        %v1172 = vsub.f32 %v488, %v1171
        %v1173 = vand.u32 %v1172, 4294901760
        %1174 = vmatpush1.msra.mxu0 %v1173
        %v1175 = vand.u32 %v493, 4294901760
        %v1176 = vsub.f32 %v493, %v1175
        %v1177 = vand.u32 %v1176, 4294901760
        %1178 = vmatprep.subr.mxu0 %v1177
        %v1179 = vand.u32 %v492, 4294901760
        %v1180 = vsub.f32 %v492, %v1179
        %v1181 = vand.u32 %v1180, 4294901760
        %1182 = vmatpush1.msra.mxu0 %v1181
        %v1183 = vand.u32 %v497, 4294901760
        %v1184 = vsub.f32 %v497, %v1183
        %v1185 = vand.u32 %v1184, 4294901760
        %1186 = vmatprep.subr.mxu0 %v1185
        %v1187 = vand.u32 %v496, 4294901760
        %v1188 = vsub.f32 %v496, %v1187
        %v1189 = vand.u32 %v1188, 4294901760
        %1190 = vmatpush1.msra.mxu0 %v1189
        %v1191 = vand.u32 %v501, 4294901760
        %v1192 = vsub.f32 %v501, %v1191
        %v1193 = vand.u32 %v1192, 4294901760
        %1194 = vmatprep.subr.mxu0 %v1193
        %v1195 = vand.u32 %v500, 4294901760
        %v1196 = vsub.f32 %v500, %v1195
        %v1197 = vand.u32 %v1196, 4294901760
        %1198 = vmatpush1.msra.mxu0 %v1197
        %v1199 = vand.u32 %v505, 4294901760
        %v1200 = vsub.f32 %v505, %v1199
        %v1201 = vand.u32 %v1200, 4294901760
        %1202 = vmatprep.subr.mxu0 %v1201
        %v1203 = vand.u32 %v504, 4294901760
        %v1204 = vsub.f32 %v504, %v1203
        %v1205 = vand.u32 %v1204, 4294901760
        %1206 = vmatpush1.msra.mxu0 %v1205
        %v1207 = vand.u32 %v509, 4294901760
        %v1208 = vsub.f32 %v509, %v1207
        %v1209 = vand.u32 %v1208, 4294901760
        %1210 = vmatprep.subr.mxu0 %v1209
        %v1211 = vand.u32 %v508, 4294901760
        %v1212 = vsub.f32 %v508, %v1211
        %v1213 = vand.u32 %v1212, 4294901760
        %1214 = vmatpush1.msra.mxu0 %v1213
        %v1215 = vand.u32 %v513, 4294901760
        %v1216 = vsub.f32 %v513, %v1215
        %v1217 = vand.u32 %v1216, 4294901760
        %1218 = vmatprep.subr.mxu0 %v1217
        %v1219 = vand.u32 %v512, 4294901760
        %v1220 = vsub.f32 %v512, %v1219
        %v1221 = vand.u32 %v1220, 4294901760
        %1222 = vmatpush1.msra.mxu0 %v1221
        %v1223 = vand.u32 %v517, 4294901760
        %v1224 = vsub.f32 %v517, %v1223
        %v1225 = vand.u32 %v1224, 4294901760
        %1226 = vmatprep.subr.mxu0 %v1225
        %v1227 = vand.u32 %v516, 4294901760
        %v1228 = vsub.f32 %v516, %v1227
        %v1229 = vand.u32 %v1228, 4294901760
        %1230 = vmatpush1.msra.mxu0 %v1229
        %1231 = vmatprep.subr.mxu0 0.0
        %1232 = vmatpush1.msra.mxu0 0.0
        %1233 = vmatprep.subr.mxu0 0.0
        %1234 = vmatpush1.msra.mxu0 0.0
        %1235 = vmatprep.subr.mxu0 0.0
        %1236 = vmatpush1.msra.mxu0 0.0
        %1237 = vmatprep.subr.mxu0 0.0
        %1238 = vmatpush1.msra.mxu0 0.0
        %1239 = vmatprep.subr.mxu0 0.0
        %1240 = vmatpush1.msra.mxu0 0.0
        %1241 = vmatprep.subr.mxu0 0.0
        %1242 = vmatpush1.msra.mxu0 0.0
        %1243 = vmatprep.subr.mxu0 0.0
        %1244 = vmatpush1.msra.mxu0 0.0
        %1245 = vmatprep.subr.mxu0 0.0
        %1246 = vmatpush1.msra.mxu0 0.0
        %1247 = vmatprep.subr.mxu0 0.0
        %1248 = vmatpush1.msra.mxu0 0.0
        %1249 = vmatprep.subr.mxu0 0.0
        %1250 = vmatpush1.msra.mxu0 0.0
        %1251 = vmatprep.subr.mxu0 0.0
        %1252 = vmatpush1.msra.mxu0 0.0
        %1253 = vmatprep.subr.mxu0 0.0
        %1254 = vmatpush1.msra.mxu0 0.0
        %1255 = vmatprep.subr.mxu0 0.0
        %1256 = vmatpush1.msra.mxu0 0.0
        %1257 = vmatprep.subr.mxu0 0.0
        %1258 = vmatpush1.msra.mxu0 0.0
        %1259 = vmatprep.subr.mxu0 0.0
        %1260 = vmatpush1.msra.mxu0 0.0
        %1261 = vmatprep.subr.mxu0 0.0
        %1262 = vmatpush1.msra.mxu0 0.0
        %1263 = vmatprep.mubr.f32.mxu0 0.0
        %v1264 = vand.u32 %v455, 4294901760
        %1265 = vmatmul.mubr.f32.gmra.mrb[0].mxu0 %v1264
        %v1266 = vpop.f32.mrb[0].mxu0
        %v1267 = vadd.f32 %v1099, %v1266
        %v1268 = vpop.f32.mrb[0].mxu0
        %v1269 = vadd.f32 %v1101, %v1268
        %1270 = vdwg.mxu0
        %v1271 = vand.u32 %v457, 4294901760
        %1272 = vmatprep.subr.mxu0 %v1271
        %v1273 = vand.u32 %v456, 4294901760
        %1274 = vmatpush1.msra.mxu0 %v1273
        %v1275 = vand.u32 %v461, 4294901760
        %1276 = vmatprep.subr.mxu0 %v1275
        %v1277 = vand.u32 %v460, 4294901760
        %1278 = vmatpush1.msra.mxu0 %v1277
        %v1279 = vand.u32 %v465, 4294901760
        %1280 = vmatprep.subr.mxu0 %v1279
        %v1281 = vand.u32 %v464, 4294901760
        %1282 = vmatpush1.msra.mxu0 %v1281
        %v1283 = vand.u32 %v469, 4294901760
        %1284 = vmatprep.subr.mxu0 %v1283
        %v1285 = vand.u32 %v468, 4294901760
        %1286 = vmatpush1.msra.mxu0 %v1285
        %v1287 = vand.u32 %v473, 4294901760
        %1288 = vmatprep.subr.mxu0 %v1287
        %v1289 = vand.u32 %v472, 4294901760
        %1290 = vmatpush1.msra.mxu0 %v1289
        %v1291 = vand.u32 %v477, 4294901760
        %1292 = vmatprep.subr.mxu0 %v1291
        %v1293 = vand.u32 %v476, 4294901760
        %1294 = vmatpush1.msra.mxu0 %v1293
        %v1295 = vand.u32 %v481, 4294901760
        %1296 = vmatprep.subr.mxu0 %v1295
        %v1297 = vand.u32 %v480, 4294901760
        %1298 = vmatpush1.msra.mxu0 %v1297
        %v1299 = vand.u32 %v485, 4294901760
        %1300 = vmatprep.subr.mxu0 %v1299
        %v1301 = vand.u32 %v484, 4294901760
        %1302 = vmatpush1.msra.mxu0 %v1301
        %v1303 = vand.u32 %v489, 4294901760
        %1304 = vmatprep.subr.mxu0 %v1303
        %v1305 = vand.u32 %v488, 4294901760
        %1306 = vmatpush1.msra.mxu0 %v1305
        %v1307 = vand.u32 %v493, 4294901760
        %1308 = vmatprep.subr.mxu0 %v1307
        %v1309 = vand.u32 %v492, 4294901760
        %1310 = vmatpush1.msra.mxu0 %v1309
        %v1311 = vand.u32 %v497, 4294901760
        %1312 = vmatprep.subr.mxu0 %v1311
        %v1313 = vand.u32 %v496, 4294901760
        %1314 = vmatpush1.msra.mxu0 %v1313
        %v1315 = vand.u32 %v501, 4294901760
        %1316 = vmatprep.subr.mxu0 %v1315
        %v1317 = vand.u32 %v500, 4294901760
        %1318 = vmatpush1.msra.mxu0 %v1317
        %v1319 = vand.u32 %v505, 4294901760
        %1320 = vmatprep.subr.mxu0 %v1319
        %v1321 = vand.u32 %v504, 4294901760
        %1322 = vmatpush1.msra.mxu0 %v1321
        %v1323 = vand.u32 %v509, 4294901760
        %1324 = vmatprep.subr.mxu0 %v1323
        %v1325 = vand.u32 %v508, 4294901760
        %1326 = vmatpush1.msra.mxu0 %v1325
        %v1327 = vand.u32 %v513, 4294901760
        %1328 = vmatprep.subr.mxu0 %v1327
        %v1329 = vand.u32 %v512, 4294901760
        %1330 = vmatpush1.msra.mxu0 %v1329
        %v1331 = vand.u32 %v517, 4294901760
        %1332 = vmatprep.subr.mxu0 %v1331
        %v1333 = vand.u32 %v516, 4294901760
        %1334 = vmatpush1.msra.mxu0 %v1333
        %1335 = vmatprep.subr.mxu0 0.0
        %1336 = vmatpush1.msra.mxu0 0.0
        %1337 = vmatprep.subr.mxu0 0.0
        %1338 = vmatpush1.msra.mxu0 0.0
        %1339 = vmatprep.subr.mxu0 0.0
        %1340 = vmatpush1.msra.mxu0 0.0
        %1341 = vmatprep.subr.mxu0 0.0
        %1342 = vmatpush1.msra.mxu0 0.0
        %1343 = vmatprep.subr.mxu0 0.0
        %1344 = vmatpush1.msra.mxu0 0.0
        %1345 = vmatprep.subr.mxu0 0.0
        %1346 = vmatpush1.msra.mxu0 0.0
        %1347 = vmatprep.subr.mxu0 0.0
        %1348 = vmatpush1.msra.mxu0 0.0
        %1349 = vmatprep.subr.mxu0 0.0
        %1350 = vmatpush1.msra.mxu0 0.0
        %1351 = vmatprep.subr.mxu0 0.0
        %1352 = vmatpush1.msra.mxu0 0.0
        %1353 = vmatprep.subr.mxu0 0.0
        %1354 = vmatpush1.msra.mxu0 0.0
        %1355 = vmatprep.subr.mxu0 0.0
        %1356 = vmatpush1.msra.mxu0 0.0
        %1357 = vmatprep.subr.mxu0 0.0
        %1358 = vmatpush1.msra.mxu0 0.0
        %1359 = vmatprep.subr.mxu0 0.0
        %1360 = vmatpush1.msra.mxu0 0.0
        %1361 = vmatprep.subr.mxu0 0.0
        %1362 = vmatpush1.msra.mxu0 0.0
        %1363 = vmatprep.subr.mxu0 0.0
        %1364 = vmatpush1.msra.mxu0 0.0
        %1365 = vmatprep.subr.mxu0 0.0
        %1366 = vmatpush1.msra.mxu0 0.0
        %1367 = vmatprep.mubr.f32.mxu0 0.0
        %v1368 = vand.u32 %v455, 4294901760
        %1369 = vmatmul.mubr.f32.gmra.mrb[0].mxu0 %v1368
        %v1370 = vpop.f32.mrb[0].mxu0
        %v1371 = vadd.f32 %v1267, %v1370
        %v1372 = vpop.f32.mrb[0].mxu0
        %v1373 = vadd.f32 %v1269, %v1372
        %1374 = vdwg.mxu0
        %v1375 = vand.u32 %v459, 4294901760
        %1376 = vmatprep.subr.mxu0 %v1375
        %v1377 = vand.u32 %v458, 4294901760
        %1378 = vmatpush1.msra.mxu0 %v1377
        %v1379 = vand.u32 %v463, 4294901760
        %1380 = vmatprep.subr.mxu0 %v1379
        %v1381 = vand.u32 %v462, 4294901760
        %1382 = vmatpush1.msra.mxu0 %v1381
        %v1383 = vand.u32 %v467, 4294901760
        %1384 = vmatprep.subr.mxu0 %v1383
        %v1385 = vand.u32 %v466, 4294901760
        %1386 = vmatpush1.msra.mxu0 %v1385
        %v1387 = vand.u32 %v471, 4294901760
        %1388 = vmatprep.subr.mxu0 %v1387
        %v1389 = vand.u32 %v470, 4294901760
        %1390 = vmatpush1.msra.mxu0 %v1389
        %v1391 = vand.u32 %v475, 4294901760
        %1392 = vmatprep.subr.mxu0 %v1391
        %v1393 = vand.u32 %v474, 4294901760
        %1394 = vmatpush1.msra.mxu0 %v1393
        %v1395 = vand.u32 %v479, 4294901760
        %1396 = vmatprep.subr.mxu0 %v1395
        %v1397 = vand.u32 %v478, 4294901760
        %1398 = vmatpush1.msra.mxu0 %v1397
        %v1399 = vand.u32 %v483, 4294901760
        %1400 = vmatprep.subr.mxu0 %v1399
        %v1401 = vand.u32 %v482, 4294901760
        %1402 = vmatpush1.msra.mxu0 %v1401
        %v1403 = vand.u32 %v487, 4294901760
        %1404 = vmatprep.subr.mxu0 %v1403
        %v1405 = vand.u32 %v486, 4294901760
        %1406 = vmatpush1.msra.mxu0 %v1405
        %v1407 = vand.u32 %v491, 4294901760
        %1408 = vmatprep.subr.mxu0 %v1407
        %v1409 = vand.u32 %v490, 4294901760
        %1410 = vmatpush1.msra.mxu0 %v1409
        %v1411 = vand.u32 %v495, 4294901760
        %1412 = vmatprep.subr.mxu0 %v1411
        %v1413 = vand.u32 %v494, 4294901760
        %1414 = vmatpush1.msra.mxu0 %v1413
        %v1415 = vand.u32 %v499, 4294901760
        %1416 = vmatprep.subr.mxu0 %v1415
        %v1417 = vand.u32 %v498, 4294901760
        %1418 = vmatpush1.msra.mxu0 %v1417
        %v1419 = vand.u32 %v503, 4294901760
        %1420 = vmatprep.subr.mxu0 %v1419
        %v1421 = vand.u32 %v502, 4294901760
        %1422 = vmatpush1.msra.mxu0 %v1421
        %v1423 = vand.u32 %v507, 4294901760
        %1424 = vmatprep.subr.mxu0 %v1423
        %v1425 = vand.u32 %v506, 4294901760
        %1426 = vmatpush1.msra.mxu0 %v1425
        %v1427 = vand.u32 %v511, 4294901760
        %1428 = vmatprep.subr.mxu0 %v1427
        %v1429 = vand.u32 %v510, 4294901760
        %1430 = vmatpush1.msra.mxu0 %v1429
        %v1431 = vand.u32 %v515, 4294901760
        %1432 = vmatprep.subr.mxu0 %v1431
        %v1433 = vand.u32 %v514, 4294901760
        %1434 = vmatpush1.msra.mxu0 %v1433
        %v1435 = vand.u32 %v519, 4294901760
        %1436 = vmatprep.subr.mxu0 %v1435
        %v1437 = vand.u32 %v518, 4294901760
        %1438 = vmatpush1.msra.mxu0 %v1437
        %1439 = vmatprep.subr.mxu0 0.0
        %1440 = vmatpush1.msra.mxu0 0.0
        %1441 = vmatprep.subr.mxu0 0.0
        %1442 = vmatpush1.msra.mxu0 0.0
        %1443 = vmatprep.subr.mxu0 0.0
        %1444 = vmatpush1.msra.mxu0 0.0
        %1445 = vmatprep.subr.mxu0 0.0
        %1446 = vmatpush1.msra.mxu0 0.0
        %1447 = vmatprep.subr.mxu0 0.0
        %1448 = vmatpush1.msra.mxu0 0.0
        %1449 = vmatprep.subr.mxu0 0.0
        %1450 = vmatpush1.msra.mxu0 0.0
        %1451 = vmatprep.subr.mxu0 0.0
        %1452 = vmatpush1.msra.mxu0 0.0
        %1453 = vmatprep.subr.mxu0 0.0
        %1454 = vmatpush1.msra.mxu0 0.0
        %1455 = vmatprep.subr.mxu0 0.0
        %1456 = vmatpush1.msra.mxu0 0.0
        %1457 = vmatprep.subr.mxu0 0.0
        %1458 = vmatpush1.msra.mxu0 0.0
        %1459 = vmatprep.subr.mxu0 0.0
        %1460 = vmatpush1.msra.mxu0 0.0
        %1461 = vmatprep.subr.mxu0 0.0
        %1462 = vmatpush1.msra.mxu0 0.0
        %1463 = vmatprep.subr.mxu0 0.0
        %1464 = vmatpush1.msra.mxu0 0.0
        %1465 = vmatprep.subr.mxu0 0.0
        %1466 = vmatpush1.msra.mxu0 0.0
        %1467 = vmatprep.subr.mxu0 0.0
        %1468 = vmatpush1.msra.mxu0 0.0
        %1469 = vmatprep.subr.mxu0 0.0
        %1470 = vmatpush1.msra.mxu0 0.0
        %1471 = vmatprep.mubr.f32.mxu0 0.0
        %v1472 = vand.u32 %v455, 4294901760
        %v1473 = vsub.f32 %v455, %v1472
        %v1474 = vand.u32 %v1473, 4294901760
        %v1475 = vsub.f32 %v1473, %v1474
        %v1476 = vand.u32 %v1475, 4294901760
        %1477 = vmatmul.mubr.f32.gmra.mrb[0].mxu0 %v1476
        %v1478 = vpop.f32.mrb[0].mxu0
        %v1479 = vadd.f32 0.0, %v1478
        %v1480 = vpop.f32.mrb[0].mxu0
        %v1481 = vadd.f32 0.0, %v1480
        %1482 = vdwg.mxu0
        %v1483 = vand.u32 %v459, 4294901760
        %v1484 = vsub.f32 %v459, %v1483
        %v1485 = vand.u32 %v1484, 4294901760
        %v1486 = vsub.f32 %v1484, %v1485
        %v1487 = vand.u32 %v1486, 4294901760
        %1488 = vmatprep.subr.mxu0 %v1487
        %v1489 = vand.u32 %v458, 4294901760
        %v1490 = vsub.f32 %v458, %v1489
        %v1491 = vand.u32 %v1490, 4294901760
        %v1492 = vsub.f32 %v1490, %v1491
        %v1493 = vand.u32 %v1492, 4294901760
        %1494 = vmatpush1.msra.mxu0 %v1493
        %v1495 = vand.u32 %v463, 4294901760
        %v1496 = vsub.f32 %v463, %v1495
        %v1497 = vand.u32 %v1496, 4294901760
        %v1498 = vsub.f32 %v1496, %v1497
        %v1499 = vand.u32 %v1498, 4294901760
        %1500 = vmatprep.subr.mxu0 %v1499
        %v1501 = vand.u32 %v462, 4294901760
        %v1502 = vsub.f32 %v462, %v1501
        %v1503 = vand.u32 %v1502, 4294901760
        %v1504 = vsub.f32 %v1502, %v1503
        %v1505 = vand.u32 %v1504, 4294901760
        %1506 = vmatpush1.msra.mxu0 %v1505
        %v1507 = vand.u32 %v467, 4294901760
        %v1508 = vsub.f32 %v467, %v1507
        %v1509 = vand.u32 %v1508, 4294901760
        %v1510 = vsub.f32 %v1508, %v1509
        %v1511 = vand.u32 %v1510, 4294901760
        %1512 = vmatprep.subr.mxu0 %v1511
        %v1513 = vand.u32 %v466, 4294901760
        %v1514 = vsub.f32 %v466, %v1513
        %v1515 = vand.u32 %v1514, 4294901760
        %v1516 = vsub.f32 %v1514, %v1515
        %v1517 = vand.u32 %v1516, 4294901760
        %1518 = vmatpush1.msra.mxu0 %v1517
        %v1519 = vand.u32 %v471, 4294901760
        %v1520 = vsub.f32 %v471, %v1519
        %v1521 = vand.u32 %v1520, 4294901760
        %v1522 = vsub.f32 %v1520, %v1521
        %v1523 = vand.u32 %v1522, 4294901760
        %1524 = vmatprep.subr.mxu0 %v1523
        %v1525 = vand.u32 %v470, 4294901760
        %v1526 = vsub.f32 %v470, %v1525
        %v1527 = vand.u32 %v1526, 4294901760
        %v1528 = vsub.f32 %v1526, %v1527
        %v1529 = vand.u32 %v1528, 4294901760
        %1530 = vmatpush1.msra.mxu0 %v1529
        %v1531 = vand.u32 %v475, 4294901760
        %v1532 = vsub.f32 %v475, %v1531
        %v1533 = vand.u32 %v1532, 4294901760
        %v1534 = vsub.f32 %v1532, %v1533
        %v1535 = vand.u32 %v1534, 4294901760
        %1536 = vmatprep.subr.mxu0 %v1535
        %v1537 = vand.u32 %v474, 4294901760
        %v1538 = vsub.f32 %v474, %v1537
        %v1539 = vand.u32 %v1538, 4294901760
        %v1540 = vsub.f32 %v1538, %v1539
        %v1541 = vand.u32 %v1540, 4294901760
        %1542 = vmatpush1.msra.mxu0 %v1541
        %v1543 = vand.u32 %v479, 4294901760
        %v1544 = vsub.f32 %v479, %v1543
        %v1545 = vand.u32 %v1544, 4294901760
        %v1546 = vsub.f32 %v1544, %v1545
        %v1547 = vand.u32 %v1546, 4294901760
        %1548 = vmatprep.subr.mxu0 %v1547
        %v1549 = vand.u32 %v478, 4294901760
        %v1550 = vsub.f32 %v478, %v1549
        %v1551 = vand.u32 %v1550, 4294901760
        %v1552 = vsub.f32 %v1550, %v1551
        %v1553 = vand.u32 %v1552, 4294901760
        %1554 = vmatpush1.msra.mxu0 %v1553
        %v1555 = vand.u32 %v483, 4294901760
        %v1556 = vsub.f32 %v483, %v1555
        %v1557 = vand.u32 %v1556, 4294901760
        %v1558 = vsub.f32 %v1556, %v1557
        %v1559 = vand.u32 %v1558, 4294901760
        %1560 = vmatprep.subr.mxu0 %v1559
        %v1561 = vand.u32 %v482, 4294901760
        %v1562 = vsub.f32 %v482, %v1561
        %v1563 = vand.u32 %v1562, 4294901760
        %v1564 = vsub.f32 %v1562, %v1563
        %v1565 = vand.u32 %v1564, 4294901760
        %1566 = vmatpush1.msra.mxu0 %v1565
        %v1567 = vand.u32 %v487, 4294901760
        %v1568 = vsub.f32 %v487, %v1567
        %v1569 = vand.u32 %v1568, 4294901760
        %v1570 = vsub.f32 %v1568, %v1569
        %v1571 = vand.u32 %v1570, 4294901760
        %1572 = vmatprep.subr.mxu0 %v1571
        %v1573 = vand.u32 %v486, 4294901760
        %v1574 = vsub.f32 %v486, %v1573
        %v1575 = vand.u32 %v1574, 4294901760
        %v1576 = vsub.f32 %v1574, %v1575
        %v1577 = vand.u32 %v1576, 4294901760
        %1578 = vmatpush1.msra.mxu0 %v1577
        %v1579 = vand.u32 %v491, 4294901760
        %v1580 = vsub.f32 %v491, %v1579
        %v1581 = vand.u32 %v1580, 4294901760
        %v1582 = vsub.f32 %v1580, %v1581
        %v1583 = vand.u32 %v1582, 4294901760
        %1584 = vmatprep.subr.mxu0 %v1583
        %v1585 = vand.u32 %v490, 4294901760
        %v1586 = vsub.f32 %v490, %v1585
        %v1587 = vand.u32 %v1586, 4294901760
        %v1588 = vsub.f32 %v1586, %v1587
        %v1589 = vand.u32 %v1588, 4294901760
        %1590 = vmatpush1.msra.mxu0 %v1589
        %v1591 = vand.u32 %v495, 4294901760
        %v1592 = vsub.f32 %v495, %v1591
        %v1593 = vand.u32 %v1592, 4294901760
        %v1594 = vsub.f32 %v1592, %v1593
        %v1595 = vand.u32 %v1594, 4294901760
        %1596 = vmatprep.subr.mxu0 %v1595
        %v1597 = vand.u32 %v494, 4294901760
        %v1598 = vsub.f32 %v494, %v1597
        %v1599 = vand.u32 %v1598, 4294901760
        %v1600 = vsub.f32 %v1598, %v1599
        %v1601 = vand.u32 %v1600, 4294901760
        %1602 = vmatpush1.msra.mxu0 %v1601
        %v1603 = vand.u32 %v499, 4294901760
        %v1604 = vsub.f32 %v499, %v1603
        %v1605 = vand.u32 %v1604, 4294901760
        %v1606 = vsub.f32 %v1604, %v1605
        %v1607 = vand.u32 %v1606, 4294901760
        %1608 = vmatprep.subr.mxu0 %v1607
        %v1609 = vand.u32 %v498, 4294901760
        %v1610 = vsub.f32 %v498, %v1609
        %v1611 = vand.u32 %v1610, 4294901760
        %v1612 = vsub.f32 %v1610, %v1611
        %v1613 = vand.u32 %v1612, 4294901760
        %1614 = vmatpush1.msra.mxu0 %v1613
        %v1615 = vand.u32 %v503, 4294901760
        %v1616 = vsub.f32 %v503, %v1615
        %v1617 = vand.u32 %v1616, 4294901760
        %v1618 = vsub.f32 %v1616, %v1617
        %v1619 = vand.u32 %v1618, 4294901760
        %1620 = vmatprep.subr.mxu0 %v1619
        %v1621 = vand.u32 %v502, 4294901760
        %v1622 = vsub.f32 %v502, %v1621
        %v1623 = vand.u32 %v1622, 4294901760
        %v1624 = vsub.f32 %v1622, %v1623
        %v1625 = vand.u32 %v1624, 4294901760
        %1626 = vmatpush1.msra.mxu0 %v1625
        %v1627 = vand.u32 %v507, 4294901760
        %v1628 = vsub.f32 %v507, %v1627
        %v1629 = vand.u32 %v1628, 4294901760
        %v1630 = vsub.f32 %v1628, %v1629
        %v1631 = vand.u32 %v1630, 4294901760
        %1632 = vmatprep.subr.mxu0 %v1631
        %v1633 = vand.u32 %v506, 4294901760
        %v1634 = vsub.f32 %v506, %v1633
        %v1635 = vand.u32 %v1634, 4294901760
        %v1636 = vsub.f32 %v1634, %v1635
        %v1637 = vand.u32 %v1636, 4294901760
        %1638 = vmatpush1.msra.mxu0 %v1637
        %v1639 = vand.u32 %v511, 4294901760
        %v1640 = vsub.f32 %v511, %v1639
        %v1641 = vand.u32 %v1640, 4294901760
        %v1642 = vsub.f32 %v1640, %v1641
        %v1643 = vand.u32 %v1642, 4294901760
        %1644 = vmatprep.subr.mxu0 %v1643
        %v1645 = vand.u32 %v510, 4294901760
        %v1646 = vsub.f32 %v510, %v1645
        %v1647 = vand.u32 %v1646, 4294901760
        %v1648 = vsub.f32 %v1646, %v1647
        %v1649 = vand.u32 %v1648, 4294901760
        %1650 = vmatpush1.msra.mxu0 %v1649
        %v1651 = vand.u32 %v515, 4294901760
        %v1652 = vsub.f32 %v515, %v1651
        %v1653 = vand.u32 %v1652, 4294901760
        %v1654 = vsub.f32 %v1652, %v1653
        %v1655 = vand.u32 %v1654, 4294901760
        %1656 = vmatprep.subr.mxu0 %v1655
        %v1657 = vand.u32 %v514, 4294901760
        %v1658 = vsub.f32 %v514, %v1657
        %v1659 = vand.u32 %v1658, 4294901760
        %v1660 = vsub.f32 %v1658, %v1659
        %v1661 = vand.u32 %v1660, 4294901760
        %1662 = vmatpush1.msra.mxu0 %v1661
        %v1663 = vand.u32 %v519, 4294901760
        %v1664 = vsub.f32 %v519, %v1663
        %v1665 = vand.u32 %v1664, 4294901760
        %v1666 = vsub.f32 %v1664, %v1665
        %v1667 = vand.u32 %v1666, 4294901760
        %1668 = vmatprep.subr.mxu0 %v1667
        %v1669 = vand.u32 %v518, 4294901760
        %v1670 = vsub.f32 %v518, %v1669
        %v1671 = vand.u32 %v1670, 4294901760
        %v1672 = vsub.f32 %v1670, %v1671
        %v1673 = vand.u32 %v1672, 4294901760
        %1674 = vmatpush1.msra.mxu0 %v1673
        %1675 = vmatprep.subr.mxu0 0.0
        %1676 = vmatpush1.msra.mxu0 0.0
        %1677 = vmatprep.subr.mxu0 0.0
        %1678 = vmatpush1.msra.mxu0 0.0
        %1679 = vmatprep.subr.mxu0 0.0
        %1680 = vmatpush1.msra.mxu0 0.0
        %1681 = vmatprep.subr.mxu0 0.0
        %1682 = vmatpush1.msra.mxu0 0.0
        %1683 = vmatprep.subr.mxu0 0.0
        %1684 = vmatpush1.msra.mxu0 0.0
        %1685 = vmatprep.subr.mxu0 0.0
        %1686 = vmatpush1.msra.mxu0 0.0
        %1687 = vmatprep.subr.mxu0 0.0
        %1688 = vmatpush1.msra.mxu0 0.0
        %1689 = vmatprep.subr.mxu0 0.0
        %1690 = vmatpush1.msra.mxu0 0.0
        %1691 = vmatprep.subr.mxu0 0.0
        %1692 = vmatpush1.msra.mxu0 0.0
        %1693 = vmatprep.subr.mxu0 0.0
        %1694 = vmatpush1.msra.mxu0 0.0
        %1695 = vmatprep.subr.mxu0 0.0
        %1696 = vmatpush1.msra.mxu0 0.0
        %1697 = vmatprep.subr.mxu0 0.0
        %1698 = vmatpush1.msra.mxu0 0.0
        %1699 = vmatprep.subr.mxu0 0.0
        %1700 = vmatpush1.msra.mxu0 0.0
        %1701 = vmatprep.subr.mxu0 0.0
        %1702 = vmatpush1.msra.mxu0 0.0
        %1703 = vmatprep.subr.mxu0 0.0
        %1704 = vmatpush1.msra.mxu0 0.0
        %1705 = vmatprep.subr.mxu0 0.0
        %1706 = vmatpush1.msra.mxu0 0.0
        %1707 = vmatprep.mubr.f32.mxu0 0.0
        %v1708 = vand.u32 %v455, 4294901760
        %1709 = vmatmul.mubr.f32.gmra.mrb[0].mxu0 %v1708
        %v1710 = vpop.f32.mrb[0].mxu0
        %v1711 = vadd.f32 %v1479, %v1710
        %v1712 = vpop.f32.mrb[0].mxu0
        %v1713 = vadd.f32 %v1481, %v1712
        %1714 = vdwg.mxu0
        %v1715 = vand.u32 %v459, 4294901760
        %v1716 = vsub.f32 %v459, %v1715
        %1717 = vmatprep.subr.mxu0 %v1716
        %v1718 = vand.u32 %v458, 4294901760
        %v1719 = vsub.f32 %v458, %v1718
        %1720 = vmatpush1.msra.mxu0 %v1719
        %v1721 = vand.u32 %v463, 4294901760
        %v1722 = vsub.f32 %v463, %v1721
        %1723 = vmatprep.subr.mxu0 %v1722
        %v1724 = vand.u32 %v462, 4294901760
        %v1725 = vsub.f32 %v462, %v1724
        %1726 = vmatpush1.msra.mxu0 %v1725
        %v1727 = vand.u32 %v467, 4294901760
        %v1728 = vsub.f32 %v467, %v1727
        %1729 = vmatprep.subr.mxu0 %v1728
        %v1730 = vand.u32 %v466, 4294901760
        %v1731 = vsub.f32 %v466, %v1730
        %1732 = vmatpush1.msra.mxu0 %v1731
        %v1733 = vand.u32 %v471, 4294901760
        %v1734 = vsub.f32 %v471, %v1733
        %1735 = vmatprep.subr.mxu0 %v1734
        %v1736 = vand.u32 %v470, 4294901760
        %v1737 = vsub.f32 %v470, %v1736
        %1738 = vmatpush1.msra.mxu0 %v1737
        %v1739 = vand.u32 %v475, 4294901760
        %v1740 = vsub.f32 %v475, %v1739
        %1741 = vmatprep.subr.mxu0 %v1740
        %v1742 = vand.u32 %v474, 4294901760
        %v1743 = vsub.f32 %v474, %v1742
        %1744 = vmatpush1.msra.mxu0 %v1743
        %v1745 = vand.u32 %v479, 4294901760
        %v1746 = vsub.f32 %v479, %v1745
        %1747 = vmatprep.subr.mxu0 %v1746
        %v1748 = vand.u32 %v478, 4294901760
        %v1749 = vsub.f32 %v478, %v1748
        %1750 = vmatpush1.msra.mxu0 %v1749
        %v1751 = vand.u32 %v483, 4294901760
        %v1752 = vsub.f32 %v483, %v1751
        %1753 = vmatprep.subr.mxu0 %v1752
        %v1754 = vand.u32 %v482, 4294901760
        %v1755 = vsub.f32 %v482, %v1754
        %1756 = vmatpush1.msra.mxu0 %v1755
        %v1757 = vand.u32 %v487, 4294901760
        %v1758 = vsub.f32 %v487, %v1757
        %1759 = vmatprep.subr.mxu0 %v1758
        %v1760 = vand.u32 %v486, 4294901760
        %v1761 = vsub.f32 %v486, %v1760
        %1762 = vmatpush1.msra.mxu0 %v1761
        %v1763 = vand.u32 %v491, 4294901760
        %v1764 = vsub.f32 %v491, %v1763
        %1765 = vmatprep.subr.mxu0 %v1764
        %v1766 = vand.u32 %v490, 4294901760
        %v1767 = vsub.f32 %v490, %v1766
        %1768 = vmatpush1.msra.mxu0 %v1767
        %v1769 = vand.u32 %v495, 4294901760
        %v1770 = vsub.f32 %v495, %v1769
        %1771 = vmatprep.subr.mxu0 %v1770
        %v1772 = vand.u32 %v494, 4294901760
        %v1773 = vsub.f32 %v494, %v1772
        %1774 = vmatpush1.msra.mxu0 %v1773
        %v1775 = vand.u32 %v499, 4294901760
        %v1776 = vsub.f32 %v499, %v1775
        %1777 = vmatprep.subr.mxu0 %v1776
        %v1778 = vand.u32 %v498, 4294901760
        %v1779 = vsub.f32 %v498, %v1778
        %1780 = vmatpush1.msra.mxu0 %v1779
        %v1781 = vand.u32 %v503, 4294901760
        %v1782 = vsub.f32 %v503, %v1781
        %1783 = vmatprep.subr.mxu0 %v1782
        %v1784 = vand.u32 %v502, 4294901760
        %v1785 = vsub.f32 %v502, %v1784
        %1786 = vmatpush1.msra.mxu0 %v1785
        %v1787 = vand.u32 %v507, 4294901760
        %v1788 = vsub.f32 %v507, %v1787
        %1789 = vmatprep.subr.mxu0 %v1788
        %v1790 = vand.u32 %v506, 4294901760
        %v1791 = vsub.f32 %v506, %v1790
        %1792 = vmatpush1.msra.mxu0 %v1791
        %v1793 = vand.u32 %v511, 4294901760
        %v1794 = vsub.f32 %v511, %v1793
        %1795 = vmatprep.subr.mxu0 %v1794
        %v1796 = vand.u32 %v510, 4294901760
        %v1797 = vsub.f32 %v510, %v1796
        %1798 = vmatpush1.msra.mxu0 %v1797
        %v1799 = vand.u32 %v515, 4294901760
        %v1800 = vsub.f32 %v515, %v1799
        %1801 = vmatprep.subr.mxu0 %v1800
        %v1802 = vand.u32 %v514, 4294901760
        %v1803 = vsub.f32 %v514, %v1802
        %1804 = vmatpush1.msra.mxu0 %v1803
        %v1805 = vand.u32 %v519, 4294901760
        %v1806 = vsub.f32 %v519, %v1805
        %1807 = vmatprep.subr.mxu0 %v1806
        %v1808 = vand.u32 %v518, 4294901760
        %v1809 = vsub.f32 %v518, %v1808
        %1810 = vmatpush1.msra.mxu0 %v1809
        %1811 = vmatprep.subr.mxu0 0.0
        %1812 = vmatpush1.msra.mxu0 0.0
        %1813 = vmatprep.subr.mxu0 0.0
        %1814 = vmatpush1.msra.mxu0 0.0
        %1815 = vmatprep.subr.mxu0 0.0
        %1816 = vmatpush1.msra.mxu0 0.0
        %1817 = vmatprep.subr.mxu0 0.0
        %1818 = vmatpush1.msra.mxu0 0.0
        %1819 = vmatprep.subr.mxu0 0.0
        %1820 = vmatpush1.msra.mxu0 0.0
        %1821 = vmatprep.subr.mxu0 0.0
        %1822 = vmatpush1.msra.mxu0 0.0
        %1823 = vmatprep.subr.mxu0 0.0
        %1824 = vmatpush1.msra.mxu0 0.0
        %1825 = vmatprep.subr.mxu0 0.0
        %1826 = vmatpush1.msra.mxu0 0.0
        %1827 = vmatprep.subr.mxu0 0.0
        %1828 = vmatpush1.msra.mxu0 0.0
        %1829 = vmatprep.subr.mxu0 0.0
        %1830 = vmatpush1.msra.mxu0 0.0
        %1831 = vmatprep.subr.mxu0 0.0
        %1832 = vmatpush1.msra.mxu0 0.0
        %1833 = vmatprep.subr.mxu0 0.0
        %1834 = vmatpush1.msra.mxu0 0.0
        %1835 = vmatprep.subr.mxu0 0.0
        %1836 = vmatpush1.msra.mxu0 0.0
        %1837 = vmatprep.subr.mxu0 0.0
        %1838 = vmatpush1.msra.mxu0 0.0
        %1839 = vmatprep.subr.mxu0 0.0
        %1840 = vmatpush1.msra.mxu0 0.0
        %1841 = vmatprep.subr.mxu0 0.0
        %1842 = vmatpush1.msra.mxu0 0.0
        %1843 = vmatprep.mubr.f32.mxu0 0.0
        %v1844 = vand.u32 %v455, 4294901760
        %v1845 = vsub.f32 %v455, %v1844
        %1846 = vmatmul.mubr.f32.gmra.mrb[0].mxu0 %v1845
        %v1847 = vpop.f32.mrb[0].mxu0
        %v1848 = vadd.f32 %v1711, %v1847
        %v1849 = vpop.f32.mrb[0].mxu0
        %v1850 = vadd.f32 %v1713, %v1849
        %1851 = vdwg.mxu0
        %v1852 = vand.u32 %v459, 4294901760
        %1853 = vmatprep.subr.mxu0 %v1852
        %v1854 = vand.u32 %v458, 4294901760
        %1855 = vmatpush1.msra.mxu0 %v1854
        %v1856 = vand.u32 %v463, 4294901760
        %1857 = vmatprep.subr.mxu0 %v1856
        %v1858 = vand.u32 %v462, 4294901760
        %1859 = vmatpush1.msra.mxu0 %v1858
        %v1860 = vand.u32 %v467, 4294901760
        %1861 = vmatprep.subr.mxu0 %v1860
        %v1862 = vand.u32 %v466, 4294901760
        %1863 = vmatpush1.msra.mxu0 %v1862
        %v1864 = vand.u32 %v471, 4294901760
        %1865 = vmatprep.subr.mxu0 %v1864
        %v1866 = vand.u32 %v470, 4294901760
        %1867 = vmatpush1.msra.mxu0 %v1866
        %v1868 = vand.u32 %v475, 4294901760
        %1869 = vmatprep.subr.mxu0 %v1868
        %v1870 = vand.u32 %v474, 4294901760
        %1871 = vmatpush1.msra.mxu0 %v1870
        %v1872 = vand.u32 %v479, 4294901760
        %1873 = vmatprep.subr.mxu0 %v1872
        %v1874 = vand.u32 %v478, 4294901760
        %1875 = vmatpush1.msra.mxu0 %v1874
        %v1876 = vand.u32 %v483, 4294901760
        %1877 = vmatprep.subr.mxu0 %v1876
        %v1878 = vand.u32 %v482, 4294901760
        %1879 = vmatpush1.msra.mxu0 %v1878
        %v1880 = vand.u32 %v487, 4294901760
        %1881 = vmatprep.subr.mxu0 %v1880
        %v1882 = vand.u32 %v486, 4294901760
        %1883 = vmatpush1.msra.mxu0 %v1882
        %v1884 = vand.u32 %v491, 4294901760
        %1885 = vmatprep.subr.mxu0 %v1884
        %v1886 = vand.u32 %v490, 4294901760
        %1887 = vmatpush1.msra.mxu0 %v1886
        %v1888 = vand.u32 %v495, 4294901760
        %1889 = vmatprep.subr.mxu0 %v1888
        %v1890 = vand.u32 %v494, 4294901760
        %1891 = vmatpush1.msra.mxu0 %v1890
        %v1892 = vand.u32 %v499, 4294901760
        %1893 = vmatprep.subr.mxu0 %v1892
        %v1894 = vand.u32 %v498, 4294901760
        %1895 = vmatpush1.msra.mxu0 %v1894
        %v1896 = vand.u32 %v503, 4294901760
        %1897 = vmatprep.subr.mxu0 %v1896
        %v1898 = vand.u32 %v502, 4294901760
        %1899 = vmatpush1.msra.mxu0 %v1898
        %v1900 = vand.u32 %v507, 4294901760
        %1901 = vmatprep.subr.mxu0 %v1900
        %v1902 = vand.u32 %v506, 4294901760
        %1903 = vmatpush1.msra.mxu0 %v1902
        %v1904 = vand.u32 %v511, 4294901760
        %1905 = vmatprep.subr.mxu0 %v1904
        %v1906 = vand.u32 %v510, 4294901760
        %1907 = vmatpush1.msra.mxu0 %v1906
        %v1908 = vand.u32 %v515, 4294901760
        %1909 = vmatprep.subr.mxu0 %v1908
        %v1910 = vand.u32 %v514, 4294901760
        %1911 = vmatpush1.msra.mxu0 %v1910
        %v1912 = vand.u32 %v519, 4294901760
        %1913 = vmatprep.subr.mxu0 %v1912
        %v1914 = vand.u32 %v518, 4294901760
        %1915 = vmatpush1.msra.mxu0 %v1914
        %1916 = vmatprep.subr.mxu0 0.0
        %1917 = vmatpush1.msra.mxu0 0.0
        %1918 = vmatprep.subr.mxu0 0.0
        %1919 = vmatpush1.msra.mxu0 0.0
        %1920 = vmatprep.subr.mxu0 0.0
        %1921 = vmatpush1.msra.mxu0 0.0
        %1922 = vmatprep.subr.mxu0 0.0
        %1923 = vmatpush1.msra.mxu0 0.0
        %1924 = vmatprep.subr.mxu0 0.0
        %1925 = vmatpush1.msra.mxu0 0.0
        %1926 = vmatprep.subr.mxu0 0.0
        %1927 = vmatpush1.msra.mxu0 0.0
        %1928 = vmatprep.subr.mxu0 0.0
        %1929 = vmatpush1.msra.mxu0 0.0
        %1930 = vmatprep.subr.mxu0 0.0
        %1931 = vmatpush1.msra.mxu0 0.0
        %1932 = vmatprep.subr.mxu0 0.0
        %1933 = vmatpush1.msra.mxu0 0.0
        %1934 = vmatprep.subr.mxu0 0.0
        %1935 = vmatpush1.msra.mxu0 0.0
        %1936 = vmatprep.subr.mxu0 0.0
        %1937 = vmatpush1.msra.mxu0 0.0
        %1938 = vmatprep.subr.mxu0 0.0
        %1939 = vmatpush1.msra.mxu0 0.0
        %1940 = vmatprep.subr.mxu0 0.0
        %1941 = vmatpush1.msra.mxu0 0.0
        %1942 = vmatprep.subr.mxu0 0.0
        %1943 = vmatpush1.msra.mxu0 0.0
        %1944 = vmatprep.subr.mxu0 0.0
        %1945 = vmatpush1.msra.mxu0 0.0
        %1946 = vmatprep.subr.mxu0 0.0
        %1947 = vmatpush1.msra.mxu0 0.0
        %1948 = vmatprep.mubr.f32.mxu0 0.0
        %v1949 = vand.u32 %v455, 4294901760
        %v1950 = vsub.f32 %v455, %v1949
        %v1951 = vand.u32 %v1950, 4294901760
        %1952 = vmatmul.mubr.f32.gmra.mrb[0].mxu0 %v1951
        %v1953 = vpop.f32.mrb[0].mxu0
        %v1954 = vadd.f32 %v1848, %v1953
        %v1955 = vpop.f32.mrb[0].mxu0
        %v1956 = vadd.f32 %v1850, %v1955
        %1957 = vdwg.mxu0
        %v1958 = vand.u32 %v459, 4294901760
        %v1959 = vsub.f32 %v459, %v1958
        %v1960 = vand.u32 %v1959, 4294901760
        %1961 = vmatprep.subr.mxu0 %v1960
        %v1962 = vand.u32 %v458, 4294901760
        %v1963 = vsub.f32 %v458, %v1962
        %v1964 = vand.u32 %v1963, 4294901760
        %1965 = vmatpush1.msra.mxu0 %v1964
        %v1966 = vand.u32 %v463, 4294901760
        %v1967 = vsub.f32 %v463, %v1966
        %v1968 = vand.u32 %v1967, 4294901760
        %1969 = vmatprep.subr.mxu0 %v1968
        %v1970 = vand.u32 %v462, 4294901760
        %v1971 = vsub.f32 %v462, %v1970
        %v1972 = vand.u32 %v1971, 4294901760
        %1973 = vmatpush1.msra.mxu0 %v1972
        %v1974 = vand.u32 %v467, 4294901760
        %v1975 = vsub.f32 %v467, %v1974
        %v1976 = vand.u32 %v1975, 4294901760
        %1977 = vmatprep.subr.mxu0 %v1976
        %v1978 = vand.u32 %v466, 4294901760
        %v1979 = vsub.f32 %v466, %v1978
        %v1980 = vand.u32 %v1979, 4294901760
        %1981 = vmatpush1.msra.mxu0 %v1980
        %v1982 = vand.u32 %v471, 4294901760
        %v1983 = vsub.f32 %v471, %v1982
        %v1984 = vand.u32 %v1983, 4294901760
        %1985 = vmatprep.subr.mxu0 %v1984
        %v1986 = vand.u32 %v470, 4294901760
        %v1987 = vsub.f32 %v470, %v1986
        %v1988 = vand.u32 %v1987, 4294901760
        %1989 = vmatpush1.msra.mxu0 %v1988
        %v1990 = vand.u32 %v475, 4294901760
        %v1991 = vsub.f32 %v475, %v1990
        %v1992 = vand.u32 %v1991, 4294901760
        %1993 = vmatprep.subr.mxu0 %v1992
        %v1994 = vand.u32 %v474, 4294901760
        %v1995 = vsub.f32 %v474, %v1994
        %v1996 = vand.u32 %v1995, 4294901760
        %1997 = vmatpush1.msra.mxu0 %v1996
        %v1998 = vand.u32 %v479, 4294901760
        %v1999 = vsub.f32 %v479, %v1998
        %v2000 = vand.u32 %v1999, 4294901760
        %2001 = vmatprep.subr.mxu0 %v2000
        %v2002 = vand.u32 %v478, 4294901760
        %v2003 = vsub.f32 %v478, %v2002
        %v2004 = vand.u32 %v2003, 4294901760
        %2005 = vmatpush1.msra.mxu0 %v2004
        %v2006 = vand.u32 %v483, 4294901760
        %v2007 = vsub.f32 %v483, %v2006
        %v2008 = vand.u32 %v2007, 4294901760
        %2009 = vmatprep.subr.mxu0 %v2008
        %v2010 = vand.u32 %v482, 4294901760
        %v2011 = vsub.f32 %v482, %v2010
        %v2012 = vand.u32 %v2011, 4294901760
        %2013 = vmatpush1.msra.mxu0 %v2012
        %v2014 = vand.u32 %v487, 4294901760
        %v2015 = vsub.f32 %v487, %v2014
        %v2016 = vand.u32 %v2015, 4294901760
        %2017 = vmatprep.subr.mxu0 %v2016
        %v2018 = vand.u32 %v486, 4294901760
        %v2019 = vsub.f32 %v486, %v2018
        %v2020 = vand.u32 %v2019, 4294901760
        %2021 = vmatpush1.msra.mxu0 %v2020
        %v2022 = vand.u32 %v491, 4294901760
        %v2023 = vsub.f32 %v491, %v2022
        %v2024 = vand.u32 %v2023, 4294901760
        %2025 = vmatprep.subr.mxu0 %v2024
        %v2026 = vand.u32 %v490, 4294901760
        %v2027 = vsub.f32 %v490, %v2026
        %v2028 = vand.u32 %v2027, 4294901760
        %2029 = vmatpush1.msra.mxu0 %v2028
        %v2030 = vand.u32 %v495, 4294901760
        %v2031 = vsub.f32 %v495, %v2030
        %v2032 = vand.u32 %v2031, 4294901760
        %2033 = vmatprep.subr.mxu0 %v2032
        %v2034 = vand.u32 %v494, 4294901760
        %v2035 = vsub.f32 %v494, %v2034
        %v2036 = vand.u32 %v2035, 4294901760
        %2037 = vmatpush1.msra.mxu0 %v2036
        %v2038 = vand.u32 %v499, 4294901760
        %v2039 = vsub.f32 %v499, %v2038
        %v2040 = vand.u32 %v2039, 4294901760
        %2041 = vmatprep.subr.mxu0 %v2040
        %v2042 = vand.u32 %v498, 4294901760
        %v2043 = vsub.f32 %v498, %v2042
        %v2044 = vand.u32 %v2043, 4294901760
        %2045 = vmatpush1.msra.mxu0 %v2044
        %v2046 = vand.u32 %v503, 4294901760
        %v2047 = vsub.f32 %v503, %v2046
        %v2048 = vand.u32 %v2047, 4294901760
        %2049 = vmatprep.subr.mxu0 %v2048
        %v2050 = vand.u32 %v502, 4294901760
        %v2051 = vsub.f32 %v502, %v2050
        %v2052 = vand.u32 %v2051, 4294901760
        %2053 = vmatpush1.msra.mxu0 %v2052
        %v2054 = vand.u32 %v507, 4294901760
        %v2055 = vsub.f32 %v507, %v2054
        %v2056 = vand.u32 %v2055, 4294901760
        %2057 = vmatprep.subr.mxu0 %v2056
        %v2058 = vand.u32 %v506, 4294901760
        %v2059 = vsub.f32 %v506, %v2058
        %v2060 = vand.u32 %v2059, 4294901760
        %2061 = vmatpush1.msra.mxu0 %v2060
        %v2062 = vand.u32 %v511, 4294901760
        %v2063 = vsub.f32 %v511, %v2062
        %v2064 = vand.u32 %v2063, 4294901760
        %2065 = vmatprep.subr.mxu0 %v2064
        %v2066 = vand.u32 %v510, 4294901760
        %v2067 = vsub.f32 %v510, %v2066
        %v2068 = vand.u32 %v2067, 4294901760
        %2069 = vmatpush1.msra.mxu0 %v2068
        %v2070 = vand.u32 %v515, 4294901760
        %v2071 = vsub.f32 %v515, %v2070
        %v2072 = vand.u32 %v2071, 4294901760
        %2073 = vmatprep.subr.mxu0 %v2072
        %v2074 = vand.u32 %v514, 4294901760
        %v2075 = vsub.f32 %v514, %v2074
        %v2076 = vand.u32 %v2075, 4294901760
        %2077 = vmatpush1.msra.mxu0 %v2076
        %v2078 = vand.u32 %v519, 4294901760
        %v2079 = vsub.f32 %v519, %v2078
        %v2080 = vand.u32 %v2079, 4294901760
        %2081 = vmatprep.subr.mxu0 %v2080
        %v2082 = vand.u32 %v518, 4294901760
        %v2083 = vsub.f32 %v518, %v2082
        %v2084 = vand.u32 %v2083, 4294901760
        %2085 = vmatpush1.msra.mxu0 %v2084
        %2086 = vmatprep.subr.mxu0 0.0
        %2087 = vmatpush1.msra.mxu0 0.0
        %2088 = vmatprep.subr.mxu0 0.0
        %2089 = vmatpush1.msra.mxu0 0.0
        %2090 = vmatprep.subr.mxu0 0.0
        %2091 = vmatpush1.msra.mxu0 0.0
        %2092 = vmatprep.subr.mxu0 0.0
        %2093 = vmatpush1.msra.mxu0 0.0
        %2094 = vmatprep.subr.mxu0 0.0
        %2095 = vmatpush1.msra.mxu0 0.0
        %2096 = vmatprep.subr.mxu0 0.0
        %2097 = vmatpush1.msra.mxu0 0.0
        %2098 = vmatprep.subr.mxu0 0.0
        %2099 = vmatpush1.msra.mxu0 0.0
        %2100 = vmatprep.subr.mxu0 0.0
        %2101 = vmatpush1.msra.mxu0 0.0
        %2102 = vmatprep.subr.mxu0 0.0
        %2103 = vmatpush1.msra.mxu0 0.0
        %2104 = vmatprep.subr.mxu0 0.0
        %2105 = vmatpush1.msra.mxu0 0.0
        %2106 = vmatprep.subr.mxu0 0.0
        %2107 = vmatpush1.msra.mxu0 0.0
        %2108 = vmatprep.subr.mxu0 0.0
        %2109 = vmatpush1.msra.mxu0 0.0
        %2110 = vmatprep.subr.mxu0 0.0
        %2111 = vmatpush1.msra.mxu0 0.0
        %2112 = vmatprep.subr.mxu0 0.0
        %2113 = vmatpush1.msra.mxu0 0.0
        %2114 = vmatprep.subr.mxu0 0.0
        %2115 = vmatpush1.msra.mxu0 0.0
        %2116 = vmatprep.subr.mxu0 0.0
        %2117 = vmatpush1.msra.mxu0 0.0
        %2118 = vmatprep.mubr.f32.mxu0 0.0
        %v2119 = vand.u32 %v455, 4294901760
        %2120 = vmatmul.mubr.f32.gmra.mrb[0].mxu0 %v2119
        %v2121 = vpop.f32.mrb[0].mxu0
        %v2122 = vadd.f32 %v1954, %v2121
        %v2123 = vpop.f32.mrb[0].mxu0
        %v2124 = vadd.f32 %v1956, %v2123
        %2125 = vdwg.mxu0
        %v2126 = vand.u32 %v459, 4294901760
        %2127 = vmatprep.subr.mxu0 %v2126
        %v2128 = vand.u32 %v458, 4294901760
        %2129 = vmatpush1.msra.mxu0 %v2128
        %v2130 = vand.u32 %v463, 4294901760
        %2131 = vmatprep.subr.mxu0 %v2130
        %v2132 = vand.u32 %v462, 4294901760
        %2133 = vmatpush1.msra.mxu0 %v2132
        %v2134 = vand.u32 %v467, 4294901760
        %2135 = vmatprep.subr.mxu0 %v2134
        %v2136 = vand.u32 %v466, 4294901760
        %2137 = vmatpush1.msra.mxu0 %v2136
        %v2138 = vand.u32 %v471, 4294901760
        %2139 = vmatprep.subr.mxu0 %v2138
        %v2140 = vand.u32 %v470, 4294901760
        %2141 = vmatpush1.msra.mxu0 %v2140
        %v2142 = vand.u32 %v475, 4294901760
        %2143 = vmatprep.subr.mxu0 %v2142
        %v2144 = vand.u32 %v474, 4294901760
        %2145 = vmatpush1.msra.mxu0 %v2144
        %v2146 = vand.u32 %v479, 4294901760
        %2147 = vmatprep.subr.mxu0 %v2146
        %v2148 = vand.u32 %v478, 4294901760
        %2149 = vmatpush1.msra.mxu0 %v2148
        %v2150 = vand.u32 %v483, 4294901760
        %2151 = vmatprep.subr.mxu0 %v2150
        %v2152 = vand.u32 %v482, 4294901760
        %2153 = vmatpush1.msra.mxu0 %v2152
        %v2154 = vand.u32 %v487, 4294901760
        %2155 = vmatprep.subr.mxu0 %v2154
        %v2156 = vand.u32 %v486, 4294901760
        %2157 = vmatpush1.msra.mxu0 %v2156
        %v2158 = vand.u32 %v491, 4294901760
        %2159 = vmatprep.subr.mxu0 %v2158
        %v2160 = vand.u32 %v490, 4294901760
        %2161 = vmatpush1.msra.mxu0 %v2160
        %v2162 = vand.u32 %v495, 4294901760
        %2163 = vmatprep.subr.mxu0 %v2162
        %v2164 = vand.u32 %v494, 4294901760
        %2165 = vmatpush1.msra.mxu0 %v2164
        %v2166 = vand.u32 %v499, 4294901760
        %2167 = vmatprep.subr.mxu0 %v2166
        %v2168 = vand.u32 %v498, 4294901760
        %2169 = vmatpush1.msra.mxu0 %v2168
        %v2170 = vand.u32 %v503, 4294901760
        %2171 = vmatprep.subr.mxu0 %v2170
        %v2172 = vand.u32 %v502, 4294901760
        %2173 = vmatpush1.msra.mxu0 %v2172
        %v2174 = vand.u32 %v507, 4294901760
        %2175 = vmatprep.subr.mxu0 %v2174
        %v2176 = vand.u32 %v506, 4294901760
        %2177 = vmatpush1.msra.mxu0 %v2176
        %v2178 = vand.u32 %v511, 4294901760
        %2179 = vmatprep.subr.mxu0 %v2178
        %v2180 = vand.u32 %v510, 4294901760
        %2181 = vmatpush1.msra.mxu0 %v2180
        %v2182 = vand.u32 %v515, 4294901760
        %2183 = vmatprep.subr.mxu0 %v2182
        %v2184 = vand.u32 %v514, 4294901760
        %2185 = vmatpush1.msra.mxu0 %v2184
        %v2186 = vand.u32 %v519, 4294901760
        %2187 = vmatprep.subr.mxu0 %v2186
        %v2188 = vand.u32 %v518, 4294901760
        %2189 = vmatpush1.msra.mxu0 %v2188
        %2190 = vmatprep.subr.mxu0 0.0
        %2191 = vmatpush1.msra.mxu0 0.0
        %2192 = vmatprep.subr.mxu0 0.0
        %2193 = vmatpush1.msra.mxu0 0.0
        %2194 = vmatprep.subr.mxu0 0.0
        %2195 = vmatpush1.msra.mxu0 0.0
        %2196 = vmatprep.subr.mxu0 0.0
        %2197 = vmatpush1.msra.mxu0 0.0
        %2198 = vmatprep.subr.mxu0 0.0
        %2199 = vmatpush1.msra.mxu0 0.0
        %2200 = vmatprep.subr.mxu0 0.0
        %2201 = vmatpush1.msra.mxu0 0.0
        %2202 = vmatprep.subr.mxu0 0.0
        %2203 = vmatpush1.msra.mxu0 0.0
        %2204 = vmatprep.subr.mxu0 0.0
        %2205 = vmatpush1.msra.mxu0 0.0
        %2206 = vmatprep.subr.mxu0 0.0
        %2207 = vmatpush1.msra.mxu0 0.0
        %2208 = vmatprep.subr.mxu0 0.0
        %2209 = vmatpush1.msra.mxu0 0.0
        %2210 = vmatprep.subr.mxu0 0.0
        %2211 = vmatpush1.msra.mxu0 0.0
        %2212 = vmatprep.subr.mxu0 0.0
        %2213 = vmatpush1.msra.mxu0 0.0
        %2214 = vmatprep.subr.mxu0 0.0
        %2215 = vmatpush1.msra.mxu0 0.0
        %2216 = vmatprep.subr.mxu0 0.0
        %2217 = vmatpush1.msra.mxu0 0.0
        %2218 = vmatprep.subr.mxu0 0.0
        %2219 = vmatpush1.msra.mxu0 0.0
        %2220 = vmatprep.subr.mxu0 0.0
        %2221 = vmatpush1.msra.mxu0 0.0
        %2222 = vmatprep.mubr.f32.mxu0 0.0
        %v2223 = vand.u32 %v455, 4294901760
        %2224 = vmatmul.mubr.f32.gmra.mrb[0].mxu0 %v2223
        %v2225 = vpop.f32.mrb[0].mxu0
        %v2226 = vadd.f32 %v2122, %v2225
        %v2227 = vpop.f32.mrb[0].mxu0
        %v2228 = vadd.f32 %v2124, %v2227
        %2229 = vdwg.mxu0
        %2230 = vst [vmem:[%s454] sm:$0xff] %v1371
        %2231 = vst [vmem:[%s454 + $0x8] sm:$0xff] %v1373
        %2232 = vst [vmem:[%s454 + $0x10] sm:$0xff] %v2226
        %2233 = vst [vmem:[%s454 + $0x18] sm:$0xff] %v2228
        %v2234 = vld [vmem:[%s379] sm:$0xff]
        %s2235 = scalar_lea.vmem [#allocation2], 512
        %v2236 = vld [vmem:[%s2235] sm:$0xff]
        %v2237 = vld [vmem:[%s2235 + $0x8] sm:$0xff]
        %v2238 = vld [vmem:[%s2235 + $0x10] sm:$0xff]
        %v2239 = vld [vmem:[%s2235 + $0x18] sm:$0xff]
        %v2240 = vld [vmem:[%s2235 + $0x20] sm:$0xff]
        %v2241 = vld [vmem:[%s2235 + $0x28] sm:$0xff]
        %v2242 = vld [vmem:[%s2235 + $0x30] sm:$0xff]
        %v2243 = vld [vmem:[%s2235 + $0x38] sm:$0xff]
        %v2244 = vld [vmem:[%s2235 + $0x40] sm:$0xff]
        %v2245 = vld [vmem:[%s2235 + $0x48] sm:$0xff]
        %v2246 = vld [vmem:[%s2235 + $0x50] sm:$0xff]
        %v2247 = vld [vmem:[%s2235 + $0x58] sm:$0xff]
        %v2248 = vld [vmem:[%s2235 + $0x60] sm:$0xff]
        %v2249 = vld [vmem:[%s2235 + $0x68] sm:$0xff]
        %v2250 = vld [vmem:[%s2235 + $0x70] sm:$0xff]
        %v2251 = vld [vmem:[%s2235 + $0x78] sm:$0xff]
        %v2252 = vld [vmem:[%s2235 + $0x80] sm:$0xff]
        %v2253 = vld [vmem:[%s2235 + $0x88] sm:$0xff]
        %v2254 = vld [vmem:[%s2235 + $0x90] sm:$0xff]
        %v2255 = vld [vmem:[%s2235 + $0x98] sm:$0xff]
        %v2256 = vld [vmem:[%s2235 + $0xa0] sm:$0xff]
        %v2257 = vld [vmem:[%s2235 + $0xa8] sm:$0xff]
        %v2258 = vld [vmem:[%s2235 + $0xb0] sm:$0xff]
        %v2259 = vld [vmem:[%s2235 + $0xb8] sm:$0xff]
        %v2260 = vld [vmem:[%s2235 + $0xc0] sm:$0xff]
        %v2261 = vld [vmem:[%s2235 + $0xc8] sm:$0xff]
        %v2262 = vld [vmem:[%s2235 + $0xd0] sm:$0xff]
        %v2263 = vld [vmem:[%s2235 + $0xd8] sm:$0xff]
        %v2264 = vld [vmem:[%s2235 + $0xe0] sm:$0xff]
        %v2265 = vld [vmem:[%s2235 + $0xe8] sm:$0xff]
        %v2266 = vld [vmem:[%s2235 + $0xf0] sm:$0xff]
        %v2267 = vld [vmem:[%s2235 + $0xf8] sm:$0xff]
        %v2268 = vld [vmem:[%s2235 + $0x100] sm:$0xff]
        %v2269 = vld [vmem:[%s2235 + $0x108] sm:$0xff]
        %v2270 = vld [vmem:[%s2235 + $0x110] sm:$0xff]
        %v2271 = vld [vmem:[%s2235 + $0x118] sm:$0xff]
        %v2272 = vld [vmem:[%s2235 + $0x120] sm:$0xff]
        %v2273 = vld [vmem:[%s2235 + $0x128] sm:$0xff]
        %v2274 = vld [vmem:[%s2235 + $0x130] sm:$0xff]
        %v2275 = vld [vmem:[%s2235 + $0x138] sm:$0xff]
        %v2276 = vld [vmem:[%s2235 + $0x140] sm:$0xff]
        %v2277 = vld [vmem:[%s2235 + $0x148] sm:$0xff]
        %v2278 = vld [vmem:[%s2235 + $0x150] sm:$0xff]
        %v2279 = vld [vmem:[%s2235 + $0x158] sm:$0xff]
        %v2280 = vld [vmem:[%s2235 + $0x160] sm:$0xff]
        %v2281 = vld [vmem:[%s2235 + $0x168] sm:$0xff]
        %v2282 = vld [vmem:[%s2235 + $0x170] sm:$0xff]
        %v2283 = vld [vmem:[%s2235 + $0x178] sm:$0xff]
        %v2284 = vld [vmem:[%s2235 + $0x180] sm:$0xff]
        %v2285 = vld [vmem:[%s2235 + $0x188] sm:$0xff]
        %v2286 = vld [vmem:[%s2235 + $0x190] sm:$0xff]
        %v2287 = vld [vmem:[%s2235 + $0x198] sm:$0xff]
        %v2288 = vld [vmem:[%s2235 + $0x1a0] sm:$0xff]
        %v2289 = vld [vmem:[%s2235 + $0x1a8] sm:$0xff]
        %v2290 = vld [vmem:[%s2235 + $0x1b0] sm:$0xff]
        %v2291 = vld [vmem:[%s2235 + $0x1b8] sm:$0xff]
        %v2292 = vld [vmem:[%s2235 + $0x1c0] sm:$0xff]
        %v2293 = vld [vmem:[%s2235 + $0x1c8] sm:$0xff]
        %v2294 = vld [vmem:[%s2235 + $0x1d0] sm:$0xff]
        %v2295 = vld [vmem:[%s2235 + $0x1d8] sm:$0xff]
        %v2296 = vld [vmem:[%s2235 + $0x1e0] sm:$0xff]
        %v2297 = vld [vmem:[%s2235 + $0x1e8] sm:$0xff]
        %v2298 = vld [vmem:[%s2235 + $0x1f0] sm:$0xff]
        %v2299 = vld [vmem:[%s2235 + $0x1f8] sm:$0xff]
        %v2300 = vand.u32 %v2237, 4294901760
        %2301 = vmatprep.subr.mxu0 %v2300
        %v2302 = vand.u32 %v2236, 4294901760
        %2303 = vmatpush1.msra.mxu0 %v2302
        %v2304 = vand.u32 %v2241, 4294901760
        %2305 = vmatprep.subr.mxu0 %v2304
        %v2306 = vand.u32 %v2240, 4294901760
        %2307 = vmatpush1.msra.mxu0 %v2306
        %v2308 = vand.u32 %v2245, 4294901760
        %2309 = vmatprep.subr.mxu0 %v2308
        %v2310 = vand.u32 %v2244, 4294901760
        %2311 = vmatpush1.msra.mxu0 %v2310
        %v2312 = vand.u32 %v2249, 4294901760
        %2313 = vmatprep.subr.mxu0 %v2312
        %v2314 = vand.u32 %v2248, 4294901760
        %2315 = vmatpush1.msra.mxu0 %v2314
        %v2316 = vand.u32 %v2253, 4294901760
        %2317 = vmatprep.subr.mxu0 %v2316
        %v2318 = vand.u32 %v2252, 4294901760
        %2319 = vmatpush1.msra.mxu0 %v2318
        %v2320 = vand.u32 %v2257, 4294901760
        %2321 = vmatprep.subr.mxu0 %v2320
        %v2322 = vand.u32 %v2256, 4294901760
        %2323 = vmatpush1.msra.mxu0 %v2322
        %v2324 = vand.u32 %v2261, 4294901760
        %2325 = vmatprep.subr.mxu0 %v2324
        %v2326 = vand.u32 %v2260, 4294901760
        %2327 = vmatpush1.msra.mxu0 %v2326
        %v2328 = vand.u32 %v2265, 4294901760
        %2329 = vmatprep.subr.mxu0 %v2328
        %v2330 = vand.u32 %v2264, 4294901760
        %2331 = vmatpush1.msra.mxu0 %v2330
        %v2332 = vand.u32 %v2269, 4294901760
        %2333 = vmatprep.subr.mxu0 %v2332
        %v2334 = vand.u32 %v2268, 4294901760
        %2335 = vmatpush1.msra.mxu0 %v2334
        %v2336 = vand.u32 %v2273, 4294901760
        %2337 = vmatprep.subr.mxu0 %v2336
        %v2338 = vand.u32 %v2272, 4294901760
        %2339 = vmatpush1.msra.mxu0 %v2338
        %v2340 = vand.u32 %v2277, 4294901760
        %2341 = vmatprep.subr.mxu0 %v2340
        %v2342 = vand.u32 %v2276, 4294901760
        %2343 = vmatpush1.msra.mxu0 %v2342
        %v2344 = vand.u32 %v2281, 4294901760
        %2345 = vmatprep.subr.mxu0 %v2344
        %v2346 = vand.u32 %v2280, 4294901760
        %2347 = vmatpush1.msra.mxu0 %v2346
        %v2348 = vand.u32 %v2285, 4294901760
        %2349 = vmatprep.subr.mxu0 %v2348
        %v2350 = vand.u32 %v2284, 4294901760
        %2351 = vmatpush1.msra.mxu0 %v2350
        %v2352 = vand.u32 %v2289, 4294901760
        %2353 = vmatprep.subr.mxu0 %v2352
        %v2354 = vand.u32 %v2288, 4294901760
        %2355 = vmatpush1.msra.mxu0 %v2354
        %v2356 = vand.u32 %v2293, 4294901760
        %2357 = vmatprep.subr.mxu0 %v2356
        %v2358 = vand.u32 %v2292, 4294901760
        %2359 = vmatpush1.msra.mxu0 %v2358
        %v2360 = vand.u32 %v2297, 4294901760
        %2361 = vmatprep.subr.mxu0 %v2360
        %v2362 = vand.u32 %v2296, 4294901760
        %2363 = vmatpush1.msra.mxu0 %v2362
        %2364 = vmatprep.subr.mxu0 0.0
        %2365 = vmatpush1.msra.mxu0 0.0
        %2366 = vmatprep.subr.mxu0 0.0
        %2367 = vmatpush1.msra.mxu0 0.0
        %2368 = vmatprep.subr.mxu0 0.0
        %2369 = vmatpush1.msra.mxu0 0.0
        %2370 = vmatprep.subr.mxu0 0.0
        %2371 = vmatpush1.msra.mxu0 0.0
        %2372 = vmatprep.subr.mxu0 0.0
        %2373 = vmatpush1.msra.mxu0 0.0
        %2374 = vmatprep.subr.mxu0 0.0
        %2375 = vmatpush1.msra.mxu0 0.0
        %2376 = vmatprep.subr.mxu0 0.0
        %2377 = vmatpush1.msra.mxu0 0.0
        %2378 = vmatprep.subr.mxu0 0.0
        %2379 = vmatpush1.msra.mxu0 0.0
        %2380 = vmatprep.subr.mxu0 0.0
        %2381 = vmatpush1.msra.mxu0 0.0
        %2382 = vmatprep.subr.mxu0 0.0
        %2383 = vmatpush1.msra.mxu0 0.0
        %2384 = vmatprep.subr.mxu0 0.0
        %2385 = vmatpush1.msra.mxu0 0.0
        %2386 = vmatprep.subr.mxu0 0.0
        %2387 = vmatpush1.msra.mxu0 0.0
        %2388 = vmatprep.subr.mxu0 0.0
        %2389 = vmatpush1.msra.mxu0 0.0
        %2390 = vmatprep.subr.mxu0 0.0
        %2391 = vmatpush1.msra.mxu0 0.0
        %2392 = vmatprep.subr.mxu0 0.0
        %2393 = vmatpush1.msra.mxu0 0.0
        %2394 = vmatprep.subr.mxu0 0.0
        %2395 = vmatpush1.msra.mxu0 0.0
        %2396 = vmatprep.mubr.f32.mxu0 0.0
        %v2397 = vand.u32 %v2234, 4294901760
        %v2398 = vsub.f32 %v2234, %v2397
        %v2399 = vand.u32 %v2398, 4294901760
        %v2400 = vsub.f32 %v2398, %v2399
        %v2401 = vand.u32 %v2400, 4294901760
        %2402 = vmatmul.mubr.f32.gmra.mrb[0].mxu0 %v2401
        %v2403 = vpop.f32.mrb[0].mxu0
        %v2404 = vadd.f32 0.0, %v2403
        %v2405 = vpop.f32.mrb[0].mxu0
        %v2406 = vadd.f32 0.0, %v2405
        %2407 = vdwg.mxu0
        %v2408 = vand.u32 %v2237, 4294901760
        %v2409 = vsub.f32 %v2237, %v2408
        %v2410 = vand.u32 %v2409, 4294901760
        %v2411 = vsub.f32 %v2409, %v2410
        %v2412 = vand.u32 %v2411, 4294901760
        %2413 = vmatprep.subr.mxu0 %v2412
        %v2414 = vand.u32 %v2236, 4294901760
        %v2415 = vsub.f32 %v2236, %v2414
        %v2416 = vand.u32 %v2415, 4294901760
        %v2417 = vsub.f32 %v2415, %v2416
        %v2418 = vand.u32 %v2417, 4294901760
        %2419 = vmatpush1.msra.mxu0 %v2418
        %v2420 = vand.u32 %v2241, 4294901760
        %v2421 = vsub.f32 %v2241, %v2420
        %v2422 = vand.u32 %v2421, 4294901760
        %v2423 = vsub.f32 %v2421, %v2422
        %v2424 = vand.u32 %v2423, 4294901760
        %2425 = vmatprep.subr.mxu0 %v2424
        %v2426 = vand.u32 %v2240, 4294901760
        %v2427 = vsub.f32 %v2240, %v2426
        %v2428 = vand.u32 %v2427, 4294901760
        %v2429 = vsub.f32 %v2427, %v2428
        %v2430 = vand.u32 %v2429, 4294901760
        %2431 = vmatpush1.msra.mxu0 %v2430
        %v2432 = vand.u32 %v2245, 4294901760
        %v2433 = vsub.f32 %v2245, %v2432
        %v2434 = vand.u32 %v2433, 4294901760
        %v2435 = vsub.f32 %v2433, %v2434
        %v2436 = vand.u32 %v2435, 4294901760
        %2437 = vmatprep.subr.mxu0 %v2436
        %v2438 = vand.u32 %v2244, 4294901760
        %v2439 = vsub.f32 %v2244, %v2438
        %v2440 = vand.u32 %v2439, 4294901760
        %v2441 = vsub.f32 %v2439, %v2440
        %v2442 = vand.u32 %v2441, 4294901760
        %2443 = vmatpush1.msra.mxu0 %v2442
        %v2444 = vand.u32 %v2249, 4294901760
        %v2445 = vsub.f32 %v2249, %v2444
        %v2446 = vand.u32 %v2445, 4294901760
        %v2447 = vsub.f32 %v2445, %v2446
        %v2448 = vand.u32 %v2447, 4294901760
        %2449 = vmatprep.subr.mxu0 %v2448
        %v2450 = vand.u32 %v2248, 4294901760
        %v2451 = vsub.f32 %v2248, %v2450
        %v2452 = vand.u32 %v2451, 4294901760
        %v2453 = vsub.f32 %v2451, %v2452
        %v2454 = vand.u32 %v2453, 4294901760
        %2455 = vmatpush1.msra.mxu0 %v2454
        %v2456 = vand.u32 %v2253, 4294901760
        %v2457 = vsub.f32 %v2253, %v2456
        %v2458 = vand.u32 %v2457, 4294901760
        %v2459 = vsub.f32 %v2457, %v2458
        %v2460 = vand.u32 %v2459, 4294901760
        %2461 = vmatprep.subr.mxu0 %v2460
        %v2462 = vand.u32 %v2252, 4294901760
        %v2463 = vsub.f32 %v2252, %v2462
        %v2464 = vand.u32 %v2463, 4294901760
        %v2465 = vsub.f32 %v2463, %v2464
        %v2466 = vand.u32 %v2465, 4294901760
        %2467 = vmatpush1.msra.mxu0 %v2466
        %v2468 = vand.u32 %v2257, 4294901760
        %v2469 = vsub.f32 %v2257, %v2468
        %v2470 = vand.u32 %v2469, 4294901760
        %v2471 = vsub.f32 %v2469, %v2470
        %v2472 = vand.u32 %v2471, 4294901760
        %2473 = vmatprep.subr.mxu0 %v2472
        %v2474 = vand.u32 %v2256, 4294901760
        %v2475 = vsub.f32 %v2256, %v2474
        %v2476 = vand.u32 %v2475, 4294901760
        %v2477 = vsub.f32 %v2475, %v2476
        %v2478 = vand.u32 %v2477, 4294901760
        %2479 = vmatpush1.msra.mxu0 %v2478
        %v2480 = vand.u32 %v2261, 4294901760
        %v2481 = vsub.f32 %v2261, %v2480
        %v2482 = vand.u32 %v2481, 4294901760
        %v2483 = vsub.f32 %v2481, %v2482
        %v2484 = vand.u32 %v2483, 4294901760
        %2485 = vmatprep.subr.mxu0 %v2484
        %v2486 = vand.u32 %v2260, 4294901760
        %v2487 = vsub.f32 %v2260, %v2486
        %v2488 = vand.u32 %v2487, 4294901760
        %v2489 = vsub.f32 %v2487, %v2488
        %v2490 = vand.u32 %v2489, 4294901760
        %2491 = vmatpush1.msra.mxu0 %v2490
        %v2492 = vand.u32 %v2265, 4294901760
        %v2493 = vsub.f32 %v2265, %v2492
        %v2494 = vand.u32 %v2493, 4294901760
        %v2495 = vsub.f32 %v2493, %v2494
        %v2496 = vand.u32 %v2495, 4294901760
        %2497 = vmatprep.subr.mxu0 %v2496
        %v2498 = vand.u32 %v2264, 4294901760
        %v2499 = vsub.f32 %v2264, %v2498
        %v2500 = vand.u32 %v2499, 4294901760
        %v2501 = vsub.f32 %v2499, %v2500
        %v2502 = vand.u32 %v2501, 4294901760
        %2503 = vmatpush1.msra.mxu0 %v2502
        %v2504 = vand.u32 %v2269, 4294901760
        %v2505 = vsub.f32 %v2269, %v2504
        %v2506 = vand.u32 %v2505, 4294901760
        %v2507 = vsub.f32 %v2505, %v2506
        %v2508 = vand.u32 %v2507, 4294901760
        %2509 = vmatprep.subr.mxu0 %v2508
        %v2510 = vand.u32 %v2268, 4294901760
        %v2511 = vsub.f32 %v2268, %v2510
        %v2512 = vand.u32 %v2511, 4294901760
        %v2513 = vsub.f32 %v2511, %v2512
        %v2514 = vand.u32 %v2513, 4294901760
        %2515 = vmatpush1.msra.mxu0 %v2514
        %v2516 = vand.u32 %v2273, 4294901760
        %v2517 = vsub.f32 %v2273, %v2516
        %v2518 = vand.u32 %v2517, 4294901760
        %v2519 = vsub.f32 %v2517, %v2518
        %v2520 = vand.u32 %v2519, 4294901760
        %2521 = vmatprep.subr.mxu0 %v2520
        %v2522 = vand.u32 %v2272, 4294901760
        %v2523 = vsub.f32 %v2272, %v2522
        %v2524 = vand.u32 %v2523, 4294901760
        %v2525 = vsub.f32 %v2523, %v2524
        %v2526 = vand.u32 %v2525, 4294901760
        %2527 = vmatpush1.msra.mxu0 %v2526
        %v2528 = vand.u32 %v2277, 4294901760
        %v2529 = vsub.f32 %v2277, %v2528
        %v2530 = vand.u32 %v2529, 4294901760
        %v2531 = vsub.f32 %v2529, %v2530
        %v2532 = vand.u32 %v2531, 4294901760
        %2533 = vmatprep.subr.mxu0 %v2532
        %v2534 = vand.u32 %v2276, 4294901760
        %v2535 = vsub.f32 %v2276, %v2534
        %v2536 = vand.u32 %v2535, 4294901760
        %v2537 = vsub.f32 %v2535, %v2536
        %v2538 = vand.u32 %v2537, 4294901760
        %2539 = vmatpush1.msra.mxu0 %v2538
        %v2540 = vand.u32 %v2281, 4294901760
        %v2541 = vsub.f32 %v2281, %v2540
        %v2542 = vand.u32 %v2541, 4294901760
        %v2543 = vsub.f32 %v2541, %v2542
        %v2544 = vand.u32 %v2543, 4294901760
        %2545 = vmatprep.subr.mxu0 %v2544
        %v2546 = vand.u32 %v2280, 4294901760
        %v2547 = vsub.f32 %v2280, %v2546
        %v2548 = vand.u32 %v2547, 4294901760
        %v2549 = vsub.f32 %v2547, %v2548
        %v2550 = vand.u32 %v2549, 4294901760
        %2551 = vmatpush1.msra.mxu0 %v2550
        %v2552 = vand.u32 %v2285, 4294901760
        %v2553 = vsub.f32 %v2285, %v2552
        %v2554 = vand.u32 %v2553, 4294901760
        %v2555 = vsub.f32 %v2553, %v2554
        %v2556 = vand.u32 %v2555, 4294901760
        %2557 = vmatprep.subr.mxu0 %v2556
        %v2558 = vand.u32 %v2284, 4294901760
        %v2559 = vsub.f32 %v2284, %v2558
        %v2560 = vand.u32 %v2559, 4294901760
        %v2561 = vsub.f32 %v2559, %v2560
        %v2562 = vand.u32 %v2561, 4294901760
        %2563 = vmatpush1.msra.mxu0 %v2562
        %v2564 = vand.u32 %v2289, 4294901760
        %v2565 = vsub.f32 %v2289, %v2564
        %v2566 = vand.u32 %v2565, 4294901760
        %v2567 = vsub.f32 %v2565, %v2566
        %v2568 = vand.u32 %v2567, 4294901760
        %2569 = vmatprep.subr.mxu0 %v2568
        %v2570 = vand.u32 %v2288, 4294901760
        %v2571 = vsub.f32 %v2288, %v2570
        %v2572 = vand.u32 %v2571, 4294901760
        %v2573 = vsub.f32 %v2571, %v2572
        %v2574 = vand.u32 %v2573, 4294901760
        %2575 = vmatpush1.msra.mxu0 %v2574
        %v2576 = vand.u32 %v2293, 4294901760
        %v2577 = vsub.f32 %v2293, %v2576
        %v2578 = vand.u32 %v2577, 4294901760
        %v2579 = vsub.f32 %v2577, %v2578
        %v2580 = vand.u32 %v2579, 4294901760
        %2581 = vmatprep.subr.mxu0 %v2580
        %v2582 = vand.u32 %v2292, 4294901760
        %v2583 = vsub.f32 %v2292, %v2582
        %v2584 = vand.u32 %v2583, 4294901760
        %v2585 = vsub.f32 %v2583, %v2584
        %v2586 = vand.u32 %v2585, 4294901760
        %2587 = vmatpush1.msra.mxu0 %v2586
        %v2588 = vand.u32 %v2297, 4294901760
        %v2589 = vsub.f32 %v2297, %v2588
        %v2590 = vand.u32 %v2589, 4294901760
        %v2591 = vsub.f32 %v2589, %v2590
        %v2592 = vand.u32 %v2591, 4294901760
        %2593 = vmatprep.subr.mxu0 %v2592
        %v2594 = vand.u32 %v2296, 4294901760
        %v2595 = vsub.f32 %v2296, %v2594
        %v2596 = vand.u32 %v2595, 4294901760
        %v2597 = vsub.f32 %v2595, %v2596
        %v2598 = vand.u32 %v2597, 4294901760
        %2599 = vmatpush1.msra.mxu0 %v2598
        %2600 = vmatprep.subr.mxu0 0.0
        %2601 = vmatpush1.msra.mxu0 0.0
        %2602 = vmatprep.subr.mxu0 0.0
        %2603 = vmatpush1.msra.mxu0 0.0
        %2604 = vmatprep.subr.mxu0 0.0
        %2605 = vmatpush1.msra.mxu0 0.0
        %2606 = vmatprep.subr.mxu0 0.0
        %2607 = vmatpush1.msra.mxu0 0.0
        %2608 = vmatprep.subr.mxu0 0.0
        %2609 = vmatpush1.msra.mxu0 0.0
        %2610 = vmatprep.subr.mxu0 0.0
        %2611 = vmatpush1.msra.mxu0 0.0
        %2612 = vmatprep.subr.mxu0 0.0
        %2613 = vmatpush1.msra.mxu0 0.0
        %2614 = vmatprep.subr.mxu0 0.0
        %2615 = vmatpush1.msra.mxu0 0.0
        %2616 = vmatprep.subr.mxu0 0.0
        %2617 = vmatpush1.msra.mxu0 0.0
        %2618 = vmatprep.subr.mxu0 0.0
        %2619 = vmatpush1.msra.mxu0 0.0
        %2620 = vmatprep.subr.mxu0 0.0
        %2621 = vmatpush1.msra.mxu0 0.0
        %2622 = vmatprep.subr.mxu0 0.0
        %2623 = vmatpush1.msra.mxu0 0.0
        %2624 = vmatprep.subr.mxu0 0.0
        %2625 = vmatpush1.msra.mxu0 0.0
        %2626 = vmatprep.subr.mxu0 0.0
        %2627 = vmatpush1.msra.mxu0 0.0
        %2628 = vmatprep.subr.mxu0 0.0
        %2629 = vmatpush1.msra.mxu0 0.0
        %2630 = vmatprep.subr.mxu0 0.0
        %2631 = vmatpush1.msra.mxu0 0.0
        %2632 = vmatprep.mubr.f32.mxu0 0.0
        %v2633 = vand.u32 %v2234, 4294901760
        %2634 = vmatmul.mubr.f32.gmra.mrb[0].mxu0 %v2633
        %v2635 = vpop.f32.mrb[0].mxu0
        %v2636 = vadd.f32 %v2404, %v2635
        %v2637 = vpop.f32.mrb[0].mxu0
        %v2638 = vadd.f32 %v2406, %v2637
        %2639 = vdwg.mxu0
        %v2640 = vand.u32 %v2237, 4294901760
        %v2641 = vsub.f32 %v2237, %v2640
        %2642 = vmatprep.subr.mxu0 %v2641
        %v2643 = vand.u32 %v2236, 4294901760
        %v2644 = vsub.f32 %v2236, %v2643
        %2645 = vmatpush1.msra.mxu0 %v2644
        %v2646 = vand.u32 %v2241, 4294901760
        %v2647 = vsub.f32 %v2241, %v2646
        %2648 = vmatprep.subr.mxu0 %v2647
        %v2649 = vand.u32 %v2240, 4294901760
        %v2650 = vsub.f32 %v2240, %v2649
        %2651 = vmatpush1.msra.mxu0 %v2650
        %v2652 = vand.u32 %v2245, 4294901760
        %v2653 = vsub.f32 %v2245, %v2652
        %2654 = vmatprep.subr.mxu0 %v2653
        %v2655 = vand.u32 %v2244, 4294901760
        %v2656 = vsub.f32 %v2244, %v2655
        %2657 = vmatpush1.msra.mxu0 %v2656
        %v2658 = vand.u32 %v2249, 4294901760
        %v2659 = vsub.f32 %v2249, %v2658
        %2660 = vmatprep.subr.mxu0 %v2659
        %v2661 = vand.u32 %v2248, 4294901760
        %v2662 = vsub.f32 %v2248, %v2661
        %2663 = vmatpush1.msra.mxu0 %v2662
        %v2664 = vand.u32 %v2253, 4294901760
        %v2665 = vsub.f32 %v2253, %v2664
        %2666 = vmatprep.subr.mxu0 %v2665
        %v2667 = vand.u32 %v2252, 4294901760
        %v2668 = vsub.f32 %v2252, %v2667
        %2669 = vmatpush1.msra.mxu0 %v2668
        %v2670 = vand.u32 %v2257, 4294901760
        %v2671 = vsub.f32 %v2257, %v2670
        %2672 = vmatprep.subr.mxu0 %v2671
        %v2673 = vand.u32 %v2256, 4294901760
        %v2674 = vsub.f32 %v2256, %v2673
        %2675 = vmatpush1.msra.mxu0 %v2674
        %v2676 = vand.u32 %v2261, 4294901760
        %v2677 = vsub.f32 %v2261, %v2676
        %2678 = vmatprep.subr.mxu0 %v2677
        %v2679 = vand.u32 %v2260, 4294901760
        %v2680 = vsub.f32 %v2260, %v2679
        %2681 = vmatpush1.msra.mxu0 %v2680
        %v2682 = vand.u32 %v2265, 4294901760
        %v2683 = vsub.f32 %v2265, %v2682
        %2684 = vmatprep.subr.mxu0 %v2683
        %v2685 = vand.u32 %v2264, 4294901760
        %v2686 = vsub.f32 %v2264, %v2685
        %2687 = vmatpush1.msra.mxu0 %v2686
        %v2688 = vand.u32 %v2269, 4294901760
        %v2689 = vsub.f32 %v2269, %v2688
        %2690 = vmatprep.subr.mxu0 %v2689
        %v2691 = vand.u32 %v2268, 4294901760
        %v2692 = vsub.f32 %v2268, %v2691
        %2693 = vmatpush1.msra.mxu0 %v2692
        %v2694 = vand.u32 %v2273, 4294901760
        %v2695 = vsub.f32 %v2273, %v2694
        %2696 = vmatprep.subr.mxu0 %v2695
        %v2697 = vand.u32 %v2272, 4294901760
        %v2698 = vsub.f32 %v2272, %v2697
        %2699 = vmatpush1.msra.mxu0 %v2698
        %v2700 = vand.u32 %v2277, 4294901760
        %v2701 = vsub.f32 %v2277, %v2700
        %2702 = vmatprep.subr.mxu0 %v2701
        %v2703 = vand.u32 %v2276, 4294901760
        %v2704 = vsub.f32 %v2276, %v2703
        %2705 = vmatpush1.msra.mxu0 %v2704
        %v2706 = vand.u32 %v2281, 4294901760
        %v2707 = vsub.f32 %v2281, %v2706
        %2708 = vmatprep.subr.mxu0 %v2707
        %v2709 = vand.u32 %v2280, 4294901760
        %v2710 = vsub.f32 %v2280, %v2709
        %2711 = vmatpush1.msra.mxu0 %v2710
        %v2712 = vand.u32 %v2285, 4294901760
        %v2713 = vsub.f32 %v2285, %v2712
        %2714 = vmatprep.subr.mxu0 %v2713
        %v2715 = vand.u32 %v2284, 4294901760
        %v2716 = vsub.f32 %v2284, %v2715
        %2717 = vmatpush1.msra.mxu0 %v2716
        %v2718 = vand.u32 %v2289, 4294901760
        %v2719 = vsub.f32 %v2289, %v2718
        %2720 = vmatprep.subr.mxu0 %v2719
        %v2721 = vand.u32 %v2288, 4294901760
        %v2722 = vsub.f32 %v2288, %v2721
        %2723 = vmatpush1.msra.mxu0 %v2722
        %v2724 = vand.u32 %v2293, 4294901760
        %v2725 = vsub.f32 %v2293, %v2724
        %2726 = vmatprep.subr.mxu0 %v2725
        %v2727 = vand.u32 %v2292, 4294901760
        %v2728 = vsub.f32 %v2292, %v2727
        %2729 = vmatpush1.msra.mxu0 %v2728
        %v2730 = vand.u32 %v2297, 4294901760
        %v2731 = vsub.f32 %v2297, %v2730
        %2732 = vmatprep.subr.mxu0 %v2731
        %v2733 = vand.u32 %v2296, 4294901760
        %v2734 = vsub.f32 %v2296, %v2733
        %2735 = vmatpush1.msra.mxu0 %v2734
        %2736 = vmatprep.subr.mxu0 0.0
        %2737 = vmatpush1.msra.mxu0 0.0
        %2738 = vmatprep.subr.mxu0 0.0
        %2739 = vmatpush1.msra.mxu0 0.0
        %2740 = vmatprep.subr.mxu0 0.0
        %2741 = vmatpush1.msra.mxu0 0.0
        %2742 = vmatprep.subr.mxu0 0.0
        %2743 = vmatpush1.msra.mxu0 0.0
        %2744 = vmatprep.subr.mxu0 0.0
        %2745 = vmatpush1.msra.mxu0 0.0
        %2746 = vmatprep.subr.mxu0 0.0
        %2747 = vmatpush1.msra.mxu0 0.0
        %2748 = vmatprep.subr.mxu0 0.0
        %2749 = vmatpush1.msra.mxu0 0.0
        %2750 = vmatprep.subr.mxu0 0.0
        %2751 = vmatpush1.msra.mxu0 0.0
        %2752 = vmatprep.subr.mxu0 0.0
        %2753 = vmatpush1.msra.mxu0 0.0
        %2754 = vmatprep.subr.mxu0 0.0
        %2755 = vmatpush1.msra.mxu0 0.0
        %2756 = vmatprep.subr.mxu0 0.0
        %2757 = vmatpush1.msra.mxu0 0.0
        %2758 = vmatprep.subr.mxu0 0.0
        %2759 = vmatpush1.msra.mxu0 0.0
        %2760 = vmatprep.subr.mxu0 0.0
        %2761 = vmatpush1.msra.mxu0 0.0
        %2762 = vmatprep.subr.mxu0 0.0
        %2763 = vmatpush1.msra.mxu0 0.0
        %2764 = vmatprep.subr.mxu0 0.0
        %2765 = vmatpush1.msra.mxu0 0.0
        %2766 = vmatprep.subr.mxu0 0.0
        %2767 = vmatpush1.msra.mxu0 0.0
        %2768 = vmatprep.mubr.f32.mxu0 0.0
        %v2769 = vand.u32 %v2234, 4294901760
        %v2770 = vsub.f32 %v2234, %v2769
        %2771 = vmatmul.mubr.f32.gmra.mrb[0].mxu0 %v2770
        %v2772 = vpop.f32.mrb[0].mxu0
        %v2773 = vadd.f32 %v2636, %v2772
        %v2774 = vpop.f32.mrb[0].mxu0
        %v2775 = vadd.f32 %v2638, %v2774
        %2776 = vdwg.mxu0
        %v2777 = vand.u32 %v2237, 4294901760
        %2778 = vmatprep.subr.mxu0 %v2777
        %v2779 = vand.u32 %v2236, 4294901760
        %2780 = vmatpush1.msra.mxu0 %v2779
        %v2781 = vand.u32 %v2241, 4294901760
        %2782 = vmatprep.subr.mxu0 %v2781
        %v2783 = vand.u32 %v2240, 4294901760
        %2784 = vmatpush1.msra.mxu0 %v2783
        %v2785 = vand.u32 %v2245, 4294901760
        %2786 = vmatprep.subr.mxu0 %v2785
        %v2787 = vand.u32 %v2244, 4294901760
        %2788 = vmatpush1.msra.mxu0 %v2787
        %v2789 = vand.u32 %v2249, 4294901760
        %2790 = vmatprep.subr.mxu0 %v2789
        %v2791 = vand.u32 %v2248, 4294901760
        %2792 = vmatpush1.msra.mxu0 %v2791
        %v2793 = vand.u32 %v2253, 4294901760
        %2794 = vmatprep.subr.mxu0 %v2793
        %v2795 = vand.u32 %v2252, 4294901760
        %2796 = vmatpush1.msra.mxu0 %v2795
        %v2797 = vand.u32 %v2257, 4294901760
        %2798 = vmatprep.subr.mxu0 %v2797
        %v2799 = vand.u32 %v2256, 4294901760
        %2800 = vmatpush1.msra.mxu0 %v2799
        %v2801 = vand.u32 %v2261, 4294901760
        %2802 = vmatprep.subr.mxu0 %v2801
        %v2803 = vand.u32 %v2260, 4294901760
        %2804 = vmatpush1.msra.mxu0 %v2803
        %v2805 = vand.u32 %v2265, 4294901760
        %2806 = vmatprep.subr.mxu0 %v2805
        %v2807 = vand.u32 %v2264, 4294901760
        %2808 = vmatpush1.msra.mxu0 %v2807
        %v2809 = vand.u32 %v2269, 4294901760
        %2810 = vmatprep.subr.mxu0 %v2809
        %v2811 = vand.u32 %v2268, 4294901760
        %2812 = vmatpush1.msra.mxu0 %v2811
        %v2813 = vand.u32 %v2273, 4294901760
        %2814 = vmatprep.subr.mxu0 %v2813
        %v2815 = vand.u32 %v2272, 4294901760
        %2816 = vmatpush1.msra.mxu0 %v2815
        %v2817 = vand.u32 %v2277, 4294901760
        %2818 = vmatprep.subr.mxu0 %v2817
        %v2819 = vand.u32 %v2276, 4294901760
        %2820 = vmatpush1.msra.mxu0 %v2819
        %v2821 = vand.u32 %v2281, 4294901760
        %2822 = vmatprep.subr.mxu0 %v2821
        %v2823 = vand.u32 %v2280, 4294901760
        %2824 = vmatpush1.msra.mxu0 %v2823
        %v2825 = vand.u32 %v2285, 4294901760
        %2826 = vmatprep.subr.mxu0 %v2825
        %v2827 = vand.u32 %v2284, 4294901760
        %2828 = vmatpush1.msra.mxu0 %v2827
        %v2829 = vand.u32 %v2289, 4294901760
        %2830 = vmatprep.subr.mxu0 %v2829
        %v2831 = vand.u32 %v2288, 4294901760
        %2832 = vmatpush1.msra.mxu0 %v2831
        %v2833 = vand.u32 %v2293, 4294901760
        %2834 = vmatprep.subr.mxu0 %v2833
        %v2835 = vand.u32 %v2292, 4294901760
        %2836 = vmatpush1.msra.mxu0 %v2835
        %v2837 = vand.u32 %v2297, 4294901760
        %2838 = vmatprep.subr.mxu0 %v2837
        %v2839 = vand.u32 %v2296, 4294901760
        %2840 = vmatpush1.msra.mxu0 %v2839
        %2841 = vmatprep.subr.mxu0 0.0
        %2842 = vmatpush1.msra.mxu0 0.0
        %2843 = vmatprep.subr.mxu0 0.0
        %2844 = vmatpush1.msra.mxu0 0.0
        %2845 = vmatprep.subr.mxu0 0.0
        %2846 = vmatpush1.msra.mxu0 0.0
        %2847 = vmatprep.subr.mxu0 0.0
        %2848 = vmatpush1.msra.mxu0 0.0
        %2849 = vmatprep.subr.mxu0 0.0
        %2850 = vmatpush1.msra.mxu0 0.0
        %2851 = vmatprep.subr.mxu0 0.0
        %2852 = vmatpush1.msra.mxu0 0.0
        %2853 = vmatprep.subr.mxu0 0.0
        %2854 = vmatpush1.msra.mxu0 0.0
        %2855 = vmatprep.subr.mxu0 0.0
        %2856 = vmatpush1.msra.mxu0 0.0
        %2857 = vmatprep.subr.mxu0 0.0
        %2858 = vmatpush1.msra.mxu0 0.0
        %2859 = vmatprep.subr.mxu0 0.0
        %2860 = vmatpush1.msra.mxu0 0.0
        %2861 = vmatprep.subr.mxu0 0.0
        %2862 = vmatpush1.msra.mxu0 0.0
        %2863 = vmatprep.subr.mxu0 0.0
        %2864 = vmatpush1.msra.mxu0 0.0
        %2865 = vmatprep.subr.mxu0 0.0
        %2866 = vmatpush1.msra.mxu0 0.0
        %2867 = vmatprep.subr.mxu0 0.0
        %2868 = vmatpush1.msra.mxu0 0.0
        %2869 = vmatprep.subr.mxu0 0.0
        %2870 = vmatpush1.msra.mxu0 0.0
        %2871 = vmatprep.subr.mxu0 0.0
        %2872 = vmatpush1.msra.mxu0 0.0
        %2873 = vmatprep.mubr.f32.mxu0 0.0
        %v2874 = vand.u32 %v2234, 4294901760
        %v2875 = vsub.f32 %v2234, %v2874
        %v2876 = vand.u32 %v2875, 4294901760
        %2877 = vmatmul.mubr.f32.gmra.mrb[0].mxu0 %v2876
        %v2878 = vpop.f32.mrb[0].mxu0
        %v2879 = vadd.f32 %v2773, %v2878
        %v2880 = vpop.f32.mrb[0].mxu0
        %v2881 = vadd.f32 %v2775, %v2880
        %2882 = vdwg.mxu0
        %v2883 = vand.u32 %v2237, 4294901760
        %v2884 = vsub.f32 %v2237, %v2883
        %v2885 = vand.u32 %v2884, 4294901760
        %2886 = vmatprep.subr.mxu0 %v2885
        %v2887 = vand.u32 %v2236, 4294901760
        %v2888 = vsub.f32 %v2236, %v2887
        %v2889 = vand.u32 %v2888, 4294901760
        %2890 = vmatpush1.msra.mxu0 %v2889
        %v2891 = vand.u32 %v2241, 4294901760
        %v2892 = vsub.f32 %v2241, %v2891
        %v2893 = vand.u32 %v2892, 4294901760
        %2894 = vmatprep.subr.mxu0 %v2893
        %v2895 = vand.u32 %v2240, 4294901760
        %v2896 = vsub.f32 %v2240, %v2895
        %v2897 = vand.u32 %v2896, 4294901760
        %2898 = vmatpush1.msra.mxu0 %v2897
        %v2899 = vand.u32 %v2245, 4294901760
        %v2900 = vsub.f32 %v2245, %v2899
        %v2901 = vand.u32 %v2900, 4294901760
        %2902 = vmatprep.subr.mxu0 %v2901
        %v2903 = vand.u32 %v2244, 4294901760
        %v2904 = vsub.f32 %v2244, %v2903
        %v2905 = vand.u32 %v2904, 4294901760
        %2906 = vmatpush1.msra.mxu0 %v2905
        %v2907 = vand.u32 %v2249, 4294901760
        %v2908 = vsub.f32 %v2249, %v2907
        %v2909 = vand.u32 %v2908, 4294901760
        %2910 = vmatprep.subr.mxu0 %v2909
        %v2911 = vand.u32 %v2248, 4294901760
        %v2912 = vsub.f32 %v2248, %v2911
        %v2913 = vand.u32 %v2912, 4294901760
        %2914 = vmatpush1.msra.mxu0 %v2913
        %v2915 = vand.u32 %v2253, 4294901760
        %v2916 = vsub.f32 %v2253, %v2915
        %v2917 = vand.u32 %v2916, 4294901760
        %2918 = vmatprep.subr.mxu0 %v2917
        %v2919 = vand.u32 %v2252, 4294901760
        %v2920 = vsub.f32 %v2252, %v2919
        %v2921 = vand.u32 %v2920, 4294901760
        %2922 = vmatpush1.msra.mxu0 %v2921
        %v2923 = vand.u32 %v2257, 4294901760
        %v2924 = vsub.f32 %v2257, %v2923
        %v2925 = vand.u32 %v2924, 4294901760
        %2926 = vmatprep.subr.mxu0 %v2925
        %v2927 = vand.u32 %v2256, 4294901760
        %v2928 = vsub.f32 %v2256, %v2927
        %v2929 = vand.u32 %v2928, 4294901760
        %2930 = vmatpush1.msra.mxu0 %v2929
        %v2931 = vand.u32 %v2261, 4294901760
        %v2932 = vsub.f32 %v2261, %v2931
        %v2933 = vand.u32 %v2932, 4294901760
        %2934 = vmatprep.subr.mxu0 %v2933
        %v2935 = vand.u32 %v2260, 4294901760
        %v2936 = vsub.f32 %v2260, %v2935
        %v2937 = vand.u32 %v2936, 4294901760
        %2938 = vmatpush1.msra.mxu0 %v2937
        %v2939 = vand.u32 %v2265, 4294901760
        %v2940 = vsub.f32 %v2265, %v2939
        %v2941 = vand.u32 %v2940, 4294901760
        %2942 = vmatprep.subr.mxu0 %v2941
        %v2943 = vand.u32 %v2264, 4294901760
        %v2944 = vsub.f32 %v2264, %v2943
        %v2945 = vand.u32 %v2944, 4294901760
        %2946 = vmatpush1.msra.mxu0 %v2945
        %v2947 = vand.u32 %v2269, 4294901760
        %v2948 = vsub.f32 %v2269, %v2947
        %v2949 = vand.u32 %v2948, 4294901760
        %2950 = vmatprep.subr.mxu0 %v2949
        %v2951 = vand.u32 %v2268, 4294901760
        %v2952 = vsub.f32 %v2268, %v2951
        %v2953 = vand.u32 %v2952, 4294901760
        %2954 = vmatpush1.msra.mxu0 %v2953
        %v2955 = vand.u32 %v2273, 4294901760
        %v2956 = vsub.f32 %v2273, %v2955
        %v2957 = vand.u32 %v2956, 4294901760
        %2958 = vmatprep.subr.mxu0 %v2957
        %v2959 = vand.u32 %v2272, 4294901760
        %v2960 = vsub.f32 %v2272, %v2959
        %v2961 = vand.u32 %v2960, 4294901760
        %2962 = vmatpush1.msra.mxu0 %v2961
        %v2963 = vand.u32 %v2277, 4294901760
        %v2964 = vsub.f32 %v2277, %v2963
        %v2965 = vand.u32 %v2964, 4294901760
        %2966 = vmatprep.subr.mxu0 %v2965
        %v2967 = vand.u32 %v2276, 4294901760
        %v2968 = vsub.f32 %v2276, %v2967
        %v2969 = vand.u32 %v2968, 4294901760
        %2970 = vmatpush1.msra.mxu0 %v2969
        %v2971 = vand.u32 %v2281, 4294901760
        %v2972 = vsub.f32 %v2281, %v2971
        %v2973 = vand.u32 %v2972, 4294901760
        %2974 = vmatprep.subr.mxu0 %v2973
        %v2975 = vand.u32 %v2280, 4294901760
        %v2976 = vsub.f32 %v2280, %v2975
        %v2977 = vand.u32 %v2976, 4294901760
        %2978 = vmatpush1.msra.mxu0 %v2977
        %v2979 = vand.u32 %v2285, 4294901760
        %v2980 = vsub.f32 %v2285, %v2979
        %v2981 = vand.u32 %v2980, 4294901760
        %2982 = vmatprep.subr.mxu0 %v2981
        %v2983 = vand.u32 %v2284, 4294901760
        %v2984 = vsub.f32 %v2284, %v2983
        %v2985 = vand.u32 %v2984, 4294901760
        %2986 = vmatpush1.msra.mxu0 %v2985
        %v2987 = vand.u32 %v2289, 4294901760
        %v2988 = vsub.f32 %v2289, %v2987
        %v2989 = vand.u32 %v2988, 4294901760
        %2990 = vmatprep.subr.mxu0 %v2989
        %v2991 = vand.u32 %v2288, 4294901760
        %v2992 = vsub.f32 %v2288, %v2991
        %v2993 = vand.u32 %v2992, 4294901760
        %2994 = vmatpush1.msra.mxu0 %v2993
        %v2995 = vand.u32 %v2293, 4294901760
        %v2996 = vsub.f32 %v2293, %v2995
        %v2997 = vand.u32 %v2996, 4294901760
        %2998 = vmatprep.subr.mxu0 %v2997
        %v2999 = vand.u32 %v2292, 4294901760
        %v3000 = vsub.f32 %v2292, %v2999
        %v3001 = vand.u32 %v3000, 4294901760
        %3002 = vmatpush1.msra.mxu0 %v3001
        %v3003 = vand.u32 %v2297, 4294901760
        %v3004 = vsub.f32 %v2297, %v3003
        %v3005 = vand.u32 %v3004, 4294901760
        %3006 = vmatprep.subr.mxu0 %v3005
        %v3007 = vand.u32 %v2296, 4294901760
        %v3008 = vsub.f32 %v2296, %v3007
        %v3009 = vand.u32 %v3008, 4294901760
        %3010 = vmatpush1.msra.mxu0 %v3009
        %3011 = vmatprep.subr.mxu0 0.0
        %3012 = vmatpush1.msra.mxu0 0.0
        %3013 = vmatprep.subr.mxu0 0.0
        %3014 = vmatpush1.msra.mxu0 0.0
        %3015 = vmatprep.subr.mxu0 0.0
        %3016 = vmatpush1.msra.mxu0 0.0
        %3017 = vmatprep.subr.mxu0 0.0
        %3018 = vmatpush1.msra.mxu0 0.0
        %3019 = vmatprep.subr.mxu0 0.0
        %3020 = vmatpush1.msra.mxu0 0.0
        %3021 = vmatprep.subr.mxu0 0.0
        %3022 = vmatpush1.msra.mxu0 0.0
        %3023 = vmatprep.subr.mxu0 0.0
        %3024 = vmatpush1.msra.mxu0 0.0
        %3025 = vmatprep.subr.mxu0 0.0
        %3026 = vmatpush1.msra.mxu0 0.0
        %3027 = vmatprep.subr.mxu0 0.0
        %3028 = vmatpush1.msra.mxu0 0.0
        %3029 = vmatprep.subr.mxu0 0.0
        %3030 = vmatpush1.msra.mxu0 0.0
        %3031 = vmatprep.subr.mxu0 0.0
        %3032 = vmatpush1.msra.mxu0 0.0
        %3033 = vmatprep.subr.mxu0 0.0
        %3034 = vmatpush1.msra.mxu0 0.0
        %3035 = vmatprep.subr.mxu0 0.0
        %3036 = vmatpush1.msra.mxu0 0.0
        %3037 = vmatprep.subr.mxu0 0.0
        %3038 = vmatpush1.msra.mxu0 0.0
        %3039 = vmatprep.subr.mxu0 0.0
        %3040 = vmatpush1.msra.mxu0 0.0
        %3041 = vmatprep.subr.mxu0 0.0
        %3042 = vmatpush1.msra.mxu0 0.0
        %3043 = vmatprep.mubr.f32.mxu0 0.0
        %v3044 = vand.u32 %v2234, 4294901760
        %3045 = vmatmul.mubr.f32.gmra.mrb[0].mxu0 %v3044
        %v3046 = vpop.f32.mrb[0].mxu0
        %v3047 = vadd.f32 %v2879, %v3046
        %v3048 = vpop.f32.mrb[0].mxu0
        %v3049 = vadd.f32 %v2881, %v3048
        %3050 = vdwg.mxu0
        %v3051 = vand.u32 %v2237, 4294901760
        %3052 = vmatprep.subr.mxu0 %v3051
        %v3053 = vand.u32 %v2236, 4294901760
        %3054 = vmatpush1.msra.mxu0 %v3053
        %v3055 = vand.u32 %v2241, 4294901760
        %3056 = vmatprep.subr.mxu0 %v3055
        %v3057 = vand.u32 %v2240, 4294901760
        %3058 = vmatpush1.msra.mxu0 %v3057
        %v3059 = vand.u32 %v2245, 4294901760
        %3060 = vmatprep.subr.mxu0 %v3059
        %v3061 = vand.u32 %v2244, 4294901760
        %3062 = vmatpush1.msra.mxu0 %v3061
        %v3063 = vand.u32 %v2249, 4294901760
        %3064 = vmatprep.subr.mxu0 %v3063
        %v3065 = vand.u32 %v2248, 4294901760
        %3066 = vmatpush1.msra.mxu0 %v3065
        %v3067 = vand.u32 %v2253, 4294901760
        %3068 = vmatprep.subr.mxu0 %v3067
        %v3069 = vand.u32 %v2252, 4294901760
        %3070 = vmatpush1.msra.mxu0 %v3069
        %v3071 = vand.u32 %v2257, 4294901760
        %3072 = vmatprep.subr.mxu0 %v3071
        %v3073 = vand.u32 %v2256, 4294901760
        %3074 = vmatpush1.msra.mxu0 %v3073
        %v3075 = vand.u32 %v2261, 4294901760
        %3076 = vmatprep.subr.mxu0 %v3075
        %v3077 = vand.u32 %v2260, 4294901760
        %3078 = vmatpush1.msra.mxu0 %v3077
        %v3079 = vand.u32 %v2265, 4294901760
        %3080 = vmatprep.subr.mxu0 %v3079
        %v3081 = vand.u32 %v2264, 4294901760
        %3082 = vmatpush1.msra.mxu0 %v3081
        %v3083 = vand.u32 %v2269, 4294901760
        %3084 = vmatprep.subr.mxu0 %v3083
        %v3085 = vand.u32 %v2268, 4294901760
        %3086 = vmatpush1.msra.mxu0 %v3085
        %v3087 = vand.u32 %v2273, 4294901760
        %3088 = vmatprep.subr.mxu0 %v3087
        %v3089 = vand.u32 %v2272, 4294901760
        %3090 = vmatpush1.msra.mxu0 %v3089
        %v3091 = vand.u32 %v2277, 4294901760
        %3092 = vmatprep.subr.mxu0 %v3091
        %v3093 = vand.u32 %v2276, 4294901760
        %3094 = vmatpush1.msra.mxu0 %v3093
        %v3095 = vand.u32 %v2281, 4294901760
        %3096 = vmatprep.subr.mxu0 %v3095
        %v3097 = vand.u32 %v2280, 4294901760
        %3098 = vmatpush1.msra.mxu0 %v3097
        %v3099 = vand.u32 %v2285, 4294901760
        %3100 = vmatprep.subr.mxu0 %v3099
        %v3101 = vand.u32 %v2284, 4294901760
        %3102 = vmatpush1.msra.mxu0 %v3101
        %v3103 = vand.u32 %v2289, 4294901760
        %3104 = vmatprep.subr.mxu0 %v3103
        %v3105 = vand.u32 %v2288, 4294901760
        %3106 = vmatpush1.msra.mxu0 %v3105
        %v3107 = vand.u32 %v2293, 4294901760
        %3108 = vmatprep.subr.mxu0 %v3107
        %v3109 = vand.u32 %v2292, 4294901760
        %3110 = vmatpush1.msra.mxu0 %v3109
        %v3111 = vand.u32 %v2297, 4294901760
        %3112 = vmatprep.subr.mxu0 %v3111
        %v3113 = vand.u32 %v2296, 4294901760
        %3114 = vmatpush1.msra.mxu0 %v3113
        %3115 = vmatprep.subr.mxu0 0.0
        %3116 = vmatpush1.msra.mxu0 0.0
        %3117 = vmatprep.subr.mxu0 0.0
        %3118 = vmatpush1.msra.mxu0 0.0
        %3119 = vmatprep.subr.mxu0 0.0
        %3120 = vmatpush1.msra.mxu0 0.0
        %3121 = vmatprep.subr.mxu0 0.0
        %3122 = vmatpush1.msra.mxu0 0.0
        %3123 = vmatprep.subr.mxu0 0.0
        %3124 = vmatpush1.msra.mxu0 0.0
        %3125 = vmatprep.subr.mxu0 0.0
        %3126 = vmatpush1.msra.mxu0 0.0
        %3127 = vmatprep.subr.mxu0 0.0
        %3128 = vmatpush1.msra.mxu0 0.0
        %3129 = vmatprep.subr.mxu0 0.0
        %3130 = vmatpush1.msra.mxu0 0.0
        %3131 = vmatprep.subr.mxu0 0.0
        %3132 = vmatpush1.msra.mxu0 0.0
        %3133 = vmatprep.subr.mxu0 0.0
        %3134 = vmatpush1.msra.mxu0 0.0
        %3135 = vmatprep.subr.mxu0 0.0
        %3136 = vmatpush1.msra.mxu0 0.0
        %3137 = vmatprep.subr.mxu0 0.0
        %3138 = vmatpush1.msra.mxu0 0.0
        %3139 = vmatprep.subr.mxu0 0.0
        %3140 = vmatpush1.msra.mxu0 0.0
        %3141 = vmatprep.subr.mxu0 0.0
        %3142 = vmatpush1.msra.mxu0 0.0
        %3143 = vmatprep.subr.mxu0 0.0
        %3144 = vmatpush1.msra.mxu0 0.0
        %3145 = vmatprep.subr.mxu0 0.0
        %3146 = vmatpush1.msra.mxu0 0.0
        %3147 = vmatprep.mubr.f32.mxu0 0.0
        %v3148 = vand.u32 %v2234, 4294901760
        %3149 = vmatmul.mubr.f32.gmra.mrb[0].mxu0 %v3148
        %v3150 = vpop.f32.mrb[0].mxu0
        %v3151 = vadd.f32 %v3047, %v3150
        %v3152 = vpop.f32.mrb[0].mxu0
        %v3153 = vadd.f32 %v3049, %v3152
        %3154 = vdwg.mxu0
        %v3155 = vand.u32 %v2239, 4294901760
        %3156 = vmatprep.subr.mxu0 %v3155
        %v3157 = vand.u32 %v2238, 4294901760
        %3158 = vmatpush1.msra.mxu0 %v3157
        %v3159 = vand.u32 %v2243, 4294901760
        %3160 = vmatprep.subr.mxu0 %v3159
        %v3161 = vand.u32 %v2242, 4294901760
        %3162 = vmatpush1.msra.mxu0 %v3161
        %v3163 = vand.u32 %v2247, 4294901760
        %3164 = vmatprep.subr.mxu0 %v3163
        %v3165 = vand.u32 %v2246, 4294901760
        %3166 = vmatpush1.msra.mxu0 %v3165
        %v3167 = vand.u32 %v2251, 4294901760
        %3168 = vmatprep.subr.mxu0 %v3167
        %v3169 = vand.u32 %v2250, 4294901760
        %3170 = vmatpush1.msra.mxu0 %v3169
        %v3171 = vand.u32 %v2255, 4294901760
        %3172 = vmatprep.subr.mxu0 %v3171
        %v3173 = vand.u32 %v2254, 4294901760
        %3174 = vmatpush1.msra.mxu0 %v3173
        %v3175 = vand.u32 %v2259, 4294901760
        %3176 = vmatprep.subr.mxu0 %v3175
        %v3177 = vand.u32 %v2258, 4294901760
        %3178 = vmatpush1.msra.mxu0 %v3177
        %v3179 = vand.u32 %v2263, 4294901760
        %3180 = vmatprep.subr.mxu0 %v3179
        %v3181 = vand.u32 %v2262, 4294901760
        %3182 = vmatpush1.msra.mxu0 %v3181
        %v3183 = vand.u32 %v2267, 4294901760
        %3184 = vmatprep.subr.mxu0 %v3183
        %v3185 = vand.u32 %v2266, 4294901760
        %3186 = vmatpush1.msra.mxu0 %v3185
        %v3187 = vand.u32 %v2271, 4294901760
        %3188 = vmatprep.subr.mxu0 %v3187
        %v3189 = vand.u32 %v2270, 4294901760
        %3190 = vmatpush1.msra.mxu0 %v3189
        %v3191 = vand.u32 %v2275, 4294901760
        %3192 = vmatprep.subr.mxu0 %v3191
        %v3193 = vand.u32 %v2274, 4294901760
        %3194 = vmatpush1.msra.mxu0 %v3193
        %v3195 = vand.u32 %v2279, 4294901760
        %3196 = vmatprep.subr.mxu0 %v3195
        %v3197 = vand.u32 %v2278, 4294901760
        %3198 = vmatpush1.msra.mxu0 %v3197
        %v3199 = vand.u32 %v2283, 4294901760
        %3200 = vmatprep.subr.mxu0 %v3199
        %v3201 = vand.u32 %v2282, 4294901760
        %3202 = vmatpush1.msra.mxu0 %v3201
        %v3203 = vand.u32 %v2287, 4294901760
        %3204 = vmatprep.subr.mxu0 %v3203
        %v3205 = vand.u32 %v2286, 4294901760
        %3206 = vmatpush1.msra.mxu0 %v3205
        %v3207 = vand.u32 %v2291, 4294901760
        %3208 = vmatprep.subr.mxu0 %v3207
        %v3209 = vand.u32 %v2290, 4294901760
        %3210 = vmatpush1.msra.mxu0 %v3209
        %v3211 = vand.u32 %v2295, 4294901760
        %3212 = vmatprep.subr.mxu0 %v3211
        %v3213 = vand.u32 %v2294, 4294901760
        %3214 = vmatpush1.msra.mxu0 %v3213
        %v3215 = vand.u32 %v2299, 4294901760
        %3216 = vmatprep.subr.mxu0 %v3215
        %v3217 = vand.u32 %v2298, 4294901760
        %3218 = vmatpush1.msra.mxu0 %v3217
        %3219 = vmatprep.subr.mxu0 0.0
        %3220 = vmatpush1.msra.mxu0 0.0
        %3221 = vmatprep.subr.mxu0 0.0
        %3222 = vmatpush1.msra.mxu0 0.0
        %3223 = vmatprep.subr.mxu0 0.0
        %3224 = vmatpush1.msra.mxu0 0.0
        %3225 = vmatprep.subr.mxu0 0.0
        %3226 = vmatpush1.msra.mxu0 0.0
        %3227 = vmatprep.subr.mxu0 0.0
        %3228 = vmatpush1.msra.mxu0 0.0
        %3229 = vmatprep.subr.mxu0 0.0
        %3230 = vmatpush1.msra.mxu0 0.0
        %3231 = vmatprep.subr.mxu0 0.0
        %3232 = vmatpush1.msra.mxu0 0.0
        %3233 = vmatprep.subr.mxu0 0.0
        %3234 = vmatpush1.msra.mxu0 0.0
        %3235 = vmatprep.subr.mxu0 0.0
        %3236 = vmatpush1.msra.mxu0 0.0
        %3237 = vmatprep.subr.mxu0 0.0
        %3238 = vmatpush1.msra.mxu0 0.0
        %3239 = vmatprep.subr.mxu0 0.0
        %3240 = vmatpush1.msra.mxu0 0.0
        %3241 = vmatprep.subr.mxu0 0.0
        %3242 = vmatpush1.msra.mxu0 0.0
        %3243 = vmatprep.subr.mxu0 0.0
        %3244 = vmatpush1.msra.mxu0 0.0
        %3245 = vmatprep.subr.mxu0 0.0
        %3246 = vmatpush1.msra.mxu0 0.0
        %3247 = vmatprep.subr.mxu0 0.0
        %3248 = vmatpush1.msra.mxu0 0.0
        %3249 = vmatprep.subr.mxu0 0.0
        %3250 = vmatpush1.msra.mxu0 0.0
        %3251 = vmatprep.mubr.f32.mxu0 0.0
        %v3252 = vand.u32 %v2234, 4294901760
        %v3253 = vsub.f32 %v2234, %v3252
        %v3254 = vand.u32 %v3253, 4294901760
        %v3255 = vsub.f32 %v3253, %v3254
        %v3256 = vand.u32 %v3255, 4294901760
        %3257 = vmatmul.mubr.f32.gmra.mrb[0].mxu0 %v3256
        %v3258 = vpop.f32.mrb[0].mxu0
        %v3259 = vadd.f32 0.0, %v3258
        %v3260 = vpop.f32.mrb[0].mxu0
        %v3261 = vadd.f32 0.0, %v3260
        %3262 = vdwg.mxu0
        %v3263 = vand.u32 %v2239, 4294901760
        %v3264 = vsub.f32 %v2239, %v3263
        %v3265 = vand.u32 %v3264, 4294901760
        %v3266 = vsub.f32 %v3264, %v3265
        %v3267 = vand.u32 %v3266, 4294901760
        %3268 = vmatprep.subr.mxu0 %v3267
        %v3269 = vand.u32 %v2238, 4294901760
        %v3270 = vsub.f32 %v2238, %v3269
        %v3271 = vand.u32 %v3270, 4294901760
        %v3272 = vsub.f32 %v3270, %v3271
        %v3273 = vand.u32 %v3272, 4294901760
        %3274 = vmatpush1.msra.mxu0 %v3273
        %v3275 = vand.u32 %v2243, 4294901760
        %v3276 = vsub.f32 %v2243, %v3275
        %v3277 = vand.u32 %v3276, 4294901760
        %v3278 = vsub.f32 %v3276, %v3277
        %v3279 = vand.u32 %v3278, 4294901760
        %3280 = vmatprep.subr.mxu0 %v3279
        %v3281 = vand.u32 %v2242, 4294901760
        %v3282 = vsub.f32 %v2242, %v3281
        %v3283 = vand.u32 %v3282, 4294901760
        %v3284 = vsub.f32 %v3282, %v3283
        %v3285 = vand.u32 %v3284, 4294901760
        %3286 = vmatpush1.msra.mxu0 %v3285
        %v3287 = vand.u32 %v2247, 4294901760
        %v3288 = vsub.f32 %v2247, %v3287
        %v3289 = vand.u32 %v3288, 4294901760
        %v3290 = vsub.f32 %v3288, %v3289
        %v3291 = vand.u32 %v3290, 4294901760
        %3292 = vmatprep.subr.mxu0 %v3291
        %v3293 = vand.u32 %v2246, 4294901760
        %v3294 = vsub.f32 %v2246, %v3293
        %v3295 = vand.u32 %v3294, 4294901760
        %v3296 = vsub.f32 %v3294, %v3295
        %v3297 = vand.u32 %v3296, 4294901760
        %3298 = vmatpush1.msra.mxu0 %v3297
        %v3299 = vand.u32 %v2251, 4294901760
        %v3300 = vsub.f32 %v2251, %v3299
        %v3301 = vand.u32 %v3300, 4294901760
        %v3302 = vsub.f32 %v3300, %v3301
        %v3303 = vand.u32 %v3302, 4294901760
        %3304 = vmatprep.subr.mxu0 %v3303
        %v3305 = vand.u32 %v2250, 4294901760
        %v3306 = vsub.f32 %v2250, %v3305
        %v3307 = vand.u32 %v3306, 4294901760
        %v3308 = vsub.f32 %v3306, %v3307
        %v3309 = vand.u32 %v3308, 4294901760
        %3310 = vmatpush1.msra.mxu0 %v3309
        %v3311 = vand.u32 %v2255, 4294901760
        %v3312 = vsub.f32 %v2255, %v3311
        %v3313 = vand.u32 %v3312, 4294901760
        %v3314 = vsub.f32 %v3312, %v3313
        %v3315 = vand.u32 %v3314, 4294901760
        %3316 = vmatprep.subr.mxu0 %v3315
        %v3317 = vand.u32 %v2254, 4294901760
        %v3318 = vsub.f32 %v2254, %v3317
        %v3319 = vand.u32 %v3318, 4294901760
        %v3320 = vsub.f32 %v3318, %v3319
        %v3321 = vand.u32 %v3320, 4294901760
        %3322 = vmatpush1.msra.mxu0 %v3321
        %v3323 = vand.u32 %v2259, 4294901760
        %v3324 = vsub.f32 %v2259, %v3323
        %v3325 = vand.u32 %v3324, 4294901760
        %v3326 = vsub.f32 %v3324, %v3325
        %v3327 = vand.u32 %v3326, 4294901760
        %3328 = vmatprep.subr.mxu0 %v3327
        %v3329 = vand.u32 %v2258, 4294901760
        %v3330 = vsub.f32 %v2258, %v3329
        %v3331 = vand.u32 %v3330, 4294901760
        %v3332 = vsub.f32 %v3330, %v3331
        %v3333 = vand.u32 %v3332, 4294901760
        %3334 = vmatpush1.msra.mxu0 %v3333
        %v3335 = vand.u32 %v2263, 4294901760
        %v3336 = vsub.f32 %v2263, %v3335
        %v3337 = vand.u32 %v3336, 4294901760
        %v3338 = vsub.f32 %v3336, %v3337
        %v3339 = vand.u32 %v3338, 4294901760
        %3340 = vmatprep.subr.mxu0 %v3339
        %v3341 = vand.u32 %v2262, 4294901760
        %v3342 = vsub.f32 %v2262, %v3341
        %v3343 = vand.u32 %v3342, 4294901760
        %v3344 = vsub.f32 %v3342, %v3343
        %v3345 = vand.u32 %v3344, 4294901760
        %3346 = vmatpush1.msra.mxu0 %v3345
        %v3347 = vand.u32 %v2267, 4294901760
        %v3348 = vsub.f32 %v2267, %v3347
        %v3349 = vand.u32 %v3348, 4294901760
        %v3350 = vsub.f32 %v3348, %v3349
        %v3351 = vand.u32 %v3350, 4294901760
        %3352 = vmatprep.subr.mxu0 %v3351
        %v3353 = vand.u32 %v2266, 4294901760
        %v3354 = vsub.f32 %v2266, %v3353
        %v3355 = vand.u32 %v3354, 4294901760
        %v3356 = vsub.f32 %v3354, %v3355
        %v3357 = vand.u32 %v3356, 4294901760
        %3358 = vmatpush1.msra.mxu0 %v3357
        %v3359 = vand.u32 %v2271, 4294901760
        %v3360 = vsub.f32 %v2271, %v3359
        %v3361 = vand.u32 %v3360, 4294901760
        %v3362 = vsub.f32 %v3360, %v3361
        %v3363 = vand.u32 %v3362, 4294901760
        %3364 = vmatprep.subr.mxu0 %v3363
        %v3365 = vand.u32 %v2270, 4294901760
        %v3366 = vsub.f32 %v2270, %v3365
        %v3367 = vand.u32 %v3366, 4294901760
        %v3368 = vsub.f32 %v3366, %v3367
        %v3369 = vand.u32 %v3368, 4294901760
        %3370 = vmatpush1.msra.mxu0 %v3369
        %v3371 = vand.u32 %v2275, 4294901760
        %v3372 = vsub.f32 %v2275, %v3371
        %v3373 = vand.u32 %v3372, 4294901760
        %v3374 = vsub.f32 %v3372, %v3373
        %v3375 = vand.u32 %v3374, 4294901760
        %3376 = vmatprep.subr.mxu0 %v3375
        %v3377 = vand.u32 %v2274, 4294901760
        %v3378 = vsub.f32 %v2274, %v3377
        %v3379 = vand.u32 %v3378, 4294901760
        %v3380 = vsub.f32 %v3378, %v3379
        %v3381 = vand.u32 %v3380, 4294901760
        %3382 = vmatpush1.msra.mxu0 %v3381
        %v3383 = vand.u32 %v2279, 4294901760
        %v3384 = vsub.f32 %v2279, %v3383
        %v3385 = vand.u32 %v3384, 4294901760
        %v3386 = vsub.f32 %v3384, %v3385
        %v3387 = vand.u32 %v3386, 4294901760
        %3388 = vmatprep.subr.mxu0 %v3387
        %v3389 = vand.u32 %v2278, 4294901760
        %v3390 = vsub.f32 %v2278, %v3389
        %v3391 = vand.u32 %v3390, 4294901760
        %v3392 = vsub.f32 %v3390, %v3391
        %v3393 = vand.u32 %v3392, 4294901760
        %3394 = vmatpush1.msra.mxu0 %v3393
        %v3395 = vand.u32 %v2283, 4294901760
        %v3396 = vsub.f32 %v2283, %v3395
        %v3397 = vand.u32 %v3396, 4294901760
        %v3398 = vsub.f32 %v3396, %v3397
        %v3399 = vand.u32 %v3398, 4294901760
        %3400 = vmatprep.subr.mxu0 %v3399
        %v3401 = vand.u32 %v2282, 4294901760
        %v3402 = vsub.f32 %v2282, %v3401
        %v3403 = vand.u32 %v3402, 4294901760
        %v3404 = vsub.f32 %v3402, %v3403
        %v3405 = vand.u32 %v3404, 4294901760
        %3406 = vmatpush1.msra.mxu0 %v3405
        %v3407 = vand.u32 %v2287, 4294901760
        %v3408 = vsub.f32 %v2287, %v3407
        %v3409 = vand.u32 %v3408, 4294901760
        %v3410 = vsub.f32 %v3408, %v3409
        %v3411 = vand.u32 %v3410, 4294901760
        %3412 = vmatprep.subr.mxu0 %v3411
        %v3413 = vand.u32 %v2286, 4294901760
        %v3414 = vsub.f32 %v2286, %v3413
        %v3415 = vand.u32 %v3414, 4294901760
        %v3416 = vsub.f32 %v3414, %v3415
        %v3417 = vand.u32 %v3416, 4294901760
        %3418 = vmatpush1.msra.mxu0 %v3417
        %v3419 = vand.u32 %v2291, 4294901760
        %v3420 = vsub.f32 %v2291, %v3419
        %v3421 = vand.u32 %v3420, 4294901760
        %v3422 = vsub.f32 %v3420, %v3421
        %v3423 = vand.u32 %v3422, 4294901760
        %3424 = vmatprep.subr.mxu0 %v3423
        %v3425 = vand.u32 %v2290, 4294901760
        %v3426 = vsub.f32 %v2290, %v3425
        %v3427 = vand.u32 %v3426, 4294901760
        %v3428 = vsub.f32 %v3426, %v3427
        %v3429 = vand.u32 %v3428, 4294901760
        %3430 = vmatpush1.msra.mxu0 %v3429
        %v3431 = vand.u32 %v2295, 4294901760
        %v3432 = vsub.f32 %v2295, %v3431
        %v3433 = vand.u32 %v3432, 4294901760
        %v3434 = vsub.f32 %v3432, %v3433
        %v3435 = vand.u32 %v3434, 4294901760
        %3436 = vmatprep.subr.mxu0 %v3435
        %v3437 = vand.u32 %v2294, 4294901760
        %v3438 = vsub.f32 %v2294, %v3437
        %v3439 = vand.u32 %v3438, 4294901760
        %v3440 = vsub.f32 %v3438, %v3439
        %v3441 = vand.u32 %v3440, 4294901760
        %3442 = vmatpush1.msra.mxu0 %v3441
        %v3443 = vand.u32 %v2299, 4294901760
        %v3444 = vsub.f32 %v2299, %v3443
        %v3445 = vand.u32 %v3444, 4294901760
        %v3446 = vsub.f32 %v3444, %v3445
        %v3447 = vand.u32 %v3446, 4294901760
        %3448 = vmatprep.subr.mxu0 %v3447
        %v3449 = vand.u32 %v2298, 4294901760
        %v3450 = vsub.f32 %v2298, %v3449
        %v3451 = vand.u32 %v3450, 4294901760
        %v3452 = vsub.f32 %v3450, %v3451
        %v3453 = vand.u32 %v3452, 4294901760
        %3454 = vmatpush1.msra.mxu0 %v3453
        %3455 = vmatprep.subr.mxu0 0.0
        %3456 = vmatpush1.msra.mxu0 0.0
        %3457 = vmatprep.subr.mxu0 0.0
        %3458 = vmatpush1.msra.mxu0 0.0
        %3459 = vmatprep.subr.mxu0 0.0
        %3460 = vmatpush1.msra.mxu0 0.0
        %3461 = vmatprep.subr.mxu0 0.0
        %3462 = vmatpush1.msra.mxu0 0.0
        %3463 = vmatprep.subr.mxu0 0.0
        %3464 = vmatpush1.msra.mxu0 0.0
        %3465 = vmatprep.subr.mxu0 0.0
        %3466 = vmatpush1.msra.mxu0 0.0
        %3467 = vmatprep.subr.mxu0 0.0
        %3468 = vmatpush1.msra.mxu0 0.0
        %3469 = vmatprep.subr.mxu0 0.0
        %3470 = vmatpush1.msra.mxu0 0.0
        %3471 = vmatprep.subr.mxu0 0.0
        %3472 = vmatpush1.msra.mxu0 0.0
        %3473 = vmatprep.subr.mxu0 0.0
        %3474 = vmatpush1.msra.mxu0 0.0
        %3475 = vmatprep.subr.mxu0 0.0
        %3476 = vmatpush1.msra.mxu0 0.0
        %3477 = vmatprep.subr.mxu0 0.0
        %3478 = vmatpush1.msra.mxu0 0.0
        %3479 = vmatprep.subr.mxu0 0.0
        %3480 = vmatpush1.msra.mxu0 0.0
        %3481 = vmatprep.subr.mxu0 0.0
        %3482 = vmatpush1.msra.mxu0 0.0
        %3483 = vmatprep.subr.mxu0 0.0
        %3484 = vmatpush1.msra.mxu0 0.0
        %3485 = vmatprep.subr.mxu0 0.0
        %3486 = vmatpush1.msra.mxu0 0.0
        %3487 = vmatprep.mubr.f32.mxu0 0.0
        %v3488 = vand.u32 %v2234, 4294901760
        %3489 = vmatmul.mubr.f32.gmra.mrb[0].mxu0 %v3488
        %v3490 = vpop.f32.mrb[0].mxu0
        %v3491 = vadd.f32 %v3259, %v3490
        %v3492 = vpop.f32.mrb[0].mxu0
        %v3493 = vadd.f32 %v3261, %v3492
        %3494 = vdwg.mxu0
        %v3495 = vand.u32 %v2239, 4294901760
        %v3496 = vsub.f32 %v2239, %v3495
        %3497 = vmatprep.subr.mxu0 %v3496
        %v3498 = vand.u32 %v2238, 4294901760
        %v3499 = vsub.f32 %v2238, %v3498
        %3500 = vmatpush1.msra.mxu0 %v3499
        %v3501 = vand.u32 %v2243, 4294901760
        %v3502 = vsub.f32 %v2243, %v3501
        %3503 = vmatprep.subr.mxu0 %v3502
        %v3504 = vand.u32 %v2242, 4294901760
        %v3505 = vsub.f32 %v2242, %v3504
        %3506 = vmatpush1.msra.mxu0 %v3505
        %v3507 = vand.u32 %v2247, 4294901760
        %v3508 = vsub.f32 %v2247, %v3507
        %3509 = vmatprep.subr.mxu0 %v3508
        %v3510 = vand.u32 %v2246, 4294901760
        %v3511 = vsub.f32 %v2246, %v3510
        %3512 = vmatpush1.msra.mxu0 %v3511
        %v3513 = vand.u32 %v2251, 4294901760
        %v3514 = vsub.f32 %v2251, %v3513
        %3515 = vmatprep.subr.mxu0 %v3514
        %v3516 = vand.u32 %v2250, 4294901760
        %v3517 = vsub.f32 %v2250, %v3516
        %3518 = vmatpush1.msra.mxu0 %v3517
        %v3519 = vand.u32 %v2255, 4294901760
        %v3520 = vsub.f32 %v2255, %v3519
        %3521 = vmatprep.subr.mxu0 %v3520
        %v3522 = vand.u32 %v2254, 4294901760
        %v3523 = vsub.f32 %v2254, %v3522
        %3524 = vmatpush1.msra.mxu0 %v3523
        %v3525 = vand.u32 %v2259, 4294901760
        %v3526 = vsub.f32 %v2259, %v3525
        %3527 = vmatprep.subr.mxu0 %v3526
        %v3528 = vand.u32 %v2258, 4294901760
        %v3529 = vsub.f32 %v2258, %v3528
        %3530 = vmatpush1.msra.mxu0 %v3529
        %v3531 = vand.u32 %v2263, 4294901760
        %v3532 = vsub.f32 %v2263, %v3531
        %3533 = vmatprep.subr.mxu0 %v3532
        %v3534 = vand.u32 %v2262, 4294901760
        %v3535 = vsub.f32 %v2262, %v3534
        %3536 = vmatpush1.msra.mxu0 %v3535
        %v3537 = vand.u32 %v2267, 4294901760
        %v3538 = vsub.f32 %v2267, %v3537
        %3539 = vmatprep.subr.mxu0 %v3538
        %v3540 = vand.u32 %v2266, 4294901760
        %v3541 = vsub.f32 %v2266, %v3540
        %3542 = vmatpush1.msra.mxu0 %v3541
        %v3543 = vand.u32 %v2271, 4294901760
        %v3544 = vsub.f32 %v2271, %v3543
        %3545 = vmatprep.subr.mxu0 %v3544
        %v3546 = vand.u32 %v2270, 4294901760
        %v3547 = vsub.f32 %v2270, %v3546
        %3548 = vmatpush1.msra.mxu0 %v3547
        %v3549 = vand.u32 %v2275, 4294901760
        %v3550 = vsub.f32 %v2275, %v3549
        %3551 = vmatprep.subr.mxu0 %v3550
        %v3552 = vand.u32 %v2274, 4294901760
        %v3553 = vsub.f32 %v2274, %v3552
        %3554 = vmatpush1.msra.mxu0 %v3553
        %v3555 = vand.u32 %v2279, 4294901760
        %v3556 = vsub.f32 %v2279, %v3555
        %3557 = vmatprep.subr.mxu0 %v3556
        %v3558 = vand.u32 %v2278, 4294901760
        %v3559 = vsub.f32 %v2278, %v3558
        %3560 = vmatpush1.msra.mxu0 %v3559
        %v3561 = vand.u32 %v2283, 4294901760
        %v3562 = vsub.f32 %v2283, %v3561
        %3563 = vmatprep.subr.mxu0 %v3562
        %v3564 = vand.u32 %v2282, 4294901760
        %v3565 = vsub.f32 %v2282, %v3564
        %3566 = vmatpush1.msra.mxu0 %v3565
        %v3567 = vand.u32 %v2287, 4294901760
        %v3568 = vsub.f32 %v2287, %v3567
        %3569 = vmatprep.subr.mxu0 %v3568
        %v3570 = vand.u32 %v2286, 4294901760
        %v3571 = vsub.f32 %v2286, %v3570
        %3572 = vmatpush1.msra.mxu0 %v3571
        %v3573 = vand.u32 %v2291, 4294901760
        %v3574 = vsub.f32 %v2291, %v3573
        %3575 = vmatprep.subr.mxu0 %v3574
        %v3576 = vand.u32 %v2290, 4294901760
        %v3577 = vsub.f32 %v2290, %v3576
        %3578 = vmatpush1.msra.mxu0 %v3577
        %v3579 = vand.u32 %v2295, 4294901760
        %v3580 = vsub.f32 %v2295, %v3579
        %3581 = vmatprep.subr.mxu0 %v3580
        %v3582 = vand.u32 %v2294, 4294901760
        %v3583 = vsub.f32 %v2294, %v3582
        %3584 = vmatpush1.msra.mxu0 %v3583
        %v3585 = vand.u32 %v2299, 4294901760
        %v3586 = vsub.f32 %v2299, %v3585
        %3587 = vmatprep.subr.mxu0 %v3586
        %v3588 = vand.u32 %v2298, 4294901760
        %v3589 = vsub.f32 %v2298, %v3588
        %3590 = vmatpush1.msra.mxu0 %v3589
        %3591 = vmatprep.subr.mxu0 0.0
        %3592 = vmatpush1.msra.mxu0 0.0
        %3593 = vmatprep.subr.mxu0 0.0
        %3594 = vmatpush1.msra.mxu0 0.0
        %3595 = vmatprep.subr.mxu0 0.0
        %3596 = vmatpush1.msra.mxu0 0.0
        %3597 = vmatprep.subr.mxu0 0.0
        %3598 = vmatpush1.msra.mxu0 0.0
        %3599 = vmatprep.subr.mxu0 0.0
        %3600 = vmatpush1.msra.mxu0 0.0
        %3601 = vmatprep.subr.mxu0 0.0
        %3602 = vmatpush1.msra.mxu0 0.0
        %3603 = vmatprep.subr.mxu0 0.0
        %3604 = vmatpush1.msra.mxu0 0.0
        %3605 = vmatprep.subr.mxu0 0.0
        %3606 = vmatpush1.msra.mxu0 0.0
        %3607 = vmatprep.subr.mxu0 0.0
        %3608 = vmatpush1.msra.mxu0 0.0
        %3609 = vmatprep.subr.mxu0 0.0
        %3610 = vmatpush1.msra.mxu0 0.0
        %3611 = vmatprep.subr.mxu0 0.0
        %3612 = vmatpush1.msra.mxu0 0.0
        %3613 = vmatprep.subr.mxu0 0.0
        %3614 = vmatpush1.msra.mxu0 0.0
        %3615 = vmatprep.subr.mxu0 0.0
        %3616 = vmatpush1.msra.mxu0 0.0
        %3617 = vmatprep.subr.mxu0 0.0
        %3618 = vmatpush1.msra.mxu0 0.0
        %3619 = vmatprep.subr.mxu0 0.0
        %3620 = vmatpush1.msra.mxu0 0.0
        %3621 = vmatprep.subr.mxu0 0.0
        %3622 = vmatpush1.msra.mxu0 0.0
        %3623 = vmatprep.mubr.f32.mxu0 0.0
        %v3624 = vand.u32 %v2234, 4294901760
        %v3625 = vsub.f32 %v2234, %v3624
        %3626 = vmatmul.mubr.f32.gmra.mrb[0].mxu0 %v3625
        %v3627 = vpop.f32.mrb[0].mxu0
        %v3628 = vadd.f32 %v3491, %v3627
        %v3629 = vpop.f32.mrb[0].mxu0
        %v3630 = vadd.f32 %v3493, %v3629
        %3631 = vdwg.mxu0
        %v3632 = vand.u32 %v2239, 4294901760
        %3633 = vmatprep.subr.mxu0 %v3632
        %v3634 = vand.u32 %v2238, 4294901760
        %3635 = vmatpush1.msra.mxu0 %v3634
        %v3636 = vand.u32 %v2243, 4294901760
        %3637 = vmatprep.subr.mxu0 %v3636
        %v3638 = vand.u32 %v2242, 4294901760
        %3639 = vmatpush1.msra.mxu0 %v3638
        %v3640 = vand.u32 %v2247, 4294901760
        %3641 = vmatprep.subr.mxu0 %v3640
        %v3642 = vand.u32 %v2246, 4294901760
        %3643 = vmatpush1.msra.mxu0 %v3642
        %v3644 = vand.u32 %v2251, 4294901760
        %3645 = vmatprep.subr.mxu0 %v3644
        %v3646 = vand.u32 %v2250, 4294901760
        %3647 = vmatpush1.msra.mxu0 %v3646
        %v3648 = vand.u32 %v2255, 4294901760
        %3649 = vmatprep.subr.mxu0 %v3648
        %v3650 = vand.u32 %v2254, 4294901760
        %3651 = vmatpush1.msra.mxu0 %v3650
        %v3652 = vand.u32 %v2259, 4294901760
        %3653 = vmatprep.subr.mxu0 %v3652
        %v3654 = vand.u32 %v2258, 4294901760
        %3655 = vmatpush1.msra.mxu0 %v3654
        %v3656 = vand.u32 %v2263, 4294901760
        %3657 = vmatprep.subr.mxu0 %v3656
        %v3658 = vand.u32 %v2262, 4294901760
        %3659 = vmatpush1.msra.mxu0 %v3658
        %v3660 = vand.u32 %v2267, 4294901760
        %3661 = vmatprep.subr.mxu0 %v3660
        %v3662 = vand.u32 %v2266, 4294901760
        %3663 = vmatpush1.msra.mxu0 %v3662
        %v3664 = vand.u32 %v2271, 4294901760
        %3665 = vmatprep.subr.mxu0 %v3664
        %v3666 = vand.u32 %v2270, 4294901760
        %3667 = vmatpush1.msra.mxu0 %v3666
        %v3668 = vand.u32 %v2275, 4294901760
        %3669 = vmatprep.subr.mxu0 %v3668
        %v3670 = vand.u32 %v2274, 4294901760
        %3671 = vmatpush1.msra.mxu0 %v3670
        %v3672 = vand.u32 %v2279, 4294901760
        %3673 = vmatprep.subr.mxu0 %v3672
        %v3674 = vand.u32 %v2278, 4294901760
        %3675 = vmatpush1.msra.mxu0 %v3674
        %v3676 = vand.u32 %v2283, 4294901760
        %3677 = vmatprep.subr.mxu0 %v3676
        %v3678 = vand.u32 %v2282, 4294901760
        %3679 = vmatpush1.msra.mxu0 %v3678
        %v3680 = vand.u32 %v2287, 4294901760
        %3681 = vmatprep.subr.mxu0 %v3680
        %v3682 = vand.u32 %v2286, 4294901760
        %3683 = vmatpush1.msra.mxu0 %v3682
        %v3684 = vand.u32 %v2291, 4294901760
        %3685 = vmatprep.subr.mxu0 %v3684
        %v3686 = vand.u32 %v2290, 4294901760
        %3687 = vmatpush1.msra.mxu0 %v3686
        %v3688 = vand.u32 %v2295, 4294901760
        %3689 = vmatprep.subr.mxu0 %v3688
        %v3690 = vand.u32 %v2294, 4294901760
        %3691 = vmatpush1.msra.mxu0 %v3690
        %v3692 = vand.u32 %v2299, 4294901760
        %3693 = vmatprep.subr.mxu0 %v3692
        %v3694 = vand.u32 %v2298, 4294901760
        %3695 = vmatpush1.msra.mxu0 %v3694
        %3696 = vmatprep.subr.mxu0 0.0
        %3697 = vmatpush1.msra.mxu0 0.0
        %3698 = vmatprep.subr.mxu0 0.0
        %3699 = vmatpush1.msra.mxu0 0.0
        %3700 = vmatprep.subr.mxu0 0.0
        %3701 = vmatpush1.msra.mxu0 0.0
        %3702 = vmatprep.subr.mxu0 0.0
        %3703 = vmatpush1.msra.mxu0 0.0
        %3704 = vmatprep.subr.mxu0 0.0
        %3705 = vmatpush1.msra.mxu0 0.0
        %3706 = vmatprep.subr.mxu0 0.0
        %3707 = vmatpush1.msra.mxu0 0.0
        %3708 = vmatprep.subr.mxu0 0.0
        %3709 = vmatpush1.msra.mxu0 0.0
        %3710 = vmatprep.subr.mxu0 0.0
        %3711 = vmatpush1.msra.mxu0 0.0
        %3712 = vmatprep.subr.mxu0 0.0
        %3713 = vmatpush1.msra.mxu0 0.0
        %3714 = vmatprep.subr.mxu0 0.0
        %3715 = vmatpush1.msra.mxu0 0.0
        %3716 = vmatprep.subr.mxu0 0.0
        %3717 = vmatpush1.msra.mxu0 0.0
        %3718 = vmatprep.subr.mxu0 0.0
        %3719 = vmatpush1.msra.mxu0 0.0
        %3720 = vmatprep.subr.mxu0 0.0
        %3721 = vmatpush1.msra.mxu0 0.0
        %3722 = vmatprep.subr.mxu0 0.0
        %3723 = vmatpush1.msra.mxu0 0.0
        %3724 = vmatprep.subr.mxu0 0.0
        %3725 = vmatpush1.msra.mxu0 0.0
        %3726 = vmatprep.subr.mxu0 0.0
        %3727 = vmatpush1.msra.mxu0 0.0
        %3728 = vmatprep.mubr.f32.mxu0 0.0
        %v3729 = vand.u32 %v2234, 4294901760
        %v3730 = vsub.f32 %v2234, %v3729
        %v3731 = vand.u32 %v3730, 4294901760
        %3732 = vmatmul.mubr.f32.gmra.mrb[0].mxu0 %v3731
        %v3733 = vpop.f32.mrb[0].mxu0
        %v3734 = vadd.f32 %v3628, %v3733
        %v3735 = vpop.f32.mrb[0].mxu0
        %v3736 = vadd.f32 %v3630, %v3735
        %3737 = vdwg.mxu0
        %v3738 = vand.u32 %v2239, 4294901760
        %v3739 = vsub.f32 %v2239, %v3738
        %v3740 = vand.u32 %v3739, 4294901760
        %3741 = vmatprep.subr.mxu0 %v3740
        %v3742 = vand.u32 %v2238, 4294901760
        %v3743 = vsub.f32 %v2238, %v3742
        %v3744 = vand.u32 %v3743, 4294901760
        %3745 = vmatpush1.msra.mxu0 %v3744
        %v3746 = vand.u32 %v2243, 4294901760
        %v3747 = vsub.f32 %v2243, %v3746
        %v3748 = vand.u32 %v3747, 4294901760
        %3749 = vmatprep.subr.mxu0 %v3748
        %v3750 = vand.u32 %v2242, 4294901760
        %v3751 = vsub.f32 %v2242, %v3750
        %v3752 = vand.u32 %v3751, 4294901760
        %3753 = vmatpush1.msra.mxu0 %v3752
        %v3754 = vand.u32 %v2247, 4294901760
        %v3755 = vsub.f32 %v2247, %v3754
        %v3756 = vand.u32 %v3755, 4294901760
        %3757 = vmatprep.subr.mxu0 %v3756
        %v3758 = vand.u32 %v2246, 4294901760
        %v3759 = vsub.f32 %v2246, %v3758
        %v3760 = vand.u32 %v3759, 4294901760
        %3761 = vmatpush1.msra.mxu0 %v3760
        %v3762 = vand.u32 %v2251, 4294901760
        %v3763 = vsub.f32 %v2251, %v3762
        %v3764 = vand.u32 %v3763, 4294901760
        %3765 = vmatprep.subr.mxu0 %v3764
        %v3766 = vand.u32 %v2250, 4294901760
        %v3767 = vsub.f32 %v2250, %v3766
        %v3768 = vand.u32 %v3767, 4294901760
        %3769 = vmatpush1.msra.mxu0 %v3768
        %v3770 = vand.u32 %v2255, 4294901760
        %v3771 = vsub.f32 %v2255, %v3770
        %v3772 = vand.u32 %v3771, 4294901760
        %3773 = vmatprep.subr.mxu0 %v3772
        %v3774 = vand.u32 %v2254, 4294901760
        %v3775 = vsub.f32 %v2254, %v3774
        %v3776 = vand.u32 %v3775, 4294901760
        %3777 = vmatpush1.msra.mxu0 %v3776
        %v3778 = vand.u32 %v2259, 4294901760
        %v3779 = vsub.f32 %v2259, %v3778
        %v3780 = vand.u32 %v3779, 4294901760
        %3781 = vmatprep.subr.mxu0 %v3780
        %v3782 = vand.u32 %v2258, 4294901760
        %v3783 = vsub.f32 %v2258, %v3782
        %v3784 = vand.u32 %v3783, 4294901760
        %3785 = vmatpush1.msra.mxu0 %v3784
        %v3786 = vand.u32 %v2263, 4294901760
        %v3787 = vsub.f32 %v2263, %v3786
        %v3788 = vand.u32 %v3787, 4294901760
        %3789 = vmatprep.subr.mxu0 %v3788
        %v3790 = vand.u32 %v2262, 4294901760
        %v3791 = vsub.f32 %v2262, %v3790
        %v3792 = vand.u32 %v3791, 4294901760
        %3793 = vmatpush1.msra.mxu0 %v3792
        %v3794 = vand.u32 %v2267, 4294901760
        %v3795 = vsub.f32 %v2267, %v3794
        %v3796 = vand.u32 %v3795, 4294901760
        %3797 = vmatprep.subr.mxu0 %v3796
        %v3798 = vand.u32 %v2266, 4294901760
        %v3799 = vsub.f32 %v2266, %v3798
        %v3800 = vand.u32 %v3799, 4294901760
        %3801 = vmatpush1.msra.mxu0 %v3800
        %v3802 = vand.u32 %v2271, 4294901760
        %v3803 = vsub.f32 %v2271, %v3802
        %v3804 = vand.u32 %v3803, 4294901760
        %3805 = vmatprep.subr.mxu0 %v3804
        %v3806 = vand.u32 %v2270, 4294901760
        %v3807 = vsub.f32 %v2270, %v3806
        %v3808 = vand.u32 %v3807, 4294901760
        %3809 = vmatpush1.msra.mxu0 %v3808
        %v3810 = vand.u32 %v2275, 4294901760
        %v3811 = vsub.f32 %v2275, %v3810
        %v3812 = vand.u32 %v3811, 4294901760
        %3813 = vmatprep.subr.mxu0 %v3812
        %v3814 = vand.u32 %v2274, 4294901760
        %v3815 = vsub.f32 %v2274, %v3814
        %v3816 = vand.u32 %v3815, 4294901760
        %3817 = vmatpush1.msra.mxu0 %v3816
        %v3818 = vand.u32 %v2279, 4294901760
        %v3819 = vsub.f32 %v2279, %v3818
        %v3820 = vand.u32 %v3819, 4294901760
        %3821 = vmatprep.subr.mxu0 %v3820
        %v3822 = vand.u32 %v2278, 4294901760
        %v3823 = vsub.f32 %v2278, %v3822
        %v3824 = vand.u32 %v3823, 4294901760
        %3825 = vmatpush1.msra.mxu0 %v3824
        %v3826 = vand.u32 %v2283, 4294901760
        %v3827 = vsub.f32 %v2283, %v3826
        %v3828 = vand.u32 %v3827, 4294901760
        %3829 = vmatprep.subr.mxu0 %v3828
        %v3830 = vand.u32 %v2282, 4294901760
        %v3831 = vsub.f32 %v2282, %v3830
        %v3832 = vand.u32 %v3831, 4294901760
        %3833 = vmatpush1.msra.mxu0 %v3832
        %v3834 = vand.u32 %v2287, 4294901760
        %v3835 = vsub.f32 %v2287, %v3834
        %v3836 = vand.u32 %v3835, 4294901760
        %3837 = vmatprep.subr.mxu0 %v3836
        %v3838 = vand.u32 %v2286, 4294901760
        %v3839 = vsub.f32 %v2286, %v3838
        %v3840 = vand.u32 %v3839, 4294901760
        %3841 = vmatpush1.msra.mxu0 %v3840
        %v3842 = vand.u32 %v2291, 4294901760
        %v3843 = vsub.f32 %v2291, %v3842
        %v3844 = vand.u32 %v3843, 4294901760
        %3845 = vmatprep.subr.mxu0 %v3844
        %v3846 = vand.u32 %v2290, 4294901760
        %v3847 = vsub.f32 %v2290, %v3846
        %v3848 = vand.u32 %v3847, 4294901760
        %3849 = vmatpush1.msra.mxu0 %v3848
        %v3850 = vand.u32 %v2295, 4294901760
        %v3851 = vsub.f32 %v2295, %v3850
        %v3852 = vand.u32 %v3851, 4294901760
        %3853 = vmatprep.subr.mxu0 %v3852
        %v3854 = vand.u32 %v2294, 4294901760
        %v3855 = vsub.f32 %v2294, %v3854
        %v3856 = vand.u32 %v3855, 4294901760
        %3857 = vmatpush1.msra.mxu0 %v3856
        %v3858 = vand.u32 %v2299, 4294901760
        %v3859 = vsub.f32 %v2299, %v3858
        %v3860 = vand.u32 %v3859, 4294901760
        %3861 = vmatprep.subr.mxu0 %v3860
        %v3862 = vand.u32 %v2298, 4294901760
        %v3863 = vsub.f32 %v2298, %v3862
        %v3864 = vand.u32 %v3863, 4294901760
        %3865 = vmatpush1.msra.mxu0 %v3864
        %3866 = vmatprep.subr.mxu0 0.0
        %3867 = vmatpush1.msra.mxu0 0.0
        %3868 = vmatprep.subr.mxu0 0.0
        %3869 = vmatpush1.msra.mxu0 0.0
        %3870 = vmatprep.subr.mxu0 0.0
        %3871 = vmatpush1.msra.mxu0 0.0
        %3872 = vmatprep.subr.mxu0 0.0
        %3873 = vmatpush1.msra.mxu0 0.0
        %3874 = vmatprep.subr.mxu0 0.0
        %3875 = vmatpush1.msra.mxu0 0.0
        %3876 = vmatprep.subr.mxu0 0.0
        %3877 = vmatpush1.msra.mxu0 0.0
        %3878 = vmatprep.subr.mxu0 0.0
        %3879 = vmatpush1.msra.mxu0 0.0
        %3880 = vmatprep.subr.mxu0 0.0
        %3881 = vmatpush1.msra.mxu0 0.0
        %3882 = vmatprep.subr.mxu0 0.0
        %3883 = vmatpush1.msra.mxu0 0.0
        %3884 = vmatprep.subr.mxu0 0.0
        %3885 = vmatpush1.msra.mxu0 0.0
        %3886 = vmatprep.subr.mxu0 0.0
        %3887 = vmatpush1.msra.mxu0 0.0
        %3888 = vmatprep.subr.mxu0 0.0
        %3889 = vmatpush1.msra.mxu0 0.0
        %3890 = vmatprep.subr.mxu0 0.0
        %3891 = vmatpush1.msra.mxu0 0.0
        %3892 = vmatprep.subr.mxu0 0.0
        %3893 = vmatpush1.msra.mxu0 0.0
        %3894 = vmatprep.subr.mxu0 0.0
        %3895 = vmatpush1.msra.mxu0 0.0
        %3896 = vmatprep.subr.mxu0 0.0
        %3897 = vmatpush1.msra.mxu0 0.0
        %3898 = vmatprep.mubr.f32.mxu0 0.0
        %v3899 = vand.u32 %v2234, 4294901760
        %3900 = vmatmul.mubr.f32.gmra.mrb[0].mxu0 %v3899
        %v3901 = vpop.f32.mrb[0].mxu0
        %v3902 = vadd.f32 %v3734, %v3901
        %v3903 = vpop.f32.mrb[0].mxu0
        %v3904 = vadd.f32 %v3736, %v3903
        %3905 = vdwg.mxu0
        %v3906 = vand.u32 %v2239, 4294901760
        %3907 = vmatprep.subr.mxu0 %v3906
        %v3908 = vand.u32 %v2238, 4294901760
        %3909 = vmatpush1.msra.mxu0 %v3908
        %v3910 = vand.u32 %v2243, 4294901760
        %3911 = vmatprep.subr.mxu0 %v3910
        %v3912 = vand.u32 %v2242, 4294901760
        %3913 = vmatpush1.msra.mxu0 %v3912
        %v3914 = vand.u32 %v2247, 4294901760
        %3915 = vmatprep.subr.mxu0 %v3914
        %v3916 = vand.u32 %v2246, 4294901760
        %3917 = vmatpush1.msra.mxu0 %v3916
        %v3918 = vand.u32 %v2251, 4294901760
        %3919 = vmatprep.subr.mxu0 %v3918
        %v3920 = vand.u32 %v2250, 4294901760
        %3921 = vmatpush1.msra.mxu0 %v3920
        %v3922 = vand.u32 %v2255, 4294901760
        %3923 = vmatprep.subr.mxu0 %v3922
        %v3924 = vand.u32 %v2254, 4294901760
        %3925 = vmatpush1.msra.mxu0 %v3924
        %v3926 = vand.u32 %v2259, 4294901760
        %3927 = vmatprep.subr.mxu0 %v3926
        %v3928 = vand.u32 %v2258, 4294901760
        %3929 = vmatpush1.msra.mxu0 %v3928
        %v3930 = vand.u32 %v2263, 4294901760
        %3931 = vmatprep.subr.mxu0 %v3930
        %v3932 = vand.u32 %v2262, 4294901760
        %3933 = vmatpush1.msra.mxu0 %v3932
        %v3934 = vand.u32 %v2267, 4294901760
        %3935 = vmatprep.subr.mxu0 %v3934
        %v3936 = vand.u32 %v2266, 4294901760
        %3937 = vmatpush1.msra.mxu0 %v3936
        %v3938 = vand.u32 %v2271, 4294901760
        %3939 = vmatprep.subr.mxu0 %v3938
        %v3940 = vand.u32 %v2270, 4294901760
        %3941 = vmatpush1.msra.mxu0 %v3940
        %v3942 = vand.u32 %v2275, 4294901760
        %3943 = vmatprep.subr.mxu0 %v3942
        %v3944 = vand.u32 %v2274, 4294901760
        %3945 = vmatpush1.msra.mxu0 %v3944
        %v3946 = vand.u32 %v2279, 4294901760
        %3947 = vmatprep.subr.mxu0 %v3946
        %v3948 = vand.u32 %v2278, 4294901760
        %3949 = vmatpush1.msra.mxu0 %v3948
        %v3950 = vand.u32 %v2283, 4294901760
        %3951 = vmatprep.subr.mxu0 %v3950
        %v3952 = vand.u32 %v2282, 4294901760
        %3953 = vmatpush1.msra.mxu0 %v3952
        %v3954 = vand.u32 %v2287, 4294901760
        %3955 = vmatprep.subr.mxu0 %v3954
        %v3956 = vand.u32 %v2286, 4294901760
        %3957 = vmatpush1.msra.mxu0 %v3956
        %v3958 = vand.u32 %v2291, 4294901760
        %3959 = vmatprep.subr.mxu0 %v3958
        %v3960 = vand.u32 %v2290, 4294901760
        %3961 = vmatpush1.msra.mxu0 %v3960
        %v3962 = vand.u32 %v2295, 4294901760
        %3963 = vmatprep.subr.mxu0 %v3962
        %v3964 = vand.u32 %v2294, 4294901760
        %3965 = vmatpush1.msra.mxu0 %v3964
        %v3966 = vand.u32 %v2299, 4294901760
        %3967 = vmatprep.subr.mxu0 %v3966
        %v3968 = vand.u32 %v2298, 4294901760
        %3969 = vmatpush1.msra.mxu0 %v3968
        %3970 = vmatprep.subr.mxu0 0.0
        %3971 = vmatpush1.msra.mxu0 0.0
        %3972 = vmatprep.subr.mxu0 0.0
        %3973 = vmatpush1.msra.mxu0 0.0
        %3974 = vmatprep.subr.mxu0 0.0
        %3975 = vmatpush1.msra.mxu0 0.0
        %3976 = vmatprep.subr.mxu0 0.0
        %3977 = vmatpush1.msra.mxu0 0.0
        %3978 = vmatprep.subr.mxu0 0.0
        %3979 = vmatpush1.msra.mxu0 0.0
        %3980 = vmatprep.subr.mxu0 0.0
        %3981 = vmatpush1.msra.mxu0 0.0
        %3982 = vmatprep.subr.mxu0 0.0
        %3983 = vmatpush1.msra.mxu0 0.0
        %3984 = vmatprep.subr.mxu0 0.0
        %3985 = vmatpush1.msra.mxu0 0.0
        %3986 = vmatprep.subr.mxu0 0.0
        %3987 = vmatpush1.msra.mxu0 0.0
        %3988 = vmatprep.subr.mxu0 0.0
        %3989 = vmatpush1.msra.mxu0 0.0
        %3990 = vmatprep.subr.mxu0 0.0
        %3991 = vmatpush1.msra.mxu0 0.0
        %3992 = vmatprep.subr.mxu0 0.0
        %3993 = vmatpush1.msra.mxu0 0.0
        %3994 = vmatprep.subr.mxu0 0.0
        %3995 = vmatpush1.msra.mxu0 0.0
        %3996 = vmatprep.subr.mxu0 0.0
        %3997 = vmatpush1.msra.mxu0 0.0
        %3998 = vmatprep.subr.mxu0 0.0
        %3999 = vmatpush1.msra.mxu0 0.0
        %4000 = vmatprep.subr.mxu0 0.0
        %4001 = vmatpush1.msra.mxu0 0.0
        %4002 = vmatprep.mubr.f32.mxu0 0.0
        %v4003 = vand.u32 %v2234, 4294901760
        %4004 = vmatmul.mubr.f32.gmra.mrb[0].mxu0 %v4003
        %v4005 = vpop.f32.mrb[0].mxu0
        %v4006 = vadd.f32 %v3902, %v4005
        %v4007 = vpop.f32.mrb[0].mxu0
        %v4008 = vadd.f32 %v3904, %v4007
        %4009 = vdwg.mxu0
        %s4010 = scalar_lea.vmem %s454, 32 [#allocation13]
        %4011 = vst [vmem:[%s4010] sm:$0xff] %v3151
        %4012 = vst [vmem:[%s4010 + $0x8] sm:$0xff] %v3153
        %4013 = vst [vmem:[%s4010 + $0x10] sm:$0xff] %v4006
        %4014 = vst [vmem:[%s4010 + $0x18] sm:$0xff] %v4008
        %v4015 = vld [vmem:[%s388] sm:$0xff]
        %s4016 = scalar_lea.vmem [#allocation2], 1024
        %v4017 = vld [vmem:[%s4016] sm:$0xff]
        %v4018 = vld [vmem:[%s4016 + $0x8] sm:$0xff]
        %v4019 = vld [vmem:[%s4016 + $0x10] sm:$0xff]
        %v4020 = vld [vmem:[%s4016 + $0x18] sm:$0xff]
        %v4021 = vld [vmem:[%s4016 + $0x20] sm:$0xff]
        %v4022 = vld [vmem:[%s4016 + $0x28] sm:$0xff]
        %v4023 = vld [vmem:[%s4016 + $0x30] sm:$0xff]
        %v4024 = vld [vmem:[%s4016 + $0x38] sm:$0xff]
        %v4025 = vld [vmem:[%s4016 + $0x40] sm:$0xff]
        %v4026 = vld [vmem:[%s4016 + $0x48] sm:$0xff]
        %v4027 = vld [vmem:[%s4016 + $0x50] sm:$0xff]
        %v4028 = vld [vmem:[%s4016 + $0x58] sm:$0xff]
        %v4029 = vld [vmem:[%s4016 + $0x60] sm:$0xff]
        %v4030 = vld [vmem:[%s4016 + $0x68] sm:$0xff]
        %v4031 = vld [vmem:[%s4016 + $0x70] sm:$0xff]
        %v4032 = vld [vmem:[%s4016 + $0x78] sm:$0xff]
        %v4033 = vld [vmem:[%s4016 + $0x80] sm:$0xff]
        %v4034 = vld [vmem:[%s4016 + $0x88] sm:$0xff]
        %v4035 = vld [vmem:[%s4016 + $0x90] sm:$0xff]
        %v4036 = vld [vmem:[%s4016 + $0x98] sm:$0xff]
        %v4037 = vld [vmem:[%s4016 + $0xa0] sm:$0xff]
        %v4038 = vld [vmem:[%s4016 + $0xa8] sm:$0xff]
        %v4039 = vld [vmem:[%s4016 + $0xb0] sm:$0xff]
        %v4040 = vld [vmem:[%s4016 + $0xb8] sm:$0xff]
        %v4041 = vld [vmem:[%s4016 + $0xc0] sm:$0xff]
        %v4042 = vld [vmem:[%s4016 + $0xc8] sm:$0xff]
        %v4043 = vld [vmem:[%s4016 + $0xd0] sm:$0xff]
        %v4044 = vld [vmem:[%s4016 + $0xd8] sm:$0xff]
        %v4045 = vld [vmem:[%s4016 + $0xe0] sm:$0xff]
        %v4046 = vld [vmem:[%s4016 + $0xe8] sm:$0xff]
        %v4047 = vld [vmem:[%s4016 + $0xf0] sm:$0xff]
        %v4048 = vld [vmem:[%s4016 + $0xf8] sm:$0xff]
        %v4049 = vld [vmem:[%s4016 + $0x100] sm:$0xff]
        %v4050 = vld [vmem:[%s4016 + $0x108] sm:$0xff]
        %v4051 = vld [vmem:[%s4016 + $0x110] sm:$0xff]
        %v4052 = vld [vmem:[%s4016 + $0x118] sm:$0xff]
        %v4053 = vld [vmem:[%s4016 + $0x120] sm:$0xff]
        %v4054 = vld [vmem:[%s4016 + $0x128] sm:$0xff]
        %v4055 = vld [vmem:[%s4016 + $0x130] sm:$0xff]
        %v4056 = vld [vmem:[%s4016 + $0x138] sm:$0xff]
        %v4057 = vld [vmem:[%s4016 + $0x140] sm:$0xff]
        %v4058 = vld [vmem:[%s4016 + $0x148] sm:$0xff]
        %v4059 = vld [vmem:[%s4016 + $0x150] sm:$0xff]
        %v4060 = vld [vmem:[%s4016 + $0x158] sm:$0xff]
        %v4061 = vld [vmem:[%s4016 + $0x160] sm:$0xff]
        %v4062 = vld [vmem:[%s4016 + $0x168] sm:$0xff]
        %v4063 = vld [vmem:[%s4016 + $0x170] sm:$0xff]
        %v4064 = vld [vmem:[%s4016 + $0x178] sm:$0xff]
        %v4065 = vld [vmem:[%s4016 + $0x180] sm:$0xff]
        %v4066 = vld [vmem:[%s4016 + $0x188] sm:$0xff]
        %v4067 = vld [vmem:[%s4016 + $0x190] sm:$0xff]
        %v4068 = vld [vmem:[%s4016 + $0x198] sm:$0xff]
        %v4069 = vld [vmem:[%s4016 + $0x1a0] sm:$0xff]
        %v4070 = vld [vmem:[%s4016 + $0x1a8] sm:$0xff]
        %v4071 = vld [vmem:[%s4016 + $0x1b0] sm:$0xff]
        %v4072 = vld [vmem:[%s4016 + $0x1b8] sm:$0xff]
        %v4073 = vld [vmem:[%s4016 + $0x1c0] sm:$0xff]
        %v4074 = vld [vmem:[%s4016 + $0x1c8] sm:$0xff]
        %v4075 = vld [vmem:[%s4016 + $0x1d0] sm:$0xff]
        %v4076 = vld [vmem:[%s4016 + $0x1d8] sm:$0xff]
        %v4077 = vld [vmem:[%s4016 + $0x1e0] sm:$0xff]
        %v4078 = vld [vmem:[%s4016 + $0x1e8] sm:$0xff]
        %v4079 = vld [vmem:[%s4016 + $0x1f0] sm:$0xff]
        %v4080 = vld [vmem:[%s4016 + $0x1f8] sm:$0xff]
        %v4081 = vand.u32 %v4018, 4294901760
        %4082 = vmatprep.subr.mxu0 %v4081
        %v4083 = vand.u32 %v4017, 4294901760
        %4084 = vmatpush1.msra.mxu0 %v4083
        %v4085 = vand.u32 %v4022, 4294901760
        %4086 = vmatprep.subr.mxu0 %v4085
        %v4087 = vand.u32 %v4021, 4294901760
        %4088 = vmatpush1.msra.mxu0 %v4087
        %v4089 = vand.u32 %v4026, 4294901760
        %4090 = vmatprep.subr.mxu0 %v4089
        %v4091 = vand.u32 %v4025, 4294901760
        %4092 = vmatpush1.msra.mxu0 %v4091
        %v4093 = vand.u32 %v4030, 4294901760
        %4094 = vmatprep.subr.mxu0 %v4093
        %v4095 = vand.u32 %v4029, 4294901760
        %4096 = vmatpush1.msra.mxu0 %v4095
        %v4097 = vand.u32 %v4034, 4294901760
        %4098 = vmatprep.subr.mxu0 %v4097
        %v4099 = vand.u32 %v4033, 4294901760
        %4100 = vmatpush1.msra.mxu0 %v4099
        %v4101 = vand.u32 %v4038, 4294901760
        %4102 = vmatprep.subr.mxu0 %v4101
        %v4103 = vand.u32 %v4037, 4294901760
        %4104 = vmatpush1.msra.mxu0 %v4103
        %v4105 = vand.u32 %v4042, 4294901760
        %4106 = vmatprep.subr.mxu0 %v4105
        %v4107 = vand.u32 %v4041, 4294901760
        %4108 = vmatpush1.msra.mxu0 %v4107
        %v4109 = vand.u32 %v4046, 4294901760
        %4110 = vmatprep.subr.mxu0 %v4109
        %v4111 = vand.u32 %v4045, 4294901760
        %4112 = vmatpush1.msra.mxu0 %v4111
        %v4113 = vand.u32 %v4050, 4294901760
        %4114 = vmatprep.subr.mxu0 %v4113
        %v4115 = vand.u32 %v4049, 4294901760
        %4116 = vmatpush1.msra.mxu0 %v4115
        %v4117 = vand.u32 %v4054, 4294901760
        %4118 = vmatprep.subr.mxu0 %v4117
        %v4119 = vand.u32 %v4053, 4294901760
        %4120 = vmatpush1.msra.mxu0 %v4119
        %v4121 = vand.u32 %v4058, 4294901760
        %4122 = vmatprep.subr.mxu0 %v4121
        %v4123 = vand.u32 %v4057, 4294901760
        %4124 = vmatpush1.msra.mxu0 %v4123
        %v4125 = vand.u32 %v4062, 4294901760
        %4126 = vmatprep.subr.mxu0 %v4125
        %v4127 = vand.u32 %v4061, 4294901760
        %4128 = vmatpush1.msra.mxu0 %v4127
        %v4129 = vand.u32 %v4066, 4294901760
        %4130 = vmatprep.subr.mxu0 %v4129
        %v4131 = vand.u32 %v4065, 4294901760
        %4132 = vmatpush1.msra.mxu0 %v4131
        %v4133 = vand.u32 %v4070, 4294901760
        %4134 = vmatprep.subr.mxu0 %v4133
        %v4135 = vand.u32 %v4069, 4294901760
        %4136 = vmatpush1.msra.mxu0 %v4135
        %v4137 = vand.u32 %v4074, 4294901760
        %4138 = vmatprep.subr.mxu0 %v4137
        %v4139 = vand.u32 %v4073, 4294901760
        %4140 = vmatpush1.msra.mxu0 %v4139
        %v4141 = vand.u32 %v4078, 4294901760
        %4142 = vmatprep.subr.mxu0 %v4141
        %v4143 = vand.u32 %v4077, 4294901760
        %4144 = vmatpush1.msra.mxu0 %v4143
        %4145 = vmatprep.subr.mxu0 0.0
        %4146 = vmatpush1.msra.mxu0 0.0
        %4147 = vmatprep.subr.mxu0 0.0
        %4148 = vmatpush1.msra.mxu0 0.0
        %4149 = vmatprep.subr.mxu0 0.0
        %4150 = vmatpush1.msra.mxu0 0.0
        %4151 = vmatprep.subr.mxu0 0.0
        %4152 = vmatpush1.msra.mxu0 0.0
        %4153 = vmatprep.subr.mxu0 0.0
        %4154 = vmatpush1.msra.mxu0 0.0
        %4155 = vmatprep.subr.mxu0 0.0
        %4156 = vmatpush1.msra.mxu0 0.0
        %4157 = vmatprep.subr.mxu0 0.0
        %4158 = vmatpush1.msra.mxu0 0.0
        %4159 = vmatprep.subr.mxu0 0.0
        %4160 = vmatpush1.msra.mxu0 0.0
        %4161 = vmatprep.subr.mxu0 0.0
        %4162 = vmatpush1.msra.mxu0 0.0
        %4163 = vmatprep.subr.mxu0 0.0
        %4164 = vmatpush1.msra.mxu0 0.0
        %4165 = vmatprep.subr.mxu0 0.0
        %4166 = vmatpush1.msra.mxu0 0.0
        %4167 = vmatprep.subr.mxu0 0.0
        %4168 = vmatpush1.msra.mxu0 0.0
        %4169 = vmatprep.subr.mxu0 0.0
        %4170 = vmatpush1.msra.mxu0 0.0
        %4171 = vmatprep.subr.mxu0 0.0
        %4172 = vmatpush1.msra.mxu0 0.0
        %4173 = vmatprep.subr.mxu0 0.0
        %4174 = vmatpush1.msra.mxu0 0.0
        %4175 = vmatprep.subr.mxu0 0.0
        %4176 = vmatpush1.msra.mxu0 0.0
        %4177 = vmatprep.mubr.f32.mxu0 0.0
        %v4178 = vand.u32 %v4015, 4294901760
        %v4179 = vsub.f32 %v4015, %v4178
        %v4180 = vand.u32 %v4179, 4294901760
        %v4181 = vsub.f32 %v4179, %v4180
        %v4182 = vand.u32 %v4181, 4294901760
        %4183 = vmatmul.mubr.f32.gmra.mrb[0].mxu0 %v4182
        %v4184 = vpop.f32.mrb[0].mxu0
        %v4185 = vadd.f32 0.0, %v4184
        %v4186 = vpop.f32.mrb[0].mxu0
        %v4187 = vadd.f32 0.0, %v4186
        %4188 = vdwg.mxu0
        %v4189 = vand.u32 %v4018, 4294901760
        %v4190 = vsub.f32 %v4018, %v4189
        %v4191 = vand.u32 %v4190, 4294901760
        %v4192 = vsub.f32 %v4190, %v4191
        %v4193 = vand.u32 %v4192, 4294901760
        %4194 = vmatprep.subr.mxu0 %v4193
        %v4195 = vand.u32 %v4017, 4294901760
        %v4196 = vsub.f32 %v4017, %v4195
        %v4197 = vand.u32 %v4196, 4294901760
        %v4198 = vsub.f32 %v4196, %v4197
        %v4199 = vand.u32 %v4198, 4294901760
        %4200 = vmatpush1.msra.mxu0 %v4199
        %v4201 = vand.u32 %v4022, 4294901760
        %v4202 = vsub.f32 %v4022, %v4201
        %v4203 = vand.u32 %v4202, 4294901760
        %v4204 = vsub.f32 %v4202, %v4203
        %v4205 = vand.u32 %v4204, 4294901760
        %4206 = vmatprep.subr.mxu0 %v4205
        %v4207 = vand.u32 %v4021, 4294901760
        %v4208 = vsub.f32 %v4021, %v4207
        %v4209 = vand.u32 %v4208, 4294901760
        %v4210 = vsub.f32 %v4208, %v4209
        %v4211 = vand.u32 %v4210, 4294901760
        %4212 = vmatpush1.msra.mxu0 %v4211
        %v4213 = vand.u32 %v4026, 4294901760
        %v4214 = vsub.f32 %v4026, %v4213
        %v4215 = vand.u32 %v4214, 4294901760
        %v4216 = vsub.f32 %v4214, %v4215
        %v4217 = vand.u32 %v4216, 4294901760
        %4218 = vmatprep.subr.mxu0 %v4217
        %v4219 = vand.u32 %v4025, 4294901760
        %v4220 = vsub.f32 %v4025, %v4219
        %v4221 = vand.u32 %v4220, 4294901760
        %v4222 = vsub.f32 %v4220, %v4221
        %v4223 = vand.u32 %v4222, 4294901760
        %4224 = vmatpush1.msra.mxu0 %v4223
        %v4225 = vand.u32 %v4030, 4294901760
        %v4226 = vsub.f32 %v4030, %v4225
        %v4227 = vand.u32 %v4226, 4294901760
        %v4228 = vsub.f32 %v4226, %v4227
        %v4229 = vand.u32 %v4228, 4294901760
        %4230 = vmatprep.subr.mxu0 %v4229
        %v4231 = vand.u32 %v4029, 4294901760
        %v4232 = vsub.f32 %v4029, %v4231
        %v4233 = vand.u32 %v4232, 4294901760
        %v4234 = vsub.f32 %v4232, %v4233
        %v4235 = vand.u32 %v4234, 4294901760
        %4236 = vmatpush1.msra.mxu0 %v4235
        %v4237 = vand.u32 %v4034, 4294901760
        %v4238 = vsub.f32 %v4034, %v4237
        %v4239 = vand.u32 %v4238, 4294901760
        %v4240 = vsub.f32 %v4238, %v4239
        %v4241 = vand.u32 %v4240, 4294901760
        %4242 = vmatprep.subr.mxu0 %v4241
        %v4243 = vand.u32 %v4033, 4294901760
        %v4244 = vsub.f32 %v4033, %v4243
        %v4245 = vand.u32 %v4244, 4294901760
        %v4246 = vsub.f32 %v4244, %v4245
        %v4247 = vand.u32 %v4246, 4294901760
        %4248 = vmatpush1.msra.mxu0 %v4247
        %v4249 = vand.u32 %v4038, 4294901760
        %v4250 = vsub.f32 %v4038, %v4249
        %v4251 = vand.u32 %v4250, 4294901760
        %v4252 = vsub.f32 %v4250, %v4251
        %v4253 = vand.u32 %v4252, 4294901760
        %4254 = vmatprep.subr.mxu0 %v4253
        %v4255 = vand.u32 %v4037, 4294901760
        %v4256 = vsub.f32 %v4037, %v4255
        %v4257 = vand.u32 %v4256, 4294901760
        %v4258 = vsub.f32 %v4256, %v4257
        %v4259 = vand.u32 %v4258, 4294901760
        %4260 = vmatpush1.msra.mxu0 %v4259
        %v4261 = vand.u32 %v4042, 4294901760
        %v4262 = vsub.f32 %v4042, %v4261
        %v4263 = vand.u32 %v4262, 4294901760
        %v4264 = vsub.f32 %v4262, %v4263
        %v4265 = vand.u32 %v4264, 4294901760
        %4266 = vmatprep.subr.mxu0 %v4265
        %v4267 = vand.u32 %v4041, 4294901760
        %v4268 = vsub.f32 %v4041, %v4267
        %v4269 = vand.u32 %v4268, 4294901760
        %v4270 = vsub.f32 %v4268, %v4269
        %v4271 = vand.u32 %v4270, 4294901760
        %4272 = vmatpush1.msra.mxu0 %v4271
        %v4273 = vand.u32 %v4046, 4294901760
        %v4274 = vsub.f32 %v4046, %v4273
        %v4275 = vand.u32 %v4274, 4294901760
        %v4276 = vsub.f32 %v4274, %v4275
        %v4277 = vand.u32 %v4276, 4294901760
        %4278 = vmatprep.subr.mxu0 %v4277
        %v4279 = vand.u32 %v4045, 4294901760
        %v4280 = vsub.f32 %v4045, %v4279
        %v4281 = vand.u32 %v4280, 4294901760
        %v4282 = vsub.f32 %v4280, %v4281
        %v4283 = vand.u32 %v4282, 4294901760
        %4284 = vmatpush1.msra.mxu0 %v4283
        %v4285 = vand.u32 %v4050, 4294901760
        %v4286 = vsub.f32 %v4050, %v4285
        %v4287 = vand.u32 %v4286, 4294901760
        %v4288 = vsub.f32 %v4286, %v4287
        %v4289 = vand.u32 %v4288, 4294901760
        %4290 = vmatprep.subr.mxu0 %v4289
        %v4291 = vand.u32 %v4049, 4294901760
        %v4292 = vsub.f32 %v4049, %v4291
        %v4293 = vand.u32 %v4292, 4294901760
        %v4294 = vsub.f32 %v4292, %v4293
        %v4295 = vand.u32 %v4294, 4294901760
        %4296 = vmatpush1.msra.mxu0 %v4295
        %v4297 = vand.u32 %v4054, 4294901760
        %v4298 = vsub.f32 %v4054, %v4297
        %v4299 = vand.u32 %v4298, 4294901760
        %v4300 = vsub.f32 %v4298, %v4299
        %v4301 = vand.u32 %v4300, 4294901760
        %4302 = vmatprep.subr.mxu0 %v4301
        %v4303 = vand.u32 %v4053, 4294901760
        %v4304 = vsub.f32 %v4053, %v4303
        %v4305 = vand.u32 %v4304, 4294901760
        %v4306 = vsub.f32 %v4304, %v4305
        %v4307 = vand.u32 %v4306, 4294901760
        %4308 = vmatpush1.msra.mxu0 %v4307
        %v4309 = vand.u32 %v4058, 4294901760
        %v4310 = vsub.f32 %v4058, %v4309
        %v4311 = vand.u32 %v4310, 4294901760
        %v4312 = vsub.f32 %v4310, %v4311
        %v4313 = vand.u32 %v4312, 4294901760
        %4314 = vmatprep.subr.mxu0 %v4313
        %v4315 = vand.u32 %v4057, 4294901760
        %v4316 = vsub.f32 %v4057, %v4315
        %v4317 = vand.u32 %v4316, 4294901760
        %v4318 = vsub.f32 %v4316, %v4317
        %v4319 = vand.u32 %v4318, 4294901760
        %4320 = vmatpush1.msra.mxu0 %v4319
        %v4321 = vand.u32 %v4062, 4294901760
        %v4322 = vsub.f32 %v4062, %v4321
        %v4323 = vand.u32 %v4322, 4294901760
        %v4324 = vsub.f32 %v4322, %v4323
        %v4325 = vand.u32 %v4324, 4294901760
        %4326 = vmatprep.subr.mxu0 %v4325
        %v4327 = vand.u32 %v4061, 4294901760
        %v4328 = vsub.f32 %v4061, %v4327
        %v4329 = vand.u32 %v4328, 4294901760
        %v4330 = vsub.f32 %v4328, %v4329
        %v4331 = vand.u32 %v4330, 4294901760
        %4332 = vmatpush1.msra.mxu0 %v4331
        %v4333 = vand.u32 %v4066, 4294901760
        %v4334 = vsub.f32 %v4066, %v4333
        %v4335 = vand.u32 %v4334, 4294901760
        %v4336 = vsub.f32 %v4334, %v4335
        %v4337 = vand.u32 %v4336, 4294901760
        %4338 = vmatprep.subr.mxu0 %v4337
        %v4339 = vand.u32 %v4065, 4294901760
        %v4340 = vsub.f32 %v4065, %v4339
        %v4341 = vand.u32 %v4340, 4294901760
        %v4342 = vsub.f32 %v4340, %v4341
        %v4343 = vand.u32 %v4342, 4294901760
        %4344 = vmatpush1.msra.mxu0 %v4343
        %v4345 = vand.u32 %v4070, 4294901760
        %v4346 = vsub.f32 %v4070, %v4345
        %v4347 = vand.u32 %v4346, 4294901760
        %v4348 = vsub.f32 %v4346, %v4347
        %v4349 = vand.u32 %v4348, 4294901760
        %4350 = vmatprep.subr.mxu0 %v4349
        %v4351 = vand.u32 %v4069, 4294901760
        %v4352 = vsub.f32 %v4069, %v4351
        %v4353 = vand.u32 %v4352, 4294901760
        %v4354 = vsub.f32 %v4352, %v4353
        %v4355 = vand.u32 %v4354, 4294901760
        %4356 = vmatpush1.msra.mxu0 %v4355
        %v4357 = vand.u32 %v4074, 4294901760
        %v4358 = vsub.f32 %v4074, %v4357
        %v4359 = vand.u32 %v4358, 4294901760
        %v4360 = vsub.f32 %v4358, %v4359
        %v4361 = vand.u32 %v4360, 4294901760
        %4362 = vmatprep.subr.mxu0 %v4361
        %v4363 = vand.u32 %v4073, 4294901760
        %v4364 = vsub.f32 %v4073, %v4363
        %v4365 = vand.u32 %v4364, 4294901760
        %v4366 = vsub.f32 %v4364, %v4365
        %v4367 = vand.u32 %v4366, 4294901760
        %4368 = vmatpush1.msra.mxu0 %v4367
        %v4369 = vand.u32 %v4078, 4294901760
        %v4370 = vsub.f32 %v4078, %v4369
        %v4371 = vand.u32 %v4370, 4294901760
        %v4372 = vsub.f32 %v4370, %v4371
        %v4373 = vand.u32 %v4372, 4294901760
        %4374 = vmatprep.subr.mxu0 %v4373
        %v4375 = vand.u32 %v4077, 4294901760
        %v4376 = vsub.f32 %v4077, %v4375
        %v4377 = vand.u32 %v4376, 4294901760
        %v4378 = vsub.f32 %v4376, %v4377
        %v4379 = vand.u32 %v4378, 4294901760
        %4380 = vmatpush1.msra.mxu0 %v4379
        %4381 = vmatprep.subr.mxu0 0.0
        %4382 = vmatpush1.msra.mxu0 0.0
        %4383 = vmatprep.subr.mxu0 0.0
        %4384 = vmatpush1.msra.mxu0 0.0
        %4385 = vmatprep.subr.mxu0 0.0
        %4386 = vmatpush1.msra.mxu0 0.0
        %4387 = vmatprep.subr.mxu0 0.0
        %4388 = vmatpush1.msra.mxu0 0.0
        %4389 = vmatprep.subr.mxu0 0.0
        %4390 = vmatpush1.msra.mxu0 0.0
        %4391 = vmatprep.subr.mxu0 0.0
        %4392 = vmatpush1.msra.mxu0 0.0
        %4393 = vmatprep.subr.mxu0 0.0
        %4394 = vmatpush1.msra.mxu0 0.0
        %4395 = vmatprep.subr.mxu0 0.0
        %4396 = vmatpush1.msra.mxu0 0.0
        %4397 = vmatprep.subr.mxu0 0.0
        %4398 = vmatpush1.msra.mxu0 0.0
        %4399 = vmatprep.subr.mxu0 0.0
        %4400 = vmatpush1.msra.mxu0 0.0
        %4401 = vmatprep.subr.mxu0 0.0
        %4402 = vmatpush1.msra.mxu0 0.0
        %4403 = vmatprep.subr.mxu0 0.0
        %4404 = vmatpush1.msra.mxu0 0.0
        %4405 = vmatprep.subr.mxu0 0.0
        %4406 = vmatpush1.msra.mxu0 0.0
        %4407 = vmatprep.subr.mxu0 0.0
        %4408 = vmatpush1.msra.mxu0 0.0
        %4409 = vmatprep.subr.mxu0 0.0
        %4410 = vmatpush1.msra.mxu0 0.0
        %4411 = vmatprep.subr.mxu0 0.0
        %4412 = vmatpush1.msra.mxu0 0.0
        %4413 = vmatprep.mubr.f32.mxu0 0.0
        %v4414 = vand.u32 %v4015, 4294901760
        %4415 = vmatmul.mubr.f32.gmra.mrb[0].mxu0 %v4414
        %v4416 = vpop.f32.mrb[0].mxu0
        %v4417 = vadd.f32 %v4185, %v4416
        %v4418 = vpop.f32.mrb[0].mxu0
        %v4419 = vadd.f32 %v4187, %v4418
        %4420 = vdwg.mxu0
        %v4421 = vand.u32 %v4018, 4294901760
        %v4422 = vsub.f32 %v4018, %v4421
        %4423 = vmatprep.subr.mxu0 %v4422
        %v4424 = vand.u32 %v4017, 4294901760
        %v4425 = vsub.f32 %v4017, %v4424
        %4426 = vmatpush1.msra.mxu0 %v4425
        %v4427 = vand.u32 %v4022, 4294901760
        %v4428 = vsub.f32 %v4022, %v4427
        %4429 = vmatprep.subr.mxu0 %v4428
        %v4430 = vand.u32 %v4021, 4294901760
        %v4431 = vsub.f32 %v4021, %v4430
        %4432 = vmatpush1.msra.mxu0 %v4431
        %v4433 = vand.u32 %v4026, 4294901760
        %v4434 = vsub.f32 %v4026, %v4433
        %4435 = vmatprep.subr.mxu0 %v4434
        %v4436 = vand.u32 %v4025, 4294901760
        %v4437 = vsub.f32 %v4025, %v4436
        %4438 = vmatpush1.msra.mxu0 %v4437
        %v4439 = vand.u32 %v4030, 4294901760
        %v4440 = vsub.f32 %v4030, %v4439
        %4441 = vmatprep.subr.mxu0 %v4440
        %v4442 = vand.u32 %v4029, 4294901760
        %v4443 = vsub.f32 %v4029, %v4442
        %4444 = vmatpush1.msra.mxu0 %v4443
        %v4445 = vand.u32 %v4034, 4294901760
        %v4446 = vsub.f32 %v4034, %v4445
        %4447 = vmatprep.subr.mxu0 %v4446
        %v4448 = vand.u32 %v4033, 4294901760
        %v4449 = vsub.f32 %v4033, %v4448
        %4450 = vmatpush1.msra.mxu0 %v4449
        %v4451 = vand.u32 %v4038, 4294901760
        %v4452 = vsub.f32 %v4038, %v4451
        %4453 = vmatprep.subr.mxu0 %v4452
        %v4454 = vand.u32 %v4037, 4294901760
        %v4455 = vsub.f32 %v4037, %v4454
        %4456 = vmatpush1.msra.mxu0 %v4455
        %v4457 = vand.u32 %v4042, 4294901760
        %v4458 = vsub.f32 %v4042, %v4457
        %4459 = vmatprep.subr.mxu0 %v4458
        %v4460 = vand.u32 %v4041, 4294901760
        %v4461 = vsub.f32 %v4041, %v4460
        %4462 = vmatpush1.msra.mxu0 %v4461
        %v4463 = vand.u32 %v4046, 4294901760
        %v4464 = vsub.f32 %v4046, %v4463
        %4465 = vmatprep.subr.mxu0 %v4464
        %v4466 = vand.u32 %v4045, 4294901760
        %v4467 = vsub.f32 %v4045, %v4466
        %4468 = vmatpush1.msra.mxu0 %v4467
        %v4469 = vand.u32 %v4050, 4294901760
        %v4470 = vsub.f32 %v4050, %v4469
        %4471 = vmatprep.subr.mxu0 %v4470
        %v4472 = vand.u32 %v4049, 4294901760
        %v4473 = vsub.f32 %v4049, %v4472
        %4474 = vmatpush1.msra.mxu0 %v4473
        %v4475 = vand.u32 %v4054, 4294901760
        %v4476 = vsub.f32 %v4054, %v4475
        %4477 = vmatprep.subr.mxu0 %v4476
        %v4478 = vand.u32 %v4053, 4294901760
        %v4479 = vsub.f32 %v4053, %v4478
        %4480 = vmatpush1.msra.mxu0 %v4479
        %v4481 = vand.u32 %v4058, 4294901760
        %v4482 = vsub.f32 %v4058, %v4481
        %4483 = vmatprep.subr.mxu0 %v4482
        %v4484 = vand.u32 %v4057, 4294901760
        %v4485 = vsub.f32 %v4057, %v4484
        %4486 = vmatpush1.msra.mxu0 %v4485
        %v4487 = vand.u32 %v4062, 4294901760
        %v4488 = vsub.f32 %v4062, %v4487
        %4489 = vmatprep.subr.mxu0 %v4488
        %v4490 = vand.u32 %v4061, 4294901760
        %v4491 = vsub.f32 %v4061, %v4490
        %4492 = vmatpush1.msra.mxu0 %v4491
        %v4493 = vand.u32 %v4066, 4294901760
        %v4494 = vsub.f32 %v4066, %v4493
        %4495 = vmatprep.subr.mxu0 %v4494
        %v4496 = vand.u32 %v4065, 4294901760
        %v4497 = vsub.f32 %v4065, %v4496
        %4498 = vmatpush1.msra.mxu0 %v4497
        %v4499 = vand.u32 %v4070, 4294901760
        %v4500 = vsub.f32 %v4070, %v4499
        %4501 = vmatprep.subr.mxu0 %v4500
        %v4502 = vand.u32 %v4069, 4294901760
        %v4503 = vsub.f32 %v4069, %v4502
        %4504 = vmatpush1.msra.mxu0 %v4503
        %v4505 = vand.u32 %v4074, 4294901760
        %v4506 = vsub.f32 %v4074, %v4505
        %4507 = vmatprep.subr.mxu0 %v4506
        %v4508 = vand.u32 %v4073, 4294901760
        %v4509 = vsub.f32 %v4073, %v4508
        %4510 = vmatpush1.msra.mxu0 %v4509
        %v4511 = vand.u32 %v4078, 4294901760
        %v4512 = vsub.f32 %v4078, %v4511
        %4513 = vmatprep.subr.mxu0 %v4512
        %v4514 = vand.u32 %v4077, 4294901760
        %v4515 = vsub.f32 %v4077, %v4514
        %4516 = vmatpush1.msra.mxu0 %v4515
        %4517 = vmatprep.subr.mxu0 0.0
        %4518 = vmatpush1.msra.mxu0 0.0
        %4519 = vmatprep.subr.mxu0 0.0
        %4520 = vmatpush1.msra.mxu0 0.0
        %4521 = vmatprep.subr.mxu0 0.0
        %4522 = vmatpush1.msra.mxu0 0.0
        %4523 = vmatprep.subr.mxu0 0.0
        %4524 = vmatpush1.msra.mxu0 0.0
        %4525 = vmatprep.subr.mxu0 0.0
        %4526 = vmatpush1.msra.mxu0 0.0
        %4527 = vmatprep.subr.mxu0 0.0
        %4528 = vmatpush1.msra.mxu0 0.0
        %4529 = vmatprep.subr.mxu0 0.0
        %4530 = vmatpush1.msra.mxu0 0.0
        %4531 = vmatprep.subr.mxu0 0.0
        %4532 = vmatpush1.msra.mxu0 0.0
        %4533 = vmatprep.subr.mxu0 0.0
        %4534 = vmatpush1.msra.mxu0 0.0
        %4535 = vmatprep.subr.mxu0 0.0
        %4536 = vmatpush1.msra.mxu0 0.0
        %4537 = vmatprep.subr.mxu0 0.0
        %4538 = vmatpush1.msra.mxu0 0.0
        %4539 = vmatprep.subr.mxu0 0.0
        %4540 = vmatpush1.msra.mxu0 0.0
        %4541 = vmatprep.subr.mxu0 0.0
        %4542 = vmatpush1.msra.mxu0 0.0
        %4543 = vmatprep.subr.mxu0 0.0
        %4544 = vmatpush1.msra.mxu0 0.0
        %4545 = vmatprep.subr.mxu0 0.0
        %4546 = vmatpush1.msra.mxu0 0.0
        %4547 = vmatprep.subr.mxu0 0.0
        %4548 = vmatpush1.msra.mxu0 0.0
        %4549 = vmatprep.mubr.f32.mxu0 0.0
        %v4550 = vand.u32 %v4015, 4294901760
        %v4551 = vsub.f32 %v4015, %v4550
        %4552 = vmatmul.mubr.f32.gmra.mrb[0].mxu0 %v4551
        %v4553 = vpop.f32.mrb[0].mxu0
        %v4554 = vadd.f32 %v4417, %v4553
        %v4555 = vpop.f32.mrb[0].mxu0
        %v4556 = vadd.f32 %v4419, %v4555
        %4557 = vdwg.mxu0
        %v4558 = vand.u32 %v4018, 4294901760
        %4559 = vmatprep.subr.mxu0 %v4558
        %v4560 = vand.u32 %v4017, 4294901760
        %4561 = vmatpush1.msra.mxu0 %v4560
        %v4562 = vand.u32 %v4022, 4294901760
        %4563 = vmatprep.subr.mxu0 %v4562
        %v4564 = vand.u32 %v4021, 4294901760
        %4565 = vmatpush1.msra.mxu0 %v4564
        %v4566 = vand.u32 %v4026, 4294901760
        %4567 = vmatprep.subr.mxu0 %v4566
        %v4568 = vand.u32 %v4025, 4294901760
        %4569 = vmatpush1.msra.mxu0 %v4568
        %v4570 = vand.u32 %v4030, 4294901760
        %4571 = vmatprep.subr.mxu0 %v4570
        %v4572 = vand.u32 %v4029, 4294901760
        %4573 = vmatpush1.msra.mxu0 %v4572
        %v4574 = vand.u32 %v4034, 4294901760
        %4575 = vmatprep.subr.mxu0 %v4574
        %v4576 = vand.u32 %v4033, 4294901760
        %4577 = vmatpush1.msra.mxu0 %v4576
        %v4578 = vand.u32 %v4038, 4294901760
        %4579 = vmatprep.subr.mxu0 %v4578
        %v4580 = vand.u32 %v4037, 4294901760
        %4581 = vmatpush1.msra.mxu0 %v4580
        %v4582 = vand.u32 %v4042, 4294901760
        %4583 = vmatprep.subr.mxu0 %v4582
        %v4584 = vand.u32 %v4041, 4294901760
        %4585 = vmatpush1.msra.mxu0 %v4584
        %v4586 = vand.u32 %v4046, 4294901760
        %4587 = vmatprep.subr.mxu0 %v4586
        %v4588 = vand.u32 %v4045, 4294901760
        %4589 = vmatpush1.msra.mxu0 %v4588
        %v4590 = vand.u32 %v4050, 4294901760
        %4591 = vmatprep.subr.mxu0 %v4590
        %v4592 = vand.u32 %v4049, 4294901760
        %4593 = vmatpush1.msra.mxu0 %v4592
        %v4594 = vand.u32 %v4054, 4294901760
        %4595 = vmatprep.subr.mxu0 %v4594
        %v4596 = vand.u32 %v4053, 4294901760
        %4597 = vmatpush1.msra.mxu0 %v4596
        %v4598 = vand.u32 %v4058, 4294901760
        %4599 = vmatprep.subr.mxu0 %v4598
        %v4600 = vand.u32 %v4057, 4294901760
        %4601 = vmatpush1.msra.mxu0 %v4600
        %v4602 = vand.u32 %v4062, 4294901760
        %4603 = vmatprep.subr.mxu0 %v4602
        %v4604 = vand.u32 %v4061, 4294901760
        %4605 = vmatpush1.msra.mxu0 %v4604
        %v4606 = vand.u32 %v4066, 4294901760
        %4607 = vmatprep.subr.mxu0 %v4606
        %v4608 = vand.u32 %v4065, 4294901760
        %4609 = vmatpush1.msra.mxu0 %v4608
        %v4610 = vand.u32 %v4070, 4294901760
        %4611 = vmatprep.subr.mxu0 %v4610
        %v4612 = vand.u32 %v4069, 4294901760
        %4613 = vmatpush1.msra.mxu0 %v4612
        %v4614 = vand.u32 %v4074, 4294901760
        %4615 = vmatprep.subr.mxu0 %v4614
        %v4616 = vand.u32 %v4073, 4294901760
        %4617 = vmatpush1.msra.mxu0 %v4616
        %v4618 = vand.u32 %v4078, 4294901760
        %4619 = vmatprep.subr.mxu0 %v4618
        %v4620 = vand.u32 %v4077, 4294901760
        %4621 = vmatpush1.msra.mxu0 %v4620
        %4622 = vmatprep.subr.mxu0 0.0
        %4623 = vmatpush1.msra.mxu0 0.0
        %4624 = vmatprep.subr.mxu0 0.0
        %4625 = vmatpush1.msra.mxu0 0.0
        %4626 = vmatprep.subr.mxu0 0.0
        %4627 = vmatpush1.msra.mxu0 0.0
        %4628 = vmatprep.subr.mxu0 0.0
        %4629 = vmatpush1.msra.mxu0 0.0
        %4630 = vmatprep.subr.mxu0 0.0
        %4631 = vmatpush1.msra.mxu0 0.0
        %4632 = vmatprep.subr.mxu0 0.0
        %4633 = vmatpush1.msra.mxu0 0.0
        %4634 = vmatprep.subr.mxu0 0.0
        %4635 = vmatpush1.msra.mxu0 0.0
        %4636 = vmatprep.subr.mxu0 0.0
        %4637 = vmatpush1.msra.mxu0 0.0
        %4638 = vmatprep.subr.mxu0 0.0
        %4639 = vmatpush1.msra.mxu0 0.0
        %4640 = vmatprep.subr.mxu0 0.0
        %4641 = vmatpush1.msra.mxu0 0.0
        %4642 = vmatprep.subr.mxu0 0.0
        %4643 = vmatpush1.msra.mxu0 0.0
        %4644 = vmatprep.subr.mxu0 0.0
        %4645 = vmatpush1.msra.mxu0 0.0
        %4646 = vmatprep.subr.mxu0 0.0
        %4647 = vmatpush1.msra.mxu0 0.0
        %4648 = vmatprep.subr.mxu0 0.0
        %4649 = vmatpush1.msra.mxu0 0.0
        %4650 = vmatprep.subr.mxu0 0.0
        %4651 = vmatpush1.msra.mxu0 0.0
        %4652 = vmatprep.subr.mxu0 0.0
        %4653 = vmatpush1.msra.mxu0 0.0
        %4654 = vmatprep.mubr.f32.mxu0 0.0
        %v4655 = vand.u32 %v4015, 4294901760
        %v4656 = vsub.f32 %v4015, %v4655
        %v4657 = vand.u32 %v4656, 4294901760
        %4658 = vmatmul.mubr.f32.gmra.mrb[0].mxu0 %v4657
        %v4659 = vpop.f32.mrb[0].mxu0
        %v4660 = vadd.f32 %v4554, %v4659
        %v4661 = vpop.f32.mrb[0].mxu0
        %v4662 = vadd.f32 %v4556, %v4661
        %4663 = vdwg.mxu0
        %v4664 = vand.u32 %v4018, 4294901760
        %v4665 = vsub.f32 %v4018, %v4664
        %v4666 = vand.u32 %v4665, 4294901760
        %4667 = vmatprep.subr.mxu0 %v4666
        %v4668 = vand.u32 %v4017, 4294901760
        %v4669 = vsub.f32 %v4017, %v4668
        %v4670 = vand.u32 %v4669, 4294901760
        %4671 = vmatpush1.msra.mxu0 %v4670
        %v4672 = vand.u32 %v4022, 4294901760
        %v4673 = vsub.f32 %v4022, %v4672
        %v4674 = vand.u32 %v4673, 4294901760
        %4675 = vmatprep.subr.mxu0 %v4674
        %v4676 = vand.u32 %v4021, 4294901760
        %v4677 = vsub.f32 %v4021, %v4676
        %v4678 = vand.u32 %v4677, 4294901760
        %4679 = vmatpush1.msra.mxu0 %v4678
        %v4680 = vand.u32 %v4026, 4294901760
        %v4681 = vsub.f32 %v4026, %v4680
        %v4682 = vand.u32 %v4681, 4294901760
        %4683 = vmatprep.subr.mxu0 %v4682
        %v4684 = vand.u32 %v4025, 4294901760
        %v4685 = vsub.f32 %v4025, %v4684
        %v4686 = vand.u32 %v4685, 4294901760
        %4687 = vmatpush1.msra.mxu0 %v4686
        %v4688 = vand.u32 %v4030, 4294901760
        %v4689 = vsub.f32 %v4030, %v4688
        %v4690 = vand.u32 %v4689, 4294901760
        %4691 = vmatprep.subr.mxu0 %v4690
        %v4692 = vand.u32 %v4029, 4294901760
        %v4693 = vsub.f32 %v4029, %v4692
        %v4694 = vand.u32 %v4693, 4294901760
        %4695 = vmatpush1.msra.mxu0 %v4694
        %v4696 = vand.u32 %v4034, 4294901760
        %v4697 = vsub.f32 %v4034, %v4696
        %v4698 = vand.u32 %v4697, 4294901760
        %4699 = vmatprep.subr.mxu0 %v4698
        %v4700 = vand.u32 %v4033, 4294901760
        %v4701 = vsub.f32 %v4033, %v4700
        %v4702 = vand.u32 %v4701, 4294901760
        %4703 = vmatpush1.msra.mxu0 %v4702
        %v4704 = vand.u32 %v4038, 4294901760
        %v4705 = vsub.f32 %v4038, %v4704
        %v4706 = vand.u32 %v4705, 4294901760
        %4707 = vmatprep.subr.mxu0 %v4706
        %v4708 = vand.u32 %v4037, 4294901760
        %v4709 = vsub.f32 %v4037, %v4708
        %v4710 = vand.u32 %v4709, 4294901760
        %4711 = vmatpush1.msra.mxu0 %v4710
        %v4712 = vand.u32 %v4042, 4294901760
        %v4713 = vsub.f32 %v4042, %v4712
        %v4714 = vand.u32 %v4713, 4294901760
        %4715 = vmatprep.subr.mxu0 %v4714
        %v4716 = vand.u32 %v4041, 4294901760
        %v4717 = vsub.f32 %v4041, %v4716
        %v4718 = vand.u32 %v4717, 4294901760
        %4719 = vmatpush1.msra.mxu0 %v4718
        %v4720 = vand.u32 %v4046, 4294901760
        %v4721 = vsub.f32 %v4046, %v4720
        %v4722 = vand.u32 %v4721, 4294901760
        %4723 = vmatprep.subr.mxu0 %v4722
        %v4724 = vand.u32 %v4045, 4294901760
        %v4725 = vsub.f32 %v4045, %v4724
        %v4726 = vand.u32 %v4725, 4294901760
        %4727 = vmatpush1.msra.mxu0 %v4726
        %v4728 = vand.u32 %v4050, 4294901760
        %v4729 = vsub.f32 %v4050, %v4728
        %v4730 = vand.u32 %v4729, 4294901760
        %4731 = vmatprep.subr.mxu0 %v4730
        %v4732 = vand.u32 %v4049, 4294901760
        %v4733 = vsub.f32 %v4049, %v4732
        %v4734 = vand.u32 %v4733, 4294901760
        %4735 = vmatpush1.msra.mxu0 %v4734
        %v4736 = vand.u32 %v4054, 4294901760
        %v4737 = vsub.f32 %v4054, %v4736
        %v4738 = vand.u32 %v4737, 4294901760
        %4739 = vmatprep.subr.mxu0 %v4738
        %v4740 = vand.u32 %v4053, 4294901760
        %v4741 = vsub.f32 %v4053, %v4740
        %v4742 = vand.u32 %v4741, 4294901760
        %4743 = vmatpush1.msra.mxu0 %v4742
        %v4744 = vand.u32 %v4058, 4294901760
        %v4745 = vsub.f32 %v4058, %v4744
        %v4746 = vand.u32 %v4745, 4294901760
        %4747 = vmatprep.subr.mxu0 %v4746
        %v4748 = vand.u32 %v4057, 4294901760
        %v4749 = vsub.f32 %v4057, %v4748
        %v4750 = vand.u32 %v4749, 4294901760
        %4751 = vmatpush1.msra.mxu0 %v4750
        %v4752 = vand.u32 %v4062, 4294901760
        %v4753 = vsub.f32 %v4062, %v4752
        %v4754 = vand.u32 %v4753, 4294901760
        %4755 = vmatprep.subr.mxu0 %v4754
        %v4756 = vand.u32 %v4061, 4294901760
        %v4757 = vsub.f32 %v4061, %v4756
        %v4758 = vand.u32 %v4757, 4294901760
        %4759 = vmatpush1.msra.mxu0 %v4758
        %v4760 = vand.u32 %v4066, 4294901760
        %v4761 = vsub.f32 %v4066, %v4760
        %v4762 = vand.u32 %v4761, 4294901760
        %4763 = vmatprep.subr.mxu0 %v4762
        %v4764 = vand.u32 %v4065, 4294901760
        %v4765 = vsub.f32 %v4065, %v4764
        %v4766 = vand.u32 %v4765, 4294901760
        %4767 = vmatpush1.msra.mxu0 %v4766
        %v4768 = vand.u32 %v4070, 4294901760
        %v4769 = vsub.f32 %v4070, %v4768
        %v4770 = vand.u32 %v4769, 4294901760
        %4771 = vmatprep.subr.mxu0 %v4770
        %v4772 = vand.u32 %v4069, 4294901760
        %v4773 = vsub.f32 %v4069, %v4772
        %v4774 = vand.u32 %v4773, 4294901760
        %4775 = vmatpush1.msra.mxu0 %v4774
        %v4776 = vand.u32 %v4074, 4294901760
        %v4777 = vsub.f32 %v4074, %v4776
        %v4778 = vand.u32 %v4777, 4294901760
        %4779 = vmatprep.subr.mxu0 %v4778
        %v4780 = vand.u32 %v4073, 4294901760
        %v4781 = vsub.f32 %v4073, %v4780
        %v4782 = vand.u32 %v4781, 4294901760
        %4783 = vmatpush1.msra.mxu0 %v4782
        %v4784 = vand.u32 %v4078, 4294901760
        %v4785 = vsub.f32 %v4078, %v4784
        %v4786 = vand.u32 %v4785, 4294901760
        %4787 = vmatprep.subr.mxu0 %v4786
        %v4788 = vand.u32 %v4077, 4294901760
        %v4789 = vsub.f32 %v4077, %v4788
        %v4790 = vand.u32 %v4789, 4294901760
        %4791 = vmatpush1.msra.mxu0 %v4790
        %4792 = vmatprep.subr.mxu0 0.0
        %4793 = vmatpush1.msra.mxu0 0.0
        %4794 = vmatprep.subr.mxu0 0.0
        %4795 = vmatpush1.msra.mxu0 0.0
        %4796 = vmatprep.subr.mxu0 0.0
        %4797 = vmatpush1.msra.mxu0 0.0
        %4798 = vmatprep.subr.mxu0 0.0
        %4799 = vmatpush1.msra.mxu0 0.0
        %4800 = vmatprep.subr.mxu0 0.0
        %4801 = vmatpush1.msra.mxu0 0.0
        %4802 = vmatprep.subr.mxu0 0.0
        %4803 = vmatpush1.msra.mxu0 0.0
        %4804 = vmatprep.subr.mxu0 0.0
        %4805 = vmatpush1.msra.mxu0 0.0
        %4806 = vmatprep.subr.mxu0 0.0
        %4807 = vmatpush1.msra.mxu0 0.0
        %4808 = vmatprep.subr.mxu0 0.0
        %4809 = vmatpush1.msra.mxu0 0.0
        %4810 = vmatprep.subr.mxu0 0.0
        %4811 = vmatpush1.msra.mxu0 0.0
        %4812 = vmatprep.subr.mxu0 0.0
        %4813 = vmatpush1.msra.mxu0 0.0
        %4814 = vmatprep.subr.mxu0 0.0
        %4815 = vmatpush1.msra.mxu0 0.0
        %4816 = vmatprep.subr.mxu0 0.0
        %4817 = vmatpush1.msra.mxu0 0.0
        %4818 = vmatprep.subr.mxu0 0.0
        %4819 = vmatpush1.msra.mxu0 0.0
        %4820 = vmatprep.subr.mxu0 0.0
        %4821 = vmatpush1.msra.mxu0 0.0
        %4822 = vmatprep.subr.mxu0 0.0
        %4823 = vmatpush1.msra.mxu0 0.0
        %4824 = vmatprep.mubr.f32.mxu0 0.0
        %v4825 = vand.u32 %v4015, 4294901760
        %4826 = vmatmul.mubr.f32.gmra.mrb[0].mxu0 %v4825
        %v4827 = vpop.f32.mrb[0].mxu0
        %v4828 = vadd.f32 %v4660, %v4827
        %v4829 = vpop.f32.mrb[0].mxu0
        %v4830 = vadd.f32 %v4662, %v4829
        %4831 = vdwg.mxu0
        %v4832 = vand.u32 %v4018, 4294901760
        %4833 = vmatprep.subr.mxu0 %v4832
        %v4834 = vand.u32 %v4017, 4294901760
        %4835 = vmatpush1.msra.mxu0 %v4834
        %v4836 = vand.u32 %v4022, 4294901760
        %4837 = vmatprep.subr.mxu0 %v4836
        %v4838 = vand.u32 %v4021, 4294901760
        %4839 = vmatpush1.msra.mxu0 %v4838
        %v4840 = vand.u32 %v4026, 4294901760
        %4841 = vmatprep.subr.mxu0 %v4840
        %v4842 = vand.u32 %v4025, 4294901760
        %4843 = vmatpush1.msra.mxu0 %v4842
        %v4844 = vand.u32 %v4030, 4294901760
        %4845 = vmatprep.subr.mxu0 %v4844
        %v4846 = vand.u32 %v4029, 4294901760
        %4847 = vmatpush1.msra.mxu0 %v4846
        %v4848 = vand.u32 %v4034, 4294901760
        %4849 = vmatprep.subr.mxu0 %v4848
        %v4850 = vand.u32 %v4033, 4294901760
        %4851 = vmatpush1.msra.mxu0 %v4850
        %v4852 = vand.u32 %v4038, 4294901760
        %4853 = vmatprep.subr.mxu0 %v4852
        %v4854 = vand.u32 %v4037, 4294901760
        %4855 = vmatpush1.msra.mxu0 %v4854
        %v4856 = vand.u32 %v4042, 4294901760
        %4857 = vmatprep.subr.mxu0 %v4856
        %v4858 = vand.u32 %v4041, 4294901760
        %4859 = vmatpush1.msra.mxu0 %v4858
        %v4860 = vand.u32 %v4046, 4294901760
        %4861 = vmatprep.subr.mxu0 %v4860
        %v4862 = vand.u32 %v4045, 4294901760
        %4863 = vmatpush1.msra.mxu0 %v4862
        %v4864 = vand.u32 %v4050, 4294901760
        %4865 = vmatprep.subr.mxu0 %v4864
        %v4866 = vand.u32 %v4049, 4294901760
        %4867 = vmatpush1.msra.mxu0 %v4866
        %v4868 = vand.u32 %v4054, 4294901760
        %4869 = vmatprep.subr.mxu0 %v4868
        %v4870 = vand.u32 %v4053, 4294901760
        %4871 = vmatpush1.msra.mxu0 %v4870
        %v4872 = vand.u32 %v4058, 4294901760
        %4873 = vmatprep.subr.mxu0 %v4872
        %v4874 = vand.u32 %v4057, 4294901760
        %4875 = vmatpush1.msra.mxu0 %v4874
        %v4876 = vand.u32 %v4062, 4294901760
        %4877 = vmatprep.subr.mxu0 %v4876
        %v4878 = vand.u32 %v4061, 4294901760
        %4879 = vmatpush1.msra.mxu0 %v4878
        %v4880 = vand.u32 %v4066, 4294901760
        %4881 = vmatprep.subr.mxu0 %v4880
        %v4882 = vand.u32 %v4065, 4294901760
        %4883 = vmatpush1.msra.mxu0 %v4882
        %v4884 = vand.u32 %v4070, 4294901760
        %4885 = vmatprep.subr.mxu0 %v4884
        %v4886 = vand.u32 %v4069, 4294901760
        %4887 = vmatpush1.msra.mxu0 %v4886
        %v4888 = vand.u32 %v4074, 4294901760
        %4889 = vmatprep.subr.mxu0 %v4888
        %v4890 = vand.u32 %v4073, 4294901760
        %4891 = vmatpush1.msra.mxu0 %v4890
        %v4892 = vand.u32 %v4078, 4294901760
        %4893 = vmatprep.subr.mxu0 %v4892
        %v4894 = vand.u32 %v4077, 4294901760
        %4895 = vmatpush1.msra.mxu0 %v4894
        %4896 = vmatprep.subr.mxu0 0.0
        %4897 = vmatpush1.msra.mxu0 0.0
        %4898 = vmatprep.subr.mxu0 0.0
        %4899 = vmatpush1.msra.mxu0 0.0
        %4900 = vmatprep.subr.mxu0 0.0
        %4901 = vmatpush1.msra.mxu0 0.0
        %4902 = vmatprep.subr.mxu0 0.0
        %4903 = vmatpush1.msra.mxu0 0.0
        %4904 = vmatprep.subr.mxu0 0.0
        %4905 = vmatpush1.msra.mxu0 0.0
        %4906 = vmatprep.subr.mxu0 0.0
        %4907 = vmatpush1.msra.mxu0 0.0
        %4908 = vmatprep.subr.mxu0 0.0
        %4909 = vmatpush1.msra.mxu0 0.0
        %4910 = vmatprep.subr.mxu0 0.0
        %4911 = vmatpush1.msra.mxu0 0.0
        %4912 = vmatprep.subr.mxu0 0.0
        %4913 = vmatpush1.msra.mxu0 0.0
        %4914 = vmatprep.subr.mxu0 0.0
        %4915 = vmatpush1.msra.mxu0 0.0
        %4916 = vmatprep.subr.mxu0 0.0
        %4917 = vmatpush1.msra.mxu0 0.0
        %4918 = vmatprep.subr.mxu0 0.0
        %4919 = vmatpush1.msra.mxu0 0.0
        %4920 = vmatprep.subr.mxu0 0.0
        %4921 = vmatpush1.msra.mxu0 0.0
        %4922 = vmatprep.subr.mxu0 0.0
        %4923 = vmatpush1.msra.mxu0 0.0
        %4924 = vmatprep.subr.mxu0 0.0
        %4925 = vmatpush1.msra.mxu0 0.0
        %4926 = vmatprep.subr.mxu0 0.0
        %4927 = vmatpush1.msra.mxu0 0.0
        %4928 = vmatprep.mubr.f32.mxu0 0.0
        %v4929 = vand.u32 %v4015, 4294901760
        %4930 = vmatmul.mubr.f32.gmra.mrb[0].mxu0 %v4929
        %v4931 = vpop.f32.mrb[0].mxu0
        %v4932 = vadd.f32 %v4828, %v4931
        %v4933 = vpop.f32.mrb[0].mxu0
        %v4934 = vadd.f32 %v4830, %v4933
        %4935 = vdwg.mxu0
        %v4936 = vand.u32 %v4020, 4294901760
        %4937 = vmatprep.subr.mxu0 %v4936
        %v4938 = vand.u32 %v4019, 4294901760
        %4939 = vmatpush1.msra.mxu0 %v4938
        %v4940 = vand.u32 %v4024, 4294901760
        %4941 = vmatprep.subr.mxu0 %v4940
        %v4942 = vand.u32 %v4023, 4294901760
        %4943 = vmatpush1.msra.mxu0 %v4942
        %v4944 = vand.u32 %v4028, 4294901760
        %4945 = vmatprep.subr.mxu0 %v4944
        %v4946 = vand.u32 %v4027, 4294901760
        %4947 = vmatpush1.msra.mxu0 %v4946
        %v4948 = vand.u32 %v4032, 4294901760
        %4949 = vmatprep.subr.mxu0 %v4948
        %v4950 = vand.u32 %v4031, 4294901760
        %4951 = vmatpush1.msra.mxu0 %v4950
        %v4952 = vand.u32 %v4036, 4294901760
        %4953 = vmatprep.subr.mxu0 %v4952
        %v4954 = vand.u32 %v4035, 4294901760
        %4955 = vmatpush1.msra.mxu0 %v4954
        %v4956 = vand.u32 %v4040, 4294901760
        %4957 = vmatprep.subr.mxu0 %v4956
        %v4958 = vand.u32 %v4039, 4294901760
        %4959 = vmatpush1.msra.mxu0 %v4958
        %v4960 = vand.u32 %v4044, 4294901760
        %4961 = vmatprep.subr.mxu0 %v4960
        %v4962 = vand.u32 %v4043, 4294901760
        %4963 = vmatpush1.msra.mxu0 %v4962
        %v4964 = vand.u32 %v4048, 4294901760
        %4965 = vmatprep.subr.mxu0 %v4964
        %v4966 = vand.u32 %v4047, 4294901760
        %4967 = vmatpush1.msra.mxu0 %v4966
        %v4968 = vand.u32 %v4052, 4294901760
        %4969 = vmatprep.subr.mxu0 %v4968
        %v4970 = vand.u32 %v4051, 4294901760
        %4971 = vmatpush1.msra.mxu0 %v4970
        %v4972 = vand.u32 %v4056, 4294901760
        %4973 = vmatprep.subr.mxu0 %v4972
        %v4974 = vand.u32 %v4055, 4294901760
        %4975 = vmatpush1.msra.mxu0 %v4974
        %v4976 = vand.u32 %v4060, 4294901760
        %4977 = vmatprep.subr.mxu0 %v4976
        %v4978 = vand.u32 %v4059, 4294901760
        %4979 = vmatpush1.msra.mxu0 %v4978
        %v4980 = vand.u32 %v4064, 4294901760
        %4981 = vmatprep.subr.mxu0 %v4980
        %v4982 = vand.u32 %v4063, 4294901760
        %4983 = vmatpush1.msra.mxu0 %v4982
        %v4984 = vand.u32 %v4068, 4294901760
        %4985 = vmatprep.subr.mxu0 %v4984
        %v4986 = vand.u32 %v4067, 4294901760
        %4987 = vmatpush1.msra.mxu0 %v4986
        %v4988 = vand.u32 %v4072, 4294901760
        %4989 = vmatprep.subr.mxu0 %v4988
        %v4990 = vand.u32 %v4071, 4294901760
        %4991 = vmatpush1.msra.mxu0 %v4990
        %v4992 = vand.u32 %v4076, 4294901760
        %4993 = vmatprep.subr.mxu0 %v4992
        %v4994 = vand.u32 %v4075, 4294901760
        %4995 = vmatpush1.msra.mxu0 %v4994
        %v4996 = vand.u32 %v4080, 4294901760
        %4997 = vmatprep.subr.mxu0 %v4996
        %v4998 = vand.u32 %v4079, 4294901760
        %4999 = vmatpush1.msra.mxu0 %v4998
        %5000 = vmatprep.subr.mxu0 0.0
        %5001 = vmatpush1.msra.mxu0 0.0
        %5002 = vmatprep.subr.mxu0 0.0
        %5003 = vmatpush1.msra.mxu0 0.0
        %5004 = vmatprep.subr.mxu0 0.0
        %5005 = vmatpush1.msra.mxu0 0.0
        %5006 = vmatprep.subr.mxu0 0.0
        %5007 = vmatpush1.msra.mxu0 0.0
        %5008 = vmatprep.subr.mxu0 0.0
        %5009 = vmatpush1.msra.mxu0 0.0
        %5010 = vmatprep.subr.mxu0 0.0
        %5011 = vmatpush1.msra.mxu0 0.0
        %5012 = vmatprep.subr.mxu0 0.0
        %5013 = vmatpush1.msra.mxu0 0.0
        %5014 = vmatprep.subr.mxu0 0.0
        %5015 = vmatpush1.msra.mxu0 0.0
        %5016 = vmatprep.subr.mxu0 0.0
        %5017 = vmatpush1.msra.mxu0 0.0
        %5018 = vmatprep.subr.mxu0 0.0
        %5019 = vmatpush1.msra.mxu0 0.0
        %5020 = vmatprep.subr.mxu0 0.0
        %5021 = vmatpush1.msra.mxu0 0.0
        %5022 = vmatprep.subr.mxu0 0.0
        %5023 = vmatpush1.msra.mxu0 0.0
        %5024 = vmatprep.subr.mxu0 0.0
        %5025 = vmatpush1.msra.mxu0 0.0
        %5026 = vmatprep.subr.mxu0 0.0
        %5027 = vmatpush1.msra.mxu0 0.0
        %5028 = vmatprep.subr.mxu0 0.0
        %5029 = vmatpush1.msra.mxu0 0.0
        %5030 = vmatprep.subr.mxu0 0.0
        %5031 = vmatpush1.msra.mxu0 0.0
        %5032 = vmatprep.mubr.f32.mxu0 0.0
        %v5033 = vand.u32 %v4015, 4294901760
        %v5034 = vsub.f32 %v4015, %v5033
        %v5035 = vand.u32 %v5034, 4294901760
        %v5036 = vsub.f32 %v5034, %v5035
        %v5037 = vand.u32 %v5036, 4294901760
        %5038 = vmatmul.mubr.f32.gmra.mrb[0].mxu0 %v5037
        %v5039 = vpop.f32.mrb[0].mxu0
        %v5040 = vadd.f32 0.0, %v5039
        %v5041 = vpop.f32.mrb[0].mxu0
        %v5042 = vadd.f32 0.0, %v5041
        %5043 = vdwg.mxu0
        %v5044 = vand.u32 %v4020, 4294901760
        %v5045 = vsub.f32 %v4020, %v5044
        %v5046 = vand.u32 %v5045, 4294901760
        %v5047 = vsub.f32 %v5045, %v5046
        %v5048 = vand.u32 %v5047, 4294901760
        %5049 = vmatprep.subr.mxu0 %v5048
        %v5050 = vand.u32 %v4019, 4294901760
        %v5051 = vsub.f32 %v4019, %v5050
        %v5052 = vand.u32 %v5051, 4294901760
        %v5053 = vsub.f32 %v5051, %v5052
        %v5054 = vand.u32 %v5053, 4294901760
        %5055 = vmatpush1.msra.mxu0 %v5054
        %v5056 = vand.u32 %v4024, 4294901760
        %v5057 = vsub.f32 %v4024, %v5056
        %v5058 = vand.u32 %v5057, 4294901760
        %v5059 = vsub.f32 %v5057, %v5058
        %v5060 = vand.u32 %v5059, 4294901760
        %5061 = vmatprep.subr.mxu0 %v5060
        %v5062 = vand.u32 %v4023, 4294901760
        %v5063 = vsub.f32 %v4023, %v5062
        %v5064 = vand.u32 %v5063, 4294901760
        %v5065 = vsub.f32 %v5063, %v5064
        %v5066 = vand.u32 %v5065, 4294901760
        %5067 = vmatpush1.msra.mxu0 %v5066
        %v5068 = vand.u32 %v4028, 4294901760
        %v5069 = vsub.f32 %v4028, %v5068
        %v5070 = vand.u32 %v5069, 4294901760
        %v5071 = vsub.f32 %v5069, %v5070
        %v5072 = vand.u32 %v5071, 4294901760
        %5073 = vmatprep.subr.mxu0 %v5072
        %v5074 = vand.u32 %v4027, 4294901760
        %v5075 = vsub.f32 %v4027, %v5074
        %v5076 = vand.u32 %v5075, 4294901760
        %v5077 = vsub.f32 %v5075, %v5076
        %v5078 = vand.u32 %v5077, 4294901760
        %5079 = vmatpush1.msra.mxu0 %v5078
        %v5080 = vand.u32 %v4032, 4294901760
        %v5081 = vsub.f32 %v4032, %v5080
        %v5082 = vand.u32 %v5081, 4294901760
        %v5083 = vsub.f32 %v5081, %v5082
        %v5084 = vand.u32 %v5083, 4294901760
        %5085 = vmatprep.subr.mxu0 %v5084
        %v5086 = vand.u32 %v4031, 4294901760
        %v5087 = vsub.f32 %v4031, %v5086
        %v5088 = vand.u32 %v5087, 4294901760
        %v5089 = vsub.f32 %v5087, %v5088
        %v5090 = vand.u32 %v5089, 4294901760
        %5091 = vmatpush1.msra.mxu0 %v5090
        %v5092 = vand.u32 %v4036, 4294901760
        %v5093 = vsub.f32 %v4036, %v5092
        %v5094 = vand.u32 %v5093, 4294901760
        %v5095 = vsub.f32 %v5093, %v5094
        %v5096 = vand.u32 %v5095, 4294901760
        %5097 = vmatprep.subr.mxu0 %v5096
        %v5098 = vand.u32 %v4035, 4294901760
        %v5099 = vsub.f32 %v4035, %v5098
        %v5100 = vand.u32 %v5099, 4294901760
        %v5101 = vsub.f32 %v5099, %v5100
        %v5102 = vand.u32 %v5101, 4294901760
        %5103 = vmatpush1.msra.mxu0 %v5102
        %v5104 = vand.u32 %v4040, 4294901760
        %v5105 = vsub.f32 %v4040, %v5104
        %v5106 = vand.u32 %v5105, 4294901760
        %v5107 = vsub.f32 %v5105, %v5106
        %v5108 = vand.u32 %v5107, 4294901760
        %5109 = vmatprep.subr.mxu0 %v5108
        %v5110 = vand.u32 %v4039, 4294901760
        %v5111 = vsub.f32 %v4039, %v5110
        %v5112 = vand.u32 %v5111, 4294901760
        %v5113 = vsub.f32 %v5111, %v5112
        %v5114 = vand.u32 %v5113, 4294901760
        %5115 = vmatpush1.msra.mxu0 %v5114
        %v5116 = vand.u32 %v4044, 4294901760
        %v5117 = vsub.f32 %v4044, %v5116
        %v5118 = vand.u32 %v5117, 4294901760
        %v5119 = vsub.f32 %v5117, %v5118
        %v5120 = vand.u32 %v5119, 4294901760
        %5121 = vmatprep.subr.mxu0 %v5120
        %v5122 = vand.u32 %v4043, 4294901760
        %v5123 = vsub.f32 %v4043, %v5122
        %v5124 = vand.u32 %v5123, 4294901760
        %v5125 = vsub.f32 %v5123, %v5124
        %v5126 = vand.u32 %v5125, 4294901760
        %5127 = vmatpush1.msra.mxu0 %v5126
        %v5128 = vand.u32 %v4048, 4294901760
        %v5129 = vsub.f32 %v4048, %v5128
        %v5130 = vand.u32 %v5129, 4294901760
        %v5131 = vsub.f32 %v5129, %v5130
        %v5132 = vand.u32 %v5131, 4294901760
        %5133 = vmatprep.subr.mxu0 %v5132
        %v5134 = vand.u32 %v4047, 4294901760
        %v5135 = vsub.f32 %v4047, %v5134
        %v5136 = vand.u32 %v5135, 4294901760
        %v5137 = vsub.f32 %v5135, %v5136
        %v5138 = vand.u32 %v5137, 4294901760
        %5139 = vmatpush1.msra.mxu0 %v5138
        %v5140 = vand.u32 %v4052, 4294901760
        %v5141 = vsub.f32 %v4052, %v5140
        %v5142 = vand.u32 %v5141, 4294901760
        %v5143 = vsub.f32 %v5141, %v5142
        %v5144 = vand.u32 %v5143, 4294901760
        %5145 = vmatprep.subr.mxu0 %v5144
        %v5146 = vand.u32 %v4051, 4294901760
        %v5147 = vsub.f32 %v4051, %v5146
        %v5148 = vand.u32 %v5147, 4294901760
        %v5149 = vsub.f32 %v5147, %v5148
        %v5150 = vand.u32 %v5149, 4294901760
        %5151 = vmatpush1.msra.mxu0 %v5150
        %v5152 = vand.u32 %v4056, 4294901760
        %v5153 = vsub.f32 %v4056, %v5152
        %v5154 = vand.u32 %v5153, 4294901760
        %v5155 = vsub.f32 %v5153, %v5154
        %v5156 = vand.u32 %v5155, 4294901760
        %5157 = vmatprep.subr.mxu0 %v5156
        %v5158 = vand.u32 %v4055, 4294901760
        %v5159 = vsub.f32 %v4055, %v5158
        %v5160 = vand.u32 %v5159, 4294901760
        %v5161 = vsub.f32 %v5159, %v5160
        %v5162 = vand.u32 %v5161, 4294901760
        %5163 = vmatpush1.msra.mxu0 %v5162
        %v5164 = vand.u32 %v4060, 4294901760
        %v5165 = vsub.f32 %v4060, %v5164
        %v5166 = vand.u32 %v5165, 4294901760
        %v5167 = vsub.f32 %v5165, %v5166
        %v5168 = vand.u32 %v5167, 4294901760
        %5169 = vmatprep.subr.mxu0 %v5168
        %v5170 = vand.u32 %v4059, 4294901760
        %v5171 = vsub.f32 %v4059, %v5170
        %v5172 = vand.u32 %v5171, 4294901760
        %v5173 = vsub.f32 %v5171, %v5172
        %v5174 = vand.u32 %v5173, 4294901760
        %5175 = vmatpush1.msra.mxu0 %v5174
        %v5176 = vand.u32 %v4064, 4294901760
        %v5177 = vsub.f32 %v4064, %v5176
        %v5178 = vand.u32 %v5177, 4294901760
        %v5179 = vsub.f32 %v5177, %v5178
        %v5180 = vand.u32 %v5179, 4294901760
        %5181 = vmatprep.subr.mxu0 %v5180
        %v5182 = vand.u32 %v4063, 4294901760
        %v5183 = vsub.f32 %v4063, %v5182
        %v5184 = vand.u32 %v5183, 4294901760
        %v5185 = vsub.f32 %v5183, %v5184
        %v5186 = vand.u32 %v5185, 4294901760
        %5187 = vmatpush1.msra.mxu0 %v5186
        %v5188 = vand.u32 %v4068, 4294901760
        %v5189 = vsub.f32 %v4068, %v5188
        %v5190 = vand.u32 %v5189, 4294901760
        %v5191 = vsub.f32 %v5189, %v5190
        %v5192 = vand.u32 %v5191, 4294901760
        %5193 = vmatprep.subr.mxu0 %v5192
        %v5194 = vand.u32 %v4067, 4294901760
        %v5195 = vsub.f32 %v4067, %v5194
        %v5196 = vand.u32 %v5195, 4294901760
        %v5197 = vsub.f32 %v5195, %v5196
        %v5198 = vand.u32 %v5197, 4294901760
        %5199 = vmatpush1.msra.mxu0 %v5198
        %v5200 = vand.u32 %v4072, 4294901760
        %v5201 = vsub.f32 %v4072, %v5200
        %v5202 = vand.u32 %v5201, 4294901760
        %v5203 = vsub.f32 %v5201, %v5202
        %v5204 = vand.u32 %v5203, 4294901760
        %5205 = vmatprep.subr.mxu0 %v5204
        %v5206 = vand.u32 %v4071, 4294901760
        %v5207 = vsub.f32 %v4071, %v5206
        %v5208 = vand.u32 %v5207, 4294901760
        %v5209 = vsub.f32 %v5207, %v5208
        %v5210 = vand.u32 %v5209, 4294901760
        %5211 = vmatpush1.msra.mxu0 %v5210
        %v5212 = vand.u32 %v4076, 4294901760
        %v5213 = vsub.f32 %v4076, %v5212
        %v5214 = vand.u32 %v5213, 4294901760
        %v5215 = vsub.f32 %v5213, %v5214
        %v5216 = vand.u32 %v5215, 4294901760
        %5217 = vmatprep.subr.mxu0 %v5216
        %v5218 = vand.u32 %v4075, 4294901760
        %v5219 = vsub.f32 %v4075, %v5218
        %v5220 = vand.u32 %v5219, 4294901760
        %v5221 = vsub.f32 %v5219, %v5220
        %v5222 = vand.u32 %v5221, 4294901760
        %5223 = vmatpush1.msra.mxu0 %v5222
        %v5224 = vand.u32 %v4080, 4294901760
        %v5225 = vsub.f32 %v4080, %v5224
        %v5226 = vand.u32 %v5225, 4294901760
        %v5227 = vsub.f32 %v5225, %v5226
        %v5228 = vand.u32 %v5227, 4294901760
        %5229 = vmatprep.subr.mxu0 %v5228
        %v5230 = vand.u32 %v4079, 4294901760
        %v5231 = vsub.f32 %v4079, %v5230
        %v5232 = vand.u32 %v5231, 4294901760
        %v5233 = vsub.f32 %v5231, %v5232
        %v5234 = vand.u32 %v5233, 4294901760
        %5235 = vmatpush1.msra.mxu0 %v5234
        %5236 = vmatprep.subr.mxu0 0.0
        %5237 = vmatpush1.msra.mxu0 0.0
        %5238 = vmatprep.subr.mxu0 0.0
        %5239 = vmatpush1.msra.mxu0 0.0
        %5240 = vmatprep.subr.mxu0 0.0
        %5241 = vmatpush1.msra.mxu0 0.0
        %5242 = vmatprep.subr.mxu0 0.0
        %5243 = vmatpush1.msra.mxu0 0.0
        %5244 = vmatprep.subr.mxu0 0.0
        %5245 = vmatpush1.msra.mxu0 0.0
        %5246 = vmatprep.subr.mxu0 0.0
        %5247 = vmatpush1.msra.mxu0 0.0
        %5248 = vmatprep.subr.mxu0 0.0
        %5249 = vmatpush1.msra.mxu0 0.0
        %5250 = vmatprep.subr.mxu0 0.0
        %5251 = vmatpush1.msra.mxu0 0.0
        %5252 = vmatprep.subr.mxu0 0.0
        %5253 = vmatpush1.msra.mxu0 0.0
        %5254 = vmatprep.subr.mxu0 0.0
        %5255 = vmatpush1.msra.mxu0 0.0
        %5256 = vmatprep.subr.mxu0 0.0
        %5257 = vmatpush1.msra.mxu0 0.0
        %5258 = vmatprep.subr.mxu0 0.0
        %5259 = vmatpush1.msra.mxu0 0.0
        %5260 = vmatprep.subr.mxu0 0.0
        %5261 = vmatpush1.msra.mxu0 0.0
        %5262 = vmatprep.subr.mxu0 0.0
        %5263 = vmatpush1.msra.mxu0 0.0
        %5264 = vmatprep.subr.mxu0 0.0
        %5265 = vmatpush1.msra.mxu0 0.0
        %5266 = vmatprep.subr.mxu0 0.0
        %5267 = vmatpush1.msra.mxu0 0.0
        %5268 = vmatprep.mubr.f32.mxu0 0.0
        %v5269 = vand.u32 %v4015, 4294901760
        %5270 = vmatmul.mubr.f32.gmra.mrb[0].mxu0 %v5269
        %v5271 = vpop.f32.mrb[0].mxu0
        %v5272 = vadd.f32 %v5040, %v5271
        %v5273 = vpop.f32.mrb[0].mxu0
        %v5274 = vadd.f32 %v5042, %v5273
        %5275 = vdwg.mxu0
        %v5276 = vand.u32 %v4020, 4294901760
        %v5277 = vsub.f32 %v4020, %v5276
        %5278 = vmatprep.subr.mxu0 %v5277
        %v5279 = vand.u32 %v4019, 4294901760
        %v5280 = vsub.f32 %v4019, %v5279
        %5281 = vmatpush1.msra.mxu0 %v5280
        %v5282 = vand.u32 %v4024, 4294901760
        %v5283 = vsub.f32 %v4024, %v5282
        %5284 = vmatprep.subr.mxu0 %v5283
        %v5285 = vand.u32 %v4023, 4294901760
        %v5286 = vsub.f32 %v4023, %v5285
        %5287 = vmatpush1.msra.mxu0 %v5286
        %v5288 = vand.u32 %v4028, 4294901760
        %v5289 = vsub.f32 %v4028, %v5288
        %5290 = vmatprep.subr.mxu0 %v5289
        %v5291 = vand.u32 %v4027, 4294901760
        %v5292 = vsub.f32 %v4027, %v5291
        %5293 = vmatpush1.msra.mxu0 %v5292
        %v5294 = vand.u32 %v4032, 4294901760
        %v5295 = vsub.f32 %v4032, %v5294
        %5296 = vmatprep.subr.mxu0 %v5295
        %v5297 = vand.u32 %v4031, 4294901760
        %v5298 = vsub.f32 %v4031, %v5297
        %5299 = vmatpush1.msra.mxu0 %v5298
        %v5300 = vand.u32 %v4036, 4294901760
        %v5301 = vsub.f32 %v4036, %v5300
        %5302 = vmatprep.subr.mxu0 %v5301
        %v5303 = vand.u32 %v4035, 4294901760
        %v5304 = vsub.f32 %v4035, %v5303
        %5305 = vmatpush1.msra.mxu0 %v5304
        %v5306 = vand.u32 %v4040, 4294901760
        %v5307 = vsub.f32 %v4040, %v5306
        %5308 = vmatprep.subr.mxu0 %v5307
        %v5309 = vand.u32 %v4039, 4294901760
        %v5310 = vsub.f32 %v4039, %v5309
        %5311 = vmatpush1.msra.mxu0 %v5310
        %v5312 = vand.u32 %v4044, 4294901760
        %v5313 = vsub.f32 %v4044, %v5312
        %5314 = vmatprep.subr.mxu0 %v5313
        %v5315 = vand.u32 %v4043, 4294901760
        %v5316 = vsub.f32 %v4043, %v5315
        %5317 = vmatpush1.msra.mxu0 %v5316
        %v5318 = vand.u32 %v4048, 4294901760
        %v5319 = vsub.f32 %v4048, %v5318
        %5320 = vmatprep.subr.mxu0 %v5319
        %v5321 = vand.u32 %v4047, 4294901760
        %v5322 = vsub.f32 %v4047, %v5321
        %5323 = vmatpush1.msra.mxu0 %v5322
        %v5324 = vand.u32 %v4052, 4294901760
        %v5325 = vsub.f32 %v4052, %v5324
        %5326 = vmatprep.subr.mxu0 %v5325
        %v5327 = vand.u32 %v4051, 4294901760
        %v5328 = vsub.f32 %v4051, %v5327
        %5329 = vmatpush1.msra.mxu0 %v5328
        %v5330 = vand.u32 %v4056, 4294901760
        %v5331 = vsub.f32 %v4056, %v5330
        %5332 = vmatprep.subr.mxu0 %v5331
        %v5333 = vand.u32 %v4055, 4294901760
        %v5334 = vsub.f32 %v4055, %v5333
        %5335 = vmatpush1.msra.mxu0 %v5334
        %v5336 = vand.u32 %v4060, 4294901760
        %v5337 = vsub.f32 %v4060, %v5336
        %5338 = vmatprep.subr.mxu0 %v5337
        %v5339 = vand.u32 %v4059, 4294901760
        %v5340 = vsub.f32 %v4059, %v5339
        %5341 = vmatpush1.msra.mxu0 %v5340
        %v5342 = vand.u32 %v4064, 4294901760
        %v5343 = vsub.f32 %v4064, %v5342
        %5344 = vmatprep.subr.mxu0 %v5343
        %v5345 = vand.u32 %v4063, 4294901760
        %v5346 = vsub.f32 %v4063, %v5345
        %5347 = vmatpush1.msra.mxu0 %v5346
        %v5348 = vand.u32 %v4068, 4294901760
        %v5349 = vsub.f32 %v4068, %v5348
        %5350 = vmatprep.subr.mxu0 %v5349
        %v5351 = vand.u32 %v4067, 4294901760
        %v5352 = vsub.f32 %v4067, %v5351
        %5353 = vmatpush1.msra.mxu0 %v5352
        %v5354 = vand.u32 %v4072, 4294901760
        %v5355 = vsub.f32 %v4072, %v5354
        %5356 = vmatprep.subr.mxu0 %v5355
        %v5357 = vand.u32 %v4071, 4294901760
        %v5358 = vsub.f32 %v4071, %v5357
        %5359 = vmatpush1.msra.mxu0 %v5358
        %v5360 = vand.u32 %v4076, 4294901760
        %v5361 = vsub.f32 %v4076, %v5360
        %5362 = vmatprep.subr.mxu0 %v5361
        %v5363 = vand.u32 %v4075, 4294901760
        %v5364 = vsub.f32 %v4075, %v5363
        %5365 = vmatpush1.msra.mxu0 %v5364
        %v5366 = vand.u32 %v4080, 4294901760
        %v5367 = vsub.f32 %v4080, %v5366
        %5368 = vmatprep.subr.mxu0 %v5367
        %v5369 = vand.u32 %v4079, 4294901760
        %v5370 = vsub.f32 %v4079, %v5369
        %5371 = vmatpush1.msra.mxu0 %v5370
        %5372 = vmatprep.subr.mxu0 0.0
        %5373 = vmatpush1.msra.mxu0 0.0
        %5374 = vmatprep.subr.mxu0 0.0
        %5375 = vmatpush1.msra.mxu0 0.0
        %5376 = vmatprep.subr.mxu0 0.0
        %5377 = vmatpush1.msra.mxu0 0.0
        %5378 = vmatprep.subr.mxu0 0.0
        %5379 = vmatpush1.msra.mxu0 0.0
        %5380 = vmatprep.subr.mxu0 0.0
        %5381 = vmatpush1.msra.mxu0 0.0
        %5382 = vmatprep.subr.mxu0 0.0
        %5383 = vmatpush1.msra.mxu0 0.0
        %5384 = vmatprep.subr.mxu0 0.0
        %5385 = vmatpush1.msra.mxu0 0.0
        %5386 = vmatprep.subr.mxu0 0.0
        %5387 = vmatpush1.msra.mxu0 0.0
        %5388 = vmatprep.subr.mxu0 0.0
        %5389 = vmatpush1.msra.mxu0 0.0
        %5390 = vmatprep.subr.mxu0 0.0
        %5391 = vmatpush1.msra.mxu0 0.0
        %5392 = vmatprep.subr.mxu0 0.0
        %5393 = vmatpush1.msra.mxu0 0.0
        %5394 = vmatprep.subr.mxu0 0.0
        %5395 = vmatpush1.msra.mxu0 0.0
        %5396 = vmatprep.subr.mxu0 0.0
        %5397 = vmatpush1.msra.mxu0 0.0
        %5398 = vmatprep.subr.mxu0 0.0
        %5399 = vmatpush1.msra.mxu0 0.0
        %5400 = vmatprep.subr.mxu0 0.0
        %5401 = vmatpush1.msra.mxu0 0.0
        %5402 = vmatprep.subr.mxu0 0.0
        %5403 = vmatpush1.msra.mxu0 0.0
        %5404 = vmatprep.mubr.f32.mxu0 0.0
        %v5405 = vand.u32 %v4015, 4294901760
        %v5406 = vsub.f32 %v4015, %v5405
        %5407 = vmatmul.mubr.f32.gmra.mrb[0].mxu0 %v5406
        %v5408 = vpop.f32.mrb[0].mxu0
        %v5409 = vadd.f32 %v5272, %v5408
        %v5410 = vpop.f32.mrb[0].mxu0
        %v5411 = vadd.f32 %v5274, %v5410
        %5412 = vdwg.mxu0
        %v5413 = vand.u32 %v4020, 4294901760
        %5414 = vmatprep.subr.mxu0 %v5413
        %v5415 = vand.u32 %v4019, 4294901760
        %5416 = vmatpush1.msra.mxu0 %v5415
        %v5417 = vand.u32 %v4024, 4294901760
        %5418 = vmatprep.subr.mxu0 %v5417
        %v5419 = vand.u32 %v4023, 4294901760
        %5420 = vmatpush1.msra.mxu0 %v5419
        %v5421 = vand.u32 %v4028, 4294901760
        %5422 = vmatprep.subr.mxu0 %v5421
        %v5423 = vand.u32 %v4027, 4294901760
        %5424 = vmatpush1.msra.mxu0 %v5423
        %v5425 = vand.u32 %v4032, 4294901760
        %5426 = vmatprep.subr.mxu0 %v5425
        %v5427 = vand.u32 %v4031, 4294901760
        %5428 = vmatpush1.msra.mxu0 %v5427
        %v5429 = vand.u32 %v4036, 4294901760
        %5430 = vmatprep.subr.mxu0 %v5429
        %v5431 = vand.u32 %v4035, 4294901760
        %5432 = vmatpush1.msra.mxu0 %v5431
        %v5433 = vand.u32 %v4040, 4294901760
        %5434 = vmatprep.subr.mxu0 %v5433
        %v5435 = vand.u32 %v4039, 4294901760
        %5436 = vmatpush1.msra.mxu0 %v5435
        %v5437 = vand.u32 %v4044, 4294901760
        %5438 = vmatprep.subr.mxu0 %v5437
        %v5439 = vand.u32 %v4043, 4294901760
        %5440 = vmatpush1.msra.mxu0 %v5439
        %v5441 = vand.u32 %v4048, 4294901760
        %5442 = vmatprep.subr.mxu0 %v5441
        %v5443 = vand.u32 %v4047, 4294901760
        %5444 = vmatpush1.msra.mxu0 %v5443
        %v5445 = vand.u32 %v4052, 4294901760
        %5446 = vmatprep.subr.mxu0 %v5445
        %v5447 = vand.u32 %v4051, 4294901760
        %5448 = vmatpush1.msra.mxu0 %v5447
        %v5449 = vand.u32 %v4056, 4294901760
        %5450 = vmatprep.subr.mxu0 %v5449
        %v5451 = vand.u32 %v4055, 4294901760
        %5452 = vmatpush1.msra.mxu0 %v5451
        %v5453 = vand.u32 %v4060, 4294901760
        %5454 = vmatprep.subr.mxu0 %v5453
        %v5455 = vand.u32 %v4059, 4294901760
        %5456 = vmatpush1.msra.mxu0 %v5455
        %v5457 = vand.u32 %v4064, 4294901760
        %5458 = vmatprep.subr.mxu0 %v5457
        %v5459 = vand.u32 %v4063, 4294901760
        %5460 = vmatpush1.msra.mxu0 %v5459
        %v5461 = vand.u32 %v4068, 4294901760
        %5462 = vmatprep.subr.mxu0 %v5461
        %v5463 = vand.u32 %v4067, 4294901760
        %5464 = vmatpush1.msra.mxu0 %v5463
        %v5465 = vand.u32 %v4072, 4294901760
        %5466 = vmatprep.subr.mxu0 %v5465
        %v5467 = vand.u32 %v4071, 4294901760
        %5468 = vmatpush1.msra.mxu0 %v5467
        %v5469 = vand.u32 %v4076, 4294901760
        %5470 = vmatprep.subr.mxu0 %v5469
        %v5471 = vand.u32 %v4075, 4294901760
        %5472 = vmatpush1.msra.mxu0 %v5471
        %v5473 = vand.u32 %v4080, 4294901760
        %5474 = vmatprep.subr.mxu0 %v5473
        %v5475 = vand.u32 %v4079, 4294901760
        %5476 = vmatpush1.msra.mxu0 %v5475
        %5477 = vmatprep.subr.mxu0 0.0
        %5478 = vmatpush1.msra.mxu0 0.0
        %5479 = vmatprep.subr.mxu0 0.0
        %5480 = vmatpush1.msra.mxu0 0.0
        %5481 = vmatprep.subr.mxu0 0.0
        %5482 = vmatpush1.msra.mxu0 0.0
        %5483 = vmatprep.subr.mxu0 0.0
        %5484 = vmatpush1.msra.mxu0 0.0
        %5485 = vmatprep.subr.mxu0 0.0
        %5486 = vmatpush1.msra.mxu0 0.0
        %5487 = vmatprep.subr.mxu0 0.0
        %5488 = vmatpush1.msra.mxu0 0.0
        %5489 = vmatprep.subr.mxu0 0.0
        %5490 = vmatpush1.msra.mxu0 0.0
        %5491 = vmatprep.subr.mxu0 0.0
        %5492 = vmatpush1.msra.mxu0 0.0
        %5493 = vmatprep.subr.mxu0 0.0
        %5494 = vmatpush1.msra.mxu0 0.0
        %5495 = vmatprep.subr.mxu0 0.0
        %5496 = vmatpush1.msra.mxu0 0.0
        %5497 = vmatprep.subr.mxu0 0.0
        %5498 = vmatpush1.msra.mxu0 0.0
        %5499 = vmatprep.subr.mxu0 0.0
        %5500 = vmatpush1.msra.mxu0 0.0
        %5501 = vmatprep.subr.mxu0 0.0
        %5502 = vmatpush1.msra.mxu0 0.0
        %5503 = vmatprep.subr.mxu0 0.0
        %5504 = vmatpush1.msra.mxu0 0.0
        %5505 = vmatprep.subr.mxu0 0.0
        %5506 = vmatpush1.msra.mxu0 0.0
        %5507 = vmatprep.subr.mxu0 0.0
        %5508 = vmatpush1.msra.mxu0 0.0
        %5509 = vmatprep.mubr.f32.mxu0 0.0
        %v5510 = vand.u32 %v4015, 4294901760
        %v5511 = vsub.f32 %v4015, %v5510
        %v5512 = vand.u32 %v5511, 4294901760
        %5513 = vmatmul.mubr.f32.gmra.mrb[0].mxu0 %v5512
        %v5514 = vpop.f32.mrb[0].mxu0
        %v5515 = vadd.f32 %v5409, %v5514
        %v5516 = vpop.f32.mrb[0].mxu0
        %v5517 = vadd.f32 %v5411, %v5516
        %5518 = vdwg.mxu0
        %v5519 = vand.u32 %v4020, 4294901760
        %v5520 = vsub.f32 %v4020, %v5519
        %v5521 = vand.u32 %v5520, 4294901760
        %5522 = vmatprep.subr.mxu0 %v5521
        %v5523 = vand.u32 %v4019, 4294901760
        %v5524 = vsub.f32 %v4019, %v5523
        %v5525 = vand.u32 %v5524, 4294901760
        %5526 = vmatpush1.msra.mxu0 %v5525
        %v5527 = vand.u32 %v4024, 4294901760
        %v5528 = vsub.f32 %v4024, %v5527
        %v5529 = vand.u32 %v5528, 4294901760
        %5530 = vmatprep.subr.mxu0 %v5529
        %v5531 = vand.u32 %v4023, 4294901760
        %v5532 = vsub.f32 %v4023, %v5531
        %v5533 = vand.u32 %v5532, 4294901760
        %5534 = vmatpush1.msra.mxu0 %v5533
        %v5535 = vand.u32 %v4028, 4294901760
        %v5536 = vsub.f32 %v4028, %v5535
        %v5537 = vand.u32 %v5536, 4294901760
        %5538 = vmatprep.subr.mxu0 %v5537
        %v5539 = vand.u32 %v4027, 4294901760
        %v5540 = vsub.f32 %v4027, %v5539
        %v5541 = vand.u32 %v5540, 4294901760
        %5542 = vmatpush1.msra.mxu0 %v5541
        %v5543 = vand.u32 %v4032, 4294901760
        %v5544 = vsub.f32 %v4032, %v5543
        %v5545 = vand.u32 %v5544, 4294901760
        %5546 = vmatprep.subr.mxu0 %v5545
        %v5547 = vand.u32 %v4031, 4294901760
        %v5548 = vsub.f32 %v4031, %v5547
        %v5549 = vand.u32 %v5548, 4294901760
        %5550 = vmatpush1.msra.mxu0 %v5549
        %v5551 = vand.u32 %v4036, 4294901760
        %v5552 = vsub.f32 %v4036, %v5551
        %v5553 = vand.u32 %v5552, 4294901760
        %5554 = vmatprep.subr.mxu0 %v5553
        %v5555 = vand.u32 %v4035, 4294901760
        %v5556 = vsub.f32 %v4035, %v5555
        %v5557 = vand.u32 %v5556, 4294901760
        %5558 = vmatpush1.msra.mxu0 %v5557
        %v5559 = vand.u32 %v4040, 4294901760
        %v5560 = vsub.f32 %v4040, %v5559
        %v5561 = vand.u32 %v5560, 4294901760
        %5562 = vmatprep.subr.mxu0 %v5561
        %v5563 = vand.u32 %v4039, 4294901760
        %v5564 = vsub.f32 %v4039, %v5563
        %v5565 = vand.u32 %v5564, 4294901760
        %5566 = vmatpush1.msra.mxu0 %v5565
        %v5567 = vand.u32 %v4044, 4294901760
        %v5568 = vsub.f32 %v4044, %v5567
        %v5569 = vand.u32 %v5568, 4294901760
        %5570 = vmatprep.subr.mxu0 %v5569
        %v5571 = vand.u32 %v4043, 4294901760
        %v5572 = vsub.f32 %v4043, %v5571
        %v5573 = vand.u32 %v5572, 4294901760
        %5574 = vmatpush1.msra.mxu0 %v5573
        %v5575 = vand.u32 %v4048, 4294901760
        %v5576 = vsub.f32 %v4048, %v5575
        %v5577 = vand.u32 %v5576, 4294901760
        %5578 = vmatprep.subr.mxu0 %v5577
        %v5579 = vand.u32 %v4047, 4294901760
        %v5580 = vsub.f32 %v4047, %v5579
        %v5581 = vand.u32 %v5580, 4294901760
        %5582 = vmatpush1.msra.mxu0 %v5581
        %v5583 = vand.u32 %v4052, 4294901760
        %v5584 = vsub.f32 %v4052, %v5583
        %v5585 = vand.u32 %v5584, 4294901760
        %5586 = vmatprep.subr.mxu0 %v5585
        %v5587 = vand.u32 %v4051, 4294901760
        %v5588 = vsub.f32 %v4051, %v5587
        %v5589 = vand.u32 %v5588, 4294901760
        %5590 = vmatpush1.msra.mxu0 %v5589
        %v5591 = vand.u32 %v4056, 4294901760
        %v5592 = vsub.f32 %v4056, %v5591
        %v5593 = vand.u32 %v5592, 4294901760
        %5594 = vmatprep.subr.mxu0 %v5593
        %v5595 = vand.u32 %v4055, 4294901760
        %v5596 = vsub.f32 %v4055, %v5595
        %v5597 = vand.u32 %v5596, 4294901760
        %5598 = vmatpush1.msra.mxu0 %v5597
        %v5599 = vand.u32 %v4060, 4294901760
        %v5600 = vsub.f32 %v4060, %v5599
        %v5601 = vand.u32 %v5600, 4294901760
        %5602 = vmatprep.subr.mxu0 %v5601
        %v5603 = vand.u32 %v4059, 4294901760
        %v5604 = vsub.f32 %v4059, %v5603
        %v5605 = vand.u32 %v5604, 4294901760
        %5606 = vmatpush1.msra.mxu0 %v5605
        %v5607 = vand.u32 %v4064, 4294901760
        %v5608 = vsub.f32 %v4064, %v5607
        %v5609 = vand.u32 %v5608, 4294901760
        %5610 = vmatprep.subr.mxu0 %v5609
        %v5611 = vand.u32 %v4063, 4294901760
        %v5612 = vsub.f32 %v4063, %v5611
        %v5613 = vand.u32 %v5612, 4294901760
        %5614 = vmatpush1.msra.mxu0 %v5613
        %v5615 = vand.u32 %v4068, 4294901760
        %v5616 = vsub.f32 %v4068, %v5615
        %v5617 = vand.u32 %v5616, 4294901760
        %5618 = vmatprep.subr.mxu0 %v5617
        %v5619 = vand.u32 %v4067, 4294901760
        %v5620 = vsub.f32 %v4067, %v5619
        %v5621 = vand.u32 %v5620, 4294901760
        %5622 = vmatpush1.msra.mxu0 %v5621
        %v5623 = vand.u32 %v4072, 4294901760
        %v5624 = vsub.f32 %v4072, %v5623
        %v5625 = vand.u32 %v5624, 4294901760
        %5626 = vmatprep.subr.mxu0 %v5625
        %v5627 = vand.u32 %v4071, 4294901760
        %v5628 = vsub.f32 %v4071, %v5627
        %v5629 = vand.u32 %v5628, 4294901760
        %5630 = vmatpush1.msra.mxu0 %v5629
        %v5631 = vand.u32 %v4076, 4294901760
        %v5632 = vsub.f32 %v4076, %v5631
        %v5633 = vand.u32 %v5632, 4294901760
        %5634 = vmatprep.subr.mxu0 %v5633
        %v5635 = vand.u32 %v4075, 4294901760
        %v5636 = vsub.f32 %v4075, %v5635
        %v5637 = vand.u32 %v5636, 4294901760
        %5638 = vmatpush1.msra.mxu0 %v5637
        %v5639 = vand.u32 %v4080, 4294901760
        %v5640 = vsub.f32 %v4080, %v5639
        %v5641 = vand.u32 %v5640, 4294901760
        %5642 = vmatprep.subr.mxu0 %v5641
        %v5643 = vand.u32 %v4079, 4294901760
        %v5644 = vsub.f32 %v4079, %v5643
        %v5645 = vand.u32 %v5644, 4294901760
        %5646 = vmatpush1.msra.mxu0 %v5645
        %5647 = vmatprep.subr.mxu0 0.0
        %5648 = vmatpush1.msra.mxu0 0.0
        %5649 = vmatprep.subr.mxu0 0.0
        %5650 = vmatpush1.msra.mxu0 0.0
        %5651 = vmatprep.subr.mxu0 0.0
        %5652 = vmatpush1.msra.mxu0 0.0
        %5653 = vmatprep.subr.mxu0 0.0
        %5654 = vmatpush1.msra.mxu0 0.0
        %5655 = vmatprep.subr.mxu0 0.0
        %5656 = vmatpush1.msra.mxu0 0.0
        %5657 = vmatprep.subr.mxu0 0.0
        %5658 = vmatpush1.msra.mxu0 0.0
        %5659 = vmatprep.subr.mxu0 0.0
        %5660 = vmatpush1.msra.mxu0 0.0
        %5661 = vmatprep.subr.mxu0 0.0
        %5662 = vmatpush1.msra.mxu0 0.0
        %5663 = vmatprep.subr.mxu0 0.0
        %5664 = vmatpush1.msra.mxu0 0.0
        %5665 = vmatprep.subr.mxu0 0.0
        %5666 = vmatpush1.msra.mxu0 0.0
        %5667 = vmatprep.subr.mxu0 0.0
        %5668 = vmatpush1.msra.mxu0 0.0
        %5669 = vmatprep.subr.mxu0 0.0
        %5670 = vmatpush1.msra.mxu0 0.0
        %5671 = vmatprep.subr.mxu0 0.0
        %5672 = vmatpush1.msra.mxu0 0.0
        %5673 = vmatprep.subr.mxu0 0.0
        %5674 = vmatpush1.msra.mxu0 0.0
        %5675 = vmatprep.subr.mxu0 0.0
        %5676 = vmatpush1.msra.mxu0 0.0
        %5677 = vmatprep.subr.mxu0 0.0
        %5678 = vmatpush1.msra.mxu0 0.0
        %5679 = vmatprep.mubr.f32.mxu0 0.0
        %v5680 = vand.u32 %v4015, 4294901760
        %5681 = vmatmul.mubr.f32.gmra.mrb[0].mxu0 %v5680
        %v5682 = vpop.f32.mrb[0].mxu0
        %v5683 = vadd.f32 %v5515, %v5682
        %v5684 = vpop.f32.mrb[0].mxu0
        %v5685 = vadd.f32 %v5517, %v5684
        %5686 = vdwg.mxu0
        %v5687 = vand.u32 %v4020, 4294901760
        %5688 = vmatprep.subr.mxu0 %v5687
        %v5689 = vand.u32 %v4019, 4294901760
        %5690 = vmatpush1.msra.mxu0 %v5689
        %v5691 = vand.u32 %v4024, 4294901760
        %5692 = vmatprep.subr.mxu0 %v5691
        %v5693 = vand.u32 %v4023, 4294901760
        %5694 = vmatpush1.msra.mxu0 %v5693
        %v5695 = vand.u32 %v4028, 4294901760
        %5696 = vmatprep.subr.mxu0 %v5695
        %v5697 = vand.u32 %v4027, 4294901760
        %5698 = vmatpush1.msra.mxu0 %v5697
        %v5699 = vand.u32 %v4032, 4294901760
        %5700 = vmatprep.subr.mxu0 %v5699
        %v5701 = vand.u32 %v4031, 4294901760
        %5702 = vmatpush1.msra.mxu0 %v5701
        %v5703 = vand.u32 %v4036, 4294901760
        %5704 = vmatprep.subr.mxu0 %v5703
        %v5705 = vand.u32 %v4035, 4294901760
        %5706 = vmatpush1.msra.mxu0 %v5705
        %v5707 = vand.u32 %v4040, 4294901760
        %5708 = vmatprep.subr.mxu0 %v5707
        %v5709 = vand.u32 %v4039, 4294901760
        %5710 = vmatpush1.msra.mxu0 %v5709
        %v5711 = vand.u32 %v4044, 4294901760
        %5712 = vmatprep.subr.mxu0 %v5711
        %v5713 = vand.u32 %v4043, 4294901760
        %5714 = vmatpush1.msra.mxu0 %v5713
        %v5715 = vand.u32 %v4048, 4294901760
        %5716 = vmatprep.subr.mxu0 %v5715
        %v5717 = vand.u32 %v4047, 4294901760
        %5718 = vmatpush1.msra.mxu0 %v5717
        %v5719 = vand.u32 %v4052, 4294901760
        %5720 = vmatprep.subr.mxu0 %v5719
        %v5721 = vand.u32 %v4051, 4294901760
        %5722 = vmatpush1.msra.mxu0 %v5721
        %v5723 = vand.u32 %v4056, 4294901760
        %5724 = vmatprep.subr.mxu0 %v5723
        %v5725 = vand.u32 %v4055, 4294901760
        %5726 = vmatpush1.msra.mxu0 %v5725
        %v5727 = vand.u32 %v4060, 4294901760
        %5728 = vmatprep.subr.mxu0 %v5727
        %v5729 = vand.u32 %v4059, 4294901760
        %5730 = vmatpush1.msra.mxu0 %v5729
        %v5731 = vand.u32 %v4064, 4294901760
        %5732 = vmatprep.subr.mxu0 %v5731
        %v5733 = vand.u32 %v4063, 4294901760
        %5734 = vmatpush1.msra.mxu0 %v5733
        %v5735 = vand.u32 %v4068, 4294901760
        %5736 = vmatprep.subr.mxu0 %v5735
        %v5737 = vand.u32 %v4067, 4294901760
        %5738 = vmatpush1.msra.mxu0 %v5737
        %v5739 = vand.u32 %v4072, 4294901760
        %5740 = vmatprep.subr.mxu0 %v5739
        %v5741 = vand.u32 %v4071, 4294901760
        %5742 = vmatpush1.msra.mxu0 %v5741
        %v5743 = vand.u32 %v4076, 4294901760
        %5744 = vmatprep.subr.mxu0 %v5743
        %v5745 = vand.u32 %v4075, 4294901760
        %5746 = vmatpush1.msra.mxu0 %v5745
        %v5747 = vand.u32 %v4080, 4294901760
        %5748 = vmatprep.subr.mxu0 %v5747
        %v5749 = vand.u32 %v4079, 4294901760
        %5750 = vmatpush1.msra.mxu0 %v5749
        %5751 = vmatprep.subr.mxu0 0.0
        %5752 = vmatpush1.msra.mxu0 0.0
        %5753 = vmatprep.subr.mxu0 0.0
        %5754 = vmatpush1.msra.mxu0 0.0
        %5755 = vmatprep.subr.mxu0 0.0
        %5756 = vmatpush1.msra.mxu0 0.0
        %5757 = vmatprep.subr.mxu0 0.0
        %5758 = vmatpush1.msra.mxu0 0.0
        %5759 = vmatprep.subr.mxu0 0.0
        %5760 = vmatpush1.msra.mxu0 0.0
        %5761 = vmatprep.subr.mxu0 0.0
        %5762 = vmatpush1.msra.mxu0 0.0
        %5763 = vmatprep.subr.mxu0 0.0
        %5764 = vmatpush1.msra.mxu0 0.0
        %5765 = vmatprep.subr.mxu0 0.0
        %5766 = vmatpush1.msra.mxu0 0.0
        %5767 = vmatprep.subr.mxu0 0.0
        %5768 = vmatpush1.msra.mxu0 0.0
        %5769 = vmatprep.subr.mxu0 0.0
        %5770 = vmatpush1.msra.mxu0 0.0
        %5771 = vmatprep.subr.mxu0 0.0
        %5772 = vmatpush1.msra.mxu0 0.0
        %5773 = vmatprep.subr.mxu0 0.0
        %5774 = vmatpush1.msra.mxu0 0.0
        %5775 = vmatprep.subr.mxu0 0.0
        %5776 = vmatpush1.msra.mxu0 0.0
        %5777 = vmatprep.subr.mxu0 0.0
        %5778 = vmatpush1.msra.mxu0 0.0
        %5779 = vmatprep.subr.mxu0 0.0
        %5780 = vmatpush1.msra.mxu0 0.0
        %5781 = vmatprep.subr.mxu0 0.0
        %5782 = vmatpush1.msra.mxu0 0.0
        %5783 = vmatprep.mubr.f32.mxu0 0.0
        %v5784 = vand.u32 %v4015, 4294901760
        %5785 = vmatmul.mubr.f32.gmra.mrb[0].mxu0 %v5784
        %v5786 = vpop.f32.mrb[0].mxu0
        %v5787 = vadd.f32 %v5683, %v5786
        %v5788 = vpop.f32.mrb[0].mxu0
        %v5789 = vadd.f32 %v5685, %v5788
        %5790 = vdwg.mxu0
        %s5791 = scalar_lea.vmem %s454, 64 [#allocation13]
        %5792 = vst [vmem:[%s5791] sm:$0xff] %v4932
        %5793 = vst [vmem:[%s5791 + $0x8] sm:$0xff] %v4934
        %5794 = vst [vmem:[%s5791 + $0x10] sm:$0xff] %v5787
        %5795 = vst [vmem:[%s5791 + $0x18] sm:$0xff] %v5789
        %v5796 = vld [vmem:[%s397] sm:$0xff]
        %s5797 = scalar_lea.vmem [#allocation2], 1536
        %v5798 = vld [vmem:[%s5797] sm:$0xff]
        %v5799 = vld [vmem:[%s5797 + $0x8] sm:$0xff]
        %v5800 = vld [vmem:[%s5797 + $0x10] sm:$0xff]
        %v5801 = vld [vmem:[%s5797 + $0x18] sm:$0xff]
        %v5802 = vld [vmem:[%s5797 + $0x20] sm:$0xff]
        %v5803 = vld [vmem:[%s5797 + $0x28] sm:$0xff]
        %v5804 = vld [vmem:[%s5797 + $0x30] sm:$0xff]
        %v5805 = vld [vmem:[%s5797 + $0x38] sm:$0xff]
        %v5806 = vld [vmem:[%s5797 + $0x40] sm:$0xff]
        %v5807 = vld [vmem:[%s5797 + $0x48] sm:$0xff]
        %v5808 = vld [vmem:[%s5797 + $0x50] sm:$0xff]
        %v5809 = vld [vmem:[%s5797 + $0x58] sm:$0xff]
        %v5810 = vld [vmem:[%s5797 + $0x60] sm:$0xff]
        %v5811 = vld [vmem:[%s5797 + $0x68] sm:$0xff]
        %v5812 = vld [vmem:[%s5797 + $0x70] sm:$0xff]
        %v5813 = vld [vmem:[%s5797 + $0x78] sm:$0xff]
        %v5814 = vld [vmem:[%s5797 + $0x80] sm:$0xff]
        %v5815 = vld [vmem:[%s5797 + $0x88] sm:$0xff]
        %v5816 = vld [vmem:[%s5797 + $0x90] sm:$0xff]
        %v5817 = vld [vmem:[%s5797 + $0x98] sm:$0xff]
        %v5818 = vld [vmem:[%s5797 + $0xa0] sm:$0xff]
        %v5819 = vld [vmem:[%s5797 + $0xa8] sm:$0xff]
        %v5820 = vld [vmem:[%s5797 + $0xb0] sm:$0xff]
        %v5821 = vld [vmem:[%s5797 + $0xb8] sm:$0xff]
        %v5822 = vld [vmem:[%s5797 + $0xc0] sm:$0xff]
        %v5823 = vld [vmem:[%s5797 + $0xc8] sm:$0xff]
        %v5824 = vld [vmem:[%s5797 + $0xd0] sm:$0xff]
        %v5825 = vld [vmem:[%s5797 + $0xd8] sm:$0xff]
        %v5826 = vld [vmem:[%s5797 + $0xe0] sm:$0xff]
        %v5827 = vld [vmem:[%s5797 + $0xe8] sm:$0xff]
        %v5828 = vld [vmem:[%s5797 + $0xf0] sm:$0xff]
        %v5829 = vld [vmem:[%s5797 + $0xf8] sm:$0xff]
        %v5830 = vld [vmem:[%s5797 + $0x100] sm:$0xff]
        %v5831 = vld [vmem:[%s5797 + $0x108] sm:$0xff]
        %v5832 = vld [vmem:[%s5797 + $0x110] sm:$0xff]
        %v5833 = vld [vmem:[%s5797 + $0x118] sm:$0xff]
        %v5834 = vld [vmem:[%s5797 + $0x120] sm:$0xff]
        %v5835 = vld [vmem:[%s5797 + $0x128] sm:$0xff]
        %v5836 = vld [vmem:[%s5797 + $0x130] sm:$0xff]
        %v5837 = vld [vmem:[%s5797 + $0x138] sm:$0xff]
        %v5838 = vld [vmem:[%s5797 + $0x140] sm:$0xff]
        %v5839 = vld [vmem:[%s5797 + $0x148] sm:$0xff]
        %v5840 = vld [vmem:[%s5797 + $0x150] sm:$0xff]
        %v5841 = vld [vmem:[%s5797 + $0x158] sm:$0xff]
        %v5842 = vld [vmem:[%s5797 + $0x160] sm:$0xff]
        %v5843 = vld [vmem:[%s5797 + $0x168] sm:$0xff]
        %v5844 = vld [vmem:[%s5797 + $0x170] sm:$0xff]
        %v5845 = vld [vmem:[%s5797 + $0x178] sm:$0xff]
        %v5846 = vld [vmem:[%s5797 + $0x180] sm:$0xff]
        %v5847 = vld [vmem:[%s5797 + $0x188] sm:$0xff]
        %v5848 = vld [vmem:[%s5797 + $0x190] sm:$0xff]
        %v5849 = vld [vmem:[%s5797 + $0x198] sm:$0xff]
        %v5850 = vld [vmem:[%s5797 + $0x1a0] sm:$0xff]
        %v5851 = vld [vmem:[%s5797 + $0x1a8] sm:$0xff]
        %v5852 = vld [vmem:[%s5797 + $0x1b0] sm:$0xff]
        %v5853 = vld [vmem:[%s5797 + $0x1b8] sm:$0xff]
        %v5854 = vld [vmem:[%s5797 + $0x1c0] sm:$0xff]
        %v5855 = vld [vmem:[%s5797 + $0x1c8] sm:$0xff]
        %v5856 = vld [vmem:[%s5797 + $0x1d0] sm:$0xff]
        %v5857 = vld [vmem:[%s5797 + $0x1d8] sm:$0xff]
        %v5858 = vld [vmem:[%s5797 + $0x1e0] sm:$0xff]
        %v5859 = vld [vmem:[%s5797 + $0x1e8] sm:$0xff]
        %v5860 = vld [vmem:[%s5797 + $0x1f0] sm:$0xff]
        %v5861 = vld [vmem:[%s5797 + $0x1f8] sm:$0xff]
        %v5862 = vand.u32 %v5799, 4294901760
        %5863 = vmatprep.subr.mxu0 %v5862
        %v5864 = vand.u32 %v5798, 4294901760
        %5865 = vmatpush1.msra.mxu0 %v5864
        %v5866 = vand.u32 %v5803, 4294901760
        %5867 = vmatprep.subr.mxu0 %v5866
        %v5868 = vand.u32 %v5802, 4294901760
        %5869 = vmatpush1.msra.mxu0 %v5868
        %v5870 = vand.u32 %v5807, 4294901760
        %5871 = vmatprep.subr.mxu0 %v5870
        %v5872 = vand.u32 %v5806, 4294901760
        %5873 = vmatpush1.msra.mxu0 %v5872
        %v5874 = vand.u32 %v5811, 4294901760
        %5875 = vmatprep.subr.mxu0 %v5874
        %v5876 = vand.u32 %v5810, 4294901760
        %5877 = vmatpush1.msra.mxu0 %v5876
        %v5878 = vand.u32 %v5815, 4294901760
        %5879 = vmatprep.subr.mxu0 %v5878
        %v5880 = vand.u32 %v5814, 4294901760
        %5881 = vmatpush1.msra.mxu0 %v5880
        %v5882 = vand.u32 %v5819, 4294901760
        %5883 = vmatprep.subr.mxu0 %v5882
        %v5884 = vand.u32 %v5818, 4294901760
        %5885 = vmatpush1.msra.mxu0 %v5884
        %v5886 = vand.u32 %v5823, 4294901760
        %5887 = vmatprep.subr.mxu0 %v5886
        %v5888 = vand.u32 %v5822, 4294901760
        %5889 = vmatpush1.msra.mxu0 %v5888
        %v5890 = vand.u32 %v5827, 4294901760
        %5891 = vmatprep.subr.mxu0 %v5890
        %v5892 = vand.u32 %v5826, 4294901760
        %5893 = vmatpush1.msra.mxu0 %v5892
        %v5894 = vand.u32 %v5831, 4294901760
        %5895 = vmatprep.subr.mxu0 %v5894
        %v5896 = vand.u32 %v5830, 4294901760
        %5897 = vmatpush1.msra.mxu0 %v5896
        %v5898 = vand.u32 %v5835, 4294901760
        %5899 = vmatprep.subr.mxu0 %v5898
        %v5900 = vand.u32 %v5834, 4294901760
        %5901 = vmatpush1.msra.mxu0 %v5900
        %v5902 = vand.u32 %v5839, 4294901760
        %5903 = vmatprep.subr.mxu0 %v5902
        %v5904 = vand.u32 %v5838, 4294901760
        %5905 = vmatpush1.msra.mxu0 %v5904
        %v5906 = vand.u32 %v5843, 4294901760
        %5907 = vmatprep.subr.mxu0 %v5906
        %v5908 = vand.u32 %v5842, 4294901760
        %5909 = vmatpush1.msra.mxu0 %v5908
        %v5910 = vand.u32 %v5847, 4294901760
        %5911 = vmatprep.subr.mxu0 %v5910
        %v5912 = vand.u32 %v5846, 4294901760
        %5913 = vmatpush1.msra.mxu0 %v5912
        %v5914 = vand.u32 %v5851, 4294901760
        %5915 = vmatprep.subr.mxu0 %v5914
        %v5916 = vand.u32 %v5850, 4294901760
        %5917 = vmatpush1.msra.mxu0 %v5916
        %v5918 = vand.u32 %v5855, 4294901760
        %5919 = vmatprep.subr.mxu0 %v5918
        %v5920 = vand.u32 %v5854, 4294901760
        %5921 = vmatpush1.msra.mxu0 %v5920
        %v5922 = vand.u32 %v5859, 4294901760
        %5923 = vmatprep.subr.mxu0 %v5922
        %v5924 = vand.u32 %v5858, 4294901760
        %5925 = vmatpush1.msra.mxu0 %v5924
        %5926 = vmatprep.subr.mxu0 0.0
        %5927 = vmatpush1.msra.mxu0 0.0
        %5928 = vmatprep.subr.mxu0 0.0
        %5929 = vmatpush1.msra.mxu0 0.0
        %5930 = vmatprep.subr.mxu0 0.0
        %5931 = vmatpush1.msra.mxu0 0.0
        %5932 = vmatprep.subr.mxu0 0.0
        %5933 = vmatpush1.msra.mxu0 0.0
        %5934 = vmatprep.subr.mxu0 0.0
        %5935 = vmatpush1.msra.mxu0 0.0
        %5936 = vmatprep.subr.mxu0 0.0
        %5937 = vmatpush1.msra.mxu0 0.0
        %5938 = vmatprep.subr.mxu0 0.0
        %5939 = vmatpush1.msra.mxu0 0.0
        %5940 = vmatprep.subr.mxu0 0.0
        %5941 = vmatpush1.msra.mxu0 0.0
        %5942 = vmatprep.subr.mxu0 0.0
        %5943 = vmatpush1.msra.mxu0 0.0
        %5944 = vmatprep.subr.mxu0 0.0
        %5945 = vmatpush1.msra.mxu0 0.0
        %5946 = vmatprep.subr.mxu0 0.0
        %5947 = vmatpush1.msra.mxu0 0.0
        %5948 = vmatprep.subr.mxu0 0.0
        %5949 = vmatpush1.msra.mxu0 0.0
        %5950 = vmatprep.subr.mxu0 0.0
        %5951 = vmatpush1.msra.mxu0 0.0
        %5952 = vmatprep.subr.mxu0 0.0
        %5953 = vmatpush1.msra.mxu0 0.0
        %5954 = vmatprep.subr.mxu0 0.0
        %5955 = vmatpush1.msra.mxu0 0.0
        %5956 = vmatprep.subr.mxu0 0.0
        %5957 = vmatpush1.msra.mxu0 0.0
        %5958 = vmatprep.mubr.f32.mxu0 0.0
        %v5959 = vand.u32 %v5796, 4294901760
        %v5960 = vsub.f32 %v5796, %v5959
        %v5961 = vand.u32 %v5960, 4294901760
        %v5962 = vsub.f32 %v5960, %v5961
        %v5963 = vand.u32 %v5962, 4294901760
        %5964 = vmatmul.mubr.f32.gmra.mrb[0].mxu0 %v5963
        %v5965 = vpop.f32.mrb[0].mxu0
        %v5966 = vadd.f32 0.0, %v5965
        %v5967 = vpop.f32.mrb[0].mxu0
        %v5968 = vadd.f32 0.0, %v5967
        %5969 = vdwg.mxu0
        %v5970 = vand.u32 %v5799, 4294901760
        %v5971 = vsub.f32 %v5799, %v5970
        %v5972 = vand.u32 %v5971, 4294901760
        %v5973 = vsub.f32 %v5971, %v5972
        %v5974 = vand.u32 %v5973, 4294901760
        %5975 = vmatprep.subr.mxu0 %v5974
        %v5976 = vand.u32 %v5798, 4294901760
        %v5977 = vsub.f32 %v5798, %v5976
        %v5978 = vand.u32 %v5977, 4294901760
        %v5979 = vsub.f32 %v5977, %v5978
        %v5980 = vand.u32 %v5979, 4294901760
        %5981 = vmatpush1.msra.mxu0 %v5980
        %v5982 = vand.u32 %v5803, 4294901760
        %v5983 = vsub.f32 %v5803, %v5982
        %v5984 = vand.u32 %v5983, 4294901760
        %v5985 = vsub.f32 %v5983, %v5984
        %v5986 = vand.u32 %v5985, 4294901760
        %5987 = vmatprep.subr.mxu0 %v5986
        %v5988 = vand.u32 %v5802, 4294901760
        %v5989 = vsub.f32 %v5802, %v5988
        %v5990 = vand.u32 %v5989, 4294901760
        %v5991 = vsub.f32 %v5989, %v5990
        %v5992 = vand.u32 %v5991, 4294901760
        %5993 = vmatpush1.msra.mxu0 %v5992
        %v5994 = vand.u32 %v5807, 4294901760
        %v5995 = vsub.f32 %v5807, %v5994
        %v5996 = vand.u32 %v5995, 4294901760
        %v5997 = vsub.f32 %v5995, %v5996
        %v5998 = vand.u32 %v5997, 4294901760
        %5999 = vmatprep.subr.mxu0 %v5998
        %v6000 = vand.u32 %v5806, 4294901760
        %v6001 = vsub.f32 %v5806, %v6000
        %v6002 = vand.u32 %v6001, 4294901760
        %v6003 = vsub.f32 %v6001, %v6002
        %v6004 = vand.u32 %v6003, 4294901760
        %6005 = vmatpush1.msra.mxu0 %v6004
        %v6006 = vand.u32 %v5811, 4294901760
        %v6007 = vsub.f32 %v5811, %v6006
        %v6008 = vand.u32 %v6007, 4294901760
        %v6009 = vsub.f32 %v6007, %v6008
        %v6010 = vand.u32 %v6009, 4294901760
        %6011 = vmatprep.subr.mxu0 %v6010
        %v6012 = vand.u32 %v5810, 4294901760
        %v6013 = vsub.f32 %v5810, %v6012
        %v6014 = vand.u32 %v6013, 4294901760
        %v6015 = vsub.f32 %v6013, %v6014
        %v6016 = vand.u32 %v6015, 4294901760
        %6017 = vmatpush1.msra.mxu0 %v6016
        %v6018 = vand.u32 %v5815, 4294901760
        %v6019 = vsub.f32 %v5815, %v6018
        %v6020 = vand.u32 %v6019, 4294901760
        %v6021 = vsub.f32 %v6019, %v6020
        %v6022 = vand.u32 %v6021, 4294901760
        %6023 = vmatprep.subr.mxu0 %v6022
        %v6024 = vand.u32 %v5814, 4294901760
        %v6025 = vsub.f32 %v5814, %v6024
        %v6026 = vand.u32 %v6025, 4294901760
        %v6027 = vsub.f32 %v6025, %v6026
        %v6028 = vand.u32 %v6027, 4294901760
        %6029 = vmatpush1.msra.mxu0 %v6028
        %v6030 = vand.u32 %v5819, 4294901760
        %v6031 = vsub.f32 %v5819, %v6030
        %v6032 = vand.u32 %v6031, 4294901760
        %v6033 = vsub.f32 %v6031, %v6032
        %v6034 = vand.u32 %v6033, 4294901760
        %6035 = vmatprep.subr.mxu0 %v6034
        %v6036 = vand.u32 %v5818, 4294901760
        %v6037 = vsub.f32 %v5818, %v6036
        %v6038 = vand.u32 %v6037, 4294901760
        %v6039 = vsub.f32 %v6037, %v6038
        %v6040 = vand.u32 %v6039, 4294901760
        %6041 = vmatpush1.msra.mxu0 %v6040
        %v6042 = vand.u32 %v5823, 4294901760
        %v6043 = vsub.f32 %v5823, %v6042
        %v6044 = vand.u32 %v6043, 4294901760
        %v6045 = vsub.f32 %v6043, %v6044
        %v6046 = vand.u32 %v6045, 4294901760
        %6047 = vmatprep.subr.mxu0 %v6046
        %v6048 = vand.u32 %v5822, 4294901760
        %v6049 = vsub.f32 %v5822, %v6048
        %v6050 = vand.u32 %v6049, 4294901760
        %v6051 = vsub.f32 %v6049, %v6050
        %v6052 = vand.u32 %v6051, 4294901760
        %6053 = vmatpush1.msra.mxu0 %v6052
        %v6054 = vand.u32 %v5827, 4294901760
        %v6055 = vsub.f32 %v5827, %v6054
        %v6056 = vand.u32 %v6055, 4294901760
        %v6057 = vsub.f32 %v6055, %v6056
        %v6058 = vand.u32 %v6057, 4294901760
        %6059 = vmatprep.subr.mxu0 %v6058
        %v6060 = vand.u32 %v5826, 4294901760
        %v6061 = vsub.f32 %v5826, %v6060
        %v6062 = vand.u32 %v6061, 4294901760
        %v6063 = vsub.f32 %v6061, %v6062
        %v6064 = vand.u32 %v6063, 4294901760
        %6065 = vmatpush1.msra.mxu0 %v6064
        %v6066 = vand.u32 %v5831, 4294901760
        %v6067 = vsub.f32 %v5831, %v6066
        %v6068 = vand.u32 %v6067, 4294901760
        %v6069 = vsub.f32 %v6067, %v6068
        %v6070 = vand.u32 %v6069, 4294901760
        %6071 = vmatprep.subr.mxu0 %v6070
        %v6072 = vand.u32 %v5830, 4294901760
        %v6073 = vsub.f32 %v5830, %v6072
        %v6074 = vand.u32 %v6073, 4294901760
        %v6075 = vsub.f32 %v6073, %v6074
        %v6076 = vand.u32 %v6075, 4294901760
        %6077 = vmatpush1.msra.mxu0 %v6076
        %v6078 = vand.u32 %v5835, 4294901760
        %v6079 = vsub.f32 %v5835, %v6078
        %v6080 = vand.u32 %v6079, 4294901760
        %v6081 = vsub.f32 %v6079, %v6080
        %v6082 = vand.u32 %v6081, 4294901760
        %6083 = vmatprep.subr.mxu0 %v6082
        %v6084 = vand.u32 %v5834, 4294901760
        %v6085 = vsub.f32 %v5834, %v6084
        %v6086 = vand.u32 %v6085, 4294901760
        %v6087 = vsub.f32 %v6085, %v6086
        %v6088 = vand.u32 %v6087, 4294901760
        %6089 = vmatpush1.msra.mxu0 %v6088
        %v6090 = vand.u32 %v5839, 4294901760
        %v6091 = vsub.f32 %v5839, %v6090
        %v6092 = vand.u32 %v6091, 4294901760
        %v6093 = vsub.f32 %v6091, %v6092
        %v6094 = vand.u32 %v6093, 4294901760
        %6095 = vmatprep.subr.mxu0 %v6094
        %v6096 = vand.u32 %v5838, 4294901760
        %v6097 = vsub.f32 %v5838, %v6096
        %v6098 = vand.u32 %v6097, 4294901760
        %v6099 = vsub.f32 %v6097, %v6098
        %v6100 = vand.u32 %v6099, 4294901760
        %6101 = vmatpush1.msra.mxu0 %v6100
        %v6102 = vand.u32 %v5843, 4294901760
        %v6103 = vsub.f32 %v5843, %v6102
        %v6104 = vand.u32 %v6103, 4294901760
        %v6105 = vsub.f32 %v6103, %v6104
        %v6106 = vand.u32 %v6105, 4294901760
        %6107 = vmatprep.subr.mxu0 %v6106
        %v6108 = vand.u32 %v5842, 4294901760
        %v6109 = vsub.f32 %v5842, %v6108
        %v6110 = vand.u32 %v6109, 4294901760
        %v6111 = vsub.f32 %v6109, %v6110
        %v6112 = vand.u32 %v6111, 4294901760
        %6113 = vmatpush1.msra.mxu0 %v6112
        %v6114 = vand.u32 %v5847, 4294901760
        %v6115 = vsub.f32 %v5847, %v6114
        %v6116 = vand.u32 %v6115, 4294901760
        %v6117 = vsub.f32 %v6115, %v6116
        %v6118 = vand.u32 %v6117, 4294901760
        %6119 = vmatprep.subr.mxu0 %v6118
        %v6120 = vand.u32 %v5846, 4294901760
        %v6121 = vsub.f32 %v5846, %v6120
        %v6122 = vand.u32 %v6121, 4294901760
        %v6123 = vsub.f32 %v6121, %v6122
        %v6124 = vand.u32 %v6123, 4294901760
        %6125 = vmatpush1.msra.mxu0 %v6124
        %v6126 = vand.u32 %v5851, 4294901760
        %v6127 = vsub.f32 %v5851, %v6126
        %v6128 = vand.u32 %v6127, 4294901760
        %v6129 = vsub.f32 %v6127, %v6128
        %v6130 = vand.u32 %v6129, 4294901760
        %6131 = vmatprep.subr.mxu0 %v6130
        %v6132 = vand.u32 %v5850, 4294901760
        %v6133 = vsub.f32 %v5850, %v6132
        %v6134 = vand.u32 %v6133, 4294901760
        %v6135 = vsub.f32 %v6133, %v6134
        %v6136 = vand.u32 %v6135, 4294901760
        %6137 = vmatpush1.msra.mxu0 %v6136
        %v6138 = vand.u32 %v5855, 4294901760
        %v6139 = vsub.f32 %v5855, %v6138
        %v6140 = vand.u32 %v6139, 4294901760
        %v6141 = vsub.f32 %v6139, %v6140
        %v6142 = vand.u32 %v6141, 4294901760
        %6143 = vmatprep.subr.mxu0 %v6142
        %v6144 = vand.u32 %v5854, 4294901760
        %v6145 = vsub.f32 %v5854, %v6144
        %v6146 = vand.u32 %v6145, 4294901760
        %v6147 = vsub.f32 %v6145, %v6146
        %v6148 = vand.u32 %v6147, 4294901760
        %6149 = vmatpush1.msra.mxu0 %v6148
        %v6150 = vand.u32 %v5859, 4294901760
        %v6151 = vsub.f32 %v5859, %v6150
        %v6152 = vand.u32 %v6151, 4294901760
        %v6153 = vsub.f32 %v6151, %v6152
        %v6154 = vand.u32 %v6153, 4294901760
        %6155 = vmatprep.subr.mxu0 %v6154
        %v6156 = vand.u32 %v5858, 4294901760
        %v6157 = vsub.f32 %v5858, %v6156
        %v6158 = vand.u32 %v6157, 4294901760
        %v6159 = vsub.f32 %v6157, %v6158
        %v6160 = vand.u32 %v6159, 4294901760
        %6161 = vmatpush1.msra.mxu0 %v6160
        %6162 = vmatprep.subr.mxu0 0.0
        %6163 = vmatpush1.msra.mxu0 0.0
        %6164 = vmatprep.subr.mxu0 0.0
        %6165 = vmatpush1.msra.mxu0 0.0
        %6166 = vmatprep.subr.mxu0 0.0
        %6167 = vmatpush1.msra.mxu0 0.0
        %6168 = vmatprep.subr.mxu0 0.0
        %6169 = vmatpush1.msra.mxu0 0.0
        %6170 = vmatprep.subr.mxu0 0.0
        %6171 = vmatpush1.msra.mxu0 0.0
        %6172 = vmatprep.subr.mxu0 0.0
        %6173 = vmatpush1.msra.mxu0 0.0
        %6174 = vmatprep.subr.mxu0 0.0
        %6175 = vmatpush1.msra.mxu0 0.0
        %6176 = vmatprep.subr.mxu0 0.0
        %6177 = vmatpush1.msra.mxu0 0.0
        %6178 = vmatprep.subr.mxu0 0.0
        %6179 = vmatpush1.msra.mxu0 0.0
        %6180 = vmatprep.subr.mxu0 0.0
        %6181 = vmatpush1.msra.mxu0 0.0
        %6182 = vmatprep.subr.mxu0 0.0
        %6183 = vmatpush1.msra.mxu0 0.0
        %6184 = vmatprep.subr.mxu0 0.0
        %6185 = vmatpush1.msra.mxu0 0.0
        %6186 = vmatprep.subr.mxu0 0.0
        %6187 = vmatpush1.msra.mxu0 0.0
        %6188 = vmatprep.subr.mxu0 0.0
        %6189 = vmatpush1.msra.mxu0 0.0
        %6190 = vmatprep.subr.mxu0 0.0
        %6191 = vmatpush1.msra.mxu0 0.0
        %6192 = vmatprep.subr.mxu0 0.0
        %6193 = vmatpush1.msra.mxu0 0.0
        %6194 = vmatprep.mubr.f32.mxu0 0.0
        %v6195 = vand.u32 %v5796, 4294901760
        %6196 = vmatmul.mubr.f32.gmra.mrb[0].mxu0 %v6195
        %v6197 = vpop.f32.mrb[0].mxu0
        %v6198 = vadd.f32 %v5966, %v6197
        %v6199 = vpop.f32.mrb[0].mxu0
        %v6200 = vadd.f32 %v5968, %v6199
        %6201 = vdwg.mxu0
        %v6202 = vand.u32 %v5799, 4294901760
        %v6203 = vsub.f32 %v5799, %v6202
        %6204 = vmatprep.subr.mxu0 %v6203
        %v6205 = vand.u32 %v5798, 4294901760
        %v6206 = vsub.f32 %v5798, %v6205
        %6207 = vmatpush1.msra.mxu0 %v6206
        %v6208 = vand.u32 %v5803, 4294901760
        %v6209 = vsub.f32 %v5803, %v6208
        %6210 = vmatprep.subr.mxu0 %v6209
        %v6211 = vand.u32 %v5802, 4294901760
        %v6212 = vsub.f32 %v5802, %v6211
        %6213 = vmatpush1.msra.mxu0 %v6212
        %v6214 = vand.u32 %v5807, 4294901760
        %v6215 = vsub.f32 %v5807, %v6214
        %6216 = vmatprep.subr.mxu0 %v6215
        %v6217 = vand.u32 %v5806, 4294901760
        %v6218 = vsub.f32 %v5806, %v6217
        %6219 = vmatpush1.msra.mxu0 %v6218
        %v6220 = vand.u32 %v5811, 4294901760
        %v6221 = vsub.f32 %v5811, %v6220
        %6222 = vmatprep.subr.mxu0 %v6221
        %v6223 = vand.u32 %v5810, 4294901760
        %v6224 = vsub.f32 %v5810, %v6223
        %6225 = vmatpush1.msra.mxu0 %v6224
        %v6226 = vand.u32 %v5815, 4294901760
        %v6227 = vsub.f32 %v5815, %v6226
        %6228 = vmatprep.subr.mxu0 %v6227
        %v6229 = vand.u32 %v5814, 4294901760
        %v6230 = vsub.f32 %v5814, %v6229
        %6231 = vmatpush1.msra.mxu0 %v6230
        %v6232 = vand.u32 %v5819, 4294901760
        %v6233 = vsub.f32 %v5819, %v6232
        %6234 = vmatprep.subr.mxu0 %v6233
        %v6235 = vand.u32 %v5818, 4294901760
        %v6236 = vsub.f32 %v5818, %v6235
        %6237 = vmatpush1.msra.mxu0 %v6236
        %v6238 = vand.u32 %v5823, 4294901760
        %v6239 = vsub.f32 %v5823, %v6238
        %6240 = vmatprep.subr.mxu0 %v6239
        %v6241 = vand.u32 %v5822, 4294901760
        %v6242 = vsub.f32 %v5822, %v6241
        %6243 = vmatpush1.msra.mxu0 %v6242
        %v6244 = vand.u32 %v5827, 4294901760
        %v6245 = vsub.f32 %v5827, %v6244
        %6246 = vmatprep.subr.mxu0 %v6245
        %v6247 = vand.u32 %v5826, 4294901760
        %v6248 = vsub.f32 %v5826, %v6247
        %6249 = vmatpush1.msra.mxu0 %v6248
        %v6250 = vand.u32 %v5831, 4294901760
        %v6251 = vsub.f32 %v5831, %v6250
        %6252 = vmatprep.subr.mxu0 %v6251
        %v6253 = vand.u32 %v5830, 4294901760
        %v6254 = vsub.f32 %v5830, %v6253
        %6255 = vmatpush1.msra.mxu0 %v6254
        %v6256 = vand.u32 %v5835, 4294901760
        %v6257 = vsub.f32 %v5835, %v6256
        %6258 = vmatprep.subr.mxu0 %v6257
        %v6259 = vand.u32 %v5834, 4294901760
        %v6260 = vsub.f32 %v5834, %v6259
        %6261 = vmatpush1.msra.mxu0 %v6260
        %v6262 = vand.u32 %v5839, 4294901760
        %v6263 = vsub.f32 %v5839, %v6262
        %6264 = vmatprep.subr.mxu0 %v6263
        %v6265 = vand.u32 %v5838, 4294901760
        %v6266 = vsub.f32 %v5838, %v6265
        %6267 = vmatpush1.msra.mxu0 %v6266
        %v6268 = vand.u32 %v5843, 4294901760
        %v6269 = vsub.f32 %v5843, %v6268
        %6270 = vmatprep.subr.mxu0 %v6269
        %v6271 = vand.u32 %v5842, 4294901760
        %v6272 = vsub.f32 %v5842, %v6271
        %6273 = vmatpush1.msra.mxu0 %v6272
        %v6274 = vand.u32 %v5847, 4294901760
        %v6275 = vsub.f32 %v5847, %v6274
        %6276 = vmatprep.subr.mxu0 %v6275
        %v6277 = vand.u32 %v5846, 4294901760
        %v6278 = vsub.f32 %v5846, %v6277
        %6279 = vmatpush1.msra.mxu0 %v6278
        %v6280 = vand.u32 %v5851, 4294901760
        %v6281 = vsub.f32 %v5851, %v6280
        %6282 = vmatprep.subr.mxu0 %v6281
        %v6283 = vand.u32 %v5850, 4294901760
        %v6284 = vsub.f32 %v5850, %v6283
        %6285 = vmatpush1.msra.mxu0 %v6284
        %v6286 = vand.u32 %v5855, 4294901760
        %v6287 = vsub.f32 %v5855, %v6286
        %6288 = vmatprep.subr.mxu0 %v6287
        %v6289 = vand.u32 %v5854, 4294901760
        %v6290 = vsub.f32 %v5854, %v6289
        %6291 = vmatpush1.msra.mxu0 %v6290
        %v6292 = vand.u32 %v5859, 4294901760
        %v6293 = vsub.f32 %v5859, %v6292
        %6294 = vmatprep.subr.mxu0 %v6293
        %v6295 = vand.u32 %v5858, 4294901760
        %v6296 = vsub.f32 %v5858, %v6295
        %6297 = vmatpush1.msra.mxu0 %v6296
        %6298 = vmatprep.subr.mxu0 0.0
        %6299 = vmatpush1.msra.mxu0 0.0
        %6300 = vmatprep.subr.mxu0 0.0
        %6301 = vmatpush1.msra.mxu0 0.0
        %6302 = vmatprep.subr.mxu0 0.0
        %6303 = vmatpush1.msra.mxu0 0.0
        %6304 = vmatprep.subr.mxu0 0.0
        %6305 = vmatpush1.msra.mxu0 0.0
        %6306 = vmatprep.subr.mxu0 0.0
        %6307 = vmatpush1.msra.mxu0 0.0
        %6308 = vmatprep.subr.mxu0 0.0
        %6309 = vmatpush1.msra.mxu0 0.0
        %6310 = vmatprep.subr.mxu0 0.0
        %6311 = vmatpush1.msra.mxu0 0.0
        %6312 = vmatprep.subr.mxu0 0.0
        %6313 = vmatpush1.msra.mxu0 0.0
        %6314 = vmatprep.subr.mxu0 0.0
        %6315 = vmatpush1.msra.mxu0 0.0
        %6316 = vmatprep.subr.mxu0 0.0
        %6317 = vmatpush1.msra.mxu0 0.0
        %6318 = vmatprep.subr.mxu0 0.0
        %6319 = vmatpush1.msra.mxu0 0.0
        %6320 = vmatprep.subr.mxu0 0.0
        %6321 = vmatpush1.msra.mxu0 0.0
        %6322 = vmatprep.subr.mxu0 0.0
        %6323 = vmatpush1.msra.mxu0 0.0
        %6324 = vmatprep.subr.mxu0 0.0
        %6325 = vmatpush1.msra.mxu0 0.0
        %6326 = vmatprep.subr.mxu0 0.0
        %6327 = vmatpush1.msra.mxu0 0.0
        %6328 = vmatprep.subr.mxu0 0.0
        %6329 = vmatpush1.msra.mxu0 0.0
        %6330 = vmatprep.mubr.f32.mxu0 0.0
        %v6331 = vand.u32 %v5796, 4294901760
        %v6332 = vsub.f32 %v5796, %v6331
        %6333 = vmatmul.mubr.f32.gmra.mrb[0].mxu0 %v6332
        %v6334 = vpop.f32.mrb[0].mxu0
        %v6335 = vadd.f32 %v6198, %v6334
        %v6336 = vpop.f32.mrb[0].mxu0
        %v6337 = vadd.f32 %v6200, %v6336
        %6338 = vdwg.mxu0
        %v6339 = vand.u32 %v5799, 4294901760
        %6340 = vmatprep.subr.mxu0 %v6339
        %v6341 = vand.u32 %v5798, 4294901760
        %6342 = vmatpush1.msra.mxu0 %v6341
        %v6343 = vand.u32 %v5803, 4294901760
        %6344 = vmatprep.subr.mxu0 %v6343
        %v6345 = vand.u32 %v5802, 4294901760
        %6346 = vmatpush1.msra.mxu0 %v6345
        %v6347 = vand.u32 %v5807, 4294901760
        %6348 = vmatprep.subr.mxu0 %v6347
        %v6349 = vand.u32 %v5806, 4294901760
        %6350 = vmatpush1.msra.mxu0 %v6349
        %v6351 = vand.u32 %v5811, 4294901760
        %6352 = vmatprep.subr.mxu0 %v6351
        %v6353 = vand.u32 %v5810, 4294901760
        %6354 = vmatpush1.msra.mxu0 %v6353
        %v6355 = vand.u32 %v5815, 4294901760
        %6356 = vmatprep.subr.mxu0 %v6355
        %v6357 = vand.u32 %v5814, 4294901760
        %6358 = vmatpush1.msra.mxu0 %v6357
        %v6359 = vand.u32 %v5819, 4294901760
        %6360 = vmatprep.subr.mxu0 %v6359
        %v6361 = vand.u32 %v5818, 4294901760
        %6362 = vmatpush1.msra.mxu0 %v6361
        %v6363 = vand.u32 %v5823, 4294901760
        %6364 = vmatprep.subr.mxu0 %v6363
        %v6365 = vand.u32 %v5822, 4294901760
        %6366 = vmatpush1.msra.mxu0 %v6365
        %v6367 = vand.u32 %v5827, 4294901760
        %6368 = vmatprep.subr.mxu0 %v6367
        %v6369 = vand.u32 %v5826, 4294901760
        %6370 = vmatpush1.msra.mxu0 %v6369
        %v6371 = vand.u32 %v5831, 4294901760
        %6372 = vmatprep.subr.mxu0 %v6371
        %v6373 = vand.u32 %v5830, 4294901760
        %6374 = vmatpush1.msra.mxu0 %v6373
        %v6375 = vand.u32 %v5835, 4294901760
        %6376 = vmatprep.subr.mxu0 %v6375
        %v6377 = vand.u32 %v5834, 4294901760
        %6378 = vmatpush1.msra.mxu0 %v6377
        %v6379 = vand.u32 %v5839, 4294901760
        %6380 = vmatprep.subr.mxu0 %v6379
        %v6381 = vand.u32 %v5838, 4294901760
        %6382 = vmatpush1.msra.mxu0 %v6381
        %v6383 = vand.u32 %v5843, 4294901760
        %6384 = vmatprep.subr.mxu0 %v6383
        %v6385 = vand.u32 %v5842, 4294901760
        %6386 = vmatpush1.msra.mxu0 %v6385
        %v6387 = vand.u32 %v5847, 4294901760
        %6388 = vmatprep.subr.mxu0 %v6387
        %v6389 = vand.u32 %v5846, 4294901760
        %6390 = vmatpush1.msra.mxu0 %v6389
        %v6391 = vand.u32 %v5851, 4294901760
        %6392 = vmatprep.subr.mxu0 %v6391
        %v6393 = vand.u32 %v5850, 4294901760
        %6394 = vmatpush1.msra.mxu0 %v6393
        %v6395 = vand.u32 %v5855, 4294901760
        %6396 = vmatprep.subr.mxu0 %v6395
        %v6397 = vand.u32 %v5854, 4294901760
        %6398 = vmatpush1.msra.mxu0 %v6397
        %v6399 = vand.u32 %v5859, 4294901760
        %6400 = vmatprep.subr.mxu0 %v6399
        %v6401 = vand.u32 %v5858, 4294901760
        %6402 = vmatpush1.msra.mxu0 %v6401
        %6403 = vmatprep.subr.mxu0 0.0
        %6404 = vmatpush1.msra.mxu0 0.0
        %6405 = vmatprep.subr.mxu0 0.0
        %6406 = vmatpush1.msra.mxu0 0.0
        %6407 = vmatprep.subr.mxu0 0.0
        %6408 = vmatpush1.msra.mxu0 0.0
        %6409 = vmatprep.subr.mxu0 0.0
        %6410 = vmatpush1.msra.mxu0 0.0
        %6411 = vmatprep.subr.mxu0 0.0
        %6412 = vmatpush1.msra.mxu0 0.0
        %6413 = vmatprep.subr.mxu0 0.0
        %6414 = vmatpush1.msra.mxu0 0.0
        %6415 = vmatprep.subr.mxu0 0.0
        %6416 = vmatpush1.msra.mxu0 0.0
        %6417 = vmatprep.subr.mxu0 0.0
        %6418 = vmatpush1.msra.mxu0 0.0
        %6419 = vmatprep.subr.mxu0 0.0
        %6420 = vmatpush1.msra.mxu0 0.0
        %6421 = vmatprep.subr.mxu0 0.0
        %6422 = vmatpush1.msra.mxu0 0.0
        %6423 = vmatprep.subr.mxu0 0.0
        %6424 = vmatpush1.msra.mxu0 0.0
        %6425 = vmatprep.subr.mxu0 0.0
        %6426 = vmatpush1.msra.mxu0 0.0
        %6427 = vmatprep.subr.mxu0 0.0
        %6428 = vmatpush1.msra.mxu0 0.0
        %6429 = vmatprep.subr.mxu0 0.0
        %6430 = vmatpush1.msra.mxu0 0.0
        %6431 = vmatprep.subr.mxu0 0.0
        %6432 = vmatpush1.msra.mxu0 0.0
        %6433 = vmatprep.subr.mxu0 0.0
        %6434 = vmatpush1.msra.mxu0 0.0
        %6435 = vmatprep.mubr.f32.mxu0 0.0
        %v6436 = vand.u32 %v5796, 4294901760
        %v6437 = vsub.f32 %v5796, %v6436
        %v6438 = vand.u32 %v6437, 4294901760
        %6439 = vmatmul.mubr.f32.gmra.mrb[0].mxu0 %v6438
        %v6440 = vpop.f32.mrb[0].mxu0
        %v6441 = vadd.f32 %v6335, %v6440
        %v6442 = vpop.f32.mrb[0].mxu0
        %v6443 = vadd.f32 %v6337, %v6442
        %6444 = vdwg.mxu0
        %v6445 = vand.u32 %v5799, 4294901760
        %v6446 = vsub.f32 %v5799, %v6445
        %v6447 = vand.u32 %v6446, 4294901760
        %6448 = vmatprep.subr.mxu0 %v6447
        %v6449 = vand.u32 %v5798, 4294901760
        %v6450 = vsub.f32 %v5798, %v6449
        %v6451 = vand.u32 %v6450, 4294901760
        %6452 = vmatpush1.msra.mxu0 %v6451
        %v6453 = vand.u32 %v5803, 4294901760
        %v6454 = vsub.f32 %v5803, %v6453
        %v6455 = vand.u32 %v6454, 4294901760
        %6456 = vmatprep.subr.mxu0 %v6455
        %v6457 = vand.u32 %v5802, 4294901760
        %v6458 = vsub.f32 %v5802, %v6457
        %v6459 = vand.u32 %v6458, 4294901760
        %6460 = vmatpush1.msra.mxu0 %v6459
        %v6461 = vand.u32 %v5807, 4294901760
        %v6462 = vsub.f32 %v5807, %v6461
        %v6463 = vand.u32 %v6462, 4294901760
        %6464 = vmatprep.subr.mxu0 %v6463
        %v6465 = vand.u32 %v5806, 4294901760
        %v6466 = vsub.f32 %v5806, %v6465
        %v6467 = vand.u32 %v6466, 4294901760
        %6468 = vmatpush1.msra.mxu0 %v6467
        %v6469 = vand.u32 %v5811, 4294901760
        %v6470 = vsub.f32 %v5811, %v6469
        %v6471 = vand.u32 %v6470, 4294901760
        %6472 = vmatprep.subr.mxu0 %v6471
        %v6473 = vand.u32 %v5810, 4294901760
        %v6474 = vsub.f32 %v5810, %v6473
        %v6475 = vand.u32 %v6474, 4294901760
        %6476 = vmatpush1.msra.mxu0 %v6475
        %v6477 = vand.u32 %v5815, 4294901760
        %v6478 = vsub.f32 %v5815, %v6477
        %v6479 = vand.u32 %v6478, 4294901760
        %6480 = vmatprep.subr.mxu0 %v6479
        %v6481 = vand.u32 %v5814, 4294901760
        %v6482 = vsub.f32 %v5814, %v6481
        %v6483 = vand.u32 %v6482, 4294901760
        %6484 = vmatpush1.msra.mxu0 %v6483
        %v6485 = vand.u32 %v5819, 4294901760
        %v6486 = vsub.f32 %v5819, %v6485
        %v6487 = vand.u32 %v6486, 4294901760
        %6488 = vmatprep.subr.mxu0 %v6487
        %v6489 = vand.u32 %v5818, 4294901760
        %v6490 = vsub.f32 %v5818, %v6489
        %v6491 = vand.u32 %v6490, 4294901760
        %6492 = vmatpush1.msra.mxu0 %v6491
        %v6493 = vand.u32 %v5823, 4294901760
        %v6494 = vsub.f32 %v5823, %v6493
        %v6495 = vand.u32 %v6494, 4294901760
        %6496 = vmatprep.subr.mxu0 %v6495
        %v6497 = vand.u32 %v5822, 4294901760
        %v6498 = vsub.f32 %v5822, %v6497
        %v6499 = vand.u32 %v6498, 4294901760
        %6500 = vmatpush1.msra.mxu0 %v6499
        %v6501 = vand.u32 %v5827, 4294901760
        %v6502 = vsub.f32 %v5827, %v6501
        %v6503 = vand.u32 %v6502, 4294901760
        %6504 = vmatprep.subr.mxu0 %v6503
        %v6505 = vand.u32 %v5826, 4294901760
        %v6506 = vsub.f32 %v5826, %v6505
        %v6507 = vand.u32 %v6506, 4294901760
        %6508 = vmatpush1.msra.mxu0 %v6507
        %v6509 = vand.u32 %v5831, 4294901760
        %v6510 = vsub.f32 %v5831, %v6509
        %v6511 = vand.u32 %v6510, 4294901760
        %6512 = vmatprep.subr.mxu0 %v6511
        %v6513 = vand.u32 %v5830, 4294901760
        %v6514 = vsub.f32 %v5830, %v6513
        %v6515 = vand.u32 %v6514, 4294901760
        %6516 = vmatpush1.msra.mxu0 %v6515
        %v6517 = vand.u32 %v5835, 4294901760
        %v6518 = vsub.f32 %v5835, %v6517
        %v6519 = vand.u32 %v6518, 4294901760
        %6520 = vmatprep.subr.mxu0 %v6519
        %v6521 = vand.u32 %v5834, 4294901760
        %v6522 = vsub.f32 %v5834, %v6521
        %v6523 = vand.u32 %v6522, 4294901760
        %6524 = vmatpush1.msra.mxu0 %v6523
        %v6525 = vand.u32 %v5839, 4294901760
        %v6526 = vsub.f32 %v5839, %v6525
        %v6527 = vand.u32 %v6526, 4294901760
        %6528 = vmatprep.subr.mxu0 %v6527
        %v6529 = vand.u32 %v5838, 4294901760
        %v6530 = vsub.f32 %v5838, %v6529
        %v6531 = vand.u32 %v6530, 4294901760
        %6532 = vmatpush1.msra.mxu0 %v6531
        %v6533 = vand.u32 %v5843, 4294901760
        %v6534 = vsub.f32 %v5843, %v6533
        %v6535 = vand.u32 %v6534, 4294901760
        %6536 = vmatprep.subr.mxu0 %v6535
        %v6537 = vand.u32 %v5842, 4294901760
        %v6538 = vsub.f32 %v5842, %v6537
        %v6539 = vand.u32 %v6538, 4294901760
        %6540 = vmatpush1.msra.mxu0 %v6539
        %v6541 = vand.u32 %v5847, 4294901760
        %v6542 = vsub.f32 %v5847, %v6541
        %v6543 = vand.u32 %v6542, 4294901760
        %6544 = vmatprep.subr.mxu0 %v6543
        %v6545 = vand.u32 %v5846, 4294901760
        %v6546 = vsub.f32 %v5846, %v6545
        %v6547 = vand.u32 %v6546, 4294901760
        %6548 = vmatpush1.msra.mxu0 %v6547
        %v6549 = vand.u32 %v5851, 4294901760
        %v6550 = vsub.f32 %v5851, %v6549
        %v6551 = vand.u32 %v6550, 4294901760
        %6552 = vmatprep.subr.mxu0 %v6551
        %v6553 = vand.u32 %v5850, 4294901760
        %v6554 = vsub.f32 %v5850, %v6553
        %v6555 = vand.u32 %v6554, 4294901760
        %6556 = vmatpush1.msra.mxu0 %v6555
        %v6557 = vand.u32 %v5855, 4294901760
        %v6558 = vsub.f32 %v5855, %v6557
        %v6559 = vand.u32 %v6558, 4294901760
        %6560 = vmatprep.subr.mxu0 %v6559
        %v6561 = vand.u32 %v5854, 4294901760
        %v6562 = vsub.f32 %v5854, %v6561
        %v6563 = vand.u32 %v6562, 4294901760
        %6564 = vmatpush1.msra.mxu0 %v6563
        %v6565 = vand.u32 %v5859, 4294901760
        %v6566 = vsub.f32 %v5859, %v6565
        %v6567 = vand.u32 %v6566, 4294901760
        %6568 = vmatprep.subr.mxu0 %v6567
        %v6569 = vand.u32 %v5858, 4294901760
        %v6570 = vsub.f32 %v5858, %v6569
        %v6571 = vand.u32 %v6570, 4294901760
        %6572 = vmatpush1.msra.mxu0 %v6571
        %6573 = vmatprep.subr.mxu0 0.0
        %6574 = vmatpush1.msra.mxu0 0.0
        %6575 = vmatprep.subr.mxu0 0.0
        %6576 = vmatpush1.msra.mxu0 0.0
        %6577 = vmatprep.subr.mxu0 0.0
        %6578 = vmatpush1.msra.mxu0 0.0
        %6579 = vmatprep.subr.mxu0 0.0
        %6580 = vmatpush1.msra.mxu0 0.0
        %6581 = vmatprep.subr.mxu0 0.0
        %6582 = vmatpush1.msra.mxu0 0.0
        %6583 = vmatprep.subr.mxu0 0.0
        %6584 = vmatpush1.msra.mxu0 0.0
        %6585 = vmatprep.subr.mxu0 0.0
        %6586 = vmatpush1.msra.mxu0 0.0
        %6587 = vmatprep.subr.mxu0 0.0
        %6588 = vmatpush1.msra.mxu0 0.0
        %6589 = vmatprep.subr.mxu0 0.0
        %6590 = vmatpush1.msra.mxu0 0.0
        %6591 = vmatprep.subr.mxu0 0.0
        %6592 = vmatpush1.msra.mxu0 0.0
        %6593 = vmatprep.subr.mxu0 0.0
        %6594 = vmatpush1.msra.mxu0 0.0
        %6595 = vmatprep.subr.mxu0 0.0
        %6596 = vmatpush1.msra.mxu0 0.0
        %6597 = vmatprep.subr.mxu0 0.0
        %6598 = vmatpush1.msra.mxu0 0.0
        %6599 = vmatprep.subr.mxu0 0.0
        %6600 = vmatpush1.msra.mxu0 0.0
        %6601 = vmatprep.subr.mxu0 0.0
        %6602 = vmatpush1.msra.mxu0 0.0
        %6603 = vmatprep.subr.mxu0 0.0
        %6604 = vmatpush1.msra.mxu0 0.0
        %6605 = vmatprep.mubr.f32.mxu0 0.0
        %v6606 = vand.u32 %v5796, 4294901760
        %6607 = vmatmul.mubr.f32.gmra.mrb[0].mxu0 %v6606
        %v6608 = vpop.f32.mrb[0].mxu0
        %v6609 = vadd.f32 %v6441, %v6608
        %v6610 = vpop.f32.mrb[0].mxu0
        %v6611 = vadd.f32 %v6443, %v6610
        %6612 = vdwg.mxu0
        %v6613 = vand.u32 %v5799, 4294901760
        %6614 = vmatprep.subr.mxu0 %v6613
        %v6615 = vand.u32 %v5798, 4294901760
        %6616 = vmatpush1.msra.mxu0 %v6615
        %v6617 = vand.u32 %v5803, 4294901760
        %6618 = vmatprep.subr.mxu0 %v6617
        %v6619 = vand.u32 %v5802, 4294901760
        %6620 = vmatpush1.msra.mxu0 %v6619
        %v6621 = vand.u32 %v5807, 4294901760
        %6622 = vmatprep.subr.mxu0 %v6621
        %v6623 = vand.u32 %v5806, 4294901760
        %6624 = vmatpush1.msra.mxu0 %v6623
        %v6625 = vand.u32 %v5811, 4294901760
        %6626 = vmatprep.subr.mxu0 %v6625
        %v6627 = vand.u32 %v5810, 4294901760
        %6628 = vmatpush1.msra.mxu0 %v6627
        %v6629 = vand.u32 %v5815, 4294901760
        %6630 = vmatprep.subr.mxu0 %v6629
        %v6631 = vand.u32 %v5814, 4294901760
        %6632 = vmatpush1.msra.mxu0 %v6631
        %v6633 = vand.u32 %v5819, 4294901760
        %6634 = vmatprep.subr.mxu0 %v6633
        %v6635 = vand.u32 %v5818, 4294901760
        %6636 = vmatpush1.msra.mxu0 %v6635
        %v6637 = vand.u32 %v5823, 4294901760
        %6638 = vmatprep.subr.mxu0 %v6637
        %v6639 = vand.u32 %v5822, 4294901760
        %6640 = vmatpush1.msra.mxu0 %v6639
        %v6641 = vand.u32 %v5827, 4294901760
        %6642 = vmatprep.subr.mxu0 %v6641
        %v6643 = vand.u32 %v5826, 4294901760
        %6644 = vmatpush1.msra.mxu0 %v6643
        %v6645 = vand.u32 %v5831, 4294901760
        %6646 = vmatprep.subr.mxu0 %v6645
        %v6647 = vand.u32 %v5830, 4294901760
        %6648 = vmatpush1.msra.mxu0 %v6647
        %v6649 = vand.u32 %v5835, 4294901760
        %6650 = vmatprep.subr.mxu0 %v6649
        %v6651 = vand.u32 %v5834, 4294901760
        %6652 = vmatpush1.msra.mxu0 %v6651
        %v6653 = vand.u32 %v5839, 4294901760
        %6654 = vmatprep.subr.mxu0 %v6653
        %v6655 = vand.u32 %v5838, 4294901760
        %6656 = vmatpush1.msra.mxu0 %v6655
        %v6657 = vand.u32 %v5843, 4294901760
        %6658 = vmatprep.subr.mxu0 %v6657
        %v6659 = vand.u32 %v5842, 4294901760
        %6660 = vmatpush1.msra.mxu0 %v6659
        %v6661 = vand.u32 %v5847, 4294901760
        %6662 = vmatprep.subr.mxu0 %v6661
        %v6663 = vand.u32 %v5846, 4294901760
        %6664 = vmatpush1.msra.mxu0 %v6663
        %v6665 = vand.u32 %v5851, 4294901760
        %6666 = vmatprep.subr.mxu0 %v6665
        %v6667 = vand.u32 %v5850, 4294901760
        %6668 = vmatpush1.msra.mxu0 %v6667
        %v6669 = vand.u32 %v5855, 4294901760
        %6670 = vmatprep.subr.mxu0 %v6669
        %v6671 = vand.u32 %v5854, 4294901760
        %6672 = vmatpush1.msra.mxu0 %v6671
        %v6673 = vand.u32 %v5859, 4294901760
        %6674 = vmatprep.subr.mxu0 %v6673
        %v6675 = vand.u32 %v5858, 4294901760
        %6676 = vmatpush1.msra.mxu0 %v6675
        %6677 = vmatprep.subr.mxu0 0.0
        %6678 = vmatpush1.msra.mxu0 0.0
        %6679 = vmatprep.subr.mxu0 0.0
        %6680 = vmatpush1.msra.mxu0 0.0
        %6681 = vmatprep.subr.mxu0 0.0
        %6682 = vmatpush1.msra.mxu0 0.0
        %6683 = vmatprep.subr.mxu0 0.0
        %6684 = vmatpush1.msra.mxu0 0.0
        %6685 = vmatprep.subr.mxu0 0.0
        %6686 = vmatpush1.msra.mxu0 0.0
        %6687 = vmatprep.subr.mxu0 0.0
        %6688 = vmatpush1.msra.mxu0 0.0
        %6689 = vmatprep.subr.mxu0 0.0
        %6690 = vmatpush1.msra.mxu0 0.0
        %6691 = vmatprep.subr.mxu0 0.0
        %6692 = vmatpush1.msra.mxu0 0.0
        %6693 = vmatprep.subr.mxu0 0.0
        %6694 = vmatpush1.msra.mxu0 0.0
        %6695 = vmatprep.subr.mxu0 0.0
        %6696 = vmatpush1.msra.mxu0 0.0
        %6697 = vmatprep.subr.mxu0 0.0
        %6698 = vmatpush1.msra.mxu0 0.0
        %6699 = vmatprep.subr.mxu0 0.0
        %6700 = vmatpush1.msra.mxu0 0.0
        %6701 = vmatprep.subr.mxu0 0.0
        %6702 = vmatpush1.msra.mxu0 0.0
        %6703 = vmatprep.subr.mxu0 0.0
        %6704 = vmatpush1.msra.mxu0 0.0
        %6705 = vmatprep.subr.mxu0 0.0
        %6706 = vmatpush1.msra.mxu0 0.0
        %6707 = vmatprep.subr.mxu0 0.0
        %6708 = vmatpush1.msra.mxu0 0.0
        %6709 = vmatprep.mubr.f32.mxu0 0.0
        %v6710 = vand.u32 %v5796, 4294901760
        %6711 = vmatmul.mubr.f32.gmra.mrb[0].mxu0 %v6710
        %v6712 = vpop.f32.mrb[0].mxu0
        %v6713 = vadd.f32 %v6609, %v6712
        %v6714 = vpop.f32.mrb[0].mxu0
        %v6715 = vadd.f32 %v6611, %v6714
        %6716 = vdwg.mxu0
        %v6717 = vand.u32 %v5801, 4294901760
        %6718 = vmatprep.subr.mxu0 %v6717
        %v6719 = vand.u32 %v5800, 4294901760
        %6720 = vmatpush1.msra.mxu0 %v6719
        %v6721 = vand.u32 %v5805, 4294901760
        %6722 = vmatprep.subr.mxu0 %v6721
        %v6723 = vand.u32 %v5804, 4294901760
        %6724 = vmatpush1.msra.mxu0 %v6723
        %v6725 = vand.u32 %v5809, 4294901760
        %6726 = vmatprep.subr.mxu0 %v6725
        %v6727 = vand.u32 %v5808, 4294901760
        %6728 = vmatpush1.msra.mxu0 %v6727
        %v6729 = vand.u32 %v5813, 4294901760
        %6730 = vmatprep.subr.mxu0 %v6729
        %v6731 = vand.u32 %v5812, 4294901760
        %6732 = vmatpush1.msra.mxu0 %v6731
        %v6733 = vand.u32 %v5817, 4294901760
        %6734 = vmatprep.subr.mxu0 %v6733
        %v6735 = vand.u32 %v5816, 4294901760
        %6736 = vmatpush1.msra.mxu0 %v6735
        %v6737 = vand.u32 %v5821, 4294901760
        %6738 = vmatprep.subr.mxu0 %v6737
        %v6739 = vand.u32 %v5820, 4294901760
        %6740 = vmatpush1.msra.mxu0 %v6739
        %v6741 = vand.u32 %v5825, 4294901760
        %6742 = vmatprep.subr.mxu0 %v6741
        %v6743 = vand.u32 %v5824, 4294901760
        %6744 = vmatpush1.msra.mxu0 %v6743
        %v6745 = vand.u32 %v5829, 4294901760
        %6746 = vmatprep.subr.mxu0 %v6745
        %v6747 = vand.u32 %v5828, 4294901760
        %6748 = vmatpush1.msra.mxu0 %v6747
        %v6749 = vand.u32 %v5833, 4294901760
        %6750 = vmatprep.subr.mxu0 %v6749
        %v6751 = vand.u32 %v5832, 4294901760
        %6752 = vmatpush1.msra.mxu0 %v6751
        %v6753 = vand.u32 %v5837, 4294901760
        %6754 = vmatprep.subr.mxu0 %v6753
        %v6755 = vand.u32 %v5836, 4294901760
        %6756 = vmatpush1.msra.mxu0 %v6755
        %v6757 = vand.u32 %v5841, 4294901760
        %6758 = vmatprep.subr.mxu0 %v6757
        %v6759 = vand.u32 %v5840, 4294901760
        %6760 = vmatpush1.msra.mxu0 %v6759
        %v6761 = vand.u32 %v5845, 4294901760
        %6762 = vmatprep.subr.mxu0 %v6761
        %v6763 = vand.u32 %v5844, 4294901760
        %6764 = vmatpush1.msra.mxu0 %v6763
        %v6765 = vand.u32 %v5849, 4294901760
        %6766 = vmatprep.subr.mxu0 %v6765
        %v6767 = vand.u32 %v5848, 4294901760
        %6768 = vmatpush1.msra.mxu0 %v6767
        %v6769 = vand.u32 %v5853, 4294901760
        %6770 = vmatprep.subr.mxu0 %v6769
        %v6771 = vand.u32 %v5852, 4294901760
        %6772 = vmatpush1.msra.mxu0 %v6771
        %v6773 = vand.u32 %v5857, 4294901760
        %6774 = vmatprep.subr.mxu0 %v6773
        %v6775 = vand.u32 %v5856, 4294901760
        %6776 = vmatpush1.msra.mxu0 %v6775
        %v6777 = vand.u32 %v5861, 4294901760
        %6778 = vmatprep.subr.mxu0 %v6777
        %v6779 = vand.u32 %v5860, 4294901760
        %6780 = vmatpush1.msra.mxu0 %v6779
        %6781 = vmatprep.subr.mxu0 0.0
        %6782 = vmatpush1.msra.mxu0 0.0
        %6783 = vmatprep.subr.mxu0 0.0
        %6784 = vmatpush1.msra.mxu0 0.0
        %6785 = vmatprep.subr.mxu0 0.0
        %6786 = vmatpush1.msra.mxu0 0.0
        %6787 = vmatprep.subr.mxu0 0.0
        %6788 = vmatpush1.msra.mxu0 0.0
        %6789 = vmatprep.subr.mxu0 0.0
        %6790 = vmatpush1.msra.mxu0 0.0
        %6791 = vmatprep.subr.mxu0 0.0
        %6792 = vmatpush1.msra.mxu0 0.0
        %6793 = vmatprep.subr.mxu0 0.0
        %6794 = vmatpush1.msra.mxu0 0.0
        %6795 = vmatprep.subr.mxu0 0.0
        %6796 = vmatpush1.msra.mxu0 0.0
        %6797 = vmatprep.subr.mxu0 0.0
        %6798 = vmatpush1.msra.mxu0 0.0
        %6799 = vmatprep.subr.mxu0 0.0
        %6800 = vmatpush1.msra.mxu0 0.0
        %6801 = vmatprep.subr.mxu0 0.0
        %6802 = vmatpush1.msra.mxu0 0.0
        %6803 = vmatprep.subr.mxu0 0.0
        %6804 = vmatpush1.msra.mxu0 0.0
        %6805 = vmatprep.subr.mxu0 0.0
        %6806 = vmatpush1.msra.mxu0 0.0
        %6807 = vmatprep.subr.mxu0 0.0
        %6808 = vmatpush1.msra.mxu0 0.0
        %6809 = vmatprep.subr.mxu0 0.0
        %6810 = vmatpush1.msra.mxu0 0.0
        %6811 = vmatprep.subr.mxu0 0.0
        %6812 = vmatpush1.msra.mxu0 0.0
        %6813 = vmatprep.mubr.f32.mxu0 0.0
        %v6814 = vand.u32 %v5796, 4294901760
        %v6815 = vsub.f32 %v5796, %v6814
        %v6816 = vand.u32 %v6815, 4294901760
        %v6817 = vsub.f32 %v6815, %v6816
        %v6818 = vand.u32 %v6817, 4294901760
        %6819 = vmatmul.mubr.f32.gmra.mrb[0].mxu0 %v6818
        %v6820 = vpop.f32.mrb[0].mxu0
        %v6821 = vadd.f32 0.0, %v6820
        %v6822 = vpop.f32.mrb[0].mxu0
        %v6823 = vadd.f32 0.0, %v6822
        %6824 = vdwg.mxu0
        %v6825 = vand.u32 %v5801, 4294901760
        %v6826 = vsub.f32 %v5801, %v6825
        %v6827 = vand.u32 %v6826, 4294901760
        %v6828 = vsub.f32 %v6826, %v6827
        %v6829 = vand.u32 %v6828, 4294901760
        %6830 = vmatprep.subr.mxu0 %v6829
        %v6831 = vand.u32 %v5800, 4294901760
        %v6832 = vsub.f32 %v5800, %v6831
        %v6833 = vand.u32 %v6832, 4294901760
        %v6834 = vsub.f32 %v6832, %v6833
        %v6835 = vand.u32 %v6834, 4294901760
        %6836 = vmatpush1.msra.mxu0 %v6835
        %v6837 = vand.u32 %v5805, 4294901760
        %v6838 = vsub.f32 %v5805, %v6837
        %v6839 = vand.u32 %v6838, 4294901760
        %v6840 = vsub.f32 %v6838, %v6839
        %v6841 = vand.u32 %v6840, 4294901760
        %6842 = vmatprep.subr.mxu0 %v6841
        %v6843 = vand.u32 %v5804, 4294901760
        %v6844 = vsub.f32 %v5804, %v6843
        %v6845 = vand.u32 %v6844, 4294901760
        %v6846 = vsub.f32 %v6844, %v6845
        %v6847 = vand.u32 %v6846, 4294901760
        %6848 = vmatpush1.msra.mxu0 %v6847
        %v6849 = vand.u32 %v5809, 4294901760
        %v6850 = vsub.f32 %v5809, %v6849
        %v6851 = vand.u32 %v6850, 4294901760
        %v6852 = vsub.f32 %v6850, %v6851
        %v6853 = vand.u32 %v6852, 4294901760
        %6854 = vmatprep.subr.mxu0 %v6853
        %v6855 = vand.u32 %v5808, 4294901760
        %v6856 = vsub.f32 %v5808, %v6855
        %v6857 = vand.u32 %v6856, 4294901760
        %v6858 = vsub.f32 %v6856, %v6857
        %v6859 = vand.u32 %v6858, 4294901760
        %6860 = vmatpush1.msra.mxu0 %v6859
        %v6861 = vand.u32 %v5813, 4294901760
        %v6862 = vsub.f32 %v5813, %v6861
        %v6863 = vand.u32 %v6862, 4294901760
        %v6864 = vsub.f32 %v6862, %v6863
        %v6865 = vand.u32 %v6864, 4294901760
        %6866 = vmatprep.subr.mxu0 %v6865
        %v6867 = vand.u32 %v5812, 4294901760
        %v6868 = vsub.f32 %v5812, %v6867
        %v6869 = vand.u32 %v6868, 4294901760
        %v6870 = vsub.f32 %v6868, %v6869
        %v6871 = vand.u32 %v6870, 4294901760
        %6872 = vmatpush1.msra.mxu0 %v6871
        %v6873 = vand.u32 %v5817, 4294901760
        %v6874 = vsub.f32 %v5817, %v6873
        %v6875 = vand.u32 %v6874, 4294901760
        %v6876 = vsub.f32 %v6874, %v6875
        %v6877 = vand.u32 %v6876, 4294901760
        %6878 = vmatprep.subr.mxu0 %v6877
        %v6879 = vand.u32 %v5816, 4294901760
        %v6880 = vsub.f32 %v5816, %v6879
        %v6881 = vand.u32 %v6880, 4294901760
        %v6882 = vsub.f32 %v6880, %v6881
        %v6883 = vand.u32 %v6882, 4294901760
        %6884 = vmatpush1.msra.mxu0 %v6883
        %v6885 = vand.u32 %v5821, 4294901760
        %v6886 = vsub.f32 %v5821, %v6885
        %v6887 = vand.u32 %v6886, 4294901760
        %v6888 = vsub.f32 %v6886, %v6887
        %v6889 = vand.u32 %v6888, 4294901760
        %6890 = vmatprep.subr.mxu0 %v6889
        %v6891 = vand.u32 %v5820, 4294901760
        %v6892 = vsub.f32 %v5820, %v6891
        %v6893 = vand.u32 %v6892, 4294901760
        %v6894 = vsub.f32 %v6892, %v6893
        %v6895 = vand.u32 %v6894, 4294901760
        %6896 = vmatpush1.msra.mxu0 %v6895
        %v6897 = vand.u32 %v5825, 4294901760
        %v6898 = vsub.f32 %v5825, %v6897
        %v6899 = vand.u32 %v6898, 4294901760
        %v6900 = vsub.f32 %v6898, %v6899
        %v6901 = vand.u32 %v6900, 4294901760
        %6902 = vmatprep.subr.mxu0 %v6901
        %v6903 = vand.u32 %v5824, 4294901760
        %v6904 = vsub.f32 %v5824, %v6903
        %v6905 = vand.u32 %v6904, 4294901760
        %v6906 = vsub.f32 %v6904, %v6905
        %v6907 = vand.u32 %v6906, 4294901760
        %6908 = vmatpush1.msra.mxu0 %v6907
        %v6909 = vand.u32 %v5829, 4294901760
        %v6910 = vsub.f32 %v5829, %v6909
        %v6911 = vand.u32 %v6910, 4294901760
        %v6912 = vsub.f32 %v6910, %v6911
        %v6913 = vand.u32 %v6912, 4294901760
        %6914 = vmatprep.subr.mxu0 %v6913
        %v6915 = vand.u32 %v5828, 4294901760
        %v6916 = vsub.f32 %v5828, %v6915
        %v6917 = vand.u32 %v6916, 4294901760
        %v6918 = vsub.f32 %v6916, %v6917
        %v6919 = vand.u32 %v6918, 4294901760
        %6920 = vmatpush1.msra.mxu0 %v6919
        %v6921 = vand.u32 %v5833, 4294901760
        %v6922 = vsub.f32 %v5833, %v6921
        %v6923 = vand.u32 %v6922, 4294901760
        %v6924 = vsub.f32 %v6922, %v6923
        %v6925 = vand.u32 %v6924, 4294901760
        %6926 = vmatprep.subr.mxu0 %v6925
        %v6927 = vand.u32 %v5832, 4294901760
        %v6928 = vsub.f32 %v5832, %v6927
        %v6929 = vand.u32 %v6928, 4294901760
        %v6930 = vsub.f32 %v6928, %v6929
        %v6931 = vand.u32 %v6930, 4294901760
        %6932 = vmatpush1.msra.mxu0 %v6931
        %v6933 = vand.u32 %v5837, 4294901760
        %v6934 = vsub.f32 %v5837, %v6933
        %v6935 = vand.u32 %v6934, 4294901760
        %v6936 = vsub.f32 %v6934, %v6935
        %v6937 = vand.u32 %v6936, 4294901760
        %6938 = vmatprep.subr.mxu0 %v6937
        %v6939 = vand.u32 %v5836, 4294901760
        %v6940 = vsub.f32 %v5836, %v6939
        %v6941 = vand.u32 %v6940, 4294901760
        %v6942 = vsub.f32 %v6940, %v6941
        %v6943 = vand.u32 %v6942, 4294901760
        %6944 = vmatpush1.msra.mxu0 %v6943
        %v6945 = vand.u32 %v5841, 4294901760
        %v6946 = vsub.f32 %v5841, %v6945
        %v6947 = vand.u32 %v6946, 4294901760
        %v6948 = vsub.f32 %v6946, %v6947
        %v6949 = vand.u32 %v6948, 4294901760
        %6950 = vmatprep.subr.mxu0 %v6949
        %v6951 = vand.u32 %v5840, 4294901760
        %v6952 = vsub.f32 %v5840, %v6951
        %v6953 = vand.u32 %v6952, 4294901760
        %v6954 = vsub.f32 %v6952, %v6953
        %v6955 = vand.u32 %v6954, 4294901760
        %6956 = vmatpush1.msra.mxu0 %v6955
        %v6957 = vand.u32 %v5845, 4294901760
        %v6958 = vsub.f32 %v5845, %v6957
        %v6959 = vand.u32 %v6958, 4294901760
        %v6960 = vsub.f32 %v6958, %v6959
        %v6961 = vand.u32 %v6960, 4294901760
        %6962 = vmatprep.subr.mxu0 %v6961
        %v6963 = vand.u32 %v5844, 4294901760
        %v6964 = vsub.f32 %v5844, %v6963
        %v6965 = vand.u32 %v6964, 4294901760
        %v6966 = vsub.f32 %v6964, %v6965
        %v6967 = vand.u32 %v6966, 4294901760
        %6968 = vmatpush1.msra.mxu0 %v6967
        %v6969 = vand.u32 %v5849, 4294901760
        %v6970 = vsub.f32 %v5849, %v6969
        %v6971 = vand.u32 %v6970, 4294901760
        %v6972 = vsub.f32 %v6970, %v6971
        %v6973 = vand.u32 %v6972, 4294901760
        %6974 = vmatprep.subr.mxu0 %v6973
        %v6975 = vand.u32 %v5848, 4294901760
        %v6976 = vsub.f32 %v5848, %v6975
        %v6977 = vand.u32 %v6976, 4294901760
        %v6978 = vsub.f32 %v6976, %v6977
        %v6979 = vand.u32 %v6978, 4294901760
        %6980 = vmatpush1.msra.mxu0 %v6979
        %v6981 = vand.u32 %v5853, 4294901760
        %v6982 = vsub.f32 %v5853, %v6981
        %v6983 = vand.u32 %v6982, 4294901760
        %v6984 = vsub.f32 %v6982, %v6983
        %v6985 = vand.u32 %v6984, 4294901760
        %6986 = vmatprep.subr.mxu0 %v6985
        %v6987 = vand.u32 %v5852, 4294901760
        %v6988 = vsub.f32 %v5852, %v6987
        %v6989 = vand.u32 %v6988, 4294901760
        %v6990 = vsub.f32 %v6988, %v6989
        %v6991 = vand.u32 %v6990, 4294901760
        %6992 = vmatpush1.msra.mxu0 %v6991
        %v6993 = vand.u32 %v5857, 4294901760
        %v6994 = vsub.f32 %v5857, %v6993
        %v6995 = vand.u32 %v6994, 4294901760
        %v6996 = vsub.f32 %v6994, %v6995
        %v6997 = vand.u32 %v6996, 4294901760
        %6998 = vmatprep.subr.mxu0 %v6997
        %v6999 = vand.u32 %v5856, 4294901760
        %v7000 = vsub.f32 %v5856, %v6999
        %v7001 = vand.u32 %v7000, 4294901760
        %v7002 = vsub.f32 %v7000, %v7001
        %v7003 = vand.u32 %v7002, 4294901760
        %7004 = vmatpush1.msra.mxu0 %v7003
        %v7005 = vand.u32 %v5861, 4294901760
        %v7006 = vsub.f32 %v5861, %v7005
        %v7007 = vand.u32 %v7006, 4294901760
        %v7008 = vsub.f32 %v7006, %v7007
        %v7009 = vand.u32 %v7008, 4294901760
        %7010 = vmatprep.subr.mxu0 %v7009
        %v7011 = vand.u32 %v5860, 4294901760
        %v7012 = vsub.f32 %v5860, %v7011
        %v7013 = vand.u32 %v7012, 4294901760
        %v7014 = vsub.f32 %v7012, %v7013
        %v7015 = vand.u32 %v7014, 4294901760
        %7016 = vmatpush1.msra.mxu0 %v7015
        %7017 = vmatprep.subr.mxu0 0.0
        %7018 = vmatpush1.msra.mxu0 0.0
        %7019 = vmatprep.subr.mxu0 0.0
        %7020 = vmatpush1.msra.mxu0 0.0
        %7021 = vmatprep.subr.mxu0 0.0
        %7022 = vmatpush1.msra.mxu0 0.0
        %7023 = vmatprep.subr.mxu0 0.0
        %7024 = vmatpush1.msra.mxu0 0.0
        %7025 = vmatprep.subr.mxu0 0.0
        %7026 = vmatpush1.msra.mxu0 0.0
        %7027 = vmatprep.subr.mxu0 0.0
        %7028 = vmatpush1.msra.mxu0 0.0
        %7029 = vmatprep.subr.mxu0 0.0
        %7030 = vmatpush1.msra.mxu0 0.0
        %7031 = vmatprep.subr.mxu0 0.0
        %7032 = vmatpush1.msra.mxu0 0.0
        %7033 = vmatprep.subr.mxu0 0.0
        %7034 = vmatpush1.msra.mxu0 0.0
        %7035 = vmatprep.subr.mxu0 0.0
        %7036 = vmatpush1.msra.mxu0 0.0
        %7037 = vmatprep.subr.mxu0 0.0
        %7038 = vmatpush1.msra.mxu0 0.0
        %7039 = vmatprep.subr.mxu0 0.0
        %7040 = vmatpush1.msra.mxu0 0.0
        %7041 = vmatprep.subr.mxu0 0.0
        %7042 = vmatpush1.msra.mxu0 0.0
        %7043 = vmatprep.subr.mxu0 0.0
        %7044 = vmatpush1.msra.mxu0 0.0
        %7045 = vmatprep.subr.mxu0 0.0
        %7046 = vmatpush1.msra.mxu0 0.0
        %7047 = vmatprep.subr.mxu0 0.0
        %7048 = vmatpush1.msra.mxu0 0.0
        %7049 = vmatprep.mubr.f32.mxu0 0.0
        %v7050 = vand.u32 %v5796, 4294901760
        %7051 = vmatmul.mubr.f32.gmra.mrb[0].mxu0 %v7050
        %v7052 = vpop.f32.mrb[0].mxu0
        %v7053 = vadd.f32 %v6821, %v7052
        %v7054 = vpop.f32.mrb[0].mxu0
        %v7055 = vadd.f32 %v6823, %v7054
        %7056 = vdwg.mxu0
        %v7057 = vand.u32 %v5801, 4294901760
        %v7058 = vsub.f32 %v5801, %v7057
        %7059 = vmatprep.subr.mxu0 %v7058
        %v7060 = vand.u32 %v5800, 4294901760
        %v7061 = vsub.f32 %v5800, %v7060
        %7062 = vmatpush1.msra.mxu0 %v7061
        %v7063 = vand.u32 %v5805, 4294901760
        %v7064 = vsub.f32 %v5805, %v7063
        %7065 = vmatprep.subr.mxu0 %v7064
        %v7066 = vand.u32 %v5804, 4294901760
        %v7067 = vsub.f32 %v5804, %v7066
        %7068 = vmatpush1.msra.mxu0 %v7067
        %v7069 = vand.u32 %v5809, 4294901760
        %v7070 = vsub.f32 %v5809, %v7069
        %7071 = vmatprep.subr.mxu0 %v7070
        %v7072 = vand.u32 %v5808, 4294901760
        %v7073 = vsub.f32 %v5808, %v7072
        %7074 = vmatpush1.msra.mxu0 %v7073
        %v7075 = vand.u32 %v5813, 4294901760
        %v7076 = vsub.f32 %v5813, %v7075
        %7077 = vmatprep.subr.mxu0 %v7076
        %v7078 = vand.u32 %v5812, 4294901760
        %v7079 = vsub.f32 %v5812, %v7078
        %7080 = vmatpush1.msra.mxu0 %v7079
        %v7081 = vand.u32 %v5817, 4294901760
        %v7082 = vsub.f32 %v5817, %v7081
        %7083 = vmatprep.subr.mxu0 %v7082
        %v7084 = vand.u32 %v5816, 4294901760
        %v7085 = vsub.f32 %v5816, %v7084
        %7086 = vmatpush1.msra.mxu0 %v7085
        %v7087 = vand.u32 %v5821, 4294901760
        %v7088 = vsub.f32 %v5821, %v7087
        %7089 = vmatprep.subr.mxu0 %v7088
        %v7090 = vand.u32 %v5820, 4294901760
        %v7091 = vsub.f32 %v5820, %v7090
        %7092 = vmatpush1.msra.mxu0 %v7091
        %v7093 = vand.u32 %v5825, 4294901760
        %v7094 = vsub.f32 %v5825, %v7093
        %7095 = vmatprep.subr.mxu0 %v7094
        %v7096 = vand.u32 %v5824, 4294901760
        %v7097 = vsub.f32 %v5824, %v7096
        %7098 = vmatpush1.msra.mxu0 %v7097
        %v7099 = vand.u32 %v5829, 4294901760
        %v7100 = vsub.f32 %v5829, %v7099
        %7101 = vmatprep.subr.mxu0 %v7100
        %v7102 = vand.u32 %v5828, 4294901760
        %v7103 = vsub.f32 %v5828, %v7102
        %7104 = vmatpush1.msra.mxu0 %v7103
        %v7105 = vand.u32 %v5833, 4294901760
        %v7106 = vsub.f32 %v5833, %v7105
        %7107 = vmatprep.subr.mxu0 %v7106
        %v7108 = vand.u32 %v5832, 4294901760
        %v7109 = vsub.f32 %v5832, %v7108
        %7110 = vmatpush1.msra.mxu0 %v7109
        %v7111 = vand.u32 %v5837, 4294901760
        %v7112 = vsub.f32 %v5837, %v7111
        %7113 = vmatprep.subr.mxu0 %v7112
        %v7114 = vand.u32 %v5836, 4294901760
        %v7115 = vsub.f32 %v5836, %v7114
        %7116 = vmatpush1.msra.mxu0 %v7115
        %v7117 = vand.u32 %v5841, 4294901760
        %v7118 = vsub.f32 %v5841, %v7117
        %7119 = vmatprep.subr.mxu0 %v7118
        %v7120 = vand.u32 %v5840, 4294901760
        %v7121 = vsub.f32 %v5840, %v7120
        %7122 = vmatpush1.msra.mxu0 %v7121
        %v7123 = vand.u32 %v5845, 4294901760
        %v7124 = vsub.f32 %v5845, %v7123
        %7125 = vmatprep.subr.mxu0 %v7124
        %v7126 = vand.u32 %v5844, 4294901760
        %v7127 = vsub.f32 %v5844, %v7126
        %7128 = vmatpush1.msra.mxu0 %v7127
        %v7129 = vand.u32 %v5849, 4294901760
        %v7130 = vsub.f32 %v5849, %v7129
        %7131 = vmatprep.subr.mxu0 %v7130
        %v7132 = vand.u32 %v5848, 4294901760
        %v7133 = vsub.f32 %v5848, %v7132
        %7134 = vmatpush1.msra.mxu0 %v7133
        %v7135 = vand.u32 %v5853, 4294901760
        %v7136 = vsub.f32 %v5853, %v7135
        %7137 = vmatprep.subr.mxu0 %v7136
        %v7138 = vand.u32 %v5852, 4294901760
        %v7139 = vsub.f32 %v5852, %v7138
        %7140 = vmatpush1.msra.mxu0 %v7139
        %v7141 = vand.u32 %v5857, 4294901760
        %v7142 = vsub.f32 %v5857, %v7141
        %7143 = vmatprep.subr.mxu0 %v7142
        %v7144 = vand.u32 %v5856, 4294901760
        %v7145 = vsub.f32 %v5856, %v7144
        %7146 = vmatpush1.msra.mxu0 %v7145
        %v7147 = vand.u32 %v5861, 4294901760
        %v7148 = vsub.f32 %v5861, %v7147
        %7149 = vmatprep.subr.mxu0 %v7148
        %v7150 = vand.u32 %v5860, 4294901760
        %v7151 = vsub.f32 %v5860, %v7150
        %7152 = vmatpush1.msra.mxu0 %v7151
        %7153 = vmatprep.subr.mxu0 0.0
        %7154 = vmatpush1.msra.mxu0 0.0
        %7155 = vmatprep.subr.mxu0 0.0
        %7156 = vmatpush1.msra.mxu0 0.0
        %7157 = vmatprep.subr.mxu0 0.0
        %7158 = vmatpush1.msra.mxu0 0.0
        %7159 = vmatprep.subr.mxu0 0.0
        %7160 = vmatpush1.msra.mxu0 0.0
        %7161 = vmatprep.subr.mxu0 0.0
        %7162 = vmatpush1.msra.mxu0 0.0
        %7163 = vmatprep.subr.mxu0 0.0
        %7164 = vmatpush1.msra.mxu0 0.0
        %7165 = vmatprep.subr.mxu0 0.0
        %7166 = vmatpush1.msra.mxu0 0.0
        %7167 = vmatprep.subr.mxu0 0.0
        %7168 = vmatpush1.msra.mxu0 0.0
        %7169 = vmatprep.subr.mxu0 0.0
        %7170 = vmatpush1.msra.mxu0 0.0
        %7171 = vmatprep.subr.mxu0 0.0
        %7172 = vmatpush1.msra.mxu0 0.0
        %7173 = vmatprep.subr.mxu0 0.0
        %7174 = vmatpush1.msra.mxu0 0.0
        %7175 = vmatprep.subr.mxu0 0.0
        %7176 = vmatpush1.msra.mxu0 0.0
        %7177 = vmatprep.subr.mxu0 0.0
        %7178 = vmatpush1.msra.mxu0 0.0
        %7179 = vmatprep.subr.mxu0 0.0
        %7180 = vmatpush1.msra.mxu0 0.0
        %7181 = vmatprep.subr.mxu0 0.0
        %7182 = vmatpush1.msra.mxu0 0.0
        %7183 = vmatprep.subr.mxu0 0.0
        %7184 = vmatpush1.msra.mxu0 0.0
        %7185 = vmatprep.mubr.f32.mxu0 0.0
        %v7186 = vand.u32 %v5796, 4294901760
        %v7187 = vsub.f32 %v5796, %v7186
        %7188 = vmatmul.mubr.f32.gmra.mrb[0].mxu0 %v7187
        %v7189 = vpop.f32.mrb[0].mxu0
        %v7190 = vadd.f32 %v7053, %v7189
        %v7191 = vpop.f32.mrb[0].mxu0
        %v7192 = vadd.f32 %v7055, %v7191
        %7193 = vdwg.mxu0
        %v7194 = vand.u32 %v5801, 4294901760
        %7195 = vmatprep.subr.mxu0 %v7194
        %v7196 = vand.u32 %v5800, 4294901760
        %7197 = vmatpush1.msra.mxu0 %v7196
        %v7198 = vand.u32 %v5805, 4294901760
        %7199 = vmatprep.subr.mxu0 %v7198
        %v7200 = vand.u32 %v5804, 4294901760
        %7201 = vmatpush1.msra.mxu0 %v7200
        %v7202 = vand.u32 %v5809, 4294901760
        %7203 = vmatprep.subr.mxu0 %v7202
        %v7204 = vand.u32 %v5808, 4294901760
        %7205 = vmatpush1.msra.mxu0 %v7204
        %v7206 = vand.u32 %v5813, 4294901760
        %7207 = vmatprep.subr.mxu0 %v7206
        %v7208 = vand.u32 %v5812, 4294901760
        %7209 = vmatpush1.msra.mxu0 %v7208
        %v7210 = vand.u32 %v5817, 4294901760
        %7211 = vmatprep.subr.mxu0 %v7210
        %v7212 = vand.u32 %v5816, 4294901760
        %7213 = vmatpush1.msra.mxu0 %v7212
        %v7214 = vand.u32 %v5821, 4294901760
        %7215 = vmatprep.subr.mxu0 %v7214
        %v7216 = vand.u32 %v5820, 4294901760
        %7217 = vmatpush1.msra.mxu0 %v7216
        %v7218 = vand.u32 %v5825, 4294901760
        %7219 = vmatprep.subr.mxu0 %v7218
        %v7220 = vand.u32 %v5824, 4294901760
        %7221 = vmatpush1.msra.mxu0 %v7220
        %v7222 = vand.u32 %v5829, 4294901760
        %7223 = vmatprep.subr.mxu0 %v7222
        %v7224 = vand.u32 %v5828, 4294901760
        %7225 = vmatpush1.msra.mxu0 %v7224
        %v7226 = vand.u32 %v5833, 4294901760
        %7227 = vmatprep.subr.mxu0 %v7226
        %v7228 = vand.u32 %v5832, 4294901760
        %7229 = vmatpush1.msra.mxu0 %v7228
        %v7230 = vand.u32 %v5837, 4294901760
        %7231 = vmatprep.subr.mxu0 %v7230
        %v7232 = vand.u32 %v5836, 4294901760
        %7233 = vmatpush1.msra.mxu0 %v7232
        %v7234 = vand.u32 %v5841, 4294901760
        %7235 = vmatprep.subr.mxu0 %v7234
        %v7236 = vand.u32 %v5840, 4294901760
        %7237 = vmatpush1.msra.mxu0 %v7236
        %v7238 = vand.u32 %v5845, 4294901760
        %7239 = vmatprep.subr.mxu0 %v7238
        %v7240 = vand.u32 %v5844, 4294901760
        %7241 = vmatpush1.msra.mxu0 %v7240
        %v7242 = vand.u32 %v5849, 4294901760
        %7243 = vmatprep.subr.mxu0 %v7242
        %v7244 = vand.u32 %v5848, 4294901760
        %7245 = vmatpush1.msra.mxu0 %v7244
        %v7246 = vand.u32 %v5853, 4294901760
        %7247 = vmatprep.subr.mxu0 %v7246
        %v7248 = vand.u32 %v5852, 4294901760
        %7249 = vmatpush1.msra.mxu0 %v7248
        %v7250 = vand.u32 %v5857, 4294901760
        %7251 = vmatprep.subr.mxu0 %v7250
        %v7252 = vand.u32 %v5856, 4294901760
        %7253 = vmatpush1.msra.mxu0 %v7252
        %v7254 = vand.u32 %v5861, 4294901760
        %7255 = vmatprep.subr.mxu0 %v7254
        %v7256 = vand.u32 %v5860, 4294901760
        %7257 = vmatpush1.msra.mxu0 %v7256
        %7258 = vmatprep.subr.mxu0 0.0
        %7259 = vmatpush1.msra.mxu0 0.0
        %7260 = vmatprep.subr.mxu0 0.0
        %7261 = vmatpush1.msra.mxu0 0.0
        %7262 = vmatprep.subr.mxu0 0.0
        %7263 = vmatpush1.msra.mxu0 0.0
        %7264 = vmatprep.subr.mxu0 0.0
        %7265 = vmatpush1.msra.mxu0 0.0
        %7266 = vmatprep.subr.mxu0 0.0
        %7267 = vmatpush1.msra.mxu0 0.0
        %7268 = vmatprep.subr.mxu0 0.0
        %7269 = vmatpush1.msra.mxu0 0.0
        %7270 = vmatprep.subr.mxu0 0.0
        %7271 = vmatpush1.msra.mxu0 0.0
        %7272 = vmatprep.subr.mxu0 0.0
        %7273 = vmatpush1.msra.mxu0 0.0
        %7274 = vmatprep.subr.mxu0 0.0
        %7275 = vmatpush1.msra.mxu0 0.0
        %7276 = vmatprep.subr.mxu0 0.0
        %7277 = vmatpush1.msra.mxu0 0.0
        %7278 = vmatprep.subr.mxu0 0.0
        %7279 = vmatpush1.msra.mxu0 0.0
        %7280 = vmatprep.subr.mxu0 0.0
        %7281 = vmatpush1.msra.mxu0 0.0
        %7282 = vmatprep.subr.mxu0 0.0
        %7283 = vmatpush1.msra.mxu0 0.0
        %7284 = vmatprep.subr.mxu0 0.0
        %7285 = vmatpush1.msra.mxu0 0.0
        %7286 = vmatprep.subr.mxu0 0.0
        %7287 = vmatpush1.msra.mxu0 0.0
        %7288 = vmatprep.subr.mxu0 0.0
        %7289 = vmatpush1.msra.mxu0 0.0
        %7290 = vmatprep.mubr.f32.mxu0 0.0
        %v7291 = vand.u32 %v5796, 4294901760
        %v7292 = vsub.f32 %v5796, %v7291
        %v7293 = vand.u32 %v7292, 4294901760
        %7294 = vmatmul.mubr.f32.gmra.mrb[0].mxu0 %v7293
        %v7295 = vpop.f32.mrb[0].mxu0
        %v7296 = vadd.f32 %v7190, %v7295
        %v7297 = vpop.f32.mrb[0].mxu0
        %v7298 = vadd.f32 %v7192, %v7297
        %7299 = vdwg.mxu0
        %v7300 = vand.u32 %v5801, 4294901760
        %v7301 = vsub.f32 %v5801, %v7300
        %v7302 = vand.u32 %v7301, 4294901760
        %7303 = vmatprep.subr.mxu0 %v7302
        %v7304 = vand.u32 %v5800, 4294901760
        %v7305 = vsub.f32 %v5800, %v7304
        %v7306 = vand.u32 %v7305, 4294901760
        %7307 = vmatpush1.msra.mxu0 %v7306
        %v7308 = vand.u32 %v5805, 4294901760
        %v7309 = vsub.f32 %v5805, %v7308
        %v7310 = vand.u32 %v7309, 4294901760
        %7311 = vmatprep.subr.mxu0 %v7310
        %v7312 = vand.u32 %v5804, 4294901760
        %v7313 = vsub.f32 %v5804, %v7312
        %v7314 = vand.u32 %v7313, 4294901760
        %7315 = vmatpush1.msra.mxu0 %v7314
        %v7316 = vand.u32 %v5809, 4294901760
        %v7317 = vsub.f32 %v5809, %v7316
        %v7318 = vand.u32 %v7317, 4294901760
        %7319 = vmatprep.subr.mxu0 %v7318
        %v7320 = vand.u32 %v5808, 4294901760
        %v7321 = vsub.f32 %v5808, %v7320
        %v7322 = vand.u32 %v7321, 4294901760
        %7323 = vmatpush1.msra.mxu0 %v7322
        %v7324 = vand.u32 %v5813, 4294901760
        %v7325 = vsub.f32 %v5813, %v7324
        %v7326 = vand.u32 %v7325, 4294901760
        %7327 = vmatprep.subr.mxu0 %v7326
        %v7328 = vand.u32 %v5812, 4294901760
        %v7329 = vsub.f32 %v5812, %v7328
        %v7330 = vand.u32 %v7329, 4294901760
        %7331 = vmatpush1.msra.mxu0 %v7330
        %v7332 = vand.u32 %v5817, 4294901760
        %v7333 = vsub.f32 %v5817, %v7332
        %v7334 = vand.u32 %v7333, 4294901760
        %7335 = vmatprep.subr.mxu0 %v7334
        %v7336 = vand.u32 %v5816, 4294901760
        %v7337 = vsub.f32 %v5816, %v7336
        %v7338 = vand.u32 %v7337, 4294901760
        %7339 = vmatpush1.msra.mxu0 %v7338
        %v7340 = vand.u32 %v5821, 4294901760
        %v7341 = vsub.f32 %v5821, %v7340
        %v7342 = vand.u32 %v7341, 4294901760
        %7343 = vmatprep.subr.mxu0 %v7342
        %v7344 = vand.u32 %v5820, 4294901760
        %v7345 = vsub.f32 %v5820, %v7344
        %v7346 = vand.u32 %v7345, 4294901760
        %7347 = vmatpush1.msra.mxu0 %v7346
        %v7348 = vand.u32 %v5825, 4294901760
        %v7349 = vsub.f32 %v5825, %v7348
        %v7350 = vand.u32 %v7349, 4294901760
        %7351 = vmatprep.subr.mxu0 %v7350
        %v7352 = vand.u32 %v5824, 4294901760
        %v7353 = vsub.f32 %v5824, %v7352
        %v7354 = vand.u32 %v7353, 4294901760
        %7355 = vmatpush1.msra.mxu0 %v7354
        %v7356 = vand.u32 %v5829, 4294901760
        %v7357 = vsub.f32 %v5829, %v7356
        %v7358 = vand.u32 %v7357, 4294901760
        %7359 = vmatprep.subr.mxu0 %v7358
        %v7360 = vand.u32 %v5828, 4294901760
        %v7361 = vsub.f32 %v5828, %v7360
        %v7362 = vand.u32 %v7361, 4294901760
        %7363 = vmatpush1.msra.mxu0 %v7362
        %v7364 = vand.u32 %v5833, 4294901760
        %v7365 = vsub.f32 %v5833, %v7364
        %v7366 = vand.u32 %v7365, 4294901760
        %7367 = vmatprep.subr.mxu0 %v7366
        %v7368 = vand.u32 %v5832, 4294901760
        %v7369 = vsub.f32 %v5832, %v7368
        %v7370 = vand.u32 %v7369, 4294901760
        %7371 = vmatpush1.msra.mxu0 %v7370
        %v7372 = vand.u32 %v5837, 4294901760
        %v7373 = vsub.f32 %v5837, %v7372
        %v7374 = vand.u32 %v7373, 4294901760
        %7375 = vmatprep.subr.mxu0 %v7374
        %v7376 = vand.u32 %v5836, 4294901760
        %v7377 = vsub.f32 %v5836, %v7376
        %v7378 = vand.u32 %v7377, 4294901760
        %7379 = vmatpush1.msra.mxu0 %v7378
        %v7380 = vand.u32 %v5841, 4294901760
        %v7381 = vsub.f32 %v5841, %v7380
        %v7382 = vand.u32 %v7381, 4294901760
        %7383 = vmatprep.subr.mxu0 %v7382
        %v7384 = vand.u32 %v5840, 4294901760
        %v7385 = vsub.f32 %v5840, %v7384
        %v7386 = vand.u32 %v7385, 4294901760
        %7387 = vmatpush1.msra.mxu0 %v7386
        %v7388 = vand.u32 %v5845, 4294901760
        %v7389 = vsub.f32 %v5845, %v7388
        %v7390 = vand.u32 %v7389, 4294901760
        %7391 = vmatprep.subr.mxu0 %v7390
        %v7392 = vand.u32 %v5844, 4294901760
        %v7393 = vsub.f32 %v5844, %v7392
        %v7394 = vand.u32 %v7393, 4294901760
        %7395 = vmatpush1.msra.mxu0 %v7394
        %v7396 = vand.u32 %v5849, 4294901760
        %v7397 = vsub.f32 %v5849, %v7396
        %v7398 = vand.u32 %v7397, 4294901760
        %7399 = vmatprep.subr.mxu0 %v7398
        %v7400 = vand.u32 %v5848, 4294901760
        %v7401 = vsub.f32 %v5848, %v7400
        %v7402 = vand.u32 %v7401, 4294901760
        %7403 = vmatpush1.msra.mxu0 %v7402
        %v7404 = vand.u32 %v5853, 4294901760
        %v7405 = vsub.f32 %v5853, %v7404
        %v7406 = vand.u32 %v7405, 4294901760
        %7407 = vmatprep.subr.mxu0 %v7406
        %v7408 = vand.u32 %v5852, 4294901760
        %v7409 = vsub.f32 %v5852, %v7408
        %v7410 = vand.u32 %v7409, 4294901760
        %7411 = vmatpush1.msra.mxu0 %v7410
        %v7412 = vand.u32 %v5857, 4294901760
        %v7413 = vsub.f32 %v5857, %v7412
        %v7414 = vand.u32 %v7413, 4294901760
        %7415 = vmatprep.subr.mxu0 %v7414
        %v7416 = vand.u32 %v5856, 4294901760
        %v7417 = vsub.f32 %v5856, %v7416
        %v7418 = vand.u32 %v7417, 4294901760
        %7419 = vmatpush1.msra.mxu0 %v7418
        %v7420 = vand.u32 %v5861, 4294901760
        %v7421 = vsub.f32 %v5861, %v7420
        %v7422 = vand.u32 %v7421, 4294901760
        %7423 = vmatprep.subr.mxu0 %v7422
        %v7424 = vand.u32 %v5860, 4294901760
        %v7425 = vsub.f32 %v5860, %v7424
        %v7426 = vand.u32 %v7425, 4294901760
        %7427 = vmatpush1.msra.mxu0 %v7426
        %7428 = vmatprep.subr.mxu0 0.0
        %7429 = vmatpush1.msra.mxu0 0.0
        %7430 = vmatprep.subr.mxu0 0.0
        %7431 = vmatpush1.msra.mxu0 0.0
        %7432 = vmatprep.subr.mxu0 0.0
        %7433 = vmatpush1.msra.mxu0 0.0
        %7434 = vmatprep.subr.mxu0 0.0
        %7435 = vmatpush1.msra.mxu0 0.0
        %7436 = vmatprep.subr.mxu0 0.0
        %7437 = vmatpush1.msra.mxu0 0.0
        %7438 = vmatprep.subr.mxu0 0.0
        %7439 = vmatpush1.msra.mxu0 0.0
        %7440 = vmatprep.subr.mxu0 0.0
        %7441 = vmatpush1.msra.mxu0 0.0
        %7442 = vmatprep.subr.mxu0 0.0
        %7443 = vmatpush1.msra.mxu0 0.0
        %7444 = vmatprep.subr.mxu0 0.0
        %7445 = vmatpush1.msra.mxu0 0.0
        %7446 = vmatprep.subr.mxu0 0.0
        %7447 = vmatpush1.msra.mxu0 0.0
        %7448 = vmatprep.subr.mxu0 0.0
        %7449 = vmatpush1.msra.mxu0 0.0
        %7450 = vmatprep.subr.mxu0 0.0
        %7451 = vmatpush1.msra.mxu0 0.0
        %7452 = vmatprep.subr.mxu0 0.0
        %7453 = vmatpush1.msra.mxu0 0.0
        %7454 = vmatprep.subr.mxu0 0.0
        %7455 = vmatpush1.msra.mxu0 0.0
        %7456 = vmatprep.subr.mxu0 0.0
        %7457 = vmatpush1.msra.mxu0 0.0
        %7458 = vmatprep.subr.mxu0 0.0
        %7459 = vmatpush1.msra.mxu0 0.0
        %7460 = vmatprep.mubr.f32.mxu0 0.0
        %v7461 = vand.u32 %v5796, 4294901760
        %7462 = vmatmul.mubr.f32.gmra.mrb[0].mxu0 %v7461
        %v7463 = vpop.f32.mrb[0].mxu0
        %v7464 = vadd.f32 %v7296, %v7463
        %v7465 = vpop.f32.mrb[0].mxu0
        %v7466 = vadd.f32 %v7298, %v7465
        %7467 = vdwg.mxu0
        %v7468 = vand.u32 %v5801, 4294901760
        %7469 = vmatprep.subr.mxu0 %v7468
        %v7470 = vand.u32 %v5800, 4294901760
        %7471 = vmatpush1.msra.mxu0 %v7470
        %v7472 = vand.u32 %v5805, 4294901760
        %7473 = vmatprep.subr.mxu0 %v7472
        %v7474 = vand.u32 %v5804, 4294901760
        %7475 = vmatpush1.msra.mxu0 %v7474
        %v7476 = vand.u32 %v5809, 4294901760
        %7477 = vmatprep.subr.mxu0 %v7476
        %v7478 = vand.u32 %v5808, 4294901760
        %7479 = vmatpush1.msra.mxu0 %v7478
        %v7480 = vand.u32 %v5813, 4294901760
        %7481 = vmatprep.subr.mxu0 %v7480
        %v7482 = vand.u32 %v5812, 4294901760
        %7483 = vmatpush1.msra.mxu0 %v7482
        %v7484 = vand.u32 %v5817, 4294901760
        %7485 = vmatprep.subr.mxu0 %v7484
        %v7486 = vand.u32 %v5816, 4294901760
        %7487 = vmatpush1.msra.mxu0 %v7486
        %v7488 = vand.u32 %v5821, 4294901760
        %7489 = vmatprep.subr.mxu0 %v7488
        %v7490 = vand.u32 %v5820, 4294901760
        %7491 = vmatpush1.msra.mxu0 %v7490
        %v7492 = vand.u32 %v5825, 4294901760
        %7493 = vmatprep.subr.mxu0 %v7492
        %v7494 = vand.u32 %v5824, 4294901760
        %7495 = vmatpush1.msra.mxu0 %v7494
        %v7496 = vand.u32 %v5829, 4294901760
        %7497 = vmatprep.subr.mxu0 %v7496
        %v7498 = vand.u32 %v5828, 4294901760
        %7499 = vmatpush1.msra.mxu0 %v7498
        %v7500 = vand.u32 %v5833, 4294901760
        %7501 = vmatprep.subr.mxu0 %v7500
        %v7502 = vand.u32 %v5832, 4294901760
        %7503 = vmatpush1.msra.mxu0 %v7502
        %v7504 = vand.u32 %v5837, 4294901760
        %7505 = vmatprep.subr.mxu0 %v7504
        %v7506 = vand.u32 %v5836, 4294901760
        %7507 = vmatpush1.msra.mxu0 %v7506
        %v7508 = vand.u32 %v5841, 4294901760
        %7509 = vmatprep.subr.mxu0 %v7508
        %v7510 = vand.u32 %v5840, 4294901760
        %7511 = vmatpush1.msra.mxu0 %v7510
        %v7512 = vand.u32 %v5845, 4294901760
        %7513 = vmatprep.subr.mxu0 %v7512
        %v7514 = vand.u32 %v5844, 4294901760
        %7515 = vmatpush1.msra.mxu0 %v7514
        %v7516 = vand.u32 %v5849, 4294901760
        %7517 = vmatprep.subr.mxu0 %v7516
        %v7518 = vand.u32 %v5848, 4294901760
        %7519 = vmatpush1.msra.mxu0 %v7518
        %v7520 = vand.u32 %v5853, 4294901760
        %7521 = vmatprep.subr.mxu0 %v7520
        %v7522 = vand.u32 %v5852, 4294901760
        %7523 = vmatpush1.msra.mxu0 %v7522
        %v7524 = vand.u32 %v5857, 4294901760
        %7525 = vmatprep.subr.mxu0 %v7524
        %v7526 = vand.u32 %v5856, 4294901760
        %7527 = vmatpush1.msra.mxu0 %v7526
        %v7528 = vand.u32 %v5861, 4294901760
        %7529 = vmatprep.subr.mxu0 %v7528
        %v7530 = vand.u32 %v5860, 4294901760
        %7531 = vmatpush1.msra.mxu0 %v7530
        %7532 = vmatprep.subr.mxu0 0.0
        %7533 = vmatpush1.msra.mxu0 0.0
        %7534 = vmatprep.subr.mxu0 0.0
        %7535 = vmatpush1.msra.mxu0 0.0
        %7536 = vmatprep.subr.mxu0 0.0
        %7537 = vmatpush1.msra.mxu0 0.0
        %7538 = vmatprep.subr.mxu0 0.0
        %7539 = vmatpush1.msra.mxu0 0.0
        %7540 = vmatprep.subr.mxu0 0.0
        %7541 = vmatpush1.msra.mxu0 0.0
        %7542 = vmatprep.subr.mxu0 0.0
        %7543 = vmatpush1.msra.mxu0 0.0
        %7544 = vmatprep.subr.mxu0 0.0
        %7545 = vmatpush1.msra.mxu0 0.0
        %7546 = vmatprep.subr.mxu0 0.0
        %7547 = vmatpush1.msra.mxu0 0.0
        %7548 = vmatprep.subr.mxu0 0.0
        %7549 = vmatpush1.msra.mxu0 0.0
        %7550 = vmatprep.subr.mxu0 0.0
        %7551 = vmatpush1.msra.mxu0 0.0
        %7552 = vmatprep.subr.mxu0 0.0
        %7553 = vmatpush1.msra.mxu0 0.0
        %7554 = vmatprep.subr.mxu0 0.0
        %7555 = vmatpush1.msra.mxu0 0.0
        %7556 = vmatprep.subr.mxu0 0.0
        %7557 = vmatpush1.msra.mxu0 0.0
        %7558 = vmatprep.subr.mxu0 0.0
        %7559 = vmatpush1.msra.mxu0 0.0
        %7560 = vmatprep.subr.mxu0 0.0
        %7561 = vmatpush1.msra.mxu0 0.0
        %7562 = vmatprep.subr.mxu0 0.0
        %7563 = vmatpush1.msra.mxu0 0.0
        %7564 = vmatprep.mubr.f32.mxu0 0.0
        %v7565 = vand.u32 %v5796, 4294901760
        %7566 = vmatmul.mubr.f32.gmra.mrb[0].mxu0 %v7565
        %v7567 = vpop.f32.mrb[0].mxu0
        %v7568 = vadd.f32 %v7464, %v7567
        %v7569 = vpop.f32.mrb[0].mxu0
        %v7570 = vadd.f32 %v7466, %v7569
        %7571 = vdwg.mxu0
        %s7572 = scalar_lea.vmem %s454, 96 [#allocation13]
        %7573 = vst [vmem:[%s7572] sm:$0xff] %v6713
        %7574 = vst [vmem:[%s7572 + $0x8] sm:$0xff] %v6715
        %7575 = vst [vmem:[%s7572 + $0x10] sm:$0xff] %v7568
        %7576 = vst [vmem:[%s7572 + $0x18] sm:$0xff] %v7570
        %v7577 = vld [vmem:[%s406] sm:$0xff]
        %v7578 = vld [vmem:[%s406 + $0x8] sm:$0xff]
        %v7579 = vld [vmem:[%s406 + $0x10] sm:$0xff]
        %v7580 = vld [vmem:[%s406 + $0x18] sm:$0xff]
        %s7581 = scalar_lea.vmem %s454, 128 [#allocation13]
        %7582 = vst [vmem:[%s7581] sm:$0xff] %v7577
        %7583 = vst [vmem:[%s7581 + $0x8] sm:$0xff] %v7578
        %7584 = vst [vmem:[%s7581 + $0x10] sm:$0xff] %v7579
        %7585 = vst [vmem:[%s7581 + $0x18] sm:$0xff] %v7580
        %s7586 = sand.u32 %s213, 1
        %s7587 = scalar_lea.sflag [#allocation4], %s7586
        %s7588 = sand.u32 %s213, 1
        %s7589 = smul.addr %s7588, 160
        %s7590 = scalar_lea.vmem [#allocation13], %s7589
        // Predicated region
        $region69: #{tpu_custom_call.1} parent=43 // pred_check
          %p7591 = pneg %p223
        $region70: #{tpu_custom_call.1} parent=43 // pred_check_branch
          %7593 = sbr.rel (%p7591) target = $region72
        $region71: #{tpu_custom_call.1} parent=43 // pred_region
          %s7595 = ssub.s32 2560, 2560
          %7596 = vsyncadd %s7587, %s7595
          %s7597 = smul.addr %s35, 4
          %s7598 = smul.addr %s34, 20
          %s7599 = sadd.s32 %s7597, %s7598
          %s7600 = smul.addr %s7599, 128
          %s7601 = scalar_lea.hbm %s6, %s7600
          %s7602 = sshll.u32 %s7590, 4
          %s7603 = int_to_ptr.vmem [resolvable:$true] %s7602
          %7608 = dma.vmem_to_hbm [thread:$0]  %s7603, 2560, %s7601, %s7587, 512, 512, 32
        $region72: #{tpu_custom_call.1} parent=43 // pred_fallthru
          _
      $region44: #{tpu_custom_call.1} parent=5 // pred_fallthru
        _
      %p7609 = scmp.le.s32.totalorder 2, %s25
      // Predicated region
      $region73: #{tpu_custom_call.1} parent=5 // pred_check
        %p7610 = pneg %p7609
      $region74: #{tpu_custom_call.1} parent=5 // pred_check_branch
        %7612 = sbr.rel (%p7610) target = $region76
      $region75: #{tpu_custom_call.1} parent=5 // pred_region
        %s7613 = ssub.s32 %s25, 2
        // Predicated region
        $region77: #{tpu_custom_call.1} parent=75 // pred_check
          %p7614 = pneg %p229
        $region78: #{tpu_custom_call.1} parent=75 // pred_check_branch
          %7616 = sbr.rel (%p7614) target = $region80
        $region79: #{tpu_custom_call.1} parent=75 // pred_region
          %s7617 = sand.u32 %s214, 1
          %s7618 = scalar_lea.sflag [#allocation4], %s7617
          %s7619 = sand.u32 %s214, 1
          %s7620 = smul.addr %s7619, 160
          %s7621 = scalar_lea.vmem [#allocation13], %s7620
          %7622 = dma.done %s7618, 2560
        $region80: #{tpu_custom_call.1} parent=75 // pred_fallthru
          _
      $region76: #{tpu_custom_call.1} parent=5 // pred_fallthru
        _
    $region6: #{tpu_custom_call.1} parent=1 // loop_footer
      %s29 = sadd.s32 1, %s25
    $region7: #{tpu_custom_call.1} parent=1 // loop_footer_branch
      %24 = sbr.rel target = $region3
    $region8: #{tpu_custom_call.1} parent=1 // loop_exit
      _
    %7623 = vsyncpa [#allocation3], 1
    %s7624 = scalar_lea.sflag [#allocation3], 1
    %7625 = vsyncpa %s7624, 1
    %7626 = vsyncpa [#allocation6], 1
    %s7627 = scalar_lea.sflag [#allocation6], 1
    %7628 = vsyncpa %s7627, 1
    %7629 = vsyncpa [#allocation9], 1
    %s7630 = scalar_lea.sflag [#allocation9], 1
    %7631 = vsyncpa %s7630, 1
    %7632 = vsyncpa [#allocation12], 1
    %s7633 = scalar_lea.sflag [#allocation12], 1
    %7634 = vsyncpa %s7633, 1
    %7635 = vsyncpa [#allocation4], 1
    %s7636 = scalar_lea.sflag [#allocation4], 1
    %7637 = vsyncpa %s7636, 1

</llo_original>
